<compile_context>
chip_gen: v7x
topology: tpu7x:2x2x1
jax: 0.10.0
libtpu: 0.0.40
codegen_flags: <defaults>
</compile_context>

<pallas_src>
import jax
import jax.numpy as jnp
from jax.experimental import pallas as pl
from jax.experimental.pallas import tpu as pltpu

H1, H2, H3 = 2000, 500, 500


def _round_up(v, m):
    return (v + m - 1) // m * m


def _cdiv(a, b):
    return -(-a // b)


def decoder_kernel(x_ref,
                   w1_ref, b1_ref,
                   w2_ref, b2_ref,
                   w3_ref, b3_ref,
                   w4_ref, b4_ref,
                   o_ref):
    # Mixed precision: bf16 operands on the MXU, f32 accumulation + bias + ReLU.
    h = x_ref[...].astype(jnp.bfloat16)
    h = jnp.dot(h, w1_ref[...], preferred_element_type=jnp.float32) + b1_ref[...]
    h = jnp.maximum(h, 0.0).astype(jnp.bfloat16)
    h = jnp.dot(h, w2_ref[...], preferred_element_type=jnp.float32) + b2_ref[...]
    h = jnp.maximum(h, 0.0).astype(jnp.bfloat16)
    h = jnp.dot(h, w3_ref[...], preferred_element_type=jnp.float32) + b3_ref[...]
    h = jnp.maximum(h, 0.0).astype(jnp.bfloat16)
    out = jnp.dot(h, w4_ref[...], preferred_element_type=jnp.float32) + b4_ref[...]
    o_ref[...] = out.astype(o_ref.dtype)


def init_params(key, feature_dim, input_dim):
    """Deterministic synthetic parameter init (shapes match nn.Linear)."""
    dims = [(feature_dim, H1), (H1, H2), (H2, H3), (H3, input_dim)]
    params = []
    for fan_in, fan_out in dims:
        kw, kb, key = jax.random.split(key, 3)
        scale = 1.0 / jnp.sqrt(jnp.float32(fan_in))
        w = jax.random.uniform(kw, (fan_in, fan_out), jnp.float32,
                               minval=-scale, maxval=scale)
        b = jax.random.uniform(kb, (1, fan_out), jnp.float32,
                               minval=-scale, maxval=scale)
        params.append((w, b))
    return params


def prepare_params(params):
    """Zero-pad hidden/output widths to multiples of 128, cast weights to bf16.

    Zero padding is numerically exact: padded hidden units are ReLU(0+0)=0 and
    the corresponding (padded) input rows of the next weight matrix are zero.
    """
    prepared = []
    prev_out_pad = None
    for w, b in params:
        fan_in, fan_out = w.shape
        in_p = fan_in if prev_out_pad is None else prev_out_pad
        out_p = _round_up(fan_out, 128)
        w_p = jnp.zeros((in_p, out_p), jnp.float32).at[:fan_in, :fan_out].set(w)
        b_p = jnp.zeros((1, out_p), jnp.float32).at[:, :fan_out].set(
            b.reshape(1, -1))
        prepared.append((w_p.astype(jnp.bfloat16), b_p))
        prev_out_pad = out_p
    return prepared


def _choose_batch_tile(B, tile_b):
    """Pick (TB, n_tiles) so padding <= 15 rows/tile and both v7x TCs get work."""
    n_tiles = max(1, _cdiv(B, tile_b))
    # For medium/large batches ensure >= 2 tiles so the "parallel" batch axis
    # splits across v7x's two TensorCores; keep tiles >= 128 rows.
    if n_tiles < 2 and B >= 256:
        n_tiles = 2
    # Multiple of 16: keeps bf16 activations on dense (16,128) sublane packing
    # (v5e) and satisfies the (8,128) block constraint.
    TB = _round_up(_cdiv(B, n_tiles), 16)
    return TB, n_tiles


def _decoder_call(x_padded, prepared, TB, n_tiles, single_buffer_weights):
    (w1, b1), (w2, b2), (w3, b3), (w4, b4) = prepared
    B_pad, F = x_padded.shape
    H1P, H2P, H3P, OP = w1.shape[1], w2.shape[1], w3.shape[1], w4.shape[1]

    def resident(shape):
        # Constant block index -> DMA'd once and kept resident across the grid.
        # Single-buffer it: double buffering a never-changing block only
        # doubles its VMEM footprint.
        if single_buffer_weights:
            return pl.BlockSpec(shape, lambda i: (0, 0),
                                pipeline_mode=pl.Buffered(1))
        return pl.BlockSpec(shape, lambda i: (0, 0))

    flops = 2 * B_pad * (F * H1P + H1P * H2P + H2P * H3P + H3P * OP)
    bytes_accessed = (
        B_pad * F * 4 + B_pad * OP * 4
        + sum(int(w.size) * 2 + int(b.size) * 4 for (w, b) in prepared))

    return pl.pallas_call(
        decoder_kernel,
        out_shape=jax.ShapeDtypeStruct((B_pad, OP), jnp.float32),
        grid_spec=pltpu.PrefetchScalarGridSpec(
            num_scalar_prefetch=0,
            grid=(n_tiles,),
            in_specs=[
                # x tile marches over the batch axis (software-pipelined).
                pl.BlockSpec((TB, F), lambda i: (i, 0)),
                # Weights / biases: resident, single-buffered.
                resident((F, H1P)), resident((1, H1P)),
                resident((H1P, H2P)), resident((1, H2P)),
                resident((H2P, H3P)), resident((1, H3P)),
                resident((H3P, OP)), resident((1, OP)),
            ],
            # Lane-dense (multiple-of-128-wide) output -> unmasked stores.
            out_specs=pl.BlockSpec((TB, OP), lambda i: (i, 0)),
        ),
        compiler_params=pltpu.CompilerParams(
            dimension_semantics=("parallel",)),
        cost_estimate=pl.CostEstimate(
            flops=flops, transcendentals=0, bytes_accessed=bytes_accessed),
    )(x_padded, w1, b1, w2, b2, w3, b3, w4, b4)


def decoder_forward(x, prepared, out_dim, *, tile_b=512):
    """Run the fused 4-layer MLP. `prepared` comes from prepare_params()."""
    B, _ = x.shape
    TB, n_tiles = _choose_batch_tile(B, tile_b)
    B_pad = TB * n_tiles
    if B_pad != B:
        x = jnp.pad(x, ((0, B_pad - B), (0, 0)))

    try:
        out = jax.block_until_ready(
            _decoder_call(x, prepared, TB, n_tiles, single_buffer_weights=True))
    except Exception:
        # Fallback for environments where pl.Buffered(1) on resident inputs is
        # rejected: default double-buffering is still correct, just uses ~2x
        # weight VMEM.
        out = jax.block_until_ready(
            _decoder_call(x, prepared, TB, n_tiles, single_buffer_weights=False))

    # Slice off batch padding and lane padding of the output.
    return out[:B, :out_dim]


def decoder_reference_mixed(x, prepared, out_dim):
    """Pure-JAX reference mirroring the kernel's bf16/f32 mixed precision."""
    h = x
    n = len(prepared)
    for i, (w, b) in enumerate(prepared):
        h = jnp.dot(h.astype(jnp.bfloat16), w,
                    preferred_element_type=jnp.float32) + b
        if i < n - 1:
            h = jnp.maximum(h, 0.0)
    return h[:, :out_dim]


def decoder_reference_f32(x, params):
    """Full-precision reference of the PyTorch forward pass."""
    h = x
    for i, (w, b) in enumerate(params):
        h = h @ w + b
        if i < len(params) - 1:
            h = jnp.maximum(h, 0.0)
    return h


if __name__ == "__main__":
    batch = 8
    feature_dim = 32
    input_dim = 64

    key = jax.random.PRNGKey(0)
    kx, kp = jax.random.split(key)

    x = jax.random.normal(kx, (batch, feature_dim), jnp.float32)
    params = init_params(kp, feature_dim, input_dim)
    prepared = prepare_params(params)

    out = decoder_forward(x, prepared, input_dim)
    out = jax.block_until_ready(out)
    assert out.shape == (batch, input_dim)

    # Gating check: exact-math comparison against a reference with the same
    # bf16/f32 mixed-precision path as the kernel.
    ref_mixed = decoder_reference_mixed(x, prepared, input_dim)
    assert jnp.allclose(out, ref_mixed, atol=1e-2, rtol=1e-2), \
        "mismatch vs mixed-precision reference"

    # Sanity check against the full-f32 PyTorch-equivalent forward (loose tol
    # only to absorb bf16 weight quantization error).
    ref_f32 = decoder_reference_f32(x, params)
    assert jnp.allclose(out, ref_f32, atol=1e-1, rtol=1e-1), \
        "mismatch vs f32 reference"

    print("KERNEL_OK")
</pallas_src>

<mosaic_0001>
module attributes {stable_mosaic.version = 11 : i64} {
  func.func @decoder_kernel(%arg0: i32, %arg1: memref<16x32xf32, #tpu.memory_space<vmem>>, %arg2: memref<32x2048xbf16, #tpu.memory_space<vmem>>, %arg3: memref<1x2048xf32, #tpu.memory_space<vmem>>, %arg4: memref<2048x512xbf16, #tpu.memory_space<vmem>>, %arg5: memref<1x512xf32, #tpu.memory_space<vmem>>, %arg6: memref<512x512xbf16, #tpu.memory_space<vmem>>, %arg7: memref<1x512xf32, #tpu.memory_space<vmem>>, %arg8: memref<512x128xbf16, #tpu.memory_space<vmem>>, %arg9: memref<1x128xf32, #tpu.memory_space<vmem>>, %arg10: memref<16x128xf32, #tpu.memory_space<vmem>>) attributes {dimension_semantics = [#tpu.dimension_semantics<parallel>], iteration_bounds = array<i64: 1>, scalar_prefetch = 0 : i64, scratch_operands = 0 : i64, tpu.core_type = #tpu.core_type<tc>, window_params = [{transform_indices = @transform_0, window_bounds = array<i64: 16, 32>}, {pipeline_mode = #tpu.pipeline_mode<synchronous>, transform_indices = @transform_1, window_bounds = array<i64: 32, 2048>}, {pipeline_mode = #tpu.pipeline_mode<synchronous>, transform_indices = @transform_2, window_bounds = array<i64: 1, 2048>}, {pipeline_mode = #tpu.pipeline_mode<synchronous>, transform_indices = @transform_3, window_bounds = array<i64: 2048, 512>}, {pipeline_mode = #tpu.pipeline_mode<synchronous>, transform_indices = @transform_4, window_bounds = array<i64: 1, 512>}, {pipeline_mode = #tpu.pipeline_mode<synchronous>, transform_indices = @transform_5, window_bounds = array<i64: 512, 512>}, {pipeline_mode = #tpu.pipeline_mode<synchronous>, transform_indices = @transform_6, window_bounds = array<i64: 1, 512>}, {pipeline_mode = #tpu.pipeline_mode<synchronous>, transform_indices = @transform_7, window_bounds = array<i64: 512, 128>}, {pipeline_mode = #tpu.pipeline_mode<synchronous>, transform_indices = @transform_8, window_bounds = array<i64: 1, 128>}, {transform_indices = @transform_9, window_bounds = array<i64: 16, 128>}]} {
    %c0 = arith.constant 0 : index
    %c0_0 = arith.constant 0 : index
    %0 = vector.load %arg1[%c0, %c0_0] : memref<16x32xf32, #tpu.memory_space<vmem>>, vector<16x32xf32>
    %1 = arith.truncf %0 : vector<16x32xf32> to vector<16x32xbf16>
    %c0_1 = arith.constant 0 : index
    %c0_2 = arith.constant 0 : index
    %2 = vector.load %arg2[%c0_1, %c0_2] : memref<32x2048xbf16, #tpu.memory_space<vmem>>, vector<32x2048xbf16>
    %cst = arith.constant dense<0.000000e+00> : vector<16x2048xf32>
    %3 = tpu.matmul %1, %2, %cst {dimension_numbers = #tpu.dot_dimension_numbers<[1], [0], [0], [1], [0, 0, 1, 1], [], []>} : vector<16x32xbf16>, vector<32x2048xbf16>, vector<16x2048xf32> -> vector<16x2048xf32>
    %c0_3 = arith.constant 0 : index
    %c0_4 = arith.constant 0 : index
    %4 = vector.load %arg3[%c0_3, %c0_4] : memref<1x2048xf32, #tpu.memory_space<vmem>>, vector<1x2048xf32>
    %5 = vector.broadcast %4 : vector<1x2048xf32> to vector<16x2048xf32>
    %6 = arith.addf %3, %5 : vector<16x2048xf32>
    %cst_5 = arith.constant 0.000000e+00 : f32
    %7 = vector.broadcast %cst_5 : f32 to vector<16x2048xf32>
    %8 = arith.maximumf %6, %7 : vector<16x2048xf32>
    %9 = arith.truncf %8 : vector<16x2048xf32> to vector<16x2048xbf16>
    %c0_6 = arith.constant 0 : index
    %c0_7 = arith.constant 0 : index
    %10 = vector.load %arg4[%c0_6, %c0_7] : memref<2048x512xbf16, #tpu.memory_space<vmem>>, vector<2048x512xbf16>
    %cst_8 = arith.constant dense<0.000000e+00> : vector<16x512xf32>
    %11 = tpu.matmul %9, %10, %cst_8 {dimension_numbers = #tpu.dot_dimension_numbers<[1], [0], [0], [1], [0, 0, 1, 1], [], []>} : vector<16x2048xbf16>, vector<2048x512xbf16>, vector<16x512xf32> -> vector<16x512xf32>
    %c0_9 = arith.constant 0 : index
    %c0_10 = arith.constant 0 : index
    %12 = vector.load %arg5[%c0_9, %c0_10] : memref<1x512xf32, #tpu.memory_space<vmem>>, vector<1x512xf32>
    %13 = vector.broadcast %12 : vector<1x512xf32> to vector<16x512xf32>
    %14 = arith.addf %11, %13 : vector<16x512xf32>
    %cst_11 = arith.constant 0.000000e+00 : f32
    %15 = vector.broadcast %cst_11 : f32 to vector<16x512xf32>
    %16 = arith.maximumf %14, %15 : vector<16x512xf32>
    %17 = arith.truncf %16 : vector<16x512xf32> to vector<16x512xbf16>
    %c0_12 = arith.constant 0 : index
    %c0_13 = arith.constant 0 : index
    %18 = vector.load %arg6[%c0_12, %c0_13] : memref<512x512xbf16, #tpu.memory_space<vmem>>, vector<512x512xbf16>
    %cst_14 = arith.constant dense<0.000000e+00> : vector<16x512xf32>
    %19 = tpu.matmul %17, %18, %cst_14 {dimension_numbers = #tpu.dot_dimension_numbers<[1], [0], [0], [1], [0, 0, 1, 1], [], []>} : vector<16x512xbf16>, vector<512x512xbf16>, vector<16x512xf32> -> vector<16x512xf32>
    %c0_15 = arith.constant 0 : index
    %c0_16 = arith.constant 0 : index
    %20 = vector.load %arg7[%c0_15, %c0_16] : memref<1x512xf32, #tpu.memory_space<vmem>>, vector<1x512xf32>
    %21 = vector.broadcast %20 : vector<1x512xf32> to vector<16x512xf32>
    %22 = arith.addf %19, %21 : vector<16x512xf32>
    %cst_17 = arith.constant 0.000000e+00 : f32
    %23 = vector.broadcast %cst_17 : f32 to vector<16x512xf32>
    %24 = arith.maximumf %22, %23 : vector<16x512xf32>
    %25 = arith.truncf %24 : vector<16x512xf32> to vector<16x512xbf16>
    %c0_18 = arith.constant 0 : index
    %c0_19 = arith.constant 0 : index
    %26 = vector.load %arg8[%c0_18, %c0_19] : memref<512x128xbf16, #tpu.memory_space<vmem>>, vector<512x128xbf16>
    %cst_20 = arith.constant dense<0.000000e+00> : vector<16x128xf32>
    %27 = tpu.matmul %25, %26, %cst_20 {dimension_numbers = #tpu.dot_dimension_numbers<[1], [0], [0], [1], [0, 0, 1, 1], [], []>} : vector<16x512xbf16>, vector<512x128xbf16>, vector<16x128xf32> -> vector<16x128xf32>
    %c0_21 = arith.constant 0 : index
    %c0_22 = arith.constant 0 : index
    %28 = vector.load %arg9[%c0_21, %c0_22] : memref<1x128xf32, #tpu.memory_space<vmem>>, vector<1x128xf32>
    %29 = vector.broadcast %28 : vector<1x128xf32> to vector<16x128xf32>
    %30 = arith.addf %27, %29 : vector<16x128xf32>
    %c0_23 = arith.constant 0 : index
    %c0_24 = arith.constant 0 : index
    %31 = vector.load %arg10[%c0_23, %c0_24] : memref<16x128xf32, #tpu.memory_space<vmem>>, vector<16x128xf32>
    tpu.vector_store %arg10[%c0_23, %c0_24], %30 {strides = array<i32>} : memref<16x128xf32, #tpu.memory_space<vmem>>, vector<16x128xf32>,
    return
  }
  func.func @transform_0(%arg0: i32) -> (i32, i32) {
    %c0_i32 = arith.constant 0 : i32
    %c0_i32_0 = arith.constant 0 : i32
    return %arg0, %c0_i32 : i32, i32
  }
  func.func @transform_1(%arg0: i32) -> (i32, i32) {
    %c0_i32 = arith.constant 0 : i32
    %c0_i32_0 = arith.constant 0 : i32
    %c0_i32_1 = arith.constant 0 : i32
    return %c0_i32, %c0_i32_0 : i32, i32
  }
  func.func @transform_2(%arg0: i32) -> (i32, i32) {
    %c0_i32 = arith.constant 0 : i32
    %c0_i32_0 = arith.constant 0 : i32
    %c0_i32_1 = arith.constant 0 : i32
    return %c0_i32, %c0_i32_0 : i32, i32
  }
  func.func @transform_3(%arg0: i32) -> (i32, i32) {
    %c0_i32 = arith.constant 0 : i32
    %c0_i32_0 = arith.constant 0 : i32
    %c0_i32_1 = arith.constant 0 : i32
    return %c0_i32, %c0_i32_0 : i32, i32
  }
  func.func @transform_4(%arg0: i32) -> (i32, i32) {
    %c0_i32 = arith.constant 0 : i32
    %c0_i32_0 = arith.constant 0 : i32
    %c0_i32_1 = arith.constant 0 : i32
    return %c0_i32, %c0_i32_0 : i32, i32
  }
  func.func @transform_5(%arg0: i32) -> (i32, i32) {
    %c0_i32 = arith.constant 0 : i32
    %c0_i32_0 = arith.constant 0 : i32
    %c0_i32_1 = arith.constant 0 : i32
    return %c0_i32, %c0_i32_0 : i32, i32
  }
  func.func @transform_6(%arg0: i32) -> (i32, i32) {
    %c0_i32 = arith.constant 0 : i32
    %c0_i32_0 = arith.constant 0 : i32
    %c0_i32_1 = arith.constant 0 : i32
    return %c0_i32, %c0_i32_0 : i32, i32
  }
  func.func @transform_7(%arg0: i32) -> (i32, i32) {
    %c0_i32 = arith.constant 0 : i32
    %c0_i32_0 = arith.constant 0 : i32
    %c0_i32_1 = arith.constant 0 : i32
    return %c0_i32, %c0_i32_0 : i32, i32
  }
  func.func @transform_8(%arg0: i32) -> (i32, i32) {
    %c0_i32 = arith.constant 0 : i32
    %c0_i32_0 = arith.constant 0 : i32
    %c0_i32_1 = arith.constant 0 : i32
    return %c0_i32, %c0_i32_0 : i32, i32
  }
  func.func @transform_9(%arg0: i32) -> (i32, i32) {
    %c0_i32 = arith.constant 0 : i32
    %c0_i32_0 = arith.constant 0 : i32
    return %arg0, %c0_i32 : i32, i32
  }
}

module attributes {stable_mosaic.version = 11 : i64} {
  func.func @decoder_kernel(%arg0: i32, %arg1: memref<16x32xf32, #tpu.memory_space<vmem>>, %arg2: memref<32x2048xbf16, #tpu.memory_space<vmem>>, %arg3: memref<1x2048xf32, #tpu.memory_space<vmem>>, %arg4: memref<2048x512xbf16, #tpu.memory_space<vmem>>, %arg5: memref<1x512xf32, #tpu.memory_space<vmem>>, %arg6: memref<512x512xbf16, #tpu.memory_space<vmem>>, %arg7: memref<1x512xf32, #tpu.memory_space<vmem>>, %arg8: memref<512x128xbf16, #tpu.memory_space<vmem>>, %arg9: memref<1x128xf32, #tpu.memory_space<vmem>>, %arg10: memref<16x128xf32, #tpu.memory_space<vmem>>) attributes {dimension_semantics = [#tpu.dimension_semantics<parallel>], iteration_bounds = array<i64: 1>, scalar_prefetch = 0 : i64, scratch_operands = 0 : i64, tpu.core_type = #tpu.core_type<tc>, window_params = [{transform_indices = @transform_0, window_bounds = array<i64: 16, 32>}, {pipeline_mode = #tpu.pipeline_mode<synchronous>, transform_indices = @transform_1, window_bounds = array<i64: 32, 2048>}, {pipeline_mode = #tpu.pipeline_mode<synchronous>, transform_indices = @transform_2, window_bounds = array<i64: 1, 2048>}, {pipeline_mode = #tpu.pipeline_mode<synchronous>, transform_indices = @transform_3, window_bounds = array<i64: 2048, 512>}, {pipeline_mode = #tpu.pipeline_mode<synchronous>, transform_indices = @transform_4, window_bounds = array<i64: 1, 512>}, {pipeline_mode = #tpu.pipeline_mode<synchronous>, transform_indices = @transform_5, window_bounds = array<i64: 512, 512>}, {pipeline_mode = #tpu.pipeline_mode<synchronous>, transform_indices = @transform_6, window_bounds = array<i64: 1, 512>}, {pipeline_mode = #tpu.pipeline_mode<synchronous>, transform_indices = @transform_7, window_bounds = array<i64: 512, 128>}, {pipeline_mode = #tpu.pipeline_mode<synchronous>, transform_indices = @transform_8, window_bounds = array<i64: 1, 128>}, {transform_indices = @transform_9, window_bounds = array<i64: 16, 128>}]} {
    %c0 = arith.constant 0 : index
    %c0_0 = arith.constant 0 : index
    %0 = vector.load %arg1[%c0, %c0_0] : memref<16x32xf32, #tpu.memory_space<vmem>>, vector<16x32xf32>
    %1 = arith.truncf %0 : vector<16x32xf32> to vector<16x32xbf16>
    %c0_1 = arith.constant 0 : index
    %c0_2 = arith.constant 0 : index
    %2 = vector.load %arg2[%c0_1, %c0_2] : memref<32x2048xbf16, #tpu.memory_space<vmem>>, vector<32x2048xbf16>
    %cst = arith.constant dense<0.000000e+00> : vector<16x2048xf32>
    %3 = tpu.matmul %1, %2, %cst {dimension_numbers = #tpu.dot_dimension_numbers<[1], [0], [0], [1], [0, 0, 1, 1], [], []>} : vector<16x32xbf16>, vector<32x2048xbf16>, vector<16x2048xf32> -> vector<16x2048xf32>
    %c0_3 = arith.constant 0 : index
    %c0_4 = arith.constant 0 : index
    %4 = vector.load %arg3[%c0_3, %c0_4] : memref<1x2048xf32, #tpu.memory_space<vmem>>, vector<1x2048xf32>
    %5 = vector.broadcast %4 : vector<1x2048xf32> to vector<16x2048xf32>
    %6 = arith.addf %3, %5 : vector<16x2048xf32>
    %cst_5 = arith.constant 0.000000e+00 : f32
    %7 = vector.broadcast %cst_5 : f32 to vector<16x2048xf32>
    %8 = arith.maximumf %6, %7 : vector<16x2048xf32>
    %9 = arith.truncf %8 : vector<16x2048xf32> to vector<16x2048xbf16>
    %c0_6 = arith.constant 0 : index
    %c0_7 = arith.constant 0 : index
    %10 = vector.load %arg4[%c0_6, %c0_7] : memref<2048x512xbf16, #tpu.memory_space<vmem>>, vector<2048x512xbf16>
    %cst_8 = arith.constant dense<0.000000e+00> : vector<16x512xf32>
    %11 = tpu.matmul %9, %10, %cst_8 {dimension_numbers = #tpu.dot_dimension_numbers<[1], [0], [0], [1], [0, 0, 1, 1], [], []>} : vector<16x2048xbf16>, vector<2048x512xbf16>, vector<16x512xf32> -> vector<16x512xf32>
    %c0_9 = arith.constant 0 : index
    %c0_10 = arith.constant 0 : index
    %12 = vector.load %arg5[%c0_9, %c0_10] : memref<1x512xf32, #tpu.memory_space<vmem>>, vector<1x512xf32>
    %13 = vector.broadcast %12 : vector<1x512xf32> to vector<16x512xf32>
    %14 = arith.addf %11, %13 : vector<16x512xf32>
    %cst_11 = arith.constant 0.000000e+00 : f32
    %15 = vector.broadcast %cst_11 : f32 to vector<16x512xf32>
    %16 = arith.maximumf %14, %15 : vector<16x512xf32>
    %17 = arith.truncf %16 : vector<16x512xf32> to vector<16x512xbf16>
    %c0_12 = arith.constant 0 : index
    %c0_13 = arith.constant 0 : index
    %18 = vector.load %arg6[%c0_12, %c0_13] : memref<512x512xbf16, #tpu.memory_space<vmem>>, vector<512x512xbf16>
    %cst_14 = arith.constant dense<0.000000e+00> : vector<16x512xf32>
    %19 = tpu.matmul %17, %18, %cst_14 {dimension_numbers = #tpu.dot_dimension_numbers<[1], [0], [0], [1], [0, 0, 1, 1], [], []>} : vector<16x512xbf16>, vector<512x512xbf16>, vector<16x512xf32> -> vector<16x512xf32>
    %c0_15 = arith.constant 0 : index
    %c0_16 = arith.constant 0 : index
    %20 = vector.load %arg7[%c0_15, %c0_16] : memref<1x512xf32, #tpu.memory_space<vmem>>, vector<1x512xf32>
    %21 = vector.broadcast %20 : vector<1x512xf32> to vector<16x512xf32>
    %22 = arith.addf %19, %21 : vector<16x512xf32>
    %cst_17 = arith.constant 0.000000e+00 : f32
    %23 = vector.broadcast %cst_17 : f32 to vector<16x512xf32>
    %24 = arith.maximumf %22, %23 : vector<16x512xf32>
    %25 = arith.truncf %24 : vector<16x512xf32> to vector<16x512xbf16>
    %c0_18 = arith.constant 0 : index
    %c0_19 = arith.constant 0 : index
    %26 = vector.load %arg8[%c0_18, %c0_19] : memref<512x128xbf16, #tpu.memory_space<vmem>>, vector<512x128xbf16>
    %cst_20 = arith.constant dense<0.000000e+00> : vector<16x128xf32>
    %27 = tpu.matmul %25, %26, %cst_20 {dimension_numbers = #tpu.dot_dimension_numbers<[1], [0], [0], [1], [0, 0, 1, 1], [], []>} : vector<16x512xbf16>, vector<512x128xbf16>, vector<16x128xf32> -> vector<16x128xf32>
    %c0_21 = arith.constant 0 : index
    %c0_22 = arith.constant 0 : index
    %28 = vector.load %arg9[%c0_21, %c0_22] : memref<1x128xf32, #tpu.memory_space<vmem>>, vector<1x128xf32>
    %29 = vector.broadcast %28 : vector<1x128xf32> to vector<16x128xf32>
    %30 = arith.addf %27, %29 : vector<16x128xf32>
    %c0_23 = arith.constant 0 : index
    %c0_24 = arith.constant 0 : index
    %31 = vector.load %arg10[%c0_23, %c0_24] : memref<16x128xf32, #tpu.memory_space<vmem>>, vector<16x128xf32>
    tpu.vector_store %arg10[%c0_23, %c0_24], %30 {strides = array<i32>} : memref<16x128xf32, #tpu.memory_space<vmem>>, vector<16x128xf32>,
    return
  }
  func.func @transform_0(%arg0: i32) -> (i32, i32) {
    %c0_i32 = arith.constant 0 : i32
    %c0_i32_0 = arith.constant 0 : i32
    return %arg0, %c0_i32 : i32, i32
  }
  func.func @transform_1(%arg0: i32) -> (i32, i32) {
    %c0_i32 = arith.constant 0 : i32
    %c0_i32_0 = arith.constant 0 : i32
    %c0_i32_1 = arith.constant 0 : i32
    return %c0_i32, %c0_i32_0 : i32, i32
  }
  func.func @transform_2(%arg0: i32) -> (i32, i32) {
    %c0_i32 = arith.constant 0 : i32
    %c0_i32_0 = arith.constant 0 : i32
    %c0_i32_1 = arith.constant 0 : i32
    return %c0_i32, %c0_i32_0 : i32, i32
  }
  func.func @transform_3(%arg0: i32) -> (i32, i32) {
    %c0_i32 = arith.constant 0 : i32
    %c0_i32_0 = arith.constant 0 : i32
    %c0_i32_1 = arith.constant 0 : i32
    return %c0_i32, %c0_i32_0 : i32, i32
  }
  func.func @transform_4(%arg0: i32) -> (i32, i32) {
    %c0_i32 = arith.constant 0 : i32
    %c0_i32_0 = arith.constant 0 : i32
    %c0_i32_1 = arith.constant 0 : i32
    return %c0_i32, %c0_i32_0 : i32, i32
  }
  func.func @transform_5(%arg0: i32) -> (i32, i32) {
    %c0_i32 = arith.constant 0 : i32
    %c0_i32_0 = arith.constant 0 : i32
    %c0_i32_1 = arith.constant 0 : i32
    return %c0_i32, %c0_i32_0 : i32, i32
  }
  func.func @transform_6(%arg0: i32) -> (i32, i32) {
    %c0_i32 = arith.constant 0 : i32
    %c0_i32_0 = arith.constant 0 : i32
    %c0_i32_1 = arith.constant 0 : i32
    return %c0_i32, %c0_i32_0 : i32, i32
  }
  func.func @transform_7(%arg0: i32) -> (i32, i32) {
    %c0_i32 = arith.constant 0 : i32
    %c0_i32_0 = arith.constant 0 : i32
    %c0_i32_1 = arith.constant 0 : i32
    return %c0_i32, %c0_i32_0 : i32, i32
  }
  func.func @transform_8(%arg0: i32) -> (i32, i32) {
    %c0_i32 = arith.constant 0 : i32
    %c0_i32_0 = arith.constant 0 : i32
    %c0_i32_1 = arith.constant 0 : i32
    return %c0_i32, %c0_i32_0 : i32, i32
  }
  func.func @transform_9(%arg0: i32) -> (i32, i32) {
    %c0_i32 = arith.constant 0 : i32
    %c0_i32_0 = arith.constant 0 : i32
    return %arg0, %c0_i32 : i32, i32
  }
}

</mosaic_0001>

<llo_original>
// kernel: tpu_custom_call.1
$region0: #{tpu_custom_call.1}
  #allocation0 [shape = 'u32[]', space=smem, size = 0x4, offset = 0x4, fixed_abs, tag = 'smem constant byte address 0x4 - core index']
  #allocation1 [shape = 'u32[144,128]{1,0:T(1,128)}', space=vmem, size = 0x12000, scoped, tag = 'internal scratch']
  %s0 = inlined_call_operand.hbm [shape: f32[16,32], index: 0, kind: input, shape index: {}]
  %s1 = inlined_call_operand.hbm [shape: bf16[32,2048], index: 1, kind: input, shape index: {}]
  %s2 = inlined_call_operand.hbm [shape: f32[1,2048], index: 2, kind: input, shape index: {}]
  %s3 = inlined_call_operand.hbm [shape: bf16[2048,512], index: 3, kind: input, shape index: {}]
  %s4 = inlined_call_operand.hbm [shape: f32[1,512], index: 4, kind: input, shape index: {}]
  %s5 = inlined_call_operand.hbm [shape: bf16[512,512], index: 5, kind: input, shape index: {}]
  %s6 = inlined_call_operand.hbm [shape: f32[1,512], index: 6, kind: input, shape index: {}]
  %s7 = inlined_call_operand.hbm [shape: bf16[512,128], index: 7, kind: input, shape index: {}]
  %s8 = inlined_call_operand.hbm [shape: f32[1,128], index: 8, kind: input, shape index: {}]
  %s9 = inlined_call_operand.hbm [shape: f32[16,128], index: 9, kind: output, shape index: {}]
  %s10 = sld [smem:[#allocation0]]
  $region82: #{tpu_custom_call.1} parent=0
    _
  %s12 = ssub.s32 1, %s10
  %s13 = scalar_select 0, %s12, %s10
  $region1: #{tpu_custom_call.1} parent=0
    #allocation2 [shape = 'u8[8192]{0}', space=vmem, size = 0x2000, scoped, tag = 'input window, operand 0, single buffered']
    #allocation3 [shape = 's32[1]{0}', space=sflag, size = 0x4, scoped, tag = 'scoped memory for tpu_custom_call.1']
    #allocation4 [shape = 's32[1]{0}', space=sflag, size = 0x4, scoped, tag = 'scoped memory for tpu_custom_call.1']
    #allocation5 [shape = 'u8[131072]{0}', space=vmem, size = 0x20000, scoped, tag = 'input window, operand 1, single buffered']
    #allocation6 [shape = 's32[1]{0}', space=sflag, size = 0x4, scoped, tag = 'scoped memory for tpu_custom_call.1']
    #allocation7 [shape = 'u8[8192]{0}', space=vmem, size = 0x2000, scoped, tag = 'input window, operand 2, single buffered']
    #allocation8 [shape = 'u8[2097152]{0}', space=vmem, size = 0x200000, scoped, tag = 'input window, operand 3, single buffered']
    #allocation9 [shape = 's32[1]{0}', space=sflag, size = 0x4, scoped, tag = 'scoped memory for tpu_custom_call.1']
    #allocation10 [shape = 'u8[2048]{0}', space=vmem, size = 0x800, scoped, tag = 'input window, operand 4, single buffered']
    #allocation11 [shape = 'u8[524288]{0}', space=vmem, size = 0x80000, scoped, tag = 'input window, operand 5, single buffered']
    #allocation12 [shape = 's32[1]{0}', space=sflag, size = 0x4, scoped, tag = 'scoped memory for tpu_custom_call.1']
    #allocation13 [shape = 'u8[2048]{0}', space=vmem, size = 0x800, scoped, tag = 'input window, operand 6, single buffered']
    #allocation14 [shape = 'u8[131072]{0}', space=vmem, size = 0x20000, scoped, tag = 'input window, operand 7, single buffered']
    #allocation15 [shape = 's32[1]{0}', space=sflag, size = 0x4, scoped, tag = 'scoped memory for tpu_custom_call.1']
    #allocation16 [shape = 'u8[512]{0}', space=vmem, size = 0x400, scoped, tag = 'input window, operand 8, single buffered']
    #allocation17 [shape = 'u8[8192]{0}', space=vmem, size = 0x2000, scoped, tag = 'output window, operand 0, single buffered']
    %14 = vsyncpa [#allocation3], 0
    %15 = vsyncpa [#allocation6], 0
    %16 = vsyncpa [#allocation9], 0
    %17 = vsyncpa [#allocation12], 0
    %18 = vsyncpa [#allocation15], 0
    %19 = vsyncpa [#allocation4], 0
    // Predicated region
    $region2: #{tpu_custom_call.1} parent=1 // pred_check
      _
    $region3: #{tpu_custom_call.1} parent=1 // pred_check_branch
      %21 = sbr.rel (0) target = $region5
    $region4: #{tpu_custom_call.1} parent=1 // pred_region
      %s23 = ssub.s32 256, 256
      %24 = vsyncadd [#allocation3], %s23
      %s25 = sshll.u32 [#allocation2], 4
      %s26 = int_to_ptr.vmem [resolvable:$true] %s25
      %31 = dma.hbm_to_vmem [thread:$0]  %s0, 256, %s26, [#allocation3], 128, 128, 8
    $region5: #{tpu_custom_call.1} parent=1 // pred_fallthru
      _
    // Predicated region
    $region6: #{tpu_custom_call.1} parent=1 // pred_check
      _
    $region7: #{tpu_custom_call.1} parent=1 // pred_check_branch
      %33 = sbr.rel (0) target = $region9
    $region8: #{tpu_custom_call.1} parent=1 // pred_region
      %s35 = ssub.s32 4096, 4096
      %36 = vsyncadd [#allocation6], %s35
      %s37 = sshll.u32 [#allocation5], 4
      %s38 = int_to_ptr.vmem [resolvable:$true] %s37
      %43 = dma.hbm_to_vmem [thread:$0]  %s1, 4096, %s38, [#allocation6], 1024, 1024, 64
    $region9: #{tpu_custom_call.1} parent=1 // pred_fallthru
      _
    // Predicated region
    $region10: #{tpu_custom_call.1} parent=1 // pred_check
      _
    $region11: #{tpu_custom_call.1} parent=1 // pred_check_branch
      %45 = sbr.rel (0) target = $region13
    $region12: #{tpu_custom_call.1} parent=1 // pred_region
      %s47 = ssub.s32 256, 256
      %48 = vsyncadd [#allocation6], %s47
      %s50 = sshll.u32 [#allocation7], 4
      %s51 = int_to_ptr.vmem [resolvable:$true] %s50
      %53 = dma.hbm_to_vmem [thread:$0]  %s2, 256, %s51, [#allocation6]
    $region13: #{tpu_custom_call.1} parent=1 // pred_fallthru
      _
    // Predicated region
    $region14: #{tpu_custom_call.1} parent=1 // pred_check
      _
    $region15: #{tpu_custom_call.1} parent=1 // pred_check_branch
      %55 = sbr.rel (0) target = $region17
    $region16: #{tpu_custom_call.1} parent=1 // pred_region
      %s57 = ssub.s32 65536, 65536
      %58 = vsyncadd [#allocation9], %s57
      %s59 = sshll.u32 [#allocation8], 4
      %s60 = int_to_ptr.vmem [resolvable:$true] %s59
      %65 = dma.hbm_to_vmem [thread:$0]  %s3, 65536, %s60, [#allocation9], 256, 256, 16
    $region17: #{tpu_custom_call.1} parent=1 // pred_fallthru
      _
    // Predicated region
    $region18: #{tpu_custom_call.1} parent=1 // pred_check
      _
    $region19: #{tpu_custom_call.1} parent=1 // pred_check_branch
      %67 = sbr.rel (0) target = $region21
    $region20: #{tpu_custom_call.1} parent=1 // pred_region
      %s69 = ssub.s32 64, 64
      %70 = vsyncadd [#allocation9], %s69
      %s72 = sshll.u32 [#allocation10], 4
      %s73 = int_to_ptr.vmem [resolvable:$true] %s72
      %75 = dma.hbm_to_vmem [thread:$0]  %s4, 64, %s73, [#allocation9]
    $region21: #{tpu_custom_call.1} parent=1 // pred_fallthru
      _
    // Predicated region
    $region22: #{tpu_custom_call.1} parent=1 // pred_check
      _
    $region23: #{tpu_custom_call.1} parent=1 // pred_check_branch
      %77 = sbr.rel (0) target = $region25
    $region24: #{tpu_custom_call.1} parent=1 // pred_region
      %s79 = ssub.s32 16384, 16384
      %80 = vsyncadd [#allocation12], %s79
      %s81 = sshll.u32 [#allocation11], 4
      %s82 = int_to_ptr.vmem [resolvable:$true] %s81
      %87 = dma.hbm_to_vmem [thread:$0]  %s5, 16384, %s82, [#allocation12], 256, 256, 16
    $region25: #{tpu_custom_call.1} parent=1 // pred_fallthru
      _
    // Predicated region
    $region26: #{tpu_custom_call.1} parent=1 // pred_check
      _
    $region27: #{tpu_custom_call.1} parent=1 // pred_check_branch
      %89 = sbr.rel (0) target = $region29
    $region28: #{tpu_custom_call.1} parent=1 // pred_region
      %s91 = ssub.s32 64, 64
      %92 = vsyncadd [#allocation12], %s91
      %s94 = sshll.u32 [#allocation13], 4
      %s95 = int_to_ptr.vmem [resolvable:$true] %s94
      %97 = dma.hbm_to_vmem [thread:$0]  %s6, 64, %s95, [#allocation12]
    $region29: #{tpu_custom_call.1} parent=1 // pred_fallthru
      _
    // Predicated region
    $region30: #{tpu_custom_call.1} parent=1 // pred_check
      _
    $region31: #{tpu_custom_call.1} parent=1 // pred_check_branch
      %99 = sbr.rel (0) target = $region33
    $region32: #{tpu_custom_call.1} parent=1 // pred_region
      %s101 = ssub.s32 4096, 4096
      %102 = vsyncadd [#allocation15], %s101
      %s103 = sshll.u32 [#allocation14], 4
      %s104 = int_to_ptr.vmem [resolvable:$true] %s103
      %109 = dma.hbm_to_vmem [thread:$0]  %s7, 4096, %s104, [#allocation15], 64, 64, 4
    $region33: #{tpu_custom_call.1} parent=1 // pred_fallthru
      _
    // Predicated region
    $region34: #{tpu_custom_call.1} parent=1 // pred_check
      _
    $region35: #{tpu_custom_call.1} parent=1 // pred_check_branch
      %111 = sbr.rel (0) target = $region37
    $region36: #{tpu_custom_call.1} parent=1 // pred_region
      %s113 = ssub.s32 16, 16
      %114 = vsyncadd [#allocation15], %s113
      %s116 = sshll.u32 [#allocation16], 4
      %s117 = int_to_ptr.vmem [resolvable:$true] %s116
      %119 = dma.hbm_to_vmem [thread:$0]  %s8, 16, %s117, [#allocation15]
    $region37: #{tpu_custom_call.1} parent=1 // pred_fallthru
      _
    // Predicated region
    $region38: #{tpu_custom_call.1} parent=1 // pred_check
      _
    $region39: #{tpu_custom_call.1} parent=1 // pred_check_branch
      %121 = sbr.rel (0) target = $region41
    $region40: #{tpu_custom_call.1} parent=1 // pred_region
      %122 = dma.done [#allocation3], 256
    $region41: #{tpu_custom_call.1} parent=1 // pred_fallthru
      _
    // Predicated region
    $region42: #{tpu_custom_call.1} parent=1 // pred_check
      _
    $region43: #{tpu_custom_call.1} parent=1 // pred_check_branch
      %124 = sbr.rel (0) target = $region45
    $region44: #{tpu_custom_call.1} parent=1 // pred_region
      %125 = dma.done [#allocation6], 4096
    $region45: #{tpu_custom_call.1} parent=1 // pred_fallthru
      _
    // Predicated region
    $region46: #{tpu_custom_call.1} parent=1 // pred_check
      _
    $region47: #{tpu_custom_call.1} parent=1 // pred_check_branch
      %127 = sbr.rel (0) target = $region49
    $region48: #{tpu_custom_call.1} parent=1 // pred_region
      %128 = dma.done [#allocation6], 256
    $region49: #{tpu_custom_call.1} parent=1 // pred_fallthru
      _
    // Predicated region
    $region50: #{tpu_custom_call.1} parent=1 // pred_check
      _
    $region51: #{tpu_custom_call.1} parent=1 // pred_check_branch
      %130 = sbr.rel (0) target = $region53
    $region52: #{tpu_custom_call.1} parent=1 // pred_region
      %131 = dma.done [#allocation9], 65536
    $region53: #{tpu_custom_call.1} parent=1 // pred_fallthru
      _
    // Predicated region
    $region54: #{tpu_custom_call.1} parent=1 // pred_check
      _
    $region55: #{tpu_custom_call.1} parent=1 // pred_check_branch
      %133 = sbr.rel (0) target = $region57
    $region56: #{tpu_custom_call.1} parent=1 // pred_region
      %134 = dma.done [#allocation9], 64
    $region57: #{tpu_custom_call.1} parent=1 // pred_fallthru
      _
    // Predicated region
    $region58: #{tpu_custom_call.1} parent=1 // pred_check
      _
    $region59: #{tpu_custom_call.1} parent=1 // pred_check_branch
      %136 = sbr.rel (0) target = $region61
    $region60: #{tpu_custom_call.1} parent=1 // pred_region
      %137 = dma.done [#allocation12], 16384
    $region61: #{tpu_custom_call.1} parent=1 // pred_fallthru
      _
    // Predicated region
    $region62: #{tpu_custom_call.1} parent=1 // pred_check
      _
    $region63: #{tpu_custom_call.1} parent=1 // pred_check_branch
      %139 = sbr.rel (0) target = $region65
    $region64: #{tpu_custom_call.1} parent=1 // pred_region
      %140 = dma.done [#allocation12], 64
    $region65: #{tpu_custom_call.1} parent=1 // pred_fallthru
      _
    // Predicated region
    $region66: #{tpu_custom_call.1} parent=1 // pred_check
      _
    $region67: #{tpu_custom_call.1} parent=1 // pred_check_branch
      %142 = sbr.rel (0) target = $region69
    $region68: #{tpu_custom_call.1} parent=1 // pred_region
      %143 = dma.done [#allocation15], 4096
    $region69: #{tpu_custom_call.1} parent=1 // pred_fallthru
      _
    // Predicated region
    $region70: #{tpu_custom_call.1} parent=1 // pred_check
      _
    $region71: #{tpu_custom_call.1} parent=1 // pred_check_branch
      %145 = sbr.rel (0) target = $region73
    $region72: #{tpu_custom_call.1} parent=1 // pred_region
      %146 = dma.done [#allocation15], 16
    $region73: #{tpu_custom_call.1} parent=1 // pred_fallthru
      _
    %v148 = vld [vmem:[#allocation2] sm:$0xff]
    %v149 = vld [vmem:[#allocation2 + $0x8] sm:$0xff]
    %v150 = vpack.c.bf16 %v149, %v148
    %v151 = vld [vmem:[#allocation5] sm:$0xff]
    %v152 = vld [vmem:[#allocation5 + $0x8] sm:$0xff]
    %v153 = vld [vmem:[#allocation5 + $0x10] sm:$0xff]
    %v154 = vld [vmem:[#allocation5 + $0x18] sm:$0xff]
    %v155 = vld [vmem:[#allocation5 + $0x20] sm:$0xff]
    %v156 = vld [vmem:[#allocation5 + $0x28] sm:$0xff]
    %v157 = vld [vmem:[#allocation5 + $0x30] sm:$0xff]
    %v158 = vld [vmem:[#allocation5 + $0x38] sm:$0xff]
    %v159 = vld [vmem:[#allocation5 + $0x40] sm:$0xff]
    %v160 = vld [vmem:[#allocation5 + $0x48] sm:$0xff]
    %v161 = vld [vmem:[#allocation5 + $0x50] sm:$0xff]
    %v162 = vld [vmem:[#allocation5 + $0x58] sm:$0xff]
    %v163 = vld [vmem:[#allocation5 + $0x60] sm:$0xff]
    %v164 = vld [vmem:[#allocation5 + $0x68] sm:$0xff]
    %v165 = vld [vmem:[#allocation5 + $0x70] sm:$0xff]
    %v166 = vld [vmem:[#allocation5 + $0x78] sm:$0xff]
    %v167 = vld [vmem:[#allocation5 + $0x80] sm:$0xff]
    %v168 = vld [vmem:[#allocation5 + $0x88] sm:$0xff]
    %v169 = vld [vmem:[#allocation5 + $0x90] sm:$0xff]
    %v170 = vld [vmem:[#allocation5 + $0x98] sm:$0xff]
    %v171 = vld [vmem:[#allocation5 + $0xa0] sm:$0xff]
    %v172 = vld [vmem:[#allocation5 + $0xa8] sm:$0xff]
    %v173 = vld [vmem:[#allocation5 + $0xb0] sm:$0xff]
    %v174 = vld [vmem:[#allocation5 + $0xb8] sm:$0xff]
    %v175 = vld [vmem:[#allocation5 + $0xc0] sm:$0xff]
    %v176 = vld [vmem:[#allocation5 + $0xc8] sm:$0xff]
    %v177 = vld [vmem:[#allocation5 + $0xd0] sm:$0xff]
    %v178 = vld [vmem:[#allocation5 + $0xd8] sm:$0xff]
    %v179 = vld [vmem:[#allocation5 + $0xe0] sm:$0xff]
    %v180 = vld [vmem:[#allocation5 + $0xe8] sm:$0xff]
    %v181 = vld [vmem:[#allocation5 + $0xf0] sm:$0xff]
    %v182 = vld [vmem:[#allocation5 + $0xf8] sm:$0xff]
    %v183 = vld [vmem:[#allocation7] sm:$0xff]
    %v184 = vld [vmem:[#allocation7 + $0x8] sm:$0xff]
    %v187 = vlaneseq
    %v188 = vshrl.u32 %v187, 7
    %v189 = vsub.s32 0, %v188
    %v190 = vrot.slane %v183, %v189
    %v191 = vlaneseq
    %v192 = vshrl.u32 %v191, 7
    %v193 = vsub.s32 1, %v192
    %v194 = vrot.slane %v183, %v193
    %v195 = vlaneseq
    %v196 = vshrl.u32 %v195, 7
    %v197 = vsub.s32 2, %v196
    %v198 = vrot.slane %v183, %v197
    %v199 = vlaneseq
    %v200 = vshrl.u32 %v199, 7
    %v201 = vsub.s32 3, %v200
    %v202 = vrot.slane %v183, %v201
    %v203 = vlaneseq
    %v204 = vshrl.u32 %v203, 7
    %v205 = vsub.s32 4, %v204
    %v206 = vrot.slane %v183, %v205
    %v207 = vlaneseq
    %v208 = vshrl.u32 %v207, 7
    %v209 = vsub.s32 5, %v208
    %v210 = vrot.slane %v183, %v209
    %v211 = vlaneseq
    %v212 = vshrl.u32 %v211, 7
    %v213 = vsub.s32 6, %v212
    %v214 = vrot.slane %v183, %v213
    %v215 = vlaneseq
    %v216 = vshrl.u32 %v215, 7
    %v217 = vsub.s32 7, %v216
    %v218 = vrot.slane %v183, %v217
    %v219 = vlaneseq
    %v220 = vshrl.u32 %v219, 7
    %v221 = vsub.s32 0, %v220
    %v222 = vrot.slane %v184, %v221
    %v223 = vlaneseq
    %v224 = vshrl.u32 %v223, 7
    %v225 = vsub.s32 1, %v224
    %v226 = vrot.slane %v184, %v225
    %v227 = vlaneseq
    %v228 = vshrl.u32 %v227, 7
    %v229 = vsub.s32 2, %v228
    %v230 = vrot.slane %v184, %v229
    %v231 = vlaneseq
    %v232 = vshrl.u32 %v231, 7
    %v233 = vsub.s32 3, %v232
    %v234 = vrot.slane %v184, %v233
    %v235 = vlaneseq
    %v236 = vshrl.u32 %v235, 7
    %v237 = vsub.s32 4, %v236
    %v238 = vrot.slane %v184, %v237
    %v239 = vlaneseq
    %v240 = vshrl.u32 %v239, 7
    %v241 = vsub.s32 5, %v240
    %v242 = vrot.slane %v184, %v241
    %v243 = vlaneseq
    %v244 = vshrl.u32 %v243, 7
    %v245 = vsub.s32 6, %v244
    %v246 = vrot.slane %v184, %v245
    %v247 = vlaneseq
    %v248 = vshrl.u32 %v247, 7
    %v249 = vsub.s32 7, %v248
    %v250 = vrot.slane %v184, %v249
    %v299 = vunpack.c.l.b16 %v151
    %v300 = vunpack.c.h.b16 %v151
    %v301 = vunpack.c.l.b16 %v152
    %v302 = vunpack.c.h.b16 %v152
    %v303 = vunpack.c.l.b16 %v153
    %v304 = vunpack.c.h.b16 %v153
    %v305 = vunpack.c.l.b16 %v154
    %v306 = vunpack.c.h.b16 %v154
    %v307 = vunpack.c.l.b16 %v155
    %v308 = vunpack.c.h.b16 %v155
    %v309 = vunpack.c.l.b16 %v156
    %v310 = vunpack.c.h.b16 %v156
    %v311 = vunpack.c.l.b16 %v157
    %v312 = vunpack.c.h.b16 %v157
    %v313 = vunpack.c.l.b16 %v158
    %v314 = vunpack.c.h.b16 %v158
    %v315 = vunpack.c.l.b16 %v159
    %v316 = vunpack.c.h.b16 %v159
    %v317 = vunpack.c.l.b16 %v160
    %v318 = vunpack.c.h.b16 %v160
    %v319 = vunpack.c.l.b16 %v161
    %v320 = vunpack.c.h.b16 %v161
    %v321 = vunpack.c.l.b16 %v162
    %v322 = vunpack.c.h.b16 %v162
    %v323 = vunpack.c.l.b16 %v163
    %v324 = vunpack.c.h.b16 %v163
    %v325 = vunpack.c.l.b16 %v164
    %v326 = vunpack.c.h.b16 %v164
    %v327 = vunpack.c.l.b16 %v165
    %v328 = vunpack.c.h.b16 %v165
    %v329 = vunpack.c.l.b16 %v166
    %v330 = vunpack.c.h.b16 %v166
    %v331 = vunpack.c.l.b16 %v167
    %v332 = vunpack.c.h.b16 %v167
    %v333 = vunpack.c.l.b16 %v168
    %v334 = vunpack.c.h.b16 %v168
    %v335 = vunpack.c.l.b16 %v169
    %v336 = vunpack.c.h.b16 %v169
    %v337 = vunpack.c.l.b16 %v170
    %v338 = vunpack.c.h.b16 %v170
    %v339 = vunpack.c.l.b16 %v171
    %v340 = vunpack.c.h.b16 %v171
    %v341 = vunpack.c.l.b16 %v172
    %v342 = vunpack.c.h.b16 %v172
    %v343 = vunpack.c.l.b16 %v173
    %v344 = vunpack.c.h.b16 %v173
    %v345 = vunpack.c.l.b16 %v174
    %v346 = vunpack.c.h.b16 %v174
    %v347 = vunpack.c.l.b16 %v175
    %v348 = vunpack.c.h.b16 %v175
    %v349 = vunpack.c.l.b16 %v176
    %v350 = vunpack.c.h.b16 %v176
    %v351 = vunpack.c.l.b16 %v177
    %v352 = vunpack.c.h.b16 %v177
    %v353 = vunpack.c.l.b16 %v178
    %v354 = vunpack.c.h.b16 %v178
    %v355 = vunpack.c.l.b16 %v179
    %v356 = vunpack.c.h.b16 %v179
    %v357 = vunpack.c.l.b16 %v180
    %v358 = vunpack.c.h.b16 %v180
    %v359 = vunpack.c.l.b16 %v181
    %v360 = vunpack.c.h.b16 %v181
    %v361 = vunpack.c.l.b16 %v182
    %v362 = vunpack.c.h.b16 %v182
    %v363 = vpack.c.b16 %v315, %v299
    %v364 = vpack.c.b16 %v316, %v300
    %v365 = vpack.c.b16 %v317, %v301
    %v366 = vpack.c.b16 %v318, %v302
    %v367 = vpack.c.b16 %v319, %v303
    %v368 = vpack.c.b16 %v320, %v304
    %v369 = vpack.c.b16 %v321, %v305
    %v370 = vpack.c.b16 %v322, %v306
    %v371 = vpack.c.b16 %v323, %v307
    %v372 = vpack.c.b16 %v324, %v308
    %v373 = vpack.c.b16 %v325, %v309
    %v374 = vpack.c.b16 %v326, %v310
    %v375 = vpack.c.b16 %v327, %v311
    %v376 = vpack.c.b16 %v328, %v312
    %v377 = vpack.c.b16 %v329, %v313
    %v378 = vpack.c.b16 %v330, %v314
    %v379 = vpack.c.b16 %v347, %v331
    %v380 = vpack.c.b16 %v348, %v332
    %v381 = vpack.c.b16 %v349, %v333
    %v382 = vpack.c.b16 %v350, %v334
    %v383 = vpack.c.b16 %v351, %v335
    %v384 = vpack.c.b16 %v352, %v336
    %v385 = vpack.c.b16 %v353, %v337
    %v386 = vpack.c.b16 %v354, %v338
    %v387 = vpack.c.b16 %v355, %v339
    %v388 = vpack.c.b16 %v356, %v340
    %v389 = vpack.c.b16 %v357, %v341
    %v390 = vpack.c.b16 %v358, %v342
    %v391 = vpack.c.b16 %v359, %v343
    %v392 = vpack.c.b16 %v360, %v344
    %v393 = vpack.c.b16 %v361, %v345
    %v394 = vpack.c.b16 %v362, %v346
    %vm427 = vcmask 261120
    %v429 = vsel %vm427, %v150, 0
    %431 = vmatprep.subr.bf16.mxu0 %v364
    %432 = vmatpush1.bf16.msra.mxu0 %v363
    %433 = vmatprep.subr.bf16.mxu0 %v380
    %434 = vmatpush1.bf16.msra.mxu0 %v379
    %435 = vmatprep.subr.bf16.mxu0 0
    %436 = vmatpush1.bf16.msra.mxu0 0
    %437 = vmatprep.subr.bf16.mxu0 0
    %438 = vmatpush1.bf16.msra.mxu0 0
    %439 = vmatprep.subr.bf16.mxu0 0
    %440 = vmatpush1.bf16.msra.mxu0 0
    %441 = vmatprep.subr.bf16.mxu0 0
    %442 = vmatpush1.bf16.msra.mxu0 0
    %443 = vmatprep.subr.bf16.mxu0 0
    %444 = vmatpush1.bf16.msra.mxu0 0
    %445 = vmatprep.subr.bf16.mxu0 0
    %446 = vmatpush1.bf16.msra.mxu0 0
    %447 = vmatprep.subr.bf16.mxu0 0
    %448 = vmatpush1.bf16.msra.mxu0 0
    %449 = vmatprep.subr.bf16.mxu0 0
    %450 = vmatpush1.bf16.msra.mxu0 0
    %451 = vmatprep.subr.bf16.mxu0 0
    %452 = vmatpush1.bf16.msra.mxu0 0
    %453 = vmatprep.subr.bf16.mxu0 0
    %454 = vmatpush1.bf16.msra.mxu0 0
    %455 = vmatprep.subr.bf16.mxu0 0
    %456 = vmatpush1.bf16.msra.mxu0 0
    %457 = vmatprep.subr.bf16.mxu0 0
    %458 = vmatpush1.bf16.msra.mxu0 0
    %459 = vmatprep.subr.bf16.mxu0 0
    %460 = vmatpush1.bf16.msra.mxu0 0
    %461 = vmatprep.subr.bf16.mxu0 0
    %462 = vmatpush1.bf16.msra.mxu0 0
    %463 = vmatprep.mubr.bf16.mxu0 0
    %464 = vmatmul.mubr.bf16.gmra.mrb[0].mxu0 %v429
    %v465 = vpop.f32.mrb[0].mxu0
    %v466 = vadd.f32 %v190, %v465
    %v467 = vpop.f32.mrb[0].mxu0
    %v468 = vadd.f32 %v194, %v467
    %v469 = vpop.f32.mrb[0].mxu0
    %v470 = vadd.f32 %v190, %v469
    %v471 = vpop.f32.mrb[0].mxu0
    %v472 = vadd.f32 %v194, %v471
    %473 = vdwg.mxu0
    %474 = vmatprep.subr.bf16.mxu0 %v366
    %475 = vmatpush1.bf16.msra.mxu0 %v365
    %476 = vmatprep.subr.bf16.mxu0 %v382
    %477 = vmatpush1.bf16.msra.mxu0 %v381
    %478 = vmatprep.subr.bf16.mxu0 0
    %479 = vmatpush1.bf16.msra.mxu0 0
    %480 = vmatprep.subr.bf16.mxu0 0
    %481 = vmatpush1.bf16.msra.mxu0 0
    %482 = vmatprep.subr.bf16.mxu0 0
    %483 = vmatpush1.bf16.msra.mxu0 0
    %484 = vmatprep.subr.bf16.mxu0 0
    %485 = vmatpush1.bf16.msra.mxu0 0
    %486 = vmatprep.subr.bf16.mxu0 0
    %487 = vmatpush1.bf16.msra.mxu0 0
    %488 = vmatprep.subr.bf16.mxu0 0
    %489 = vmatpush1.bf16.msra.mxu0 0
    %490 = vmatprep.subr.bf16.mxu0 0
    %491 = vmatpush1.bf16.msra.mxu0 0
    %492 = vmatprep.subr.bf16.mxu0 0
    %493 = vmatpush1.bf16.msra.mxu0 0
    %494 = vmatprep.subr.bf16.mxu0 0
    %495 = vmatpush1.bf16.msra.mxu0 0
    %496 = vmatprep.subr.bf16.mxu0 0
    %497 = vmatpush1.bf16.msra.mxu0 0
    %498 = vmatprep.subr.bf16.mxu0 0
    %499 = vmatpush1.bf16.msra.mxu0 0
    %500 = vmatprep.subr.bf16.mxu0 0
    %501 = vmatpush1.bf16.msra.mxu0 0
    %502 = vmatprep.subr.bf16.mxu0 0
    %503 = vmatpush1.bf16.msra.mxu0 0
    %504 = vmatprep.subr.bf16.mxu0 0
    %505 = vmatpush1.bf16.msra.mxu0 0
    %506 = vmatprep.mubr.bf16.mxu0 0
    %507 = vmatmul.mubr.bf16.gmra.mrb[0].mxu0 %v429
    %v508 = vpop.f32.mrb[0].mxu0
    %v509 = vadd.f32 %v198, %v508
    %v510 = vpop.f32.mrb[0].mxu0
    %v511 = vadd.f32 %v202, %v510
    %v512 = vpop.f32.mrb[0].mxu0
    %v513 = vadd.f32 %v198, %v512
    %v514 = vpop.f32.mrb[0].mxu0
    %v515 = vadd.f32 %v202, %v514
    %516 = vdwg.mxu0
    %517 = vmatprep.subr.bf16.mxu0 %v368
    %518 = vmatpush1.bf16.msra.mxu0 %v367
    %519 = vmatprep.subr.bf16.mxu0 %v384
    %520 = vmatpush1.bf16.msra.mxu0 %v383
    %521 = vmatprep.subr.bf16.mxu0 0
    %522 = vmatpush1.bf16.msra.mxu0 0
    %523 = vmatprep.subr.bf16.mxu0 0
    %524 = vmatpush1.bf16.msra.mxu0 0
    %525 = vmatprep.subr.bf16.mxu0 0
    %526 = vmatpush1.bf16.msra.mxu0 0
    %527 = vmatprep.subr.bf16.mxu0 0
    %528 = vmatpush1.bf16.msra.mxu0 0
    %529 = vmatprep.subr.bf16.mxu0 0
    %530 = vmatpush1.bf16.msra.mxu0 0
    %531 = vmatprep.subr.bf16.mxu0 0
    %532 = vmatpush1.bf16.msra.mxu0 0
    %533 = vmatprep.subr.bf16.mxu0 0
    %534 = vmatpush1.bf16.msra.mxu0 0
    %535 = vmatprep.subr.bf16.mxu0 0
    %536 = vmatpush1.bf16.msra.mxu0 0
    %537 = vmatprep.subr.bf16.mxu0 0
    %538 = vmatpush1.bf16.msra.mxu0 0
    %539 = vmatprep.subr.bf16.mxu0 0
    %540 = vmatpush1.bf16.msra.mxu0 0
    %541 = vmatprep.subr.bf16.mxu0 0
    %542 = vmatpush1.bf16.msra.mxu0 0
    %543 = vmatprep.subr.bf16.mxu0 0
    %544 = vmatpush1.bf16.msra.mxu0 0
    %545 = vmatprep.subr.bf16.mxu0 0
    %546 = vmatpush1.bf16.msra.mxu0 0
    %547 = vmatprep.subr.bf16.mxu0 0
    %548 = vmatpush1.bf16.msra.mxu0 0
    %549 = vmatprep.mubr.bf16.mxu0 0
    %550 = vmatmul.mubr.bf16.gmra.mrb[0].mxu0 %v429
    %v551 = vpop.f32.mrb[0].mxu0
    %v552 = vadd.f32 %v206, %v551
    %v553 = vpop.f32.mrb[0].mxu0
    %v554 = vadd.f32 %v210, %v553
    %v555 = vpop.f32.mrb[0].mxu0
    %v556 = vadd.f32 %v206, %v555
    %v557 = vpop.f32.mrb[0].mxu0
    %v558 = vadd.f32 %v210, %v557
    %559 = vdwg.mxu0
    %560 = vmatprep.subr.bf16.mxu0 %v370
    %561 = vmatpush1.bf16.msra.mxu0 %v369
    %562 = vmatprep.subr.bf16.mxu0 %v386
    %563 = vmatpush1.bf16.msra.mxu0 %v385
    %564 = vmatprep.subr.bf16.mxu0 0
    %565 = vmatpush1.bf16.msra.mxu0 0
    %566 = vmatprep.subr.bf16.mxu0 0
    %567 = vmatpush1.bf16.msra.mxu0 0
    %568 = vmatprep.subr.bf16.mxu0 0
    %569 = vmatpush1.bf16.msra.mxu0 0
    %570 = vmatprep.subr.bf16.mxu0 0
    %571 = vmatpush1.bf16.msra.mxu0 0
    %572 = vmatprep.subr.bf16.mxu0 0
    %573 = vmatpush1.bf16.msra.mxu0 0
    %574 = vmatprep.subr.bf16.mxu0 0
    %575 = vmatpush1.bf16.msra.mxu0 0
    %576 = vmatprep.subr.bf16.mxu0 0
    %577 = vmatpush1.bf16.msra.mxu0 0
    %578 = vmatprep.subr.bf16.mxu0 0
    %579 = vmatpush1.bf16.msra.mxu0 0
    %580 = vmatprep.subr.bf16.mxu0 0
    %581 = vmatpush1.bf16.msra.mxu0 0
    %582 = vmatprep.subr.bf16.mxu0 0
    %583 = vmatpush1.bf16.msra.mxu0 0
    %584 = vmatprep.subr.bf16.mxu0 0
    %585 = vmatpush1.bf16.msra.mxu0 0
    %586 = vmatprep.subr.bf16.mxu0 0
    %587 = vmatpush1.bf16.msra.mxu0 0
    %588 = vmatprep.subr.bf16.mxu0 0
    %589 = vmatpush1.bf16.msra.mxu0 0
    %590 = vmatprep.subr.bf16.mxu0 0
    %591 = vmatpush1.bf16.msra.mxu0 0
    %592 = vmatprep.mubr.bf16.mxu0 0
    %593 = vmatmul.mubr.bf16.gmra.mrb[0].mxu0 %v429
    %v594 = vpop.f32.mrb[0].mxu0
    %v595 = vadd.f32 %v214, %v594
    %v596 = vpop.f32.mrb[0].mxu0
    %v597 = vadd.f32 %v218, %v596
    %v598 = vpop.f32.mrb[0].mxu0
    %v599 = vadd.f32 %v214, %v598
    %v600 = vpop.f32.mrb[0].mxu0
    %v601 = vadd.f32 %v218, %v600
    %602 = vdwg.mxu0
    %603 = vmatprep.subr.bf16.mxu0 %v372
    %604 = vmatpush1.bf16.msra.mxu0 %v371
    %605 = vmatprep.subr.bf16.mxu0 %v388
    %606 = vmatpush1.bf16.msra.mxu0 %v387
    %607 = vmatprep.subr.bf16.mxu0 0
    %608 = vmatpush1.bf16.msra.mxu0 0
    %609 = vmatprep.subr.bf16.mxu0 0
    %610 = vmatpush1.bf16.msra.mxu0 0
    %611 = vmatprep.subr.bf16.mxu0 0
    %612 = vmatpush1.bf16.msra.mxu0 0
    %613 = vmatprep.subr.bf16.mxu0 0
    %614 = vmatpush1.bf16.msra.mxu0 0
    %615 = vmatprep.subr.bf16.mxu0 0
    %616 = vmatpush1.bf16.msra.mxu0 0
    %617 = vmatprep.subr.bf16.mxu0 0
    %618 = vmatpush1.bf16.msra.mxu0 0
    %619 = vmatprep.subr.bf16.mxu0 0
    %620 = vmatpush1.bf16.msra.mxu0 0
    %621 = vmatprep.subr.bf16.mxu0 0
    %622 = vmatpush1.bf16.msra.mxu0 0
    %623 = vmatprep.subr.bf16.mxu0 0
    %624 = vmatpush1.bf16.msra.mxu0 0
    %625 = vmatprep.subr.bf16.mxu0 0
    %626 = vmatpush1.bf16.msra.mxu0 0
    %627 = vmatprep.subr.bf16.mxu0 0
    %628 = vmatpush1.bf16.msra.mxu0 0
    %629 = vmatprep.subr.bf16.mxu0 0
    %630 = vmatpush1.bf16.msra.mxu0 0
    %631 = vmatprep.subr.bf16.mxu0 0
    %632 = vmatpush1.bf16.msra.mxu0 0
    %633 = vmatprep.subr.bf16.mxu0 0
    %634 = vmatpush1.bf16.msra.mxu0 0
    %635 = vmatprep.mubr.bf16.mxu0 0
    %636 = vmatmul.mubr.bf16.gmra.mrb[0].mxu0 %v429
    %v637 = vpop.f32.mrb[0].mxu0
    %v638 = vadd.f32 %v222, %v637
    %v639 = vpop.f32.mrb[0].mxu0
    %v640 = vadd.f32 %v226, %v639
    %v641 = vpop.f32.mrb[0].mxu0
    %v642 = vadd.f32 %v222, %v641
    %v643 = vpop.f32.mrb[0].mxu0
    %v644 = vadd.f32 %v226, %v643
    %645 = vdwg.mxu0
    %646 = vmatprep.subr.bf16.mxu0 %v374
    %647 = vmatpush1.bf16.msra.mxu0 %v373
    %648 = vmatprep.subr.bf16.mxu0 %v390
    %649 = vmatpush1.bf16.msra.mxu0 %v389
    %650 = vmatprep.subr.bf16.mxu0 0
    %651 = vmatpush1.bf16.msra.mxu0 0
    %652 = vmatprep.subr.bf16.mxu0 0
    %653 = vmatpush1.bf16.msra.mxu0 0
    %654 = vmatprep.subr.bf16.mxu0 0
    %655 = vmatpush1.bf16.msra.mxu0 0
    %656 = vmatprep.subr.bf16.mxu0 0
    %657 = vmatpush1.bf16.msra.mxu0 0
    %658 = vmatprep.subr.bf16.mxu0 0
    %659 = vmatpush1.bf16.msra.mxu0 0
    %660 = vmatprep.subr.bf16.mxu0 0
    %661 = vmatpush1.bf16.msra.mxu0 0
    %662 = vmatprep.subr.bf16.mxu0 0
    %663 = vmatpush1.bf16.msra.mxu0 0
    %664 = vmatprep.subr.bf16.mxu0 0
    %665 = vmatpush1.bf16.msra.mxu0 0
    %666 = vmatprep.subr.bf16.mxu0 0
    %667 = vmatpush1.bf16.msra.mxu0 0
    %668 = vmatprep.subr.bf16.mxu0 0
    %669 = vmatpush1.bf16.msra.mxu0 0
    %670 = vmatprep.subr.bf16.mxu0 0
    %671 = vmatpush1.bf16.msra.mxu0 0
    %672 = vmatprep.subr.bf16.mxu0 0
    %673 = vmatpush1.bf16.msra.mxu0 0
    %674 = vmatprep.subr.bf16.mxu0 0
    %675 = vmatpush1.bf16.msra.mxu0 0
    %676 = vmatprep.subr.bf16.mxu0 0
    %677 = vmatpush1.bf16.msra.mxu0 0
    %678 = vmatprep.mubr.bf16.mxu0 0
    %679 = vmatmul.mubr.bf16.gmra.mrb[0].mxu0 %v429
    %v680 = vpop.f32.mrb[0].mxu0
    %v681 = vadd.f32 %v230, %v680
    %v682 = vpop.f32.mrb[0].mxu0
    %v683 = vadd.f32 %v234, %v682
    %v684 = vpop.f32.mrb[0].mxu0
    %v685 = vadd.f32 %v230, %v684
    %v686 = vpop.f32.mrb[0].mxu0
    %v687 = vadd.f32 %v234, %v686
    %688 = vdwg.mxu0
    %689 = vmatprep.subr.bf16.mxu0 %v376
    %690 = vmatpush1.bf16.msra.mxu0 %v375
    %691 = vmatprep.subr.bf16.mxu0 %v392
    %692 = vmatpush1.bf16.msra.mxu0 %v391
    %693 = vmatprep.subr.bf16.mxu0 0
    %694 = vmatpush1.bf16.msra.mxu0 0
    %695 = vmatprep.subr.bf16.mxu0 0
    %696 = vmatpush1.bf16.msra.mxu0 0
    %697 = vmatprep.subr.bf16.mxu0 0
    %698 = vmatpush1.bf16.msra.mxu0 0
    %699 = vmatprep.subr.bf16.mxu0 0
    %700 = vmatpush1.bf16.msra.mxu0 0
    %701 = vmatprep.subr.bf16.mxu0 0
    %702 = vmatpush1.bf16.msra.mxu0 0
    %703 = vmatprep.subr.bf16.mxu0 0
    %704 = vmatpush1.bf16.msra.mxu0 0
    %705 = vmatprep.subr.bf16.mxu0 0
    %706 = vmatpush1.bf16.msra.mxu0 0
    %707 = vmatprep.subr.bf16.mxu0 0
    %708 = vmatpush1.bf16.msra.mxu0 0
    %709 = vmatprep.subr.bf16.mxu0 0
    %710 = vmatpush1.bf16.msra.mxu0 0
    %711 = vmatprep.subr.bf16.mxu0 0
    %712 = vmatpush1.bf16.msra.mxu0 0
    %713 = vmatprep.subr.bf16.mxu0 0
    %714 = vmatpush1.bf16.msra.mxu0 0
    %715 = vmatprep.subr.bf16.mxu0 0
    %716 = vmatpush1.bf16.msra.mxu0 0
    %717 = vmatprep.subr.bf16.mxu0 0
    %718 = vmatpush1.bf16.msra.mxu0 0
    %719 = vmatprep.subr.bf16.mxu0 0
    %720 = vmatpush1.bf16.msra.mxu0 0
    %721 = vmatprep.mubr.bf16.mxu0 0
    %722 = vmatmul.mubr.bf16.gmra.mrb[0].mxu0 %v429
    %v723 = vpop.f32.mrb[0].mxu0
    %v724 = vadd.f32 %v238, %v723
    %v725 = vpop.f32.mrb[0].mxu0
    %v726 = vadd.f32 %v242, %v725
    %v727 = vpop.f32.mrb[0].mxu0
    %v728 = vadd.f32 %v238, %v727
    %v729 = vpop.f32.mrb[0].mxu0
    %v730 = vadd.f32 %v242, %v729
    %731 = vdwg.mxu0
    %732 = vmatprep.subr.bf16.mxu0 %v378
    %733 = vmatpush1.bf16.msra.mxu0 %v377
    %734 = vmatprep.subr.bf16.mxu0 %v394
    %735 = vmatpush1.bf16.msra.mxu0 %v393
    %736 = vmatprep.subr.bf16.mxu0 0
    %737 = vmatpush1.bf16.msra.mxu0 0
    %738 = vmatprep.subr.bf16.mxu0 0
    %739 = vmatpush1.bf16.msra.mxu0 0
    %740 = vmatprep.subr.bf16.mxu0 0
    %741 = vmatpush1.bf16.msra.mxu0 0
    %742 = vmatprep.subr.bf16.mxu0 0
    %743 = vmatpush1.bf16.msra.mxu0 0
    %744 = vmatprep.subr.bf16.mxu0 0
    %745 = vmatpush1.bf16.msra.mxu0 0
    %746 = vmatprep.subr.bf16.mxu0 0
    %747 = vmatpush1.bf16.msra.mxu0 0
    %748 = vmatprep.subr.bf16.mxu0 0
    %749 = vmatpush1.bf16.msra.mxu0 0
    %750 = vmatprep.subr.bf16.mxu0 0
    %751 = vmatpush1.bf16.msra.mxu0 0
    %752 = vmatprep.subr.bf16.mxu0 0
    %753 = vmatpush1.bf16.msra.mxu0 0
    %754 = vmatprep.subr.bf16.mxu0 0
    %755 = vmatpush1.bf16.msra.mxu0 0
    %756 = vmatprep.subr.bf16.mxu0 0
    %757 = vmatpush1.bf16.msra.mxu0 0
    %758 = vmatprep.subr.bf16.mxu0 0
    %759 = vmatpush1.bf16.msra.mxu0 0
    %760 = vmatprep.subr.bf16.mxu0 0
    %761 = vmatpush1.bf16.msra.mxu0 0
    %762 = vmatprep.subr.bf16.mxu0 0
    %763 = vmatpush1.bf16.msra.mxu0 0
    %764 = vmatprep.mubr.bf16.mxu0 0
    %765 = vmatmul.mubr.bf16.gmra.mrb[0].mxu0 %v429
    %v766 = vpop.f32.mrb[0].mxu0
    %v767 = vadd.f32 %v246, %v766
    %v768 = vpop.f32.mrb[0].mxu0
    %v769 = vadd.f32 %v250, %v768
    %v770 = vpop.f32.mrb[0].mxu0
    %v771 = vadd.f32 %v246, %v770
    %v772 = vpop.f32.mrb[0].mxu0
    %v773 = vadd.f32 %v250, %v772
    %774 = vdwg.mxu0
    %v775 = vmax.f32 %v466, 0.0
    %v776 = vmax.f32 %v468, 0.0
    %v777 = vmax.f32 %v509, 0.0
    %v778 = vmax.f32 %v511, 0.0
    %v779 = vmax.f32 %v552, 0.0
    %v780 = vmax.f32 %v554, 0.0
    %v781 = vmax.f32 %v595, 0.0
    %v782 = vmax.f32 %v597, 0.0
    %v783 = vmax.f32 %v638, 0.0
    %v784 = vmax.f32 %v640, 0.0
    %v785 = vmax.f32 %v681, 0.0
    %v786 = vmax.f32 %v683, 0.0
    %v787 = vmax.f32 %v724, 0.0
    %v788 = vmax.f32 %v726, 0.0
    %v789 = vmax.f32 %v767, 0.0
    %v790 = vmax.f32 %v769, 0.0
    %v791 = vmax.f32 %v470, 0.0
    %v792 = vmax.f32 %v472, 0.0
    %v793 = vmax.f32 %v513, 0.0
    %v794 = vmax.f32 %v515, 0.0
    %v795 = vmax.f32 %v556, 0.0
    %v796 = vmax.f32 %v558, 0.0
    %v797 = vmax.f32 %v599, 0.0
    %v798 = vmax.f32 %v601, 0.0
    %v799 = vmax.f32 %v642, 0.0
    %v800 = vmax.f32 %v644, 0.0
    %v801 = vmax.f32 %v685, 0.0
    %v802 = vmax.f32 %v687, 0.0
    %v803 = vmax.f32 %v728, 0.0
    %v804 = vmax.f32 %v730, 0.0
    %v805 = vmax.f32 %v771, 0.0
    %v806 = vmax.f32 %v773, 0.0
    %v807 = vpack.c.bf16 %v791, %v775
    %v808 = vpack.c.bf16 %v792, %v776
    %v809 = vpack.c.bf16 %v793, %v777
    %v810 = vpack.c.bf16 %v794, %v778
    %v811 = vpack.c.bf16 %v795, %v779
    %v812 = vpack.c.bf16 %v796, %v780
    %v813 = vpack.c.bf16 %v797, %v781
    %v814 = vpack.c.bf16 %v798, %v782
    %v815 = vpack.c.bf16 %v799, %v783
    %v816 = vpack.c.bf16 %v800, %v784
    %v817 = vpack.c.bf16 %v801, %v785
    %v818 = vpack.c.bf16 %v802, %v786
    %v819 = vpack.c.bf16 %v803, %v787
    %v820 = vpack.c.bf16 %v804, %v788
    %v821 = vpack.c.bf16 %v805, %v789
    %v822 = vpack.c.bf16 %v806, %v790
    %v823 = vld [vmem:[#allocation8] sm:$0xff]
    %v824 = vld [vmem:[#allocation8 + $0x8] sm:$0xff]
    %v825 = vld [vmem:[#allocation8 + $0x10] sm:$0xff]
    %v826 = vld [vmem:[#allocation8 + $0x18] sm:$0xff]
    %v827 = vld [vmem:[#allocation8 + $0x20] sm:$0xff]
    %v828 = vld [vmem:[#allocation8 + $0x28] sm:$0xff]
    %v829 = vld [vmem:[#allocation8 + $0x30] sm:$0xff]
    %v830 = vld [vmem:[#allocation8 + $0x38] sm:$0xff]
    %v831 = vld [vmem:[#allocation8 + $0x40] sm:$0xff]
    %v832 = vld [vmem:[#allocation8 + $0x48] sm:$0xff]
    %v833 = vld [vmem:[#allocation8 + $0x50] sm:$0xff]
    %v834 = vld [vmem:[#allocation8 + $0x58] sm:$0xff]
    %v835 = vld [vmem:[#allocation8 + $0x60] sm:$0xff]
    %v836 = vld [vmem:[#allocation8 + $0x68] sm:$0xff]
    %v837 = vld [vmem:[#allocation8 + $0x70] sm:$0xff]
    %v838 = vld [vmem:[#allocation8 + $0x78] sm:$0xff]
    %v839 = vld [vmem:[#allocation8 + $0x80] sm:$0xff]
    %v840 = vld [vmem:[#allocation8 + $0x88] sm:$0xff]
    %v841 = vld [vmem:[#allocation8 + $0x90] sm:$0xff]
    %v842 = vld [vmem:[#allocation8 + $0x98] sm:$0xff]
    %v843 = vld [vmem:[#allocation8 + $0xa0] sm:$0xff]
    %v844 = vld [vmem:[#allocation8 + $0xa8] sm:$0xff]
    %v845 = vld [vmem:[#allocation8 + $0xb0] sm:$0xff]
    %v846 = vld [vmem:[#allocation8 + $0xb8] sm:$0xff]
    %v847 = vld [vmem:[#allocation8 + $0xc0] sm:$0xff]
    %v848 = vld [vmem:[#allocation8 + $0xc8] sm:$0xff]
    %v849 = vld [vmem:[#allocation8 + $0xd0] sm:$0xff]
    %v850 = vld [vmem:[#allocation8 + $0xd8] sm:$0xff]
    %v851 = vld [vmem:[#allocation8 + $0xe0] sm:$0xff]
    %v852 = vld [vmem:[#allocation8 + $0xe8] sm:$0xff]
    %v853 = vld [vmem:[#allocation8 + $0xf0] sm:$0xff]
    %v854 = vld [vmem:[#allocation8 + $0xf8] sm:$0xff]
    %v855 = vld [vmem:[#allocation8 + $0x100] sm:$0xff]
    %v856 = vld [vmem:[#allocation8 + $0x108] sm:$0xff]
    %v857 = vld [vmem:[#allocation8 + $0x110] sm:$0xff]
    %v858 = vld [vmem:[#allocation8 + $0x118] sm:$0xff]
    %v859 = vld [vmem:[#allocation8 + $0x120] sm:$0xff]
    %v860 = vld [vmem:[#allocation8 + $0x128] sm:$0xff]
    %v861 = vld [vmem:[#allocation8 + $0x130] sm:$0xff]
    %v862 = vld [vmem:[#allocation8 + $0x138] sm:$0xff]
    %v863 = vld [vmem:[#allocation8 + $0x140] sm:$0xff]
    %v864 = vld [vmem:[#allocation8 + $0x148] sm:$0xff]
    %v865 = vld [vmem:[#allocation8 + $0x150] sm:$0xff]
    %v866 = vld [vmem:[#allocation8 + $0x158] sm:$0xff]
    %v867 = vld [vmem:[#allocation8 + $0x160] sm:$0xff]
    %v868 = vld [vmem:[#allocation8 + $0x168] sm:$0xff]
    %v869 = vld [vmem:[#allocation8 + $0x170] sm:$0xff]
    %v870 = vld [vmem:[#allocation8 + $0x178] sm:$0xff]
    %v871 = vld [vmem:[#allocation8 + $0x180] sm:$0xff]
    %v872 = vld [vmem:[#allocation8 + $0x188] sm:$0xff]
    %v873 = vld [vmem:[#allocation8 + $0x190] sm:$0xff]
    %v874 = vld [vmem:[#allocation8 + $0x198] sm:$0xff]
    %v875 = vld [vmem:[#allocation8 + $0x1a0] sm:$0xff]
    %v876 = vld [vmem:[#allocation8 + $0x1a8] sm:$0xff]
    %v877 = vld [vmem:[#allocation8 + $0x1b0] sm:$0xff]
    %v878 = vld [vmem:[#allocation8 + $0x1b8] sm:$0xff]
    %v879 = vld [vmem:[#allocation8 + $0x1c0] sm:$0xff]
    %v880 = vld [vmem:[#allocation8 + $0x1c8] sm:$0xff]
    %v881 = vld [vmem:[#allocation8 + $0x1d0] sm:$0xff]
    %v882 = vld [vmem:[#allocation8 + $0x1d8] sm:$0xff]
    %v883 = vld [vmem:[#allocation8 + $0x1e0] sm:$0xff]
    %v884 = vld [vmem:[#allocation8 + $0x1e8] sm:$0xff]
    %v885 = vld [vmem:[#allocation8 + $0x1f0] sm:$0xff]
    %v886 = vld [vmem:[#allocation8 + $0x1f8] sm:$0xff]
    %v887 = vld [vmem:[#allocation8 + $0x200] sm:$0xff]
    %v888 = vld [vmem:[#allocation8 + $0x208] sm:$0xff]
    %v889 = vld [vmem:[#allocation8 + $0x210] sm:$0xff]
    %v890 = vld [vmem:[#allocation8 + $0x218] sm:$0xff]
    %v891 = vld [vmem:[#allocation8 + $0x220] sm:$0xff]
    %v892 = vld [vmem:[#allocation8 + $0x228] sm:$0xff]
    %v893 = vld [vmem:[#allocation8 + $0x230] sm:$0xff]
    %v894 = vld [vmem:[#allocation8 + $0x238] sm:$0xff]
    %v895 = vld [vmem:[#allocation8 + $0x240] sm:$0xff]
    %v896 = vld [vmem:[#allocation8 + $0x248] sm:$0xff]
    %v897 = vld [vmem:[#allocation8 + $0x250] sm:$0xff]
    %v898 = vld [vmem:[#allocation8 + $0x258] sm:$0xff]
    %v899 = vld [vmem:[#allocation8 + $0x260] sm:$0xff]
    %v900 = vld [vmem:[#allocation8 + $0x268] sm:$0xff]
    %v901 = vld [vmem:[#allocation8 + $0x270] sm:$0xff]
    %v902 = vld [vmem:[#allocation8 + $0x278] sm:$0xff]
    %v903 = vld [vmem:[#allocation8 + $0x280] sm:$0xff]
    %v904 = vld [vmem:[#allocation8 + $0x288] sm:$0xff]
    %v905 = vld [vmem:[#allocation8 + $0x290] sm:$0xff]
    %v906 = vld [vmem:[#allocation8 + $0x298] sm:$0xff]
    %v907 = vld [vmem:[#allocation8 + $0x2a0] sm:$0xff]
    %v908 = vld [vmem:[#allocation8 + $0x2a8] sm:$0xff]
    %v909 = vld [vmem:[#allocation8 + $0x2b0] sm:$0xff]
    %v910 = vld [vmem:[#allocation8 + $0x2b8] sm:$0xff]
    %v911 = vld [vmem:[#allocation8 + $0x2c0] sm:$0xff]
    %v912 = vld [vmem:[#allocation8 + $0x2c8] sm:$0xff]
    %v913 = vld [vmem:[#allocation8 + $0x2d0] sm:$0xff]
    %v914 = vld [vmem:[#allocation8 + $0x2d8] sm:$0xff]
    %v915 = vld [vmem:[#allocation8 + $0x2e0] sm:$0xff]
    %v916 = vld [vmem:[#allocation8 + $0x2e8] sm:$0xff]
    %v917 = vld [vmem:[#allocation8 + $0x2f0] sm:$0xff]
    %v918 = vld [vmem:[#allocation8 + $0x2f8] sm:$0xff]
    %v919 = vld [vmem:[#allocation8 + $0x300] sm:$0xff]
    %v920 = vld [vmem:[#allocation8 + $0x308] sm:$0xff]
    %v921 = vld [vmem:[#allocation8 + $0x310] sm:$0xff]
    %v922 = vld [vmem:[#allocation8 + $0x318] sm:$0xff]
    %v923 = vld [vmem:[#allocation8 + $0x320] sm:$0xff]
    %v924 = vld [vmem:[#allocation8 + $0x328] sm:$0xff]
    %v925 = vld [vmem:[#allocation8 + $0x330] sm:$0xff]
    %v926 = vld [vmem:[#allocation8 + $0x338] sm:$0xff]
    %v927 = vld [vmem:[#allocation8 + $0x340] sm:$0xff]
    %v928 = vld [vmem:[#allocation8 + $0x348] sm:$0xff]
    %v929 = vld [vmem:[#allocation8 + $0x350] sm:$0xff]
    %v930 = vld [vmem:[#allocation8 + $0x358] sm:$0xff]
    %v931 = vld [vmem:[#allocation8 + $0x360] sm:$0xff]
    %v932 = vld [vmem:[#allocation8 + $0x368] sm:$0xff]
    %v933 = vld [vmem:[#allocation8 + $0x370] sm:$0xff]
    %v934 = vld [vmem:[#allocation8 + $0x378] sm:$0xff]
    %v935 = vld [vmem:[#allocation8 + $0x380] sm:$0xff]
    %v936 = vld [vmem:[#allocation8 + $0x388] sm:$0xff]
    %v937 = vld [vmem:[#allocation8 + $0x390] sm:$0xff]
    %v938 = vld [vmem:[#allocation8 + $0x398] sm:$0xff]
    %v939 = vld [vmem:[#allocation8 + $0x3a0] sm:$0xff]
    %v940 = vld [vmem:[#allocation8 + $0x3a8] sm:$0xff]
    %v941 = vld [vmem:[#allocation8 + $0x3b0] sm:$0xff]
    %v942 = vld [vmem:[#allocation8 + $0x3b8] sm:$0xff]
    %v943 = vld [vmem:[#allocation8 + $0x3c0] sm:$0xff]
    %v944 = vld [vmem:[#allocation8 + $0x3c8] sm:$0xff]
    %v945 = vld [vmem:[#allocation8 + $0x3d0] sm:$0xff]
    %v946 = vld [vmem:[#allocation8 + $0x3d8] sm:$0xff]
    %v947 = vld [vmem:[#allocation8 + $0x3e0] sm:$0xff]
    %v948 = vld [vmem:[#allocation8 + $0x3e8] sm:$0xff]
    %v949 = vld [vmem:[#allocation8 + $0x3f0] sm:$0xff]
    %v950 = vld [vmem:[#allocation8 + $0x3f8] sm:$0xff]
    %v951 = vld [vmem:[#allocation8 + $0x400] sm:$0xff]
    %v952 = vld [vmem:[#allocation8 + $0x408] sm:$0xff]
    %v953 = vld [vmem:[#allocation8 + $0x410] sm:$0xff]
    %v954 = vld [vmem:[#allocation8 + $0x418] sm:$0xff]
    %v955 = vld [vmem:[#allocation8 + $0x420] sm:$0xff]
    %v956 = vld [vmem:[#allocation8 + $0x428] sm:$0xff]
    %v957 = vld [vmem:[#allocation8 + $0x430] sm:$0xff]
    %v958 = vld [vmem:[#allocation8 + $0x438] sm:$0xff]
    %v959 = vld [vmem:[#allocation8 + $0x440] sm:$0xff]
    %v960 = vld [vmem:[#allocation8 + $0x448] sm:$0xff]
    %v961 = vld [vmem:[#allocation8 + $0x450] sm:$0xff]
    %v962 = vld [vmem:[#allocation8 + $0x458] sm:$0xff]
    %v963 = vld [vmem:[#allocation8 + $0x460] sm:$0xff]
    %v964 = vld [vmem:[#allocation8 + $0x468] sm:$0xff]
    %v965 = vld [vmem:[#allocation8 + $0x470] sm:$0xff]
    %v966 = vld [vmem:[#allocation8 + $0x478] sm:$0xff]
    %v967 = vld [vmem:[#allocation8 + $0x480] sm:$0xff]
    %v968 = vld [vmem:[#allocation8 + $0x488] sm:$0xff]
    %v969 = vld [vmem:[#allocation8 + $0x490] sm:$0xff]
    %v970 = vld [vmem:[#allocation8 + $0x498] sm:$0xff]
    %v971 = vld [vmem:[#allocation8 + $0x4a0] sm:$0xff]
    %v972 = vld [vmem:[#allocation8 + $0x4a8] sm:$0xff]
    %v973 = vld [vmem:[#allocation8 + $0x4b0] sm:$0xff]
    %v974 = vld [vmem:[#allocation8 + $0x4b8] sm:$0xff]
    %v975 = vld [vmem:[#allocation8 + $0x4c0] sm:$0xff]
    %v976 = vld [vmem:[#allocation8 + $0x4c8] sm:$0xff]
    %v977 = vld [vmem:[#allocation8 + $0x4d0] sm:$0xff]
    %v978 = vld [vmem:[#allocation8 + $0x4d8] sm:$0xff]
    %v979 = vld [vmem:[#allocation8 + $0x4e0] sm:$0xff]
    %v980 = vld [vmem:[#allocation8 + $0x4e8] sm:$0xff]
    %v981 = vld [vmem:[#allocation8 + $0x4f0] sm:$0xff]
    %v982 = vld [vmem:[#allocation8 + $0x4f8] sm:$0xff]
    %v983 = vld [vmem:[#allocation8 + $0x500] sm:$0xff]
    %v984 = vld [vmem:[#allocation8 + $0x508] sm:$0xff]
    %v985 = vld [vmem:[#allocation8 + $0x510] sm:$0xff]
    %v986 = vld [vmem:[#allocation8 + $0x518] sm:$0xff]
    %v987 = vld [vmem:[#allocation8 + $0x520] sm:$0xff]
    %v988 = vld [vmem:[#allocation8 + $0x528] sm:$0xff]
    %v989 = vld [vmem:[#allocation8 + $0x530] sm:$0xff]
    %v990 = vld [vmem:[#allocation8 + $0x538] sm:$0xff]
    %v991 = vld [vmem:[#allocation8 + $0x540] sm:$0xff]
    %v992 = vld [vmem:[#allocation8 + $0x548] sm:$0xff]
    %v993 = vld [vmem:[#allocation8 + $0x550] sm:$0xff]
    %v994 = vld [vmem:[#allocation8 + $0x558] sm:$0xff]
    %v995 = vld [vmem:[#allocation8 + $0x560] sm:$0xff]
    %v996 = vld [vmem:[#allocation8 + $0x568] sm:$0xff]
    %v997 = vld [vmem:[#allocation8 + $0x570] sm:$0xff]
    %v998 = vld [vmem:[#allocation8 + $0x578] sm:$0xff]
    %v999 = vld [vmem:[#allocation8 + $0x580] sm:$0xff]
    %v1000 = vld [vmem:[#allocation8 + $0x588] sm:$0xff]
    %v1001 = vld [vmem:[#allocation8 + $0x590] sm:$0xff]
    %v1002 = vld [vmem:[#allocation8 + $0x598] sm:$0xff]
    %v1003 = vld [vmem:[#allocation8 + $0x5a0] sm:$0xff]
    %v1004 = vld [vmem:[#allocation8 + $0x5a8] sm:$0xff]
    %v1005 = vld [vmem:[#allocation8 + $0x5b0] sm:$0xff]
    %v1006 = vld [vmem:[#allocation8 + $0x5b8] sm:$0xff]
    %v1007 = vld [vmem:[#allocation8 + $0x5c0] sm:$0xff]
    %v1008 = vld [vmem:[#allocation8 + $0x5c8] sm:$0xff]
    %v1009 = vld [vmem:[#allocation8 + $0x5d0] sm:$0xff]
    %v1010 = vld [vmem:[#allocation8 + $0x5d8] sm:$0xff]
    %v1011 = vld [vmem:[#allocation8 + $0x5e0] sm:$0xff]
    %v1012 = vld [vmem:[#allocation8 + $0x5e8] sm:$0xff]
    %v1013 = vld [vmem:[#allocation8 + $0x5f0] sm:$0xff]
    %v1014 = vld [vmem:[#allocation8 + $0x5f8] sm:$0xff]
    %v1015 = vld [vmem:[#allocation8 + $0x600] sm:$0xff]
    %v1016 = vld [vmem:[#allocation8 + $0x608] sm:$0xff]
    %v1017 = vld [vmem:[#allocation8 + $0x610] sm:$0xff]
    %v1018 = vld [vmem:[#allocation8 + $0x618] sm:$0xff]
    %v1019 = vld [vmem:[#allocation8 + $0x620] sm:$0xff]
    %v1020 = vld [vmem:[#allocation8 + $0x628] sm:$0xff]
    %v1021 = vld [vmem:[#allocation8 + $0x630] sm:$0xff]
    %v1022 = vld [vmem:[#allocation8 + $0x638] sm:$0xff]
    %v1023 = vld [vmem:[#allocation8 + $0x640] sm:$0xff]
    %v1024 = vld [vmem:[#allocation8 + $0x648] sm:$0xff]
    %v1025 = vld [vmem:[#allocation8 + $0x650] sm:$0xff]
    %v1026 = vld [vmem:[#allocation8 + $0x658] sm:$0xff]
    %v1027 = vld [vmem:[#allocation8 + $0x660] sm:$0xff]
    %v1028 = vld [vmem:[#allocation8 + $0x668] sm:$0xff]
    %v1029 = vld [vmem:[#allocation8 + $0x670] sm:$0xff]
    %v1030 = vld [vmem:[#allocation8 + $0x678] sm:$0xff]
    %v1031 = vld [vmem:[#allocation8 + $0x680] sm:$0xff]
    %v1032 = vld [vmem:[#allocation8 + $0x688] sm:$0xff]
    %v1033 = vld [vmem:[#allocation8 + $0x690] sm:$0xff]
    %v1034 = vld [vmem:[#allocation8 + $0x698] sm:$0xff]
    %v1035 = vld [vmem:[#allocation8 + $0x6a0] sm:$0xff]
    %v1036 = vld [vmem:[#allocation8 + $0x6a8] sm:$0xff]
    %v1037 = vld [vmem:[#allocation8 + $0x6b0] sm:$0xff]
    %v1038 = vld [vmem:[#allocation8 + $0x6b8] sm:$0xff]
    %v1039 = vld [vmem:[#allocation8 + $0x6c0] sm:$0xff]
    %v1040 = vld [vmem:[#allocation8 + $0x6c8] sm:$0xff]
    %v1041 = vld [vmem:[#allocation8 + $0x6d0] sm:$0xff]
    %v1042 = vld [vmem:[#allocation8 + $0x6d8] sm:$0xff]
    %v1043 = vld [vmem:[#allocation8 + $0x6e0] sm:$0xff]
    %v1044 = vld [vmem:[#allocation8 + $0x6e8] sm:$0xff]
    %v1045 = vld [vmem:[#allocation8 + $0x6f0] sm:$0xff]
    %v1046 = vld [vmem:[#allocation8 + $0x6f8] sm:$0xff]
    %v1047 = vld [vmem:[#allocation8 + $0x700] sm:$0xff]
    %v1048 = vld [vmem:[#allocation8 + $0x708] sm:$0xff]
    %v1049 = vld [vmem:[#allocation8 + $0x710] sm:$0xff]
    %v1050 = vld [vmem:[#allocation8 + $0x718] sm:$0xff]
    %v1051 = vld [vmem:[#allocation8 + $0x720] sm:$0xff]
    %v1052 = vld [vmem:[#allocation8 + $0x728] sm:$0xff]
    %v1053 = vld [vmem:[#allocation8 + $0x730] sm:$0xff]
    %v1054 = vld [vmem:[#allocation8 + $0x738] sm:$0xff]
    %v1055 = vld [vmem:[#allocation8 + $0x740] sm:$0xff]
    %v1056 = vld [vmem:[#allocation8 + $0x748] sm:$0xff]
    %v1057 = vld [vmem:[#allocation8 + $0x750] sm:$0xff]
    %v1058 = vld [vmem:[#allocation8 + $0x758] sm:$0xff]
    %v1059 = vld [vmem:[#allocation8 + $0x760] sm:$0xff]
    %v1060 = vld [vmem:[#allocation8 + $0x768] sm:$0xff]
    %v1061 = vld [vmem:[#allocation8 + $0x770] sm:$0xff]
    %v1062 = vld [vmem:[#allocation8 + $0x778] sm:$0xff]
    %v1063 = vld [vmem:[#allocation8 + $0x780] sm:$0xff]
    %v1064 = vld [vmem:[#allocation8 + $0x788] sm:$0xff]
    %v1065 = vld [vmem:[#allocation8 + $0x790] sm:$0xff]
    %v1066 = vld [vmem:[#allocation8 + $0x798] sm:$0xff]
    %v1067 = vld [vmem:[#allocation8 + $0x7a0] sm:$0xff]
    %v1068 = vld [vmem:[#allocation8 + $0x7a8] sm:$0xff]
    %v1069 = vld [vmem:[#allocation8 + $0x7b0] sm:$0xff]
    %v1070 = vld [vmem:[#allocation8 + $0x7b8] sm:$0xff]
    %v1071 = vld [vmem:[#allocation8 + $0x7c0] sm:$0xff]
    %v1072 = vld [vmem:[#allocation8 + $0x7c8] sm:$0xff]
    %v1073 = vld [vmem:[#allocation8 + $0x7d0] sm:$0xff]
    %v1074 = vld [vmem:[#allocation8 + $0x7d8] sm:$0xff]
    %v1075 = vld [vmem:[#allocation8 + $0x7e0] sm:$0xff]
    %v1076 = vld [vmem:[#allocation8 + $0x7e8] sm:$0xff]
    %v1077 = vld [vmem:[#allocation8 + $0x7f0] sm:$0xff]
    %v1078 = vld [vmem:[#allocation8 + $0x7f8] sm:$0xff]
    %v1079 = vld [vmem:[#allocation8 + $0x800] sm:$0xff]
    %v1080 = vld [vmem:[#allocation8 + $0x808] sm:$0xff]
    %v1081 = vld [vmem:[#allocation8 + $0x810] sm:$0xff]
    %v1082 = vld [vmem:[#allocation8 + $0x818] sm:$0xff]
    %v1083 = vld [vmem:[#allocation8 + $0x820] sm:$0xff]
    %v1084 = vld [vmem:[#allocation8 + $0x828] sm:$0xff]
    %v1085 = vld [vmem:[#allocation8 + $0x830] sm:$0xff]
    %v1086 = vld [vmem:[#allocation8 + $0x838] sm:$0xff]
    %v1087 = vld [vmem:[#allocation8 + $0x840] sm:$0xff]
    %v1088 = vld [vmem:[#allocation8 + $0x848] sm:$0xff]
    %v1089 = vld [vmem:[#allocation8 + $0x850] sm:$0xff]
    %v1090 = vld [vmem:[#allocation8 + $0x858] sm:$0xff]
    %v1091 = vld [vmem:[#allocation8 + $0x860] sm:$0xff]
    %v1092 = vld [vmem:[#allocation8 + $0x868] sm:$0xff]
    %v1093 = vld [vmem:[#allocation8 + $0x870] sm:$0xff]
    %v1094 = vld [vmem:[#allocation8 + $0x878] sm:$0xff]
    %v1095 = vld [vmem:[#allocation8 + $0x880] sm:$0xff]
    %v1096 = vld [vmem:[#allocation8 + $0x888] sm:$0xff]
    %v1097 = vld [vmem:[#allocation8 + $0x890] sm:$0xff]
    %v1098 = vld [vmem:[#allocation8 + $0x898] sm:$0xff]
    %v1099 = vld [vmem:[#allocation8 + $0x8a0] sm:$0xff]
    %v1100 = vld [vmem:[#allocation8 + $0x8a8] sm:$0xff]
    %v1101 = vld [vmem:[#allocation8 + $0x8b0] sm:$0xff]
    %v1102 = vld [vmem:[#allocation8 + $0x8b8] sm:$0xff]
    %v1103 = vld [vmem:[#allocation8 + $0x8c0] sm:$0xff]
    %v1104 = vld [vmem:[#allocation8 + $0x8c8] sm:$0xff]
    %v1105 = vld [vmem:[#allocation8 + $0x8d0] sm:$0xff]
    %v1106 = vld [vmem:[#allocation8 + $0x8d8] sm:$0xff]
    %v1107 = vld [vmem:[#allocation8 + $0x8e0] sm:$0xff]
    %v1108 = vld [vmem:[#allocation8 + $0x8e8] sm:$0xff]
    %v1109 = vld [vmem:[#allocation8 + $0x8f0] sm:$0xff]
    %v1110 = vld [vmem:[#allocation8 + $0x8f8] sm:$0xff]
    %v1111 = vld [vmem:[#allocation8 + $0x900] sm:$0xff]
    %v1112 = vld [vmem:[#allocation8 + $0x908] sm:$0xff]
    %v1113 = vld [vmem:[#allocation8 + $0x910] sm:$0xff]
    %v1114 = vld [vmem:[#allocation8 + $0x918] sm:$0xff]
    %v1115 = vld [vmem:[#allocation8 + $0x920] sm:$0xff]
    %v1116 = vld [vmem:[#allocation8 + $0x928] sm:$0xff]
    %v1117 = vld [vmem:[#allocation8 + $0x930] sm:$0xff]
    %v1118 = vld [vmem:[#allocation8 + $0x938] sm:$0xff]
    %v1119 = vld [vmem:[#allocation8 + $0x940] sm:$0xff]
    %v1120 = vld [vmem:[#allocation8 + $0x948] sm:$0xff]
    %v1121 = vld [vmem:[#allocation8 + $0x950] sm:$0xff]
    %v1122 = vld [vmem:[#allocation8 + $0x958] sm:$0xff]
    %v1123 = vld [vmem:[#allocation8 + $0x960] sm:$0xff]
    %v1124 = vld [vmem:[#allocation8 + $0x968] sm:$0xff]
    %v1125 = vld [vmem:[#allocation8 + $0x970] sm:$0xff]
    %v1126 = vld [vmem:[#allocation8 + $0x978] sm:$0xff]
    %v1127 = vld [vmem:[#allocation8 + $0x980] sm:$0xff]
    %v1128 = vld [vmem:[#allocation8 + $0x988] sm:$0xff]
    %v1129 = vld [vmem:[#allocation8 + $0x990] sm:$0xff]
    %v1130 = vld [vmem:[#allocation8 + $0x998] sm:$0xff]
    %v1131 = vld [vmem:[#allocation8 + $0x9a0] sm:$0xff]
    %v1132 = vld [vmem:[#allocation8 + $0x9a8] sm:$0xff]
    %v1133 = vld [vmem:[#allocation8 + $0x9b0] sm:$0xff]
    %v1134 = vld [vmem:[#allocation8 + $0x9b8] sm:$0xff]
    %v1135 = vld [vmem:[#allocation8 + $0x9c0] sm:$0xff]
    %v1136 = vld [vmem:[#allocation8 + $0x9c8] sm:$0xff]
    %v1137 = vld [vmem:[#allocation8 + $0x9d0] sm:$0xff]
    %v1138 = vld [vmem:[#allocation8 + $0x9d8] sm:$0xff]
    %v1139 = vld [vmem:[#allocation8 + $0x9e0] sm:$0xff]
    %v1140 = vld [vmem:[#allocation8 + $0x9e8] sm:$0xff]
    %v1141 = vld [vmem:[#allocation8 + $0x9f0] sm:$0xff]
    %v1142 = vld [vmem:[#allocation8 + $0x9f8] sm:$0xff]
    %v1143 = vld [vmem:[#allocation8 + $0xa00] sm:$0xff]
    %v1144 = vld [vmem:[#allocation8 + $0xa08] sm:$0xff]
    %v1145 = vld [vmem:[#allocation8 + $0xa10] sm:$0xff]
    %v1146 = vld [vmem:[#allocation8 + $0xa18] sm:$0xff]
    %v1147 = vld [vmem:[#allocation8 + $0xa20] sm:$0xff]
    %v1148 = vld [vmem:[#allocation8 + $0xa28] sm:$0xff]
    %v1149 = vld [vmem:[#allocation8 + $0xa30] sm:$0xff]
    %v1150 = vld [vmem:[#allocation8 + $0xa38] sm:$0xff]
    %v1151 = vld [vmem:[#allocation8 + $0xa40] sm:$0xff]
    %v1152 = vld [vmem:[#allocation8 + $0xa48] sm:$0xff]
    %v1153 = vld [vmem:[#allocation8 + $0xa50] sm:$0xff]
    %v1154 = vld [vmem:[#allocation8 + $0xa58] sm:$0xff]
    %v1155 = vld [vmem:[#allocation8 + $0xa60] sm:$0xff]
    %v1156 = vld [vmem:[#allocation8 + $0xa68] sm:$0xff]
    %v1157 = vld [vmem:[#allocation8 + $0xa70] sm:$0xff]
    %v1158 = vld [vmem:[#allocation8 + $0xa78] sm:$0xff]
    %v1159 = vld [vmem:[#allocation8 + $0xa80] sm:$0xff]
    %v1160 = vld [vmem:[#allocation8 + $0xa88] sm:$0xff]
    %v1161 = vld [vmem:[#allocation8 + $0xa90] sm:$0xff]
    %v1162 = vld [vmem:[#allocation8 + $0xa98] sm:$0xff]
    %v1163 = vld [vmem:[#allocation8 + $0xaa0] sm:$0xff]
    %v1164 = vld [vmem:[#allocation8 + $0xaa8] sm:$0xff]
    %v1165 = vld [vmem:[#allocation8 + $0xab0] sm:$0xff]
    %v1166 = vld [vmem:[#allocation8 + $0xab8] sm:$0xff]
    %v1167 = vld [vmem:[#allocation8 + $0xac0] sm:$0xff]
    %v1168 = vld [vmem:[#allocation8 + $0xac8] sm:$0xff]
    %v1169 = vld [vmem:[#allocation8 + $0xad0] sm:$0xff]
    %v1170 = vld [vmem:[#allocation8 + $0xad8] sm:$0xff]
    %v1171 = vld [vmem:[#allocation8 + $0xae0] sm:$0xff]
    %v1172 = vld [vmem:[#allocation8 + $0xae8] sm:$0xff]
    %v1173 = vld [vmem:[#allocation8 + $0xaf0] sm:$0xff]
    %v1174 = vld [vmem:[#allocation8 + $0xaf8] sm:$0xff]
    %v1175 = vld [vmem:[#allocation8 + $0xb00] sm:$0xff]
    %v1176 = vld [vmem:[#allocation8 + $0xb08] sm:$0xff]
    %v1177 = vld [vmem:[#allocation8 + $0xb10] sm:$0xff]
    %v1178 = vld [vmem:[#allocation8 + $0xb18] sm:$0xff]
    %v1179 = vld [vmem:[#allocation8 + $0xb20] sm:$0xff]
    %v1180 = vld [vmem:[#allocation8 + $0xb28] sm:$0xff]
    %v1181 = vld [vmem:[#allocation8 + $0xb30] sm:$0xff]
    %v1182 = vld [vmem:[#allocation8 + $0xb38] sm:$0xff]
    %v1183 = vld [vmem:[#allocation8 + $0xb40] sm:$0xff]
    %v1184 = vld [vmem:[#allocation8 + $0xb48] sm:$0xff]
    %v1185 = vld [vmem:[#allocation8 + $0xb50] sm:$0xff]
    %v1186 = vld [vmem:[#allocation8 + $0xb58] sm:$0xff]
    %v1187 = vld [vmem:[#allocation8 + $0xb60] sm:$0xff]
    %v1188 = vld [vmem:[#allocation8 + $0xb68] sm:$0xff]
    %v1189 = vld [vmem:[#allocation8 + $0xb70] sm:$0xff]
    %v1190 = vld [vmem:[#allocation8 + $0xb78] sm:$0xff]
    %v1191 = vld [vmem:[#allocation8 + $0xb80] sm:$0xff]
    %v1192 = vld [vmem:[#allocation8 + $0xb88] sm:$0xff]
    %v1193 = vld [vmem:[#allocation8 + $0xb90] sm:$0xff]
    %v1194 = vld [vmem:[#allocation8 + $0xb98] sm:$0xff]
    %v1195 = vld [vmem:[#allocation8 + $0xba0] sm:$0xff]
    %v1196 = vld [vmem:[#allocation8 + $0xba8] sm:$0xff]
    %v1197 = vld [vmem:[#allocation8 + $0xbb0] sm:$0xff]
    %v1198 = vld [vmem:[#allocation8 + $0xbb8] sm:$0xff]
    %v1199 = vld [vmem:[#allocation8 + $0xbc0] sm:$0xff]
    %v1200 = vld [vmem:[#allocation8 + $0xbc8] sm:$0xff]
    %v1201 = vld [vmem:[#allocation8 + $0xbd0] sm:$0xff]
    %v1202 = vld [vmem:[#allocation8 + $0xbd8] sm:$0xff]
    %v1203 = vld [vmem:[#allocation8 + $0xbe0] sm:$0xff]
    %v1204 = vld [vmem:[#allocation8 + $0xbe8] sm:$0xff]
    %v1205 = vld [vmem:[#allocation8 + $0xbf0] sm:$0xff]
    %v1206 = vld [vmem:[#allocation8 + $0xbf8] sm:$0xff]
    %v1207 = vld [vmem:[#allocation8 + $0xc00] sm:$0xff]
    %v1208 = vld [vmem:[#allocation8 + $0xc08] sm:$0xff]
    %v1209 = vld [vmem:[#allocation8 + $0xc10] sm:$0xff]
    %v1210 = vld [vmem:[#allocation8 + $0xc18] sm:$0xff]
    %v1211 = vld [vmem:[#allocation8 + $0xc20] sm:$0xff]
    %v1212 = vld [vmem:[#allocation8 + $0xc28] sm:$0xff]
    %v1213 = vld [vmem:[#allocation8 + $0xc30] sm:$0xff]
    %v1214 = vld [vmem:[#allocation8 + $0xc38] sm:$0xff]
    %v1215 = vld [vmem:[#allocation8 + $0xc40] sm:$0xff]
    %v1216 = vld [vmem:[#allocation8 + $0xc48] sm:$0xff]
    %v1217 = vld [vmem:[#allocation8 + $0xc50] sm:$0xff]
    %v1218 = vld [vmem:[#allocation8 + $0xc58] sm:$0xff]
    %v1219 = vld [vmem:[#allocation8 + $0xc60] sm:$0xff]
    %v1220 = vld [vmem:[#allocation8 + $0xc68] sm:$0xff]
    %v1221 = vld [vmem:[#allocation8 + $0xc70] sm:$0xff]
    %v1222 = vld [vmem:[#allocation8 + $0xc78] sm:$0xff]
    %v1223 = vld [vmem:[#allocation8 + $0xc80] sm:$0xff]
    %v1224 = vld [vmem:[#allocation8 + $0xc88] sm:$0xff]
    %v1225 = vld [vmem:[#allocation8 + $0xc90] sm:$0xff]
    %v1226 = vld [vmem:[#allocation8 + $0xc98] sm:$0xff]
    %v1227 = vld [vmem:[#allocation8 + $0xca0] sm:$0xff]
    %v1228 = vld [vmem:[#allocation8 + $0xca8] sm:$0xff]
    %v1229 = vld [vmem:[#allocation8 + $0xcb0] sm:$0xff]
    %v1230 = vld [vmem:[#allocation8 + $0xcb8] sm:$0xff]
    %v1231 = vld [vmem:[#allocation8 + $0xcc0] sm:$0xff]
    %v1232 = vld [vmem:[#allocation8 + $0xcc8] sm:$0xff]
    %v1233 = vld [vmem:[#allocation8 + $0xcd0] sm:$0xff]
    %v1234 = vld [vmem:[#allocation8 + $0xcd8] sm:$0xff]
    %v1235 = vld [vmem:[#allocation8 + $0xce0] sm:$0xff]
    %v1236 = vld [vmem:[#allocation8 + $0xce8] sm:$0xff]
    %v1237 = vld [vmem:[#allocation8 + $0xcf0] sm:$0xff]
    %v1238 = vld [vmem:[#allocation8 + $0xcf8] sm:$0xff]
    %v1239 = vld [vmem:[#allocation8 + $0xd00] sm:$0xff]
    %v1240 = vld [vmem:[#allocation8 + $0xd08] sm:$0xff]
    %v1241 = vld [vmem:[#allocation8 + $0xd10] sm:$0xff]
    %v1242 = vld [vmem:[#allocation8 + $0xd18] sm:$0xff]
    %v1243 = vld [vmem:[#allocation8 + $0xd20] sm:$0xff]
    %v1244 = vld [vmem:[#allocation8 + $0xd28] sm:$0xff]
    %v1245 = vld [vmem:[#allocation8 + $0xd30] sm:$0xff]
    %v1246 = vld [vmem:[#allocation8 + $0xd38] sm:$0xff]
    %v1247 = vld [vmem:[#allocation8 + $0xd40] sm:$0xff]
    %v1248 = vld [vmem:[#allocation8 + $0xd48] sm:$0xff]
    %v1249 = vld [vmem:[#allocation8 + $0xd50] sm:$0xff]
    %v1250 = vld [vmem:[#allocation8 + $0xd58] sm:$0xff]
    %v1251 = vld [vmem:[#allocation8 + $0xd60] sm:$0xff]
    %v1252 = vld [vmem:[#allocation8 + $0xd68] sm:$0xff]
    %v1253 = vld [vmem:[#allocation8 + $0xd70] sm:$0xff]
    %v1254 = vld [vmem:[#allocation8 + $0xd78] sm:$0xff]
    %v1255 = vld [vmem:[#allocation8 + $0xd80] sm:$0xff]
    %v1256 = vld [vmem:[#allocation8 + $0xd88] sm:$0xff]
    %v1257 = vld [vmem:[#allocation8 + $0xd90] sm:$0xff]
    %v1258 = vld [vmem:[#allocation8 + $0xd98] sm:$0xff]
    %v1259 = vld [vmem:[#allocation8 + $0xda0] sm:$0xff]
    %v1260 = vld [vmem:[#allocation8 + $0xda8] sm:$0xff]
    %v1261 = vld [vmem:[#allocation8 + $0xdb0] sm:$0xff]
    %v1262 = vld [vmem:[#allocation8 + $0xdb8] sm:$0xff]
    %v1263 = vld [vmem:[#allocation8 + $0xdc0] sm:$0xff]
    %v1264 = vld [vmem:[#allocation8 + $0xdc8] sm:$0xff]
    %v1265 = vld [vmem:[#allocation8 + $0xdd0] sm:$0xff]
    %v1266 = vld [vmem:[#allocation8 + $0xdd8] sm:$0xff]
    %v1267 = vld [vmem:[#allocation8 + $0xde0] sm:$0xff]
    %v1268 = vld [vmem:[#allocation8 + $0xde8] sm:$0xff]
    %v1269 = vld [vmem:[#allocation8 + $0xdf0] sm:$0xff]
    %v1270 = vld [vmem:[#allocation8 + $0xdf8] sm:$0xff]
    %v1271 = vld [vmem:[#allocation8 + $0xe00] sm:$0xff]
    %v1272 = vld [vmem:[#allocation8 + $0xe08] sm:$0xff]
    %v1273 = vld [vmem:[#allocation8 + $0xe10] sm:$0xff]
    %v1274 = vld [vmem:[#allocation8 + $0xe18] sm:$0xff]
    %v1275 = vld [vmem:[#allocation8 + $0xe20] sm:$0xff]
    %v1276 = vld [vmem:[#allocation8 + $0xe28] sm:$0xff]
    %v1277 = vld [vmem:[#allocation8 + $0xe30] sm:$0xff]
    %v1278 = vld [vmem:[#allocation8 + $0xe38] sm:$0xff]
    %v1279 = vld [vmem:[#allocation8 + $0xe40] sm:$0xff]
    %v1280 = vld [vmem:[#allocation8 + $0xe48] sm:$0xff]
    %v1281 = vld [vmem:[#allocation8 + $0xe50] sm:$0xff]
    %v1282 = vld [vmem:[#allocation8 + $0xe58] sm:$0xff]
    %v1283 = vld [vmem:[#allocation8 + $0xe60] sm:$0xff]
    %v1284 = vld [vmem:[#allocation8 + $0xe68] sm:$0xff]
    %v1285 = vld [vmem:[#allocation8 + $0xe70] sm:$0xff]
    %v1286 = vld [vmem:[#allocation8 + $0xe78] sm:$0xff]
    %v1287 = vld [vmem:[#allocation8 + $0xe80] sm:$0xff]
    %v1288 = vld [vmem:[#allocation8 + $0xe88] sm:$0xff]
    %v1289 = vld [vmem:[#allocation8 + $0xe90] sm:$0xff]
    %v1290 = vld [vmem:[#allocation8 + $0xe98] sm:$0xff]
    %v1291 = vld [vmem:[#allocation8 + $0xea0] sm:$0xff]
    %v1292 = vld [vmem:[#allocation8 + $0xea8] sm:$0xff]
    %v1293 = vld [vmem:[#allocation8 + $0xeb0] sm:$0xff]
    %v1294 = vld [vmem:[#allocation8 + $0xeb8] sm:$0xff]
    %v1295 = vld [vmem:[#allocation8 + $0xec0] sm:$0xff]
    %v1296 = vld [vmem:[#allocation8 + $0xec8] sm:$0xff]
    %v1297 = vld [vmem:[#allocation8 + $0xed0] sm:$0xff]
    %v1298 = vld [vmem:[#allocation8 + $0xed8] sm:$0xff]
    %v1299 = vld [vmem:[#allocation8 + $0xee0] sm:$0xff]
    %v1300 = vld [vmem:[#allocation8 + $0xee8] sm:$0xff]
    %v1301 = vld [vmem:[#allocation8 + $0xef0] sm:$0xff]
    %v1302 = vld [vmem:[#allocation8 + $0xef8] sm:$0xff]
    %v1303 = vld [vmem:[#allocation8 + $0xf00] sm:$0xff]
    %v1304 = vld [vmem:[#allocation8 + $0xf08] sm:$0xff]
    %v1305 = vld [vmem:[#allocation8 + $0xf10] sm:$0xff]
    %v1306 = vld [vmem:[#allocation8 + $0xf18] sm:$0xff]
    %v1307 = vld [vmem:[#allocation8 + $0xf20] sm:$0xff]
    %v1308 = vld [vmem:[#allocation8 + $0xf28] sm:$0xff]
    %v1309 = vld [vmem:[#allocation8 + $0xf30] sm:$0xff]
    %v1310 = vld [vmem:[#allocation8 + $0xf38] sm:$0xff]
    %v1311 = vld [vmem:[#allocation8 + $0xf40] sm:$0xff]
    %v1312 = vld [vmem:[#allocation8 + $0xf48] sm:$0xff]
    %v1313 = vld [vmem:[#allocation8 + $0xf50] sm:$0xff]
    %v1314 = vld [vmem:[#allocation8 + $0xf58] sm:$0xff]
    %v1315 = vld [vmem:[#allocation8 + $0xf60] sm:$0xff]
    %v1316 = vld [vmem:[#allocation8 + $0xf68] sm:$0xff]
    %v1317 = vld [vmem:[#allocation8 + $0xf70] sm:$0xff]
    %v1318 = vld [vmem:[#allocation8 + $0xf78] sm:$0xff]
    %v1319 = vld [vmem:[#allocation8 + $0xf80] sm:$0xff]
    %v1320 = vld [vmem:[#allocation8 + $0xf88] sm:$0xff]
    %v1321 = vld [vmem:[#allocation8 + $0xf90] sm:$0xff]
    %v1322 = vld [vmem:[#allocation8 + $0xf98] sm:$0xff]
    %v1323 = vld [vmem:[#allocation8 + $0xfa0] sm:$0xff]
    %v1324 = vld [vmem:[#allocation8 + $0xfa8] sm:$0xff]
    %v1325 = vld [vmem:[#allocation8 + $0xfb0] sm:$0xff]
    %v1326 = vld [vmem:[#allocation8 + $0xfb8] sm:$0xff]
    %v1327 = vld [vmem:[#allocation8 + $0xfc0] sm:$0xff]
    %v1328 = vld [vmem:[#allocation8 + $0xfc8] sm:$0xff]
    %v1329 = vld [vmem:[#allocation8 + $0xfd0] sm:$0xff]
    %v1330 = vld [vmem:[#allocation8 + $0xfd8] sm:$0xff]
    %v1331 = vld [vmem:[#allocation8 + $0xfe0] sm:$0xff]
    %v1332 = vld [vmem:[#allocation8 + $0xfe8] sm:$0xff]
    %v1333 = vld [vmem:[#allocation8 + $0xff0] sm:$0xff]
    %v1334 = vld [vmem:[#allocation8 + $0xff8] sm:$0xff]
    %v1335 = vld [vmem:[#allocation10] sm:$0xf]
    %v1337 = vlaneseq
    %v1338 = vshrl.u32 %v1337, 7
    %v1339 = vsub.s32 0, %v1338
    %v1340 = vrot.slane %v1335, %v1339
    %v1341 = vlaneseq
    %v1342 = vshrl.u32 %v1341, 7
    %v1343 = vsub.s32 1, %v1342
    %v1344 = vrot.slane %v1335, %v1343
    %v1345 = vlaneseq
    %v1346 = vshrl.u32 %v1345, 7
    %v1347 = vsub.s32 2, %v1346
    %v1348 = vrot.slane %v1335, %v1347
    %v1349 = vlaneseq
    %v1350 = vshrl.u32 %v1349, 7
    %v1351 = vsub.s32 3, %v1350
    %v1352 = vrot.slane %v1335, %v1351
    %v1869 = vunpack.c.l.b16 %v823
    %v1870 = vunpack.c.h.b16 %v823
    %v1871 = vunpack.c.l.b16 %v824
    %v1872 = vunpack.c.h.b16 %v824
    %v1873 = vunpack.c.l.b16 %v825
    %v1874 = vunpack.c.h.b16 %v825
    %v1875 = vunpack.c.l.b16 %v826
    %v1876 = vunpack.c.h.b16 %v826
    %v1877 = vunpack.c.l.b16 %v827
    %v1878 = vunpack.c.h.b16 %v827
    %v1879 = vunpack.c.l.b16 %v828
    %v1880 = vunpack.c.h.b16 %v828
    %v1881 = vunpack.c.l.b16 %v829
    %v1882 = vunpack.c.h.b16 %v829
    %v1883 = vunpack.c.l.b16 %v830
    %v1884 = vunpack.c.h.b16 %v830
    %v1885 = vunpack.c.l.b16 %v831
    %v1886 = vunpack.c.h.b16 %v831
    %v1887 = vunpack.c.l.b16 %v832
    %v1888 = vunpack.c.h.b16 %v832
    %v1889 = vunpack.c.l.b16 %v833
    %v1890 = vunpack.c.h.b16 %v833
    %v1891 = vunpack.c.l.b16 %v834
    %v1892 = vunpack.c.h.b16 %v834
    %v1893 = vunpack.c.l.b16 %v835
    %v1894 = vunpack.c.h.b16 %v835
    %v1895 = vunpack.c.l.b16 %v836
    %v1896 = vunpack.c.h.b16 %v836
    %v1897 = vunpack.c.l.b16 %v837
    %v1898 = vunpack.c.h.b16 %v837
    %v1899 = vunpack.c.l.b16 %v838
    %v1900 = vunpack.c.h.b16 %v838
    %v1901 = vunpack.c.l.b16 %v839
    %v1902 = vunpack.c.h.b16 %v839
    %v1903 = vunpack.c.l.b16 %v840
    %v1904 = vunpack.c.h.b16 %v840
    %v1905 = vunpack.c.l.b16 %v841
    %v1906 = vunpack.c.h.b16 %v841
    %v1907 = vunpack.c.l.b16 %v842
    %v1908 = vunpack.c.h.b16 %v842
    %v1909 = vunpack.c.l.b16 %v843
    %v1910 = vunpack.c.h.b16 %v843
    %v1911 = vunpack.c.l.b16 %v844
    %v1912 = vunpack.c.h.b16 %v844
    %v1913 = vunpack.c.l.b16 %v845
    %v1914 = vunpack.c.h.b16 %v845
    %v1915 = vunpack.c.l.b16 %v846
    %v1916 = vunpack.c.h.b16 %v846
    %v1917 = vunpack.c.l.b16 %v847
    %v1918 = vunpack.c.h.b16 %v847
    %v1919 = vunpack.c.l.b16 %v848
    %v1920 = vunpack.c.h.b16 %v848
    %v1921 = vunpack.c.l.b16 %v849
    %v1922 = vunpack.c.h.b16 %v849
    %v1923 = vunpack.c.l.b16 %v850
    %v1924 = vunpack.c.h.b16 %v850
    %v1925 = vunpack.c.l.b16 %v851
    %v1926 = vunpack.c.h.b16 %v851
    %v1927 = vunpack.c.l.b16 %v852
    %v1928 = vunpack.c.h.b16 %v852
    %v1929 = vunpack.c.l.b16 %v853
    %v1930 = vunpack.c.h.b16 %v853
    %v1931 = vunpack.c.l.b16 %v854
    %v1932 = vunpack.c.h.b16 %v854
    %v1933 = vunpack.c.l.b16 %v855
    %v1934 = vunpack.c.h.b16 %v855
    %v1935 = vunpack.c.l.b16 %v856
    %v1936 = vunpack.c.h.b16 %v856
    %v1937 = vunpack.c.l.b16 %v857
    %v1938 = vunpack.c.h.b16 %v857
    %v1939 = vunpack.c.l.b16 %v858
    %v1940 = vunpack.c.h.b16 %v858
    %v1941 = vunpack.c.l.b16 %v859
    %v1942 = vunpack.c.h.b16 %v859
    %v1943 = vunpack.c.l.b16 %v860
    %v1944 = vunpack.c.h.b16 %v860
    %v1945 = vunpack.c.l.b16 %v861
    %v1946 = vunpack.c.h.b16 %v861
    %v1947 = vunpack.c.l.b16 %v862
    %v1948 = vunpack.c.h.b16 %v862
    %v1949 = vunpack.c.l.b16 %v863
    %v1950 = vunpack.c.h.b16 %v863
    %v1951 = vunpack.c.l.b16 %v864
    %v1952 = vunpack.c.h.b16 %v864
    %v1953 = vunpack.c.l.b16 %v865
    %v1954 = vunpack.c.h.b16 %v865
    %v1955 = vunpack.c.l.b16 %v866
    %v1956 = vunpack.c.h.b16 %v866
    %v1957 = vunpack.c.l.b16 %v867
    %v1958 = vunpack.c.h.b16 %v867
    %v1959 = vunpack.c.l.b16 %v868
    %v1960 = vunpack.c.h.b16 %v868
    %v1961 = vunpack.c.l.b16 %v869
    %v1962 = vunpack.c.h.b16 %v869
    %v1963 = vunpack.c.l.b16 %v870
    %v1964 = vunpack.c.h.b16 %v870
    %v1965 = vunpack.c.l.b16 %v871
    %v1966 = vunpack.c.h.b16 %v871
    %v1967 = vunpack.c.l.b16 %v872
    %v1968 = vunpack.c.h.b16 %v872
    %v1969 = vunpack.c.l.b16 %v873
    %v1970 = vunpack.c.h.b16 %v873
    %v1971 = vunpack.c.l.b16 %v874
    %v1972 = vunpack.c.h.b16 %v874
    %v1973 = vunpack.c.l.b16 %v875
    %v1974 = vunpack.c.h.b16 %v875
    %v1975 = vunpack.c.l.b16 %v876
    %v1976 = vunpack.c.h.b16 %v876
    %v1977 = vunpack.c.l.b16 %v877
    %v1978 = vunpack.c.h.b16 %v877
    %v1979 = vunpack.c.l.b16 %v878
    %v1980 = vunpack.c.h.b16 %v878
    %v1981 = vunpack.c.l.b16 %v879
    %v1982 = vunpack.c.h.b16 %v879
    %v1983 = vunpack.c.l.b16 %v880
    %v1984 = vunpack.c.h.b16 %v880
    %v1985 = vunpack.c.l.b16 %v881
    %v1986 = vunpack.c.h.b16 %v881
    %v1987 = vunpack.c.l.b16 %v882
    %v1988 = vunpack.c.h.b16 %v882
    %v1989 = vunpack.c.l.b16 %v883
    %v1990 = vunpack.c.h.b16 %v883
    %v1991 = vunpack.c.l.b16 %v884
    %v1992 = vunpack.c.h.b16 %v884
    %v1993 = vunpack.c.l.b16 %v885
    %v1994 = vunpack.c.h.b16 %v885
    %v1995 = vunpack.c.l.b16 %v886
    %v1996 = vunpack.c.h.b16 %v886
    %v1997 = vunpack.c.l.b16 %v887
    %v1998 = vunpack.c.h.b16 %v887
    %v1999 = vunpack.c.l.b16 %v888
    %v2000 = vunpack.c.h.b16 %v888
    %v2001 = vunpack.c.l.b16 %v889
    %v2002 = vunpack.c.h.b16 %v889
    %v2003 = vunpack.c.l.b16 %v890
    %v2004 = vunpack.c.h.b16 %v890
    %v2005 = vunpack.c.l.b16 %v891
    %v2006 = vunpack.c.h.b16 %v891
    %v2007 = vunpack.c.l.b16 %v892
    %v2008 = vunpack.c.h.b16 %v892
    %v2009 = vunpack.c.l.b16 %v893
    %v2010 = vunpack.c.h.b16 %v893
    %v2011 = vunpack.c.l.b16 %v894
    %v2012 = vunpack.c.h.b16 %v894
    %v2013 = vunpack.c.l.b16 %v895
    %v2014 = vunpack.c.h.b16 %v895
    %v2015 = vunpack.c.l.b16 %v896
    %v2016 = vunpack.c.h.b16 %v896
    %v2017 = vunpack.c.l.b16 %v897
    %v2018 = vunpack.c.h.b16 %v897
    %v2019 = vunpack.c.l.b16 %v898
    %v2020 = vunpack.c.h.b16 %v898
    %v2021 = vunpack.c.l.b16 %v899
    %v2022 = vunpack.c.h.b16 %v899
    %v2023 = vunpack.c.l.b16 %v900
    %v2024 = vunpack.c.h.b16 %v900
    %v2025 = vunpack.c.l.b16 %v901
    %v2026 = vunpack.c.h.b16 %v901
    %v2027 = vunpack.c.l.b16 %v902
    %v2028 = vunpack.c.h.b16 %v902
    %v2029 = vunpack.c.l.b16 %v903
    %v2030 = vunpack.c.h.b16 %v903
    %v2031 = vunpack.c.l.b16 %v904
    %v2032 = vunpack.c.h.b16 %v904
    %v2033 = vunpack.c.l.b16 %v905
    %v2034 = vunpack.c.h.b16 %v905
    %v2035 = vunpack.c.l.b16 %v906
    %v2036 = vunpack.c.h.b16 %v906
    %v2037 = vunpack.c.l.b16 %v907
    %v2038 = vunpack.c.h.b16 %v907
    %v2039 = vunpack.c.l.b16 %v908
    %v2040 = vunpack.c.h.b16 %v908
    %v2041 = vunpack.c.l.b16 %v909
    %v2042 = vunpack.c.h.b16 %v909
    %v2043 = vunpack.c.l.b16 %v910
    %v2044 = vunpack.c.h.b16 %v910
    %v2045 = vunpack.c.l.b16 %v911
    %v2046 = vunpack.c.h.b16 %v911
    %v2047 = vunpack.c.l.b16 %v912
    %v2048 = vunpack.c.h.b16 %v912
    %v2049 = vunpack.c.l.b16 %v913
    %v2050 = vunpack.c.h.b16 %v913
    %v2051 = vunpack.c.l.b16 %v914
    %v2052 = vunpack.c.h.b16 %v914
    %v2053 = vunpack.c.l.b16 %v915
    %v2054 = vunpack.c.h.b16 %v915
    %v2055 = vunpack.c.l.b16 %v916
    %v2056 = vunpack.c.h.b16 %v916
    %v2057 = vunpack.c.l.b16 %v917
    %v2058 = vunpack.c.h.b16 %v917
    %v2059 = vunpack.c.l.b16 %v918
    %v2060 = vunpack.c.h.b16 %v918
    %v2061 = vunpack.c.l.b16 %v919
    %v2062 = vunpack.c.h.b16 %v919
    %v2063 = vunpack.c.l.b16 %v920
    %v2064 = vunpack.c.h.b16 %v920
    %v2065 = vunpack.c.l.b16 %v921
    %v2066 = vunpack.c.h.b16 %v921
    %v2067 = vunpack.c.l.b16 %v922
    %v2068 = vunpack.c.h.b16 %v922
    %v2069 = vunpack.c.l.b16 %v923
    %v2070 = vunpack.c.h.b16 %v923
    %v2071 = vunpack.c.l.b16 %v924
    %v2072 = vunpack.c.h.b16 %v924
    %v2073 = vunpack.c.l.b16 %v925
    %v2074 = vunpack.c.h.b16 %v925
    %v2075 = vunpack.c.l.b16 %v926
    %v2076 = vunpack.c.h.b16 %v926
    %v2077 = vunpack.c.l.b16 %v927
    %v2078 = vunpack.c.h.b16 %v927
    %v2079 = vunpack.c.l.b16 %v928
    %v2080 = vunpack.c.h.b16 %v928
    %v2081 = vunpack.c.l.b16 %v929
    %v2082 = vunpack.c.h.b16 %v929
    %v2083 = vunpack.c.l.b16 %v930
    %v2084 = vunpack.c.h.b16 %v930
    %v2085 = vunpack.c.l.b16 %v931
    %v2086 = vunpack.c.h.b16 %v931
    %v2087 = vunpack.c.l.b16 %v932
    %v2088 = vunpack.c.h.b16 %v932
    %v2089 = vunpack.c.l.b16 %v933
    %v2090 = vunpack.c.h.b16 %v933
    %v2091 = vunpack.c.l.b16 %v934
    %v2092 = vunpack.c.h.b16 %v934
    %v2093 = vunpack.c.l.b16 %v935
    %v2094 = vunpack.c.h.b16 %v935
    %v2095 = vunpack.c.l.b16 %v936
    %v2096 = vunpack.c.h.b16 %v936
    %v2097 = vunpack.c.l.b16 %v937
    %v2098 = vunpack.c.h.b16 %v937
    %v2099 = vunpack.c.l.b16 %v938
    %v2100 = vunpack.c.h.b16 %v938
    %v2101 = vunpack.c.l.b16 %v939
    %v2102 = vunpack.c.h.b16 %v939
    %v2103 = vunpack.c.l.b16 %v940
    %v2104 = vunpack.c.h.b16 %v940
    %v2105 = vunpack.c.l.b16 %v941
    %v2106 = vunpack.c.h.b16 %v941
    %v2107 = vunpack.c.l.b16 %v942
    %v2108 = vunpack.c.h.b16 %v942
    %v2109 = vunpack.c.l.b16 %v943
    %v2110 = vunpack.c.h.b16 %v943
    %v2111 = vunpack.c.l.b16 %v944
    %v2112 = vunpack.c.h.b16 %v944
    %v2113 = vunpack.c.l.b16 %v945
    %v2114 = vunpack.c.h.b16 %v945
    %v2115 = vunpack.c.l.b16 %v946
    %v2116 = vunpack.c.h.b16 %v946
    %v2117 = vunpack.c.l.b16 %v947
    %v2118 = vunpack.c.h.b16 %v947
    %v2119 = vunpack.c.l.b16 %v948
    %v2120 = vunpack.c.h.b16 %v948
    %v2121 = vunpack.c.l.b16 %v949
    %v2122 = vunpack.c.h.b16 %v949
    %v2123 = vunpack.c.l.b16 %v950
    %v2124 = vunpack.c.h.b16 %v950
    %v2125 = vunpack.c.l.b16 %v951
    %v2126 = vunpack.c.h.b16 %v951
    %v2127 = vunpack.c.l.b16 %v952
    %v2128 = vunpack.c.h.b16 %v952
    %v2129 = vunpack.c.l.b16 %v953
    %v2130 = vunpack.c.h.b16 %v953
    %v2131 = vunpack.c.l.b16 %v954
    %v2132 = vunpack.c.h.b16 %v954
    %v2133 = vunpack.c.l.b16 %v955
    %v2134 = vunpack.c.h.b16 %v955
    %v2135 = vunpack.c.l.b16 %v956
    %v2136 = vunpack.c.h.b16 %v956
    %v2137 = vunpack.c.l.b16 %v957
    %v2138 = vunpack.c.h.b16 %v957
    %v2139 = vunpack.c.l.b16 %v958
    %v2140 = vunpack.c.h.b16 %v958
    %v2141 = vunpack.c.l.b16 %v959
    %v2142 = vunpack.c.h.b16 %v959
    %v2143 = vunpack.c.l.b16 %v960
    %v2144 = vunpack.c.h.b16 %v960
    %v2145 = vunpack.c.l.b16 %v961
    %v2146 = vunpack.c.h.b16 %v961
    %v2147 = vunpack.c.l.b16 %v962
    %v2148 = vunpack.c.h.b16 %v962
    %v2149 = vunpack.c.l.b16 %v963
    %v2150 = vunpack.c.h.b16 %v963
    %v2151 = vunpack.c.l.b16 %v964
    %v2152 = vunpack.c.h.b16 %v964
    %v2153 = vunpack.c.l.b16 %v965
    %v2154 = vunpack.c.h.b16 %v965
    %v2155 = vunpack.c.l.b16 %v966
    %v2156 = vunpack.c.h.b16 %v966
    %v2157 = vunpack.c.l.b16 %v967
    %v2158 = vunpack.c.h.b16 %v967
    %v2159 = vunpack.c.l.b16 %v968
    %v2160 = vunpack.c.h.b16 %v968
    %v2161 = vunpack.c.l.b16 %v969
    %v2162 = vunpack.c.h.b16 %v969
    %v2163 = vunpack.c.l.b16 %v970
    %v2164 = vunpack.c.h.b16 %v970
    %v2165 = vunpack.c.l.b16 %v971
    %v2166 = vunpack.c.h.b16 %v971
    %v2167 = vunpack.c.l.b16 %v972
    %v2168 = vunpack.c.h.b16 %v972
    %v2169 = vunpack.c.l.b16 %v973
    %v2170 = vunpack.c.h.b16 %v973
    %v2171 = vunpack.c.l.b16 %v974
    %v2172 = vunpack.c.h.b16 %v974
    %v2173 = vunpack.c.l.b16 %v975
    %v2174 = vunpack.c.h.b16 %v975
    %v2175 = vunpack.c.l.b16 %v976
    %v2176 = vunpack.c.h.b16 %v976
    %v2177 = vunpack.c.l.b16 %v977
    %v2178 = vunpack.c.h.b16 %v977
    %v2179 = vunpack.c.l.b16 %v978
    %v2180 = vunpack.c.h.b16 %v978
    %v2181 = vunpack.c.l.b16 %v979
    %v2182 = vunpack.c.h.b16 %v979
    %v2183 = vunpack.c.l.b16 %v980
    %v2184 = vunpack.c.h.b16 %v980
    %v2185 = vunpack.c.l.b16 %v981
    %v2186 = vunpack.c.h.b16 %v981
    %v2187 = vunpack.c.l.b16 %v982
    %v2188 = vunpack.c.h.b16 %v982
    %v2189 = vunpack.c.l.b16 %v983
    %v2190 = vunpack.c.h.b16 %v983
    %v2191 = vunpack.c.l.b16 %v984
    %v2192 = vunpack.c.h.b16 %v984
    %v2193 = vunpack.c.l.b16 %v985
    %v2194 = vunpack.c.h.b16 %v985
    %v2195 = vunpack.c.l.b16 %v986
    %v2196 = vunpack.c.h.b16 %v986
    %v2197 = vunpack.c.l.b16 %v987
    %v2198 = vunpack.c.h.b16 %v987
    %v2199 = vunpack.c.l.b16 %v988
    %v2200 = vunpack.c.h.b16 %v988
    %v2201 = vunpack.c.l.b16 %v989
    %v2202 = vunpack.c.h.b16 %v989
    %v2203 = vunpack.c.l.b16 %v990
    %v2204 = vunpack.c.h.b16 %v990
    %v2205 = vunpack.c.l.b16 %v991
    %v2206 = vunpack.c.h.b16 %v991
    %v2207 = vunpack.c.l.b16 %v992
    %v2208 = vunpack.c.h.b16 %v992
    %v2209 = vunpack.c.l.b16 %v993
    %v2210 = vunpack.c.h.b16 %v993
    %v2211 = vunpack.c.l.b16 %v994
    %v2212 = vunpack.c.h.b16 %v994
    %v2213 = vunpack.c.l.b16 %v995
    %v2214 = vunpack.c.h.b16 %v995
    %v2215 = vunpack.c.l.b16 %v996
    %v2216 = vunpack.c.h.b16 %v996
    %v2217 = vunpack.c.l.b16 %v997
    %v2218 = vunpack.c.h.b16 %v997
    %v2219 = vunpack.c.l.b16 %v998
    %v2220 = vunpack.c.h.b16 %v998
    %v2221 = vunpack.c.l.b16 %v999
    %v2222 = vunpack.c.h.b16 %v999
    %v2223 = vunpack.c.l.b16 %v1000
    %v2224 = vunpack.c.h.b16 %v1000
    %v2225 = vunpack.c.l.b16 %v1001
    %v2226 = vunpack.c.h.b16 %v1001
    %v2227 = vunpack.c.l.b16 %v1002
    %v2228 = vunpack.c.h.b16 %v1002
    %v2229 = vunpack.c.l.b16 %v1003
    %v2230 = vunpack.c.h.b16 %v1003
    %v2231 = vunpack.c.l.b16 %v1004
    %v2232 = vunpack.c.h.b16 %v1004
    %v2233 = vunpack.c.l.b16 %v1005
    %v2234 = vunpack.c.h.b16 %v1005
    %v2235 = vunpack.c.l.b16 %v1006
    %v2236 = vunpack.c.h.b16 %v1006
    %v2237 = vunpack.c.l.b16 %v1007
    %v2238 = vunpack.c.h.b16 %v1007
    %v2239 = vunpack.c.l.b16 %v1008
    %v2240 = vunpack.c.h.b16 %v1008
    %v2241 = vunpack.c.l.b16 %v1009
    %v2242 = vunpack.c.h.b16 %v1009
    %v2243 = vunpack.c.l.b16 %v1010
    %v2244 = vunpack.c.h.b16 %v1010
    %v2245 = vunpack.c.l.b16 %v1011
    %v2246 = vunpack.c.h.b16 %v1011
    %v2247 = vunpack.c.l.b16 %v1012
    %v2248 = vunpack.c.h.b16 %v1012
    %v2249 = vunpack.c.l.b16 %v1013
    %v2250 = vunpack.c.h.b16 %v1013
    %v2251 = vunpack.c.l.b16 %v1014
    %v2252 = vunpack.c.h.b16 %v1014
    %v2253 = vunpack.c.l.b16 %v1015
    %v2254 = vunpack.c.h.b16 %v1015
    %v2255 = vunpack.c.l.b16 %v1016
    %v2256 = vunpack.c.h.b16 %v1016
    %v2257 = vunpack.c.l.b16 %v1017
    %v2258 = vunpack.c.h.b16 %v1017
    %v2259 = vunpack.c.l.b16 %v1018
    %v2260 = vunpack.c.h.b16 %v1018
    %v2261 = vunpack.c.l.b16 %v1019
    %v2262 = vunpack.c.h.b16 %v1019
    %v2263 = vunpack.c.l.b16 %v1020
    %v2264 = vunpack.c.h.b16 %v1020
    %v2265 = vunpack.c.l.b16 %v1021
    %v2266 = vunpack.c.h.b16 %v1021
    %v2267 = vunpack.c.l.b16 %v1022
    %v2268 = vunpack.c.h.b16 %v1022
    %v2269 = vunpack.c.l.b16 %v1023
    %v2270 = vunpack.c.h.b16 %v1023
    %v2271 = vunpack.c.l.b16 %v1024
    %v2272 = vunpack.c.h.b16 %v1024
    %v2273 = vunpack.c.l.b16 %v1025
    %v2274 = vunpack.c.h.b16 %v1025
    %v2275 = vunpack.c.l.b16 %v1026
    %v2276 = vunpack.c.h.b16 %v1026
    %v2277 = vunpack.c.l.b16 %v1027
    %v2278 = vunpack.c.h.b16 %v1027
    %v2279 = vunpack.c.l.b16 %v1028
    %v2280 = vunpack.c.h.b16 %v1028
    %v2281 = vunpack.c.l.b16 %v1029
    %v2282 = vunpack.c.h.b16 %v1029
    %v2283 = vunpack.c.l.b16 %v1030
    %v2284 = vunpack.c.h.b16 %v1030
    %v2285 = vunpack.c.l.b16 %v1031
    %v2286 = vunpack.c.h.b16 %v1031
    %v2287 = vunpack.c.l.b16 %v1032
    %v2288 = vunpack.c.h.b16 %v1032
    %v2289 = vunpack.c.l.b16 %v1033
    %v2290 = vunpack.c.h.b16 %v1033
    %v2291 = vunpack.c.l.b16 %v1034
    %v2292 = vunpack.c.h.b16 %v1034
    %v2293 = vunpack.c.l.b16 %v1035
    %v2294 = vunpack.c.h.b16 %v1035
    %v2295 = vunpack.c.l.b16 %v1036
    %v2296 = vunpack.c.h.b16 %v1036
    %v2297 = vunpack.c.l.b16 %v1037
    %v2298 = vunpack.c.h.b16 %v1037
    %v2299 = vunpack.c.l.b16 %v1038
    %v2300 = vunpack.c.h.b16 %v1038
    %v2301 = vunpack.c.l.b16 %v1039
    %v2302 = vunpack.c.h.b16 %v1039
    %v2303 = vunpack.c.l.b16 %v1040
    %v2304 = vunpack.c.h.b16 %v1040
    %v2305 = vunpack.c.l.b16 %v1041
    %v2306 = vunpack.c.h.b16 %v1041
    %v2307 = vunpack.c.l.b16 %v1042
    %v2308 = vunpack.c.h.b16 %v1042
    %v2309 = vunpack.c.l.b16 %v1043
    %v2310 = vunpack.c.h.b16 %v1043
    %v2311 = vunpack.c.l.b16 %v1044
    %v2312 = vunpack.c.h.b16 %v1044
    %v2313 = vunpack.c.l.b16 %v1045
    %v2314 = vunpack.c.h.b16 %v1045
    %v2315 = vunpack.c.l.b16 %v1046
    %v2316 = vunpack.c.h.b16 %v1046
    %v2317 = vunpack.c.l.b16 %v1047
    %v2318 = vunpack.c.h.b16 %v1047
    %v2319 = vunpack.c.l.b16 %v1048
    %v2320 = vunpack.c.h.b16 %v1048
    %v2321 = vunpack.c.l.b16 %v1049
    %v2322 = vunpack.c.h.b16 %v1049
    %v2323 = vunpack.c.l.b16 %v1050
    %v2324 = vunpack.c.h.b16 %v1050
    %v2325 = vunpack.c.l.b16 %v1051
    %v2326 = vunpack.c.h.b16 %v1051
    %v2327 = vunpack.c.l.b16 %v1052
    %v2328 = vunpack.c.h.b16 %v1052
    %v2329 = vunpack.c.l.b16 %v1053
    %v2330 = vunpack.c.h.b16 %v1053
    %v2331 = vunpack.c.l.b16 %v1054
    %v2332 = vunpack.c.h.b16 %v1054
    %v2333 = vunpack.c.l.b16 %v1055
    %v2334 = vunpack.c.h.b16 %v1055
    %v2335 = vunpack.c.l.b16 %v1056
    %v2336 = vunpack.c.h.b16 %v1056
    %v2337 = vunpack.c.l.b16 %v1057
    %v2338 = vunpack.c.h.b16 %v1057
    %v2339 = vunpack.c.l.b16 %v1058
    %v2340 = vunpack.c.h.b16 %v1058
    %v2341 = vunpack.c.l.b16 %v1059
    %v2342 = vunpack.c.h.b16 %v1059
    %v2343 = vunpack.c.l.b16 %v1060
    %v2344 = vunpack.c.h.b16 %v1060
    %v2345 = vunpack.c.l.b16 %v1061
    %v2346 = vunpack.c.h.b16 %v1061
    %v2347 = vunpack.c.l.b16 %v1062
    %v2348 = vunpack.c.h.b16 %v1062
    %v2349 = vunpack.c.l.b16 %v1063
    %v2350 = vunpack.c.h.b16 %v1063
    %v2351 = vunpack.c.l.b16 %v1064
    %v2352 = vunpack.c.h.b16 %v1064
    %v2353 = vunpack.c.l.b16 %v1065
    %v2354 = vunpack.c.h.b16 %v1065
    %v2355 = vunpack.c.l.b16 %v1066
    %v2356 = vunpack.c.h.b16 %v1066
    %v2357 = vunpack.c.l.b16 %v1067
    %v2358 = vunpack.c.h.b16 %v1067
    %v2359 = vunpack.c.l.b16 %v1068
    %v2360 = vunpack.c.h.b16 %v1068
    %v2361 = vunpack.c.l.b16 %v1069
    %v2362 = vunpack.c.h.b16 %v1069
    %v2363 = vunpack.c.l.b16 %v1070
    %v2364 = vunpack.c.h.b16 %v1070
    %v2365 = vunpack.c.l.b16 %v1071
    %v2366 = vunpack.c.h.b16 %v1071
    %v2367 = vunpack.c.l.b16 %v1072
    %v2368 = vunpack.c.h.b16 %v1072
    %v2369 = vunpack.c.l.b16 %v1073
    %v2370 = vunpack.c.h.b16 %v1073
    %v2371 = vunpack.c.l.b16 %v1074
    %v2372 = vunpack.c.h.b16 %v1074
    %v2373 = vunpack.c.l.b16 %v1075
    %v2374 = vunpack.c.h.b16 %v1075
    %v2375 = vunpack.c.l.b16 %v1076
    %v2376 = vunpack.c.h.b16 %v1076
    %v2377 = vunpack.c.l.b16 %v1077
    %v2378 = vunpack.c.h.b16 %v1077
    %v2379 = vunpack.c.l.b16 %v1078
    %v2380 = vunpack.c.h.b16 %v1078
    %v2381 = vunpack.c.l.b16 %v1079
    %v2382 = vunpack.c.h.b16 %v1079
    %v2383 = vunpack.c.l.b16 %v1080
    %v2384 = vunpack.c.h.b16 %v1080
    %v2385 = vunpack.c.l.b16 %v1081
    %v2386 = vunpack.c.h.b16 %v1081
    %v2387 = vunpack.c.l.b16 %v1082
    %v2388 = vunpack.c.h.b16 %v1082
    %v2389 = vunpack.c.l.b16 %v1083
    %v2390 = vunpack.c.h.b16 %v1083
    %v2391 = vunpack.c.l.b16 %v1084
    %v2392 = vunpack.c.h.b16 %v1084
    %v2393 = vunpack.c.l.b16 %v1085
    %v2394 = vunpack.c.h.b16 %v1085
    %v2395 = vunpack.c.l.b16 %v1086
    %v2396 = vunpack.c.h.b16 %v1086
    %v2397 = vunpack.c.l.b16 %v1087
    %v2398 = vunpack.c.h.b16 %v1087
    %v2399 = vunpack.c.l.b16 %v1088
    %v2400 = vunpack.c.h.b16 %v1088
    %v2401 = vunpack.c.l.b16 %v1089
    %v2402 = vunpack.c.h.b16 %v1089
    %v2403 = vunpack.c.l.b16 %v1090
    %v2404 = vunpack.c.h.b16 %v1090
    %v2405 = vunpack.c.l.b16 %v1091
    %v2406 = vunpack.c.h.b16 %v1091
    %v2407 = vunpack.c.l.b16 %v1092
    %v2408 = vunpack.c.h.b16 %v1092
    %v2409 = vunpack.c.l.b16 %v1093
    %v2410 = vunpack.c.h.b16 %v1093
    %v2411 = vunpack.c.l.b16 %v1094
    %v2412 = vunpack.c.h.b16 %v1094
    %v2413 = vunpack.c.l.b16 %v1095
    %v2414 = vunpack.c.h.b16 %v1095
    %v2415 = vunpack.c.l.b16 %v1096
    %v2416 = vunpack.c.h.b16 %v1096
    %v2417 = vunpack.c.l.b16 %v1097
    %v2418 = vunpack.c.h.b16 %v1097
    %v2419 = vunpack.c.l.b16 %v1098
    %v2420 = vunpack.c.h.b16 %v1098
    %v2421 = vunpack.c.l.b16 %v1099
    %v2422 = vunpack.c.h.b16 %v1099
    %v2423 = vunpack.c.l.b16 %v1100
    %v2424 = vunpack.c.h.b16 %v1100
    %v2425 = vunpack.c.l.b16 %v1101
    %v2426 = vunpack.c.h.b16 %v1101
    %v2427 = vunpack.c.l.b16 %v1102
    %v2428 = vunpack.c.h.b16 %v1102
    %v2429 = vunpack.c.l.b16 %v1103
    %v2430 = vunpack.c.h.b16 %v1103
    %v2431 = vunpack.c.l.b16 %v1104
    %v2432 = vunpack.c.h.b16 %v1104
    %v2433 = vunpack.c.l.b16 %v1105
    %v2434 = vunpack.c.h.b16 %v1105
    %v2435 = vunpack.c.l.b16 %v1106
    %v2436 = vunpack.c.h.b16 %v1106
    %v2437 = vunpack.c.l.b16 %v1107
    %v2438 = vunpack.c.h.b16 %v1107
    %v2439 = vunpack.c.l.b16 %v1108
    %v2440 = vunpack.c.h.b16 %v1108
    %v2441 = vunpack.c.l.b16 %v1109
    %v2442 = vunpack.c.h.b16 %v1109
    %v2443 = vunpack.c.l.b16 %v1110
    %v2444 = vunpack.c.h.b16 %v1110
    %v2445 = vunpack.c.l.b16 %v1111
    %v2446 = vunpack.c.h.b16 %v1111
    %v2447 = vunpack.c.l.b16 %v1112
    %v2448 = vunpack.c.h.b16 %v1112
    %v2449 = vunpack.c.l.b16 %v1113
    %v2450 = vunpack.c.h.b16 %v1113
    %v2451 = vunpack.c.l.b16 %v1114
    %v2452 = vunpack.c.h.b16 %v1114
    %v2453 = vunpack.c.l.b16 %v1115
    %v2454 = vunpack.c.h.b16 %v1115
    %v2455 = vunpack.c.l.b16 %v1116
    %v2456 = vunpack.c.h.b16 %v1116
    %v2457 = vunpack.c.l.b16 %v1117
    %v2458 = vunpack.c.h.b16 %v1117
    %v2459 = vunpack.c.l.b16 %v1118
    %v2460 = vunpack.c.h.b16 %v1118
    %v2461 = vunpack.c.l.b16 %v1119
    %v2462 = vunpack.c.h.b16 %v1119
    %v2463 = vunpack.c.l.b16 %v1120
    %v2464 = vunpack.c.h.b16 %v1120
    %v2465 = vunpack.c.l.b16 %v1121
    %v2466 = vunpack.c.h.b16 %v1121
    %v2467 = vunpack.c.l.b16 %v1122
    %v2468 = vunpack.c.h.b16 %v1122
    %v2469 = vunpack.c.l.b16 %v1123
    %v2470 = vunpack.c.h.b16 %v1123
    %v2471 = vunpack.c.l.b16 %v1124
    %v2472 = vunpack.c.h.b16 %v1124
    %v2473 = vunpack.c.l.b16 %v1125
    %v2474 = vunpack.c.h.b16 %v1125
    %v2475 = vunpack.c.l.b16 %v1126
    %v2476 = vunpack.c.h.b16 %v1126
    %v2477 = vunpack.c.l.b16 %v1127
    %v2478 = vunpack.c.h.b16 %v1127
    %v2479 = vunpack.c.l.b16 %v1128
    %v2480 = vunpack.c.h.b16 %v1128
    %v2481 = vunpack.c.l.b16 %v1129
    %v2482 = vunpack.c.h.b16 %v1129
    %v2483 = vunpack.c.l.b16 %v1130
    %v2484 = vunpack.c.h.b16 %v1130
    %v2485 = vunpack.c.l.b16 %v1131
    %v2486 = vunpack.c.h.b16 %v1131
    %v2487 = vunpack.c.l.b16 %v1132
    %v2488 = vunpack.c.h.b16 %v1132
    %v2489 = vunpack.c.l.b16 %v1133
    %v2490 = vunpack.c.h.b16 %v1133
    %v2491 = vunpack.c.l.b16 %v1134
    %v2492 = vunpack.c.h.b16 %v1134
    %v2493 = vunpack.c.l.b16 %v1135
    %v2494 = vunpack.c.h.b16 %v1135
    %v2495 = vunpack.c.l.b16 %v1136
    %v2496 = vunpack.c.h.b16 %v1136
    %v2497 = vunpack.c.l.b16 %v1137
    %v2498 = vunpack.c.h.b16 %v1137
    %v2499 = vunpack.c.l.b16 %v1138
    %v2500 = vunpack.c.h.b16 %v1138
    %v2501 = vunpack.c.l.b16 %v1139
    %v2502 = vunpack.c.h.b16 %v1139
    %v2503 = vunpack.c.l.b16 %v1140
    %v2504 = vunpack.c.h.b16 %v1140
    %v2505 = vunpack.c.l.b16 %v1141
    %v2506 = vunpack.c.h.b16 %v1141
    %v2507 = vunpack.c.l.b16 %v1142
    %v2508 = vunpack.c.h.b16 %v1142
    %v2509 = vunpack.c.l.b16 %v1143
    %v2510 = vunpack.c.h.b16 %v1143
    %v2511 = vunpack.c.l.b16 %v1144
    %v2512 = vunpack.c.h.b16 %v1144
    %v2513 = vunpack.c.l.b16 %v1145
    %v2514 = vunpack.c.h.b16 %v1145
    %v2515 = vunpack.c.l.b16 %v1146
    %v2516 = vunpack.c.h.b16 %v1146
    %v2517 = vunpack.c.l.b16 %v1147
    %v2518 = vunpack.c.h.b16 %v1147
    %v2519 = vunpack.c.l.b16 %v1148
    %v2520 = vunpack.c.h.b16 %v1148
    %v2521 = vunpack.c.l.b16 %v1149
    %v2522 = vunpack.c.h.b16 %v1149
    %v2523 = vunpack.c.l.b16 %v1150
    %v2524 = vunpack.c.h.b16 %v1150
    %v2525 = vunpack.c.l.b16 %v1151
    %v2526 = vunpack.c.h.b16 %v1151
    %v2527 = vunpack.c.l.b16 %v1152
    %v2528 = vunpack.c.h.b16 %v1152
    %v2529 = vunpack.c.l.b16 %v1153
    %v2530 = vunpack.c.h.b16 %v1153
    %v2531 = vunpack.c.l.b16 %v1154
    %v2532 = vunpack.c.h.b16 %v1154
    %v2533 = vunpack.c.l.b16 %v1155
    %v2534 = vunpack.c.h.b16 %v1155
    %v2535 = vunpack.c.l.b16 %v1156
    %v2536 = vunpack.c.h.b16 %v1156
    %v2537 = vunpack.c.l.b16 %v1157
    %v2538 = vunpack.c.h.b16 %v1157
    %v2539 = vunpack.c.l.b16 %v1158
    %v2540 = vunpack.c.h.b16 %v1158
    %v2541 = vunpack.c.l.b16 %v1159
    %v2542 = vunpack.c.h.b16 %v1159
    %v2543 = vunpack.c.l.b16 %v1160
    %v2544 = vunpack.c.h.b16 %v1160
    %v2545 = vunpack.c.l.b16 %v1161
    %v2546 = vunpack.c.h.b16 %v1161
    %v2547 = vunpack.c.l.b16 %v1162
    %v2548 = vunpack.c.h.b16 %v1162
    %v2549 = vunpack.c.l.b16 %v1163
    %v2550 = vunpack.c.h.b16 %v1163
    %v2551 = vunpack.c.l.b16 %v1164
    %v2552 = vunpack.c.h.b16 %v1164
    %v2553 = vunpack.c.l.b16 %v1165
    %v2554 = vunpack.c.h.b16 %v1165
    %v2555 = vunpack.c.l.b16 %v1166
    %v2556 = vunpack.c.h.b16 %v1166
    %v2557 = vunpack.c.l.b16 %v1167
    %v2558 = vunpack.c.h.b16 %v1167
    %v2559 = vunpack.c.l.b16 %v1168
    %v2560 = vunpack.c.h.b16 %v1168
    %v2561 = vunpack.c.l.b16 %v1169
    %v2562 = vunpack.c.h.b16 %v1169
    %v2563 = vunpack.c.l.b16 %v1170
    %v2564 = vunpack.c.h.b16 %v1170
    %v2565 = vunpack.c.l.b16 %v1171
    %v2566 = vunpack.c.h.b16 %v1171
    %v2567 = vunpack.c.l.b16 %v1172
    %v2568 = vunpack.c.h.b16 %v1172
    %v2569 = vunpack.c.l.b16 %v1173
    %v2570 = vunpack.c.h.b16 %v1173
    %v2571 = vunpack.c.l.b16 %v1174
    %v2572 = vunpack.c.h.b16 %v1174
    %v2573 = vunpack.c.l.b16 %v1175
    %v2574 = vunpack.c.h.b16 %v1175
    %v2575 = vunpack.c.l.b16 %v1176
    %v2576 = vunpack.c.h.b16 %v1176
    %v2577 = vunpack.c.l.b16 %v1177
    %v2578 = vunpack.c.h.b16 %v1177
    %v2579 = vunpack.c.l.b16 %v1178
    %v2580 = vunpack.c.h.b16 %v1178
    %v2581 = vunpack.c.l.b16 %v1179
    %v2582 = vunpack.c.h.b16 %v1179
    %v2583 = vunpack.c.l.b16 %v1180
    %v2584 = vunpack.c.h.b16 %v1180
    %v2585 = vunpack.c.l.b16 %v1181
    %v2586 = vunpack.c.h.b16 %v1181
    %v2587 = vunpack.c.l.b16 %v1182
    %v2588 = vunpack.c.h.b16 %v1182
    %v2589 = vunpack.c.l.b16 %v1183
    %v2590 = vunpack.c.h.b16 %v1183
    %v2591 = vunpack.c.l.b16 %v1184
    %v2592 = vunpack.c.h.b16 %v1184
    %v2593 = vunpack.c.l.b16 %v1185
    %v2594 = vunpack.c.h.b16 %v1185
    %v2595 = vunpack.c.l.b16 %v1186
    %v2596 = vunpack.c.h.b16 %v1186
    %v2597 = vunpack.c.l.b16 %v1187
    %v2598 = vunpack.c.h.b16 %v1187
    %v2599 = vunpack.c.l.b16 %v1188
    %v2600 = vunpack.c.h.b16 %v1188
    %v2601 = vunpack.c.l.b16 %v1189
    %v2602 = vunpack.c.h.b16 %v1189
    %v2603 = vunpack.c.l.b16 %v1190
    %v2604 = vunpack.c.h.b16 %v1190
    %v2605 = vunpack.c.l.b16 %v1191
    %v2606 = vunpack.c.h.b16 %v1191
    %v2607 = vunpack.c.l.b16 %v1192
    %v2608 = vunpack.c.h.b16 %v1192
    %v2609 = vunpack.c.l.b16 %v1193
    %v2610 = vunpack.c.h.b16 %v1193
    %v2611 = vunpack.c.l.b16 %v1194
    %v2612 = vunpack.c.h.b16 %v1194
    %v2613 = vunpack.c.l.b16 %v1195
    %v2614 = vunpack.c.h.b16 %v1195
    %v2615 = vunpack.c.l.b16 %v1196
    %v2616 = vunpack.c.h.b16 %v1196
    %v2617 = vunpack.c.l.b16 %v1197
    %v2618 = vunpack.c.h.b16 %v1197
    %v2619 = vunpack.c.l.b16 %v1198
    %v2620 = vunpack.c.h.b16 %v1198
    %v2621 = vunpack.c.l.b16 %v1199
    %v2622 = vunpack.c.h.b16 %v1199
    %v2623 = vunpack.c.l.b16 %v1200
    %v2624 = vunpack.c.h.b16 %v1200
    %v2625 = vunpack.c.l.b16 %v1201
    %v2626 = vunpack.c.h.b16 %v1201
    %v2627 = vunpack.c.l.b16 %v1202
    %v2628 = vunpack.c.h.b16 %v1202
    %v2629 = vunpack.c.l.b16 %v1203
    %v2630 = vunpack.c.h.b16 %v1203
    %v2631 = vunpack.c.l.b16 %v1204
    %v2632 = vunpack.c.h.b16 %v1204
    %v2633 = vunpack.c.l.b16 %v1205
    %v2634 = vunpack.c.h.b16 %v1205
    %v2635 = vunpack.c.l.b16 %v1206
    %v2636 = vunpack.c.h.b16 %v1206
    %v2637 = vunpack.c.l.b16 %v1207
    %v2638 = vunpack.c.h.b16 %v1207
    %v2639 = vunpack.c.l.b16 %v1208
    %v2640 = vunpack.c.h.b16 %v1208
    %v2641 = vunpack.c.l.b16 %v1209
    %v2642 = vunpack.c.h.b16 %v1209
    %v2643 = vunpack.c.l.b16 %v1210
    %v2644 = vunpack.c.h.b16 %v1210
    %v2645 = vunpack.c.l.b16 %v1211
    %v2646 = vunpack.c.h.b16 %v1211
    %v2647 = vunpack.c.l.b16 %v1212
    %v2648 = vunpack.c.h.b16 %v1212
    %v2649 = vunpack.c.l.b16 %v1213
    %v2650 = vunpack.c.h.b16 %v1213
    %v2651 = vunpack.c.l.b16 %v1214
    %v2652 = vunpack.c.h.b16 %v1214
    %v2653 = vunpack.c.l.b16 %v1215
    %v2654 = vunpack.c.h.b16 %v1215
    %v2655 = vunpack.c.l.b16 %v1216
    %v2656 = vunpack.c.h.b16 %v1216
    %v2657 = vunpack.c.l.b16 %v1217
    %v2658 = vunpack.c.h.b16 %v1217
    %v2659 = vunpack.c.l.b16 %v1218
    %v2660 = vunpack.c.h.b16 %v1218
    %v2661 = vunpack.c.l.b16 %v1219
    %v2662 = vunpack.c.h.b16 %v1219
    %v2663 = vunpack.c.l.b16 %v1220
    %v2664 = vunpack.c.h.b16 %v1220
    %v2665 = vunpack.c.l.b16 %v1221
    %v2666 = vunpack.c.h.b16 %v1221
    %v2667 = vunpack.c.l.b16 %v1222
    %v2668 = vunpack.c.h.b16 %v1222
    %v2669 = vunpack.c.l.b16 %v1223
    %v2670 = vunpack.c.h.b16 %v1223
    %v2671 = vunpack.c.l.b16 %v1224
    %v2672 = vunpack.c.h.b16 %v1224
    %v2673 = vunpack.c.l.b16 %v1225
    %v2674 = vunpack.c.h.b16 %v1225
    %v2675 = vunpack.c.l.b16 %v1226
    %v2676 = vunpack.c.h.b16 %v1226
    %v2677 = vunpack.c.l.b16 %v1227
    %v2678 = vunpack.c.h.b16 %v1227
    %v2679 = vunpack.c.l.b16 %v1228
    %v2680 = vunpack.c.h.b16 %v1228
    %v2681 = vunpack.c.l.b16 %v1229
    %v2682 = vunpack.c.h.b16 %v1229
    %v2683 = vunpack.c.l.b16 %v1230
    %v2684 = vunpack.c.h.b16 %v1230
    %v2685 = vunpack.c.l.b16 %v1231
    %v2686 = vunpack.c.h.b16 %v1231
    %v2687 = vunpack.c.l.b16 %v1232
    %v2688 = vunpack.c.h.b16 %v1232
    %v2689 = vunpack.c.l.b16 %v1233
    %v2690 = vunpack.c.h.b16 %v1233
    %v2691 = vunpack.c.l.b16 %v1234
    %v2692 = vunpack.c.h.b16 %v1234
    %v2693 = vunpack.c.l.b16 %v1235
    %v2694 = vunpack.c.h.b16 %v1235
    %v2695 = vunpack.c.l.b16 %v1236
    %v2696 = vunpack.c.h.b16 %v1236
    %v2697 = vunpack.c.l.b16 %v1237
    %v2698 = vunpack.c.h.b16 %v1237
    %v2699 = vunpack.c.l.b16 %v1238
    %v2700 = vunpack.c.h.b16 %v1238
    %v2701 = vunpack.c.l.b16 %v1239
    %v2702 = vunpack.c.h.b16 %v1239
    %v2703 = vunpack.c.l.b16 %v1240
    %v2704 = vunpack.c.h.b16 %v1240
    %v2705 = vunpack.c.l.b16 %v1241
    %v2706 = vunpack.c.h.b16 %v1241
    %v2707 = vunpack.c.l.b16 %v1242
    %v2708 = vunpack.c.h.b16 %v1242
    %v2709 = vunpack.c.l.b16 %v1243
    %v2710 = vunpack.c.h.b16 %v1243
    %v2711 = vunpack.c.l.b16 %v1244
    %v2712 = vunpack.c.h.b16 %v1244
    %v2713 = vunpack.c.l.b16 %v1245
    %v2714 = vunpack.c.h.b16 %v1245
    %v2715 = vunpack.c.l.b16 %v1246
    %v2716 = vunpack.c.h.b16 %v1246
    %v2717 = vunpack.c.l.b16 %v1247
    %v2718 = vunpack.c.h.b16 %v1247
    %v2719 = vunpack.c.l.b16 %v1248
    %v2720 = vunpack.c.h.b16 %v1248
    %v2721 = vunpack.c.l.b16 %v1249
    %v2722 = vunpack.c.h.b16 %v1249
    %v2723 = vunpack.c.l.b16 %v1250
    %v2724 = vunpack.c.h.b16 %v1250
    %v2725 = vunpack.c.l.b16 %v1251
    %v2726 = vunpack.c.h.b16 %v1251
    %v2727 = vunpack.c.l.b16 %v1252
    %v2728 = vunpack.c.h.b16 %v1252
    %v2729 = vunpack.c.l.b16 %v1253
    %v2730 = vunpack.c.h.b16 %v1253
    %v2731 = vunpack.c.l.b16 %v1254
    %v2732 = vunpack.c.h.b16 %v1254
    %v2733 = vunpack.c.l.b16 %v1255
    %v2734 = vunpack.c.h.b16 %v1255
    %v2735 = vunpack.c.l.b16 %v1256
    %v2736 = vunpack.c.h.b16 %v1256
    %v2737 = vunpack.c.l.b16 %v1257
    %v2738 = vunpack.c.h.b16 %v1257
    %v2739 = vunpack.c.l.b16 %v1258
    %v2740 = vunpack.c.h.b16 %v1258
    %v2741 = vunpack.c.l.b16 %v1259
    %v2742 = vunpack.c.h.b16 %v1259
    %v2743 = vunpack.c.l.b16 %v1260
    %v2744 = vunpack.c.h.b16 %v1260
    %v2745 = vunpack.c.l.b16 %v1261
    %v2746 = vunpack.c.h.b16 %v1261
    %v2747 = vunpack.c.l.b16 %v1262
    %v2748 = vunpack.c.h.b16 %v1262
    %v2749 = vunpack.c.l.b16 %v1263
    %v2750 = vunpack.c.h.b16 %v1263
    %v2751 = vunpack.c.l.b16 %v1264
    %v2752 = vunpack.c.h.b16 %v1264
    %v2753 = vunpack.c.l.b16 %v1265
    %v2754 = vunpack.c.h.b16 %v1265
    %v2755 = vunpack.c.l.b16 %v1266
    %v2756 = vunpack.c.h.b16 %v1266
    %v2757 = vunpack.c.l.b16 %v1267
    %v2758 = vunpack.c.h.b16 %v1267
    %v2759 = vunpack.c.l.b16 %v1268
    %v2760 = vunpack.c.h.b16 %v1268
    %v2761 = vunpack.c.l.b16 %v1269
    %v2762 = vunpack.c.h.b16 %v1269
    %v2763 = vunpack.c.l.b16 %v1270
    %v2764 = vunpack.c.h.b16 %v1270
    %v2765 = vunpack.c.l.b16 %v1271
    %v2766 = vunpack.c.h.b16 %v1271
    %v2767 = vunpack.c.l.b16 %v1272
    %v2768 = vunpack.c.h.b16 %v1272
    %v2769 = vunpack.c.l.b16 %v1273
    %v2770 = vunpack.c.h.b16 %v1273
    %v2771 = vunpack.c.l.b16 %v1274
    %v2772 = vunpack.c.h.b16 %v1274
    %v2773 = vunpack.c.l.b16 %v1275
    %v2774 = vunpack.c.h.b16 %v1275
    %v2775 = vunpack.c.l.b16 %v1276
    %v2776 = vunpack.c.h.b16 %v1276
    %v2777 = vunpack.c.l.b16 %v1277
    %v2778 = vunpack.c.h.b16 %v1277
    %v2779 = vunpack.c.l.b16 %v1278
    %v2780 = vunpack.c.h.b16 %v1278
    %v2781 = vunpack.c.l.b16 %v1279
    %v2782 = vunpack.c.h.b16 %v1279
    %v2783 = vunpack.c.l.b16 %v1280
    %v2784 = vunpack.c.h.b16 %v1280
    %v2785 = vunpack.c.l.b16 %v1281
    %v2786 = vunpack.c.h.b16 %v1281
    %v2787 = vunpack.c.l.b16 %v1282
    %v2788 = vunpack.c.h.b16 %v1282
    %v2789 = vunpack.c.l.b16 %v1283
    %v2790 = vunpack.c.h.b16 %v1283
    %v2791 = vunpack.c.l.b16 %v1284
    %v2792 = vunpack.c.h.b16 %v1284
    %v2793 = vunpack.c.l.b16 %v1285
    %v2794 = vunpack.c.h.b16 %v1285
    %v2795 = vunpack.c.l.b16 %v1286
    %v2796 = vunpack.c.h.b16 %v1286
    %v2797 = vunpack.c.l.b16 %v1287
    %v2798 = vunpack.c.h.b16 %v1287
    %v2799 = vunpack.c.l.b16 %v1288
    %v2800 = vunpack.c.h.b16 %v1288
    %v2801 = vunpack.c.l.b16 %v1289
    %v2802 = vunpack.c.h.b16 %v1289
    %v2803 = vunpack.c.l.b16 %v1290
    %v2804 = vunpack.c.h.b16 %v1290
    %v2805 = vunpack.c.l.b16 %v1291
    %v2806 = vunpack.c.h.b16 %v1291
    %v2807 = vunpack.c.l.b16 %v1292
    %v2808 = vunpack.c.h.b16 %v1292
    %v2809 = vunpack.c.l.b16 %v1293
    %v2810 = vunpack.c.h.b16 %v1293
    %v2811 = vunpack.c.l.b16 %v1294
    %v2812 = vunpack.c.h.b16 %v1294
    %v2813 = vunpack.c.l.b16 %v1295
    %v2814 = vunpack.c.h.b16 %v1295
    %v2815 = vunpack.c.l.b16 %v1296
    %v2816 = vunpack.c.h.b16 %v1296
    %v2817 = vunpack.c.l.b16 %v1297
    %v2818 = vunpack.c.h.b16 %v1297
    %v2819 = vunpack.c.l.b16 %v1298
    %v2820 = vunpack.c.h.b16 %v1298
    %v2821 = vunpack.c.l.b16 %v1299
    %v2822 = vunpack.c.h.b16 %v1299
    %v2823 = vunpack.c.l.b16 %v1300
    %v2824 = vunpack.c.h.b16 %v1300
    %v2825 = vunpack.c.l.b16 %v1301
    %v2826 = vunpack.c.h.b16 %v1301
    %v2827 = vunpack.c.l.b16 %v1302
    %v2828 = vunpack.c.h.b16 %v1302
    %v2829 = vunpack.c.l.b16 %v1303
    %v2830 = vunpack.c.h.b16 %v1303
    %v2831 = vunpack.c.l.b16 %v1304
    %v2832 = vunpack.c.h.b16 %v1304
    %v2833 = vunpack.c.l.b16 %v1305
    %v2834 = vunpack.c.h.b16 %v1305
    %v2835 = vunpack.c.l.b16 %v1306
    %v2836 = vunpack.c.h.b16 %v1306
    %v2837 = vunpack.c.l.b16 %v1307
    %v2838 = vunpack.c.h.b16 %v1307
    %v2839 = vunpack.c.l.b16 %v1308
    %v2840 = vunpack.c.h.b16 %v1308
    %v2841 = vunpack.c.l.b16 %v1309
    %v2842 = vunpack.c.h.b16 %v1309
    %v2843 = vunpack.c.l.b16 %v1310
    %v2844 = vunpack.c.h.b16 %v1310
    %v2845 = vunpack.c.l.b16 %v1311
    %v2846 = vunpack.c.h.b16 %v1311
    %v2847 = vunpack.c.l.b16 %v1312
    %v2848 = vunpack.c.h.b16 %v1312
    %v2849 = vunpack.c.l.b16 %v1313
    %v2850 = vunpack.c.h.b16 %v1313
    %v2851 = vunpack.c.l.b16 %v1314
    %v2852 = vunpack.c.h.b16 %v1314
    %v2853 = vunpack.c.l.b16 %v1315
    %v2854 = vunpack.c.h.b16 %v1315
    %v2855 = vunpack.c.l.b16 %v1316
    %v2856 = vunpack.c.h.b16 %v1316
    %v2857 = vunpack.c.l.b16 %v1317
    %v2858 = vunpack.c.h.b16 %v1317
    %v2859 = vunpack.c.l.b16 %v1318
    %v2860 = vunpack.c.h.b16 %v1318
    %v2861 = vunpack.c.l.b16 %v1319
    %v2862 = vunpack.c.h.b16 %v1319
    %v2863 = vunpack.c.l.b16 %v1320
    %v2864 = vunpack.c.h.b16 %v1320
    %v2865 = vunpack.c.l.b16 %v1321
    %v2866 = vunpack.c.h.b16 %v1321
    %v2867 = vunpack.c.l.b16 %v1322
    %v2868 = vunpack.c.h.b16 %v1322
    %v2869 = vunpack.c.l.b16 %v1323
    %v2870 = vunpack.c.h.b16 %v1323
    %v2871 = vunpack.c.l.b16 %v1324
    %v2872 = vunpack.c.h.b16 %v1324
    %v2873 = vunpack.c.l.b16 %v1325
    %v2874 = vunpack.c.h.b16 %v1325
    %v2875 = vunpack.c.l.b16 %v1326
    %v2876 = vunpack.c.h.b16 %v1326
    %v2877 = vunpack.c.l.b16 %v1327
    %v2878 = vunpack.c.h.b16 %v1327
    %v2879 = vunpack.c.l.b16 %v1328
    %v2880 = vunpack.c.h.b16 %v1328
    %v2881 = vunpack.c.l.b16 %v1329
    %v2882 = vunpack.c.h.b16 %v1329
    %v2883 = vunpack.c.l.b16 %v1330
    %v2884 = vunpack.c.h.b16 %v1330
    %v2885 = vunpack.c.l.b16 %v1331
    %v2886 = vunpack.c.h.b16 %v1331
    %v2887 = vunpack.c.l.b16 %v1332
    %v2888 = vunpack.c.h.b16 %v1332
    %v2889 = vunpack.c.l.b16 %v1333
    %v2890 = vunpack.c.h.b16 %v1333
    %v2891 = vunpack.c.l.b16 %v1334
    %v2892 = vunpack.c.h.b16 %v1334
    %v2893 = vpack.c.b16 %v1873, %v1869
    %v2894 = vpack.c.b16 %v1874, %v1870
    %v2895 = vpack.c.b16 %v1875, %v1871
    %v2896 = vpack.c.b16 %v1876, %v1872
    %v2897 = vpack.c.b16 %v1881, %v1877
    %v2898 = vpack.c.b16 %v1882, %v1878
    %v2899 = vpack.c.b16 %v1883, %v1879
    %v2900 = vpack.c.b16 %v1884, %v1880
    %v2901 = vpack.c.b16 %v1889, %v1885
    %v2902 = vpack.c.b16 %v1890, %v1886
    %v2903 = vpack.c.b16 %v1891, %v1887
    %v2904 = vpack.c.b16 %v1892, %v1888
    %v2905 = vpack.c.b16 %v1897, %v1893
    %v2906 = vpack.c.b16 %v1898, %v1894
    %v2907 = vpack.c.b16 %v1899, %v1895
    %v2908 = vpack.c.b16 %v1900, %v1896
    %v2909 = vpack.c.b16 %v1905, %v1901
    %v2910 = vpack.c.b16 %v1906, %v1902
    %v2911 = vpack.c.b16 %v1907, %v1903
    %v2912 = vpack.c.b16 %v1908, %v1904
    %v2913 = vpack.c.b16 %v1913, %v1909
    %v2914 = vpack.c.b16 %v1914, %v1910
    %v2915 = vpack.c.b16 %v1915, %v1911
    %v2916 = vpack.c.b16 %v1916, %v1912
    %v2917 = vpack.c.b16 %v1921, %v1917
    %v2918 = vpack.c.b16 %v1922, %v1918
    %v2919 = vpack.c.b16 %v1923, %v1919
    %v2920 = vpack.c.b16 %v1924, %v1920
    %v2921 = vpack.c.b16 %v1929, %v1925
    %v2922 = vpack.c.b16 %v1930, %v1926
    %v2923 = vpack.c.b16 %v1931, %v1927
    %v2924 = vpack.c.b16 %v1932, %v1928
    %v2925 = vpack.c.b16 %v1937, %v1933
    %v2926 = vpack.c.b16 %v1938, %v1934
    %v2927 = vpack.c.b16 %v1939, %v1935
    %v2928 = vpack.c.b16 %v1940, %v1936
    %v2929 = vpack.c.b16 %v1945, %v1941
    %v2930 = vpack.c.b16 %v1946, %v1942
    %v2931 = vpack.c.b16 %v1947, %v1943
    %v2932 = vpack.c.b16 %v1948, %v1944
    %v2933 = vpack.c.b16 %v1953, %v1949
    %v2934 = vpack.c.b16 %v1954, %v1950
    %v2935 = vpack.c.b16 %v1955, %v1951
    %v2936 = vpack.c.b16 %v1956, %v1952
    %v2937 = vpack.c.b16 %v1961, %v1957
    %v2938 = vpack.c.b16 %v1962, %v1958
    %v2939 = vpack.c.b16 %v1963, %v1959
    %v2940 = vpack.c.b16 %v1964, %v1960
    %v2941 = vpack.c.b16 %v1969, %v1965
    %v2942 = vpack.c.b16 %v1970, %v1966
    %v2943 = vpack.c.b16 %v1971, %v1967
    %v2944 = vpack.c.b16 %v1972, %v1968
    %v2945 = vpack.c.b16 %v1977, %v1973
    %v2946 = vpack.c.b16 %v1978, %v1974
    %v2947 = vpack.c.b16 %v1979, %v1975
    %v2948 = vpack.c.b16 %v1980, %v1976
    %v2949 = vpack.c.b16 %v1985, %v1981
    %v2950 = vpack.c.b16 %v1986, %v1982
    %v2951 = vpack.c.b16 %v1987, %v1983
    %v2952 = vpack.c.b16 %v1988, %v1984
    %v2953 = vpack.c.b16 %v1993, %v1989
    %v2954 = vpack.c.b16 %v1994, %v1990
    %v2955 = vpack.c.b16 %v1995, %v1991
    %v2956 = vpack.c.b16 %v1996, %v1992
    %v2957 = vpack.c.b16 %v2001, %v1997
    %v2958 = vpack.c.b16 %v2002, %v1998
    %v2959 = vpack.c.b16 %v2003, %v1999
    %v2960 = vpack.c.b16 %v2004, %v2000
    %v2961 = vpack.c.b16 %v2009, %v2005
    %v2962 = vpack.c.b16 %v2010, %v2006
    %v2963 = vpack.c.b16 %v2011, %v2007
    %v2964 = vpack.c.b16 %v2012, %v2008
    %v2965 = vpack.c.b16 %v2017, %v2013
    %v2966 = vpack.c.b16 %v2018, %v2014
    %v2967 = vpack.c.b16 %v2019, %v2015
    %v2968 = vpack.c.b16 %v2020, %v2016
    %v2969 = vpack.c.b16 %v2025, %v2021
    %v2970 = vpack.c.b16 %v2026, %v2022
    %v2971 = vpack.c.b16 %v2027, %v2023
    %v2972 = vpack.c.b16 %v2028, %v2024
    %v2973 = vpack.c.b16 %v2033, %v2029
    %v2974 = vpack.c.b16 %v2034, %v2030
    %v2975 = vpack.c.b16 %v2035, %v2031
    %v2976 = vpack.c.b16 %v2036, %v2032
    %v2977 = vpack.c.b16 %v2041, %v2037
    %v2978 = vpack.c.b16 %v2042, %v2038
    %v2979 = vpack.c.b16 %v2043, %v2039
    %v2980 = vpack.c.b16 %v2044, %v2040
    %v2981 = vpack.c.b16 %v2049, %v2045
    %v2982 = vpack.c.b16 %v2050, %v2046
    %v2983 = vpack.c.b16 %v2051, %v2047
    %v2984 = vpack.c.b16 %v2052, %v2048
    %v2985 = vpack.c.b16 %v2057, %v2053
    %v2986 = vpack.c.b16 %v2058, %v2054
    %v2987 = vpack.c.b16 %v2059, %v2055
    %v2988 = vpack.c.b16 %v2060, %v2056
    %v2989 = vpack.c.b16 %v2065, %v2061
    %v2990 = vpack.c.b16 %v2066, %v2062
    %v2991 = vpack.c.b16 %v2067, %v2063
    %v2992 = vpack.c.b16 %v2068, %v2064
    %v2993 = vpack.c.b16 %v2073, %v2069
    %v2994 = vpack.c.b16 %v2074, %v2070
    %v2995 = vpack.c.b16 %v2075, %v2071
    %v2996 = vpack.c.b16 %v2076, %v2072
    %v2997 = vpack.c.b16 %v2081, %v2077
    %v2998 = vpack.c.b16 %v2082, %v2078
    %v2999 = vpack.c.b16 %v2083, %v2079
    %v3000 = vpack.c.b16 %v2084, %v2080
    %v3001 = vpack.c.b16 %v2089, %v2085
    %v3002 = vpack.c.b16 %v2090, %v2086
    %v3003 = vpack.c.b16 %v2091, %v2087
    %v3004 = vpack.c.b16 %v2092, %v2088
    %v3005 = vpack.c.b16 %v2097, %v2093
    %v3006 = vpack.c.b16 %v2098, %v2094
    %v3007 = vpack.c.b16 %v2099, %v2095
    %v3008 = vpack.c.b16 %v2100, %v2096
    %v3009 = vpack.c.b16 %v2105, %v2101
    %v3010 = vpack.c.b16 %v2106, %v2102
    %v3011 = vpack.c.b16 %v2107, %v2103
    %v3012 = vpack.c.b16 %v2108, %v2104
    %v3013 = vpack.c.b16 %v2113, %v2109
    %v3014 = vpack.c.b16 %v2114, %v2110
    %v3015 = vpack.c.b16 %v2115, %v2111
    %v3016 = vpack.c.b16 %v2116, %v2112
    %v3017 = vpack.c.b16 %v2121, %v2117
    %v3018 = vpack.c.b16 %v2122, %v2118
    %v3019 = vpack.c.b16 %v2123, %v2119
    %v3020 = vpack.c.b16 %v2124, %v2120
    %v3021 = vpack.c.b16 %v2129, %v2125
    %v3022 = vpack.c.b16 %v2130, %v2126
    %v3023 = vpack.c.b16 %v2131, %v2127
    %v3024 = vpack.c.b16 %v2132, %v2128
    %v3025 = vpack.c.b16 %v2137, %v2133
    %v3026 = vpack.c.b16 %v2138, %v2134
    %v3027 = vpack.c.b16 %v2139, %v2135
    %v3028 = vpack.c.b16 %v2140, %v2136
    %v3029 = vpack.c.b16 %v2145, %v2141
    %v3030 = vpack.c.b16 %v2146, %v2142
    %v3031 = vpack.c.b16 %v2147, %v2143
    %v3032 = vpack.c.b16 %v2148, %v2144
    %v3033 = vpack.c.b16 %v2153, %v2149
    %v3034 = vpack.c.b16 %v2154, %v2150
    %v3035 = vpack.c.b16 %v2155, %v2151
    %v3036 = vpack.c.b16 %v2156, %v2152
    %v3037 = vpack.c.b16 %v2161, %v2157
    %v3038 = vpack.c.b16 %v2162, %v2158
    %v3039 = vpack.c.b16 %v2163, %v2159
    %v3040 = vpack.c.b16 %v2164, %v2160
    %v3041 = vpack.c.b16 %v2169, %v2165
    %v3042 = vpack.c.b16 %v2170, %v2166
    %v3043 = vpack.c.b16 %v2171, %v2167
    %v3044 = vpack.c.b16 %v2172, %v2168
    %v3045 = vpack.c.b16 %v2177, %v2173
    %v3046 = vpack.c.b16 %v2178, %v2174
    %v3047 = vpack.c.b16 %v2179, %v2175
    %v3048 = vpack.c.b16 %v2180, %v2176
    %v3049 = vpack.c.b16 %v2185, %v2181
    %v3050 = vpack.c.b16 %v2186, %v2182
    %v3051 = vpack.c.b16 %v2187, %v2183
    %v3052 = vpack.c.b16 %v2188, %v2184
    %v3053 = vpack.c.b16 %v2193, %v2189
    %v3054 = vpack.c.b16 %v2194, %v2190
    %v3055 = vpack.c.b16 %v2195, %v2191
    %v3056 = vpack.c.b16 %v2196, %v2192
    %v3057 = vpack.c.b16 %v2201, %v2197
    %v3058 = vpack.c.b16 %v2202, %v2198
    %v3059 = vpack.c.b16 %v2203, %v2199
    %v3060 = vpack.c.b16 %v2204, %v2200
    %v3061 = vpack.c.b16 %v2209, %v2205
    %v3062 = vpack.c.b16 %v2210, %v2206
    %v3063 = vpack.c.b16 %v2211, %v2207
    %v3064 = vpack.c.b16 %v2212, %v2208
    %v3065 = vpack.c.b16 %v2217, %v2213
    %v3066 = vpack.c.b16 %v2218, %v2214
    %v3067 = vpack.c.b16 %v2219, %v2215
    %v3068 = vpack.c.b16 %v2220, %v2216
    %v3069 = vpack.c.b16 %v2225, %v2221
    %v3070 = vpack.c.b16 %v2226, %v2222
    %v3071 = vpack.c.b16 %v2227, %v2223
    %v3072 = vpack.c.b16 %v2228, %v2224
    %v3073 = vpack.c.b16 %v2233, %v2229
    %v3074 = vpack.c.b16 %v2234, %v2230
    %v3075 = vpack.c.b16 %v2235, %v2231
    %v3076 = vpack.c.b16 %v2236, %v2232
    %v3077 = vpack.c.b16 %v2241, %v2237
    %v3078 = vpack.c.b16 %v2242, %v2238
    %v3079 = vpack.c.b16 %v2243, %v2239
    %v3080 = vpack.c.b16 %v2244, %v2240
    %v3081 = vpack.c.b16 %v2249, %v2245
    %v3082 = vpack.c.b16 %v2250, %v2246
    %v3083 = vpack.c.b16 %v2251, %v2247
    %v3084 = vpack.c.b16 %v2252, %v2248
    %v3085 = vpack.c.b16 %v2257, %v2253
    %v3086 = vpack.c.b16 %v2258, %v2254
    %v3087 = vpack.c.b16 %v2259, %v2255
    %v3088 = vpack.c.b16 %v2260, %v2256
    %v3089 = vpack.c.b16 %v2265, %v2261
    %v3090 = vpack.c.b16 %v2266, %v2262
    %v3091 = vpack.c.b16 %v2267, %v2263
    %v3092 = vpack.c.b16 %v2268, %v2264
    %v3093 = vpack.c.b16 %v2273, %v2269
    %v3094 = vpack.c.b16 %v2274, %v2270
    %v3095 = vpack.c.b16 %v2275, %v2271
    %v3096 = vpack.c.b16 %v2276, %v2272
    %v3097 = vpack.c.b16 %v2281, %v2277
    %v3098 = vpack.c.b16 %v2282, %v2278
    %v3099 = vpack.c.b16 %v2283, %v2279
    %v3100 = vpack.c.b16 %v2284, %v2280
    %v3101 = vpack.c.b16 %v2289, %v2285
    %v3102 = vpack.c.b16 %v2290, %v2286
    %v3103 = vpack.c.b16 %v2291, %v2287
    %v3104 = vpack.c.b16 %v2292, %v2288
    %v3105 = vpack.c.b16 %v2297, %v2293
    %v3106 = vpack.c.b16 %v2298, %v2294
    %v3107 = vpack.c.b16 %v2299, %v2295
    %v3108 = vpack.c.b16 %v2300, %v2296
    %v3109 = vpack.c.b16 %v2305, %v2301
    %v3110 = vpack.c.b16 %v2306, %v2302
    %v3111 = vpack.c.b16 %v2307, %v2303
    %v3112 = vpack.c.b16 %v2308, %v2304
    %v3113 = vpack.c.b16 %v2313, %v2309
    %v3114 = vpack.c.b16 %v2314, %v2310
    %v3115 = vpack.c.b16 %v2315, %v2311
    %v3116 = vpack.c.b16 %v2316, %v2312
    %v3117 = vpack.c.b16 %v2321, %v2317
    %v3118 = vpack.c.b16 %v2322, %v2318
    %v3119 = vpack.c.b16 %v2323, %v2319
    %v3120 = vpack.c.b16 %v2324, %v2320
    %v3121 = vpack.c.b16 %v2329, %v2325
    %v3122 = vpack.c.b16 %v2330, %v2326
    %v3123 = vpack.c.b16 %v2331, %v2327
    %v3124 = vpack.c.b16 %v2332, %v2328
    %v3125 = vpack.c.b16 %v2337, %v2333
    %v3126 = vpack.c.b16 %v2338, %v2334
    %v3127 = vpack.c.b16 %v2339, %v2335
    %v3128 = vpack.c.b16 %v2340, %v2336
    %v3129 = vpack.c.b16 %v2345, %v2341
    %v3130 = vpack.c.b16 %v2346, %v2342
    %v3131 = vpack.c.b16 %v2347, %v2343
    %v3132 = vpack.c.b16 %v2348, %v2344
    %v3133 = vpack.c.b16 %v2353, %v2349
    %v3134 = vpack.c.b16 %v2354, %v2350
    %v3135 = vpack.c.b16 %v2355, %v2351
    %v3136 = vpack.c.b16 %v2356, %v2352
    %v3137 = vpack.c.b16 %v2361, %v2357
    %v3138 = vpack.c.b16 %v2362, %v2358
    %v3139 = vpack.c.b16 %v2363, %v2359
    %v3140 = vpack.c.b16 %v2364, %v2360
    %v3141 = vpack.c.b16 %v2369, %v2365
    %v3142 = vpack.c.b16 %v2370, %v2366
    %v3143 = vpack.c.b16 %v2371, %v2367
    %v3144 = vpack.c.b16 %v2372, %v2368
    %v3145 = vpack.c.b16 %v2377, %v2373
    %v3146 = vpack.c.b16 %v2378, %v2374
    %v3147 = vpack.c.b16 %v2379, %v2375
    %v3148 = vpack.c.b16 %v2380, %v2376
    %v3149 = vpack.c.b16 %v2385, %v2381
    %v3150 = vpack.c.b16 %v2386, %v2382
    %v3151 = vpack.c.b16 %v2387, %v2383
    %v3152 = vpack.c.b16 %v2388, %v2384
    %v3153 = vpack.c.b16 %v2393, %v2389
    %v3154 = vpack.c.b16 %v2394, %v2390
    %v3155 = vpack.c.b16 %v2395, %v2391
    %v3156 = vpack.c.b16 %v2396, %v2392
    %v3157 = vpack.c.b16 %v2401, %v2397
    %v3158 = vpack.c.b16 %v2402, %v2398
    %v3159 = vpack.c.b16 %v2403, %v2399
    %v3160 = vpack.c.b16 %v2404, %v2400
    %v3161 = vpack.c.b16 %v2409, %v2405
    %v3162 = vpack.c.b16 %v2410, %v2406
    %v3163 = vpack.c.b16 %v2411, %v2407
    %v3164 = vpack.c.b16 %v2412, %v2408
    %v3165 = vpack.c.b16 %v2417, %v2413
    %v3166 = vpack.c.b16 %v2418, %v2414
    %v3167 = vpack.c.b16 %v2419, %v2415
    %v3168 = vpack.c.b16 %v2420, %v2416
    %v3169 = vpack.c.b16 %v2425, %v2421
    %v3170 = vpack.c.b16 %v2426, %v2422
    %v3171 = vpack.c.b16 %v2427, %v2423
    %v3172 = vpack.c.b16 %v2428, %v2424
    %v3173 = vpack.c.b16 %v2433, %v2429
    %v3174 = vpack.c.b16 %v2434, %v2430
    %v3175 = vpack.c.b16 %v2435, %v2431
    %v3176 = vpack.c.b16 %v2436, %v2432
    %v3177 = vpack.c.b16 %v2441, %v2437
    %v3178 = vpack.c.b16 %v2442, %v2438
    %v3179 = vpack.c.b16 %v2443, %v2439
    %v3180 = vpack.c.b16 %v2444, %v2440
    %v3181 = vpack.c.b16 %v2449, %v2445
    %v3182 = vpack.c.b16 %v2450, %v2446
    %v3183 = vpack.c.b16 %v2451, %v2447
    %v3184 = vpack.c.b16 %v2452, %v2448
    %v3185 = vpack.c.b16 %v2457, %v2453
    %v3186 = vpack.c.b16 %v2458, %v2454
    %v3187 = vpack.c.b16 %v2459, %v2455
    %v3188 = vpack.c.b16 %v2460, %v2456
    %v3189 = vpack.c.b16 %v2465, %v2461
    %v3190 = vpack.c.b16 %v2466, %v2462
    %v3191 = vpack.c.b16 %v2467, %v2463
    %v3192 = vpack.c.b16 %v2468, %v2464
    %v3193 = vpack.c.b16 %v2473, %v2469
    %v3194 = vpack.c.b16 %v2474, %v2470
    %v3195 = vpack.c.b16 %v2475, %v2471
    %v3196 = vpack.c.b16 %v2476, %v2472
    %v3197 = vpack.c.b16 %v2481, %v2477
    %v3198 = vpack.c.b16 %v2482, %v2478
    %v3199 = vpack.c.b16 %v2483, %v2479
    %v3200 = vpack.c.b16 %v2484, %v2480
    %v3201 = vpack.c.b16 %v2489, %v2485
    %v3202 = vpack.c.b16 %v2490, %v2486
    %v3203 = vpack.c.b16 %v2491, %v2487
    %v3204 = vpack.c.b16 %v2492, %v2488
    %v3205 = vpack.c.b16 %v2497, %v2493
    %v3206 = vpack.c.b16 %v2498, %v2494
    %v3207 = vpack.c.b16 %v2499, %v2495
    %v3208 = vpack.c.b16 %v2500, %v2496
    %v3209 = vpack.c.b16 %v2505, %v2501
    %v3210 = vpack.c.b16 %v2506, %v2502
    %v3211 = vpack.c.b16 %v2507, %v2503
    %v3212 = vpack.c.b16 %v2508, %v2504
    %v3213 = vpack.c.b16 %v2513, %v2509
    %v3214 = vpack.c.b16 %v2514, %v2510
    %v3215 = vpack.c.b16 %v2515, %v2511
    %v3216 = vpack.c.b16 %v2516, %v2512
    %v3217 = vpack.c.b16 %v2521, %v2517
    %v3218 = vpack.c.b16 %v2522, %v2518
    %v3219 = vpack.c.b16 %v2523, %v2519
    %v3220 = vpack.c.b16 %v2524, %v2520
    %v3221 = vpack.c.b16 %v2529, %v2525
    %v3222 = vpack.c.b16 %v2530, %v2526
    %v3223 = vpack.c.b16 %v2531, %v2527
    %v3224 = vpack.c.b16 %v2532, %v2528
    %v3225 = vpack.c.b16 %v2537, %v2533
    %v3226 = vpack.c.b16 %v2538, %v2534
    %v3227 = vpack.c.b16 %v2539, %v2535
    %v3228 = vpack.c.b16 %v2540, %v2536
    %v3229 = vpack.c.b16 %v2545, %v2541
    %v3230 = vpack.c.b16 %v2546, %v2542
    %v3231 = vpack.c.b16 %v2547, %v2543
    %v3232 = vpack.c.b16 %v2548, %v2544
    %v3233 = vpack.c.b16 %v2553, %v2549
    %v3234 = vpack.c.b16 %v2554, %v2550
    %v3235 = vpack.c.b16 %v2555, %v2551
    %v3236 = vpack.c.b16 %v2556, %v2552
    %v3237 = vpack.c.b16 %v2561, %v2557
    %v3238 = vpack.c.b16 %v2562, %v2558
    %v3239 = vpack.c.b16 %v2563, %v2559
    %v3240 = vpack.c.b16 %v2564, %v2560
    %v3241 = vpack.c.b16 %v2569, %v2565
    %v3242 = vpack.c.b16 %v2570, %v2566
    %v3243 = vpack.c.b16 %v2571, %v2567
    %v3244 = vpack.c.b16 %v2572, %v2568
    %v3245 = vpack.c.b16 %v2577, %v2573
    %v3246 = vpack.c.b16 %v2578, %v2574
    %v3247 = vpack.c.b16 %v2579, %v2575
    %v3248 = vpack.c.b16 %v2580, %v2576
    %v3249 = vpack.c.b16 %v2585, %v2581
    %v3250 = vpack.c.b16 %v2586, %v2582
    %v3251 = vpack.c.b16 %v2587, %v2583
    %v3252 = vpack.c.b16 %v2588, %v2584
    %v3253 = vpack.c.b16 %v2593, %v2589
    %v3254 = vpack.c.b16 %v2594, %v2590
    %v3255 = vpack.c.b16 %v2595, %v2591
    %v3256 = vpack.c.b16 %v2596, %v2592
    %v3257 = vpack.c.b16 %v2601, %v2597
    %v3258 = vpack.c.b16 %v2602, %v2598
    %v3259 = vpack.c.b16 %v2603, %v2599
    %v3260 = vpack.c.b16 %v2604, %v2600
    %v3261 = vpack.c.b16 %v2609, %v2605
    %v3262 = vpack.c.b16 %v2610, %v2606
    %v3263 = vpack.c.b16 %v2611, %v2607
    %v3264 = vpack.c.b16 %v2612, %v2608
    %v3265 = vpack.c.b16 %v2617, %v2613
    %v3266 = vpack.c.b16 %v2618, %v2614
    %v3267 = vpack.c.b16 %v2619, %v2615
    %v3268 = vpack.c.b16 %v2620, %v2616
    %v3269 = vpack.c.b16 %v2625, %v2621
    %v3270 = vpack.c.b16 %v2626, %v2622
    %v3271 = vpack.c.b16 %v2627, %v2623
    %v3272 = vpack.c.b16 %v2628, %v2624
    %v3273 = vpack.c.b16 %v2633, %v2629
    %v3274 = vpack.c.b16 %v2634, %v2630
    %v3275 = vpack.c.b16 %v2635, %v2631
    %v3276 = vpack.c.b16 %v2636, %v2632
    %v3277 = vpack.c.b16 %v2641, %v2637
    %v3278 = vpack.c.b16 %v2642, %v2638
    %v3279 = vpack.c.b16 %v2643, %v2639
    %v3280 = vpack.c.b16 %v2644, %v2640
    %v3281 = vpack.c.b16 %v2649, %v2645
    %v3282 = vpack.c.b16 %v2650, %v2646
    %v3283 = vpack.c.b16 %v2651, %v2647
    %v3284 = vpack.c.b16 %v2652, %v2648
    %v3285 = vpack.c.b16 %v2657, %v2653
    %v3286 = vpack.c.b16 %v2658, %v2654
    %v3287 = vpack.c.b16 %v2659, %v2655
    %v3288 = vpack.c.b16 %v2660, %v2656
    %v3289 = vpack.c.b16 %v2665, %v2661
    %v3290 = vpack.c.b16 %v2666, %v2662
    %v3291 = vpack.c.b16 %v2667, %v2663
    %v3292 = vpack.c.b16 %v2668, %v2664
    %v3293 = vpack.c.b16 %v2673, %v2669
    %v3294 = vpack.c.b16 %v2674, %v2670
    %v3295 = vpack.c.b16 %v2675, %v2671
    %v3296 = vpack.c.b16 %v2676, %v2672
    %v3297 = vpack.c.b16 %v2681, %v2677
    %v3298 = vpack.c.b16 %v2682, %v2678
    %v3299 = vpack.c.b16 %v2683, %v2679
    %v3300 = vpack.c.b16 %v2684, %v2680
    %v3301 = vpack.c.b16 %v2689, %v2685
    %v3302 = vpack.c.b16 %v2690, %v2686
    %v3303 = vpack.c.b16 %v2691, %v2687
    %v3304 = vpack.c.b16 %v2692, %v2688
    %v3305 = vpack.c.b16 %v2697, %v2693
    %v3306 = vpack.c.b16 %v2698, %v2694
    %v3307 = vpack.c.b16 %v2699, %v2695
    %v3308 = vpack.c.b16 %v2700, %v2696
    %v3309 = vpack.c.b16 %v2705, %v2701
    %v3310 = vpack.c.b16 %v2706, %v2702
    %v3311 = vpack.c.b16 %v2707, %v2703
    %v3312 = vpack.c.b16 %v2708, %v2704
    %v3313 = vpack.c.b16 %v2713, %v2709
    %v3314 = vpack.c.b16 %v2714, %v2710
    %v3315 = vpack.c.b16 %v2715, %v2711
    %v3316 = vpack.c.b16 %v2716, %v2712
    %v3317 = vpack.c.b16 %v2721, %v2717
    %v3318 = vpack.c.b16 %v2722, %v2718
    %v3319 = vpack.c.b16 %v2723, %v2719
    %v3320 = vpack.c.b16 %v2724, %v2720
    %v3321 = vpack.c.b16 %v2729, %v2725
    %v3322 = vpack.c.b16 %v2730, %v2726
    %v3323 = vpack.c.b16 %v2731, %v2727
    %v3324 = vpack.c.b16 %v2732, %v2728
    %v3325 = vpack.c.b16 %v2737, %v2733
    %v3326 = vpack.c.b16 %v2738, %v2734
    %v3327 = vpack.c.b16 %v2739, %v2735
    %v3328 = vpack.c.b16 %v2740, %v2736
    %v3329 = vpack.c.b16 %v2745, %v2741
    %v3330 = vpack.c.b16 %v2746, %v2742
    %v3331 = vpack.c.b16 %v2747, %v2743
    %v3332 = vpack.c.b16 %v2748, %v2744
    %v3333 = vpack.c.b16 %v2753, %v2749
    %v3334 = vpack.c.b16 %v2754, %v2750
    %v3335 = vpack.c.b16 %v2755, %v2751
    %v3336 = vpack.c.b16 %v2756, %v2752
    %v3337 = vpack.c.b16 %v2761, %v2757
    %v3338 = vpack.c.b16 %v2762, %v2758
    %v3339 = vpack.c.b16 %v2763, %v2759
    %v3340 = vpack.c.b16 %v2764, %v2760
    %v3341 = vpack.c.b16 %v2769, %v2765
    %v3342 = vpack.c.b16 %v2770, %v2766
    %v3343 = vpack.c.b16 %v2771, %v2767
    %v3344 = vpack.c.b16 %v2772, %v2768
    %v3345 = vpack.c.b16 %v2777, %v2773
    %v3346 = vpack.c.b16 %v2778, %v2774
    %v3347 = vpack.c.b16 %v2779, %v2775
    %v3348 = vpack.c.b16 %v2780, %v2776
    %v3349 = vpack.c.b16 %v2785, %v2781
    %v3350 = vpack.c.b16 %v2786, %v2782
    %v3351 = vpack.c.b16 %v2787, %v2783
    %v3352 = vpack.c.b16 %v2788, %v2784
    %v3353 = vpack.c.b16 %v2793, %v2789
    %v3354 = vpack.c.b16 %v2794, %v2790
    %v3355 = vpack.c.b16 %v2795, %v2791
    %v3356 = vpack.c.b16 %v2796, %v2792
    %v3357 = vpack.c.b16 %v2801, %v2797
    %v3358 = vpack.c.b16 %v2802, %v2798
    %v3359 = vpack.c.b16 %v2803, %v2799
    %v3360 = vpack.c.b16 %v2804, %v2800
    %v3361 = vpack.c.b16 %v2809, %v2805
    %v3362 = vpack.c.b16 %v2810, %v2806
    %v3363 = vpack.c.b16 %v2811, %v2807
    %v3364 = vpack.c.b16 %v2812, %v2808
    %v3365 = vpack.c.b16 %v2817, %v2813
    %v3366 = vpack.c.b16 %v2818, %v2814
    %v3367 = vpack.c.b16 %v2819, %v2815
    %v3368 = vpack.c.b16 %v2820, %v2816
    %v3369 = vpack.c.b16 %v2825, %v2821
    %v3370 = vpack.c.b16 %v2826, %v2822
    %v3371 = vpack.c.b16 %v2827, %v2823
    %v3372 = vpack.c.b16 %v2828, %v2824
    %v3373 = vpack.c.b16 %v2833, %v2829
    %v3374 = vpack.c.b16 %v2834, %v2830
    %v3375 = vpack.c.b16 %v2835, %v2831
    %v3376 = vpack.c.b16 %v2836, %v2832
    %v3377 = vpack.c.b16 %v2841, %v2837
    %v3378 = vpack.c.b16 %v2842, %v2838
    %v3379 = vpack.c.b16 %v2843, %v2839
    %v3380 = vpack.c.b16 %v2844, %v2840
    %v3381 = vpack.c.b16 %v2849, %v2845
    %v3382 = vpack.c.b16 %v2850, %v2846
    %v3383 = vpack.c.b16 %v2851, %v2847
    %v3384 = vpack.c.b16 %v2852, %v2848
    %v3385 = vpack.c.b16 %v2857, %v2853
    %v3386 = vpack.c.b16 %v2858, %v2854
    %v3387 = vpack.c.b16 %v2859, %v2855
    %v3388 = vpack.c.b16 %v2860, %v2856
    %v3389 = vpack.c.b16 %v2865, %v2861
    %v3390 = vpack.c.b16 %v2866, %v2862
    %v3391 = vpack.c.b16 %v2867, %v2863
    %v3392 = vpack.c.b16 %v2868, %v2864
    %v3393 = vpack.c.b16 %v2873, %v2869
    %v3394 = vpack.c.b16 %v2874, %v2870
    %v3395 = vpack.c.b16 %v2875, %v2871
    %v3396 = vpack.c.b16 %v2876, %v2872
    %v3397 = vpack.c.b16 %v2881, %v2877
    %v3398 = vpack.c.b16 %v2882, %v2878
    %v3399 = vpack.c.b16 %v2883, %v2879
    %v3400 = vpack.c.b16 %v2884, %v2880
    %v3401 = vpack.c.b16 %v2889, %v2885
    %v3402 = vpack.c.b16 %v2890, %v2886
    %v3403 = vpack.c.b16 %v2891, %v2887
    %v3404 = vpack.c.b16 %v2892, %v2888
    %3917 = vmatprep.subr.bf16.mxu0 %v2894
    %3918 = vmatpush1.bf16.msra.mxu0 %v2893
    %3919 = vmatprep.subr.bf16.mxu0 %v2898
    %3920 = vmatpush1.bf16.msra.mxu0 %v2897
    %3921 = vmatprep.subr.bf16.mxu0 %v2902
    %3922 = vmatpush1.bf16.msra.mxu0 %v2901
    %3923 = vmatprep.subr.bf16.mxu0 %v2906
    %3924 = vmatpush1.bf16.msra.mxu0 %v2905
    %3925 = vmatprep.subr.bf16.mxu0 %v2910
    %3926 = vmatpush1.bf16.msra.mxu0 %v2909
    %3927 = vmatprep.subr.bf16.mxu0 %v2914
    %3928 = vmatpush1.bf16.msra.mxu0 %v2913
    %3929 = vmatprep.subr.bf16.mxu0 %v2918
    %3930 = vmatpush1.bf16.msra.mxu0 %v2917
    %3931 = vmatprep.subr.bf16.mxu0 %v2922
    %3932 = vmatpush1.bf16.msra.mxu0 %v2921
    %3933 = vmatprep.subr.bf16.mxu0 %v2926
    %3934 = vmatpush1.bf16.msra.mxu0 %v2925
    %3935 = vmatprep.subr.bf16.mxu0 %v2930
    %3936 = vmatpush1.bf16.msra.mxu0 %v2929
    %3937 = vmatprep.subr.bf16.mxu0 %v2934
    %3938 = vmatpush1.bf16.msra.mxu0 %v2933
    %3939 = vmatprep.subr.bf16.mxu0 %v2938
    %3940 = vmatpush1.bf16.msra.mxu0 %v2937
    %3941 = vmatprep.subr.bf16.mxu0 %v2942
    %3942 = vmatpush1.bf16.msra.mxu0 %v2941
    %3943 = vmatprep.subr.bf16.mxu0 %v2946
    %3944 = vmatpush1.bf16.msra.mxu0 %v2945
    %3945 = vmatprep.subr.bf16.mxu0 %v2950
    %3946 = vmatpush1.bf16.msra.mxu0 %v2949
    %3947 = vmatprep.subr.bf16.mxu0 %v2954
    %3948 = vmatpush1.bf16.msra.mxu0 %v2953
    %3949 = vmatprep.mubr.bf16.mxu0 %v808
    %3950 = vmatmul.mubr.bf16.gmra.mrb[0].mxu0 %v807
    %v3951 = vpop.f32.mrb[0].mxu0
    %v3952 = vadd.f32 %v1340, %v3951
    %v3953 = vpop.f32.mrb[0].mxu0
    %v3954 = vadd.f32 %v1344, %v3953
    %v3955 = vpop.f32.mrb[0].mxu0
    %v3956 = vadd.f32 %v1340, %v3955
    %v3957 = vpop.f32.mrb[0].mxu0
    %v3958 = vadd.f32 %v1344, %v3957
    %3959 = vdwg.mxu0
    %3960 = vmatprep.subr.bf16.mxu0 %v2958
    %3961 = vmatpush1.bf16.msra.mxu0 %v2957
    %3962 = vmatprep.subr.bf16.mxu0 %v2962
    %3963 = vmatpush1.bf16.msra.mxu0 %v2961
    %3964 = vmatprep.subr.bf16.mxu0 %v2966
    %3965 = vmatpush1.bf16.msra.mxu0 %v2965
    %3966 = vmatprep.subr.bf16.mxu0 %v2970
    %3967 = vmatpush1.bf16.msra.mxu0 %v2969
    %3968 = vmatprep.subr.bf16.mxu0 %v2974
    %3969 = vmatpush1.bf16.msra.mxu0 %v2973
    %3970 = vmatprep.subr.bf16.mxu0 %v2978
    %3971 = vmatpush1.bf16.msra.mxu0 %v2977
    %3972 = vmatprep.subr.bf16.mxu0 %v2982
    %3973 = vmatpush1.bf16.msra.mxu0 %v2981
    %3974 = vmatprep.subr.bf16.mxu0 %v2986
    %3975 = vmatpush1.bf16.msra.mxu0 %v2985
    %3976 = vmatprep.subr.bf16.mxu0 %v2990
    %3977 = vmatpush1.bf16.msra.mxu0 %v2989
    %3978 = vmatprep.subr.bf16.mxu0 %v2994
    %3979 = vmatpush1.bf16.msra.mxu0 %v2993
    %3980 = vmatprep.subr.bf16.mxu0 %v2998
    %3981 = vmatpush1.bf16.msra.mxu0 %v2997
    %3982 = vmatprep.subr.bf16.mxu0 %v3002
    %3983 = vmatpush1.bf16.msra.mxu0 %v3001
    %3984 = vmatprep.subr.bf16.mxu0 %v3006
    %3985 = vmatpush1.bf16.msra.mxu0 %v3005
    %3986 = vmatprep.subr.bf16.mxu0 %v3010
    %3987 = vmatpush1.bf16.msra.mxu0 %v3009
    %3988 = vmatprep.subr.bf16.mxu0 %v3014
    %3989 = vmatpush1.bf16.msra.mxu0 %v3013
    %3990 = vmatprep.subr.bf16.mxu0 %v3018
    %3991 = vmatpush1.bf16.msra.mxu0 %v3017
    %3992 = vmatprep.mubr.bf16.mxu0 %v810
    %3993 = vmatmul.mubr.bf16.gmra.mrb[0].mxu0 %v809
    %v3994 = vpop.f32.mrb[0].mxu0
    %v3995 = vadd.f32 %v3952, %v3994
    %v3996 = vpop.f32.mrb[0].mxu0
    %v3997 = vadd.f32 %v3954, %v3996
    %v3998 = vpop.f32.mrb[0].mxu0
    %v3999 = vadd.f32 %v3956, %v3998
    %v4000 = vpop.f32.mrb[0].mxu0
    %v4001 = vadd.f32 %v3958, %v4000
    %4002 = vdwg.mxu0
    %4003 = vmatprep.subr.bf16.mxu0 %v3022
    %4004 = vmatpush1.bf16.msra.mxu0 %v3021
    %4005 = vmatprep.subr.bf16.mxu0 %v3026
    %4006 = vmatpush1.bf16.msra.mxu0 %v3025
    %4007 = vmatprep.subr.bf16.mxu0 %v3030
    %4008 = vmatpush1.bf16.msra.mxu0 %v3029
    %4009 = vmatprep.subr.bf16.mxu0 %v3034
    %4010 = vmatpush1.bf16.msra.mxu0 %v3033
    %4011 = vmatprep.subr.bf16.mxu0 %v3038
    %4012 = vmatpush1.bf16.msra.mxu0 %v3037
    %4013 = vmatprep.subr.bf16.mxu0 %v3042
    %4014 = vmatpush1.bf16.msra.mxu0 %v3041
    %4015 = vmatprep.subr.bf16.mxu0 %v3046
    %4016 = vmatpush1.bf16.msra.mxu0 %v3045
    %4017 = vmatprep.subr.bf16.mxu0 %v3050
    %4018 = vmatpush1.bf16.msra.mxu0 %v3049
    %4019 = vmatprep.subr.bf16.mxu0 %v3054
    %4020 = vmatpush1.bf16.msra.mxu0 %v3053
    %4021 = vmatprep.subr.bf16.mxu0 %v3058
    %4022 = vmatpush1.bf16.msra.mxu0 %v3057
    %4023 = vmatprep.subr.bf16.mxu0 %v3062
    %4024 = vmatpush1.bf16.msra.mxu0 %v3061
    %4025 = vmatprep.subr.bf16.mxu0 %v3066
    %4026 = vmatpush1.bf16.msra.mxu0 %v3065
    %4027 = vmatprep.subr.bf16.mxu0 %v3070
    %4028 = vmatpush1.bf16.msra.mxu0 %v3069
    %4029 = vmatprep.subr.bf16.mxu0 %v3074
    %4030 = vmatpush1.bf16.msra.mxu0 %v3073
    %4031 = vmatprep.subr.bf16.mxu0 %v3078
    %4032 = vmatpush1.bf16.msra.mxu0 %v3077
    %4033 = vmatprep.subr.bf16.mxu0 %v3082
    %4034 = vmatpush1.bf16.msra.mxu0 %v3081
    %4035 = vmatprep.mubr.bf16.mxu0 %v812
    %4036 = vmatmul.mubr.bf16.gmra.mrb[0].mxu0 %v811
    %v4037 = vpop.f32.mrb[0].mxu0
    %v4038 = vadd.f32 %v3995, %v4037
    %v4039 = vpop.f32.mrb[0].mxu0
    %v4040 = vadd.f32 %v3997, %v4039
    %v4041 = vpop.f32.mrb[0].mxu0
    %v4042 = vadd.f32 %v3999, %v4041
    %v4043 = vpop.f32.mrb[0].mxu0
    %v4044 = vadd.f32 %v4001, %v4043
    %4045 = vdwg.mxu0
    %4046 = vmatprep.subr.bf16.mxu0 %v3086
    %4047 = vmatpush1.bf16.msra.mxu0 %v3085
    %4048 = vmatprep.subr.bf16.mxu0 %v3090
    %4049 = vmatpush1.bf16.msra.mxu0 %v3089
    %4050 = vmatprep.subr.bf16.mxu0 %v3094
    %4051 = vmatpush1.bf16.msra.mxu0 %v3093
    %4052 = vmatprep.subr.bf16.mxu0 %v3098
    %4053 = vmatpush1.bf16.msra.mxu0 %v3097
    %4054 = vmatprep.subr.bf16.mxu0 %v3102
    %4055 = vmatpush1.bf16.msra.mxu0 %v3101
    %4056 = vmatprep.subr.bf16.mxu0 %v3106
    %4057 = vmatpush1.bf16.msra.mxu0 %v3105
    %4058 = vmatprep.subr.bf16.mxu0 %v3110
    %4059 = vmatpush1.bf16.msra.mxu0 %v3109
    %4060 = vmatprep.subr.bf16.mxu0 %v3114
    %4061 = vmatpush1.bf16.msra.mxu0 %v3113
    %4062 = vmatprep.subr.bf16.mxu0 %v3118
    %4063 = vmatpush1.bf16.msra.mxu0 %v3117
    %4064 = vmatprep.subr.bf16.mxu0 %v3122
    %4065 = vmatpush1.bf16.msra.mxu0 %v3121
    %4066 = vmatprep.subr.bf16.mxu0 %v3126
    %4067 = vmatpush1.bf16.msra.mxu0 %v3125
    %4068 = vmatprep.subr.bf16.mxu0 %v3130
    %4069 = vmatpush1.bf16.msra.mxu0 %v3129
    %4070 = vmatprep.subr.bf16.mxu0 %v3134
    %4071 = vmatpush1.bf16.msra.mxu0 %v3133
    %4072 = vmatprep.subr.bf16.mxu0 %v3138
    %4073 = vmatpush1.bf16.msra.mxu0 %v3137
    %4074 = vmatprep.subr.bf16.mxu0 %v3142
    %4075 = vmatpush1.bf16.msra.mxu0 %v3141
    %4076 = vmatprep.subr.bf16.mxu0 %v3146
    %4077 = vmatpush1.bf16.msra.mxu0 %v3145
    %4078 = vmatprep.mubr.bf16.mxu0 %v814
    %4079 = vmatmul.mubr.bf16.gmra.mrb[0].mxu0 %v813
    %v4080 = vpop.f32.mrb[0].mxu0
    %v4081 = vadd.f32 %v4038, %v4080
    %v4082 = vpop.f32.mrb[0].mxu0
    %v4083 = vadd.f32 %v4040, %v4082
    %v4084 = vpop.f32.mrb[0].mxu0
    %v4085 = vadd.f32 %v4042, %v4084
    %v4086 = vpop.f32.mrb[0].mxu0
    %v4087 = vadd.f32 %v4044, %v4086
    %4088 = vdwg.mxu0
    %4089 = vmatprep.subr.bf16.mxu0 %v3150
    %4090 = vmatpush1.bf16.msra.mxu0 %v3149
    %4091 = vmatprep.subr.bf16.mxu0 %v3154
    %4092 = vmatpush1.bf16.msra.mxu0 %v3153
    %4093 = vmatprep.subr.bf16.mxu0 %v3158
    %4094 = vmatpush1.bf16.msra.mxu0 %v3157
    %4095 = vmatprep.subr.bf16.mxu0 %v3162
    %4096 = vmatpush1.bf16.msra.mxu0 %v3161
    %4097 = vmatprep.subr.bf16.mxu0 %v3166
    %4098 = vmatpush1.bf16.msra.mxu0 %v3165
    %4099 = vmatprep.subr.bf16.mxu0 %v3170
    %4100 = vmatpush1.bf16.msra.mxu0 %v3169
    %4101 = vmatprep.subr.bf16.mxu0 %v3174
    %4102 = vmatpush1.bf16.msra.mxu0 %v3173
    %4103 = vmatprep.subr.bf16.mxu0 %v3178
    %4104 = vmatpush1.bf16.msra.mxu0 %v3177
    %4105 = vmatprep.subr.bf16.mxu0 %v3182
    %4106 = vmatpush1.bf16.msra.mxu0 %v3181
    %4107 = vmatprep.subr.bf16.mxu0 %v3186
    %4108 = vmatpush1.bf16.msra.mxu0 %v3185
    %4109 = vmatprep.subr.bf16.mxu0 %v3190
    %4110 = vmatpush1.bf16.msra.mxu0 %v3189
    %4111 = vmatprep.subr.bf16.mxu0 %v3194
    %4112 = vmatpush1.bf16.msra.mxu0 %v3193
    %4113 = vmatprep.subr.bf16.mxu0 %v3198
    %4114 = vmatpush1.bf16.msra.mxu0 %v3197
    %4115 = vmatprep.subr.bf16.mxu0 %v3202
    %4116 = vmatpush1.bf16.msra.mxu0 %v3201
    %4117 = vmatprep.subr.bf16.mxu0 %v3206
    %4118 = vmatpush1.bf16.msra.mxu0 %v3205
    %4119 = vmatprep.subr.bf16.mxu0 %v3210
    %4120 = vmatpush1.bf16.msra.mxu0 %v3209
    %4121 = vmatprep.mubr.bf16.mxu0 %v816
    %4122 = vmatmul.mubr.bf16.gmra.mrb[0].mxu0 %v815
    %v4123 = vpop.f32.mrb[0].mxu0
    %v4124 = vadd.f32 %v4081, %v4123
    %v4125 = vpop.f32.mrb[0].mxu0
    %v4126 = vadd.f32 %v4083, %v4125
    %v4127 = vpop.f32.mrb[0].mxu0
    %v4128 = vadd.f32 %v4085, %v4127
    %v4129 = vpop.f32.mrb[0].mxu0
    %v4130 = vadd.f32 %v4087, %v4129
    %4131 = vdwg.mxu0
    %4132 = vmatprep.subr.bf16.mxu0 %v3214
    %4133 = vmatpush1.bf16.msra.mxu0 %v3213
    %4134 = vmatprep.subr.bf16.mxu0 %v3218
    %4135 = vmatpush1.bf16.msra.mxu0 %v3217
    %4136 = vmatprep.subr.bf16.mxu0 %v3222
    %4137 = vmatpush1.bf16.msra.mxu0 %v3221
    %4138 = vmatprep.subr.bf16.mxu0 %v3226
    %4139 = vmatpush1.bf16.msra.mxu0 %v3225
    %4140 = vmatprep.subr.bf16.mxu0 %v3230
    %4141 = vmatpush1.bf16.msra.mxu0 %v3229
    %4142 = vmatprep.subr.bf16.mxu0 %v3234
    %4143 = vmatpush1.bf16.msra.mxu0 %v3233
    %4144 = vmatprep.subr.bf16.mxu0 %v3238
    %4145 = vmatpush1.bf16.msra.mxu0 %v3237
    %4146 = vmatprep.subr.bf16.mxu0 %v3242
    %4147 = vmatpush1.bf16.msra.mxu0 %v3241
    %4148 = vmatprep.subr.bf16.mxu0 %v3246
    %4149 = vmatpush1.bf16.msra.mxu0 %v3245
    %4150 = vmatprep.subr.bf16.mxu0 %v3250
    %4151 = vmatpush1.bf16.msra.mxu0 %v3249
    %4152 = vmatprep.subr.bf16.mxu0 %v3254
    %4153 = vmatpush1.bf16.msra.mxu0 %v3253
    %4154 = vmatprep.subr.bf16.mxu0 %v3258
    %4155 = vmatpush1.bf16.msra.mxu0 %v3257
    %4156 = vmatprep.subr.bf16.mxu0 %v3262
    %4157 = vmatpush1.bf16.msra.mxu0 %v3261
    %4158 = vmatprep.subr.bf16.mxu0 %v3266
    %4159 = vmatpush1.bf16.msra.mxu0 %v3265
    %4160 = vmatprep.subr.bf16.mxu0 %v3270
    %4161 = vmatpush1.bf16.msra.mxu0 %v3269
    %4162 = vmatprep.subr.bf16.mxu0 %v3274
    %4163 = vmatpush1.bf16.msra.mxu0 %v3273
    %4164 = vmatprep.mubr.bf16.mxu0 %v818
    %4165 = vmatmul.mubr.bf16.gmra.mrb[0].mxu0 %v817
    %v4166 = vpop.f32.mrb[0].mxu0
    %v4167 = vadd.f32 %v4124, %v4166
    %v4168 = vpop.f32.mrb[0].mxu0
    %v4169 = vadd.f32 %v4126, %v4168
    %v4170 = vpop.f32.mrb[0].mxu0
    %v4171 = vadd.f32 %v4128, %v4170
    %v4172 = vpop.f32.mrb[0].mxu0
    %v4173 = vadd.f32 %v4130, %v4172
    %4174 = vdwg.mxu0
    %4175 = vmatprep.subr.bf16.mxu0 %v3278
    %4176 = vmatpush1.bf16.msra.mxu0 %v3277
    %4177 = vmatprep.subr.bf16.mxu0 %v3282
    %4178 = vmatpush1.bf16.msra.mxu0 %v3281
    %4179 = vmatprep.subr.bf16.mxu0 %v3286
    %4180 = vmatpush1.bf16.msra.mxu0 %v3285
    %4181 = vmatprep.subr.bf16.mxu0 %v3290
    %4182 = vmatpush1.bf16.msra.mxu0 %v3289
    %4183 = vmatprep.subr.bf16.mxu0 %v3294
    %4184 = vmatpush1.bf16.msra.mxu0 %v3293
    %4185 = vmatprep.subr.bf16.mxu0 %v3298
    %4186 = vmatpush1.bf16.msra.mxu0 %v3297
    %4187 = vmatprep.subr.bf16.mxu0 %v3302
    %4188 = vmatpush1.bf16.msra.mxu0 %v3301
    %4189 = vmatprep.subr.bf16.mxu0 %v3306
    %4190 = vmatpush1.bf16.msra.mxu0 %v3305
    %4191 = vmatprep.subr.bf16.mxu0 %v3310
    %4192 = vmatpush1.bf16.msra.mxu0 %v3309
    %4193 = vmatprep.subr.bf16.mxu0 %v3314
    %4194 = vmatpush1.bf16.msra.mxu0 %v3313
    %4195 = vmatprep.subr.bf16.mxu0 %v3318
    %4196 = vmatpush1.bf16.msra.mxu0 %v3317
    %4197 = vmatprep.subr.bf16.mxu0 %v3322
    %4198 = vmatpush1.bf16.msra.mxu0 %v3321
    %4199 = vmatprep.subr.bf16.mxu0 %v3326
    %4200 = vmatpush1.bf16.msra.mxu0 %v3325
    %4201 = vmatprep.subr.bf16.mxu0 %v3330
    %4202 = vmatpush1.bf16.msra.mxu0 %v3329
    %4203 = vmatprep.subr.bf16.mxu0 %v3334
    %4204 = vmatpush1.bf16.msra.mxu0 %v3333
    %4205 = vmatprep.subr.bf16.mxu0 %v3338
    %4206 = vmatpush1.bf16.msra.mxu0 %v3337
    %4207 = vmatprep.mubr.bf16.mxu0 %v820
    %4208 = vmatmul.mubr.bf16.gmra.mrb[0].mxu0 %v819
    %v4209 = vpop.f32.mrb[0].mxu0
    %v4210 = vadd.f32 %v4167, %v4209
    %v4211 = vpop.f32.mrb[0].mxu0
    %v4212 = vadd.f32 %v4169, %v4211
    %v4213 = vpop.f32.mrb[0].mxu0
    %v4214 = vadd.f32 %v4171, %v4213
    %v4215 = vpop.f32.mrb[0].mxu0
    %v4216 = vadd.f32 %v4173, %v4215
    %4217 = vdwg.mxu0
    %4218 = vmatprep.subr.bf16.mxu0 %v3342
    %4219 = vmatpush1.bf16.msra.mxu0 %v3341
    %4220 = vmatprep.subr.bf16.mxu0 %v3346
    %4221 = vmatpush1.bf16.msra.mxu0 %v3345
    %4222 = vmatprep.subr.bf16.mxu0 %v3350
    %4223 = vmatpush1.bf16.msra.mxu0 %v3349
    %4224 = vmatprep.subr.bf16.mxu0 %v3354
    %4225 = vmatpush1.bf16.msra.mxu0 %v3353
    %4226 = vmatprep.subr.bf16.mxu0 %v3358
    %4227 = vmatpush1.bf16.msra.mxu0 %v3357
    %4228 = vmatprep.subr.bf16.mxu0 %v3362
    %4229 = vmatpush1.bf16.msra.mxu0 %v3361
    %4230 = vmatprep.subr.bf16.mxu0 %v3366
    %4231 = vmatpush1.bf16.msra.mxu0 %v3365
    %4232 = vmatprep.subr.bf16.mxu0 %v3370
    %4233 = vmatpush1.bf16.msra.mxu0 %v3369
    %4234 = vmatprep.subr.bf16.mxu0 %v3374
    %4235 = vmatpush1.bf16.msra.mxu0 %v3373
    %4236 = vmatprep.subr.bf16.mxu0 %v3378
    %4237 = vmatpush1.bf16.msra.mxu0 %v3377
    %4238 = vmatprep.subr.bf16.mxu0 %v3382
    %4239 = vmatpush1.bf16.msra.mxu0 %v3381
    %4240 = vmatprep.subr.bf16.mxu0 %v3386
    %4241 = vmatpush1.bf16.msra.mxu0 %v3385
    %4242 = vmatprep.subr.bf16.mxu0 %v3390
    %4243 = vmatpush1.bf16.msra.mxu0 %v3389
    %4244 = vmatprep.subr.bf16.mxu0 %v3394
    %4245 = vmatpush1.bf16.msra.mxu0 %v3393
    %4246 = vmatprep.subr.bf16.mxu0 %v3398
    %4247 = vmatpush1.bf16.msra.mxu0 %v3397
    %4248 = vmatprep.subr.bf16.mxu0 %v3402
    %4249 = vmatpush1.bf16.msra.mxu0 %v3401
    %4250 = vmatprep.mubr.bf16.mxu0 %v822
    %4251 = vmatmul.mubr.bf16.gmra.mrb[0].mxu0 %v821
    %v4252 = vpop.f32.mrb[0].mxu0
    %v4253 = vadd.f32 %v4210, %v4252
    %v4254 = vpop.f32.mrb[0].mxu0
    %v4255 = vadd.f32 %v4212, %v4254
    %v4256 = vpop.f32.mrb[0].mxu0
    %v4257 = vadd.f32 %v4214, %v4256
    %v4258 = vpop.f32.mrb[0].mxu0
    %v4259 = vadd.f32 %v4216, %v4258
    %4260 = vdwg.mxu0
    %4261 = vmatprep.subr.bf16.mxu0 %v2896
    %4262 = vmatpush1.bf16.msra.mxu0 %v2895
    %4263 = vmatprep.subr.bf16.mxu0 %v2900
    %4264 = vmatpush1.bf16.msra.mxu0 %v2899
    %4265 = vmatprep.subr.bf16.mxu0 %v2904
    %4266 = vmatpush1.bf16.msra.mxu0 %v2903
    %4267 = vmatprep.subr.bf16.mxu0 %v2908
    %4268 = vmatpush1.bf16.msra.mxu0 %v2907
    %4269 = vmatprep.subr.bf16.mxu0 %v2912
    %4270 = vmatpush1.bf16.msra.mxu0 %v2911
    %4271 = vmatprep.subr.bf16.mxu0 %v2916
    %4272 = vmatpush1.bf16.msra.mxu0 %v2915
    %4273 = vmatprep.subr.bf16.mxu0 %v2920
    %4274 = vmatpush1.bf16.msra.mxu0 %v2919
    %4275 = vmatprep.subr.bf16.mxu0 %v2924
    %4276 = vmatpush1.bf16.msra.mxu0 %v2923
    %4277 = vmatprep.subr.bf16.mxu0 %v2928
    %4278 = vmatpush1.bf16.msra.mxu0 %v2927
    %4279 = vmatprep.subr.bf16.mxu0 %v2932
    %4280 = vmatpush1.bf16.msra.mxu0 %v2931
    %4281 = vmatprep.subr.bf16.mxu0 %v2936
    %4282 = vmatpush1.bf16.msra.mxu0 %v2935
    %4283 = vmatprep.subr.bf16.mxu0 %v2940
    %4284 = vmatpush1.bf16.msra.mxu0 %v2939
    %4285 = vmatprep.subr.bf16.mxu0 %v2944
    %4286 = vmatpush1.bf16.msra.mxu0 %v2943
    %4287 = vmatprep.subr.bf16.mxu0 %v2948
    %4288 = vmatpush1.bf16.msra.mxu0 %v2947
    %4289 = vmatprep.subr.bf16.mxu0 %v2952
    %4290 = vmatpush1.bf16.msra.mxu0 %v2951
    %4291 = vmatprep.subr.bf16.mxu0 %v2956
    %4292 = vmatpush1.bf16.msra.mxu0 %v2955
    %4293 = vmatprep.mubr.bf16.mxu0 %v808
    %4294 = vmatmul.mubr.bf16.gmra.mrb[0].mxu0 %v807
    %v4295 = vpop.f32.mrb[0].mxu0
    %v4296 = vadd.f32 %v1348, %v4295
    %v4297 = vpop.f32.mrb[0].mxu0
    %v4298 = vadd.f32 %v1352, %v4297
    %v4299 = vpop.f32.mrb[0].mxu0
    %v4300 = vadd.f32 %v1348, %v4299
    %v4301 = vpop.f32.mrb[0].mxu0
    %v4302 = vadd.f32 %v1352, %v4301
    %4303 = vdwg.mxu0
    %4304 = vmatprep.subr.bf16.mxu0 %v2960
    %4305 = vmatpush1.bf16.msra.mxu0 %v2959
    %4306 = vmatprep.subr.bf16.mxu0 %v2964
    %4307 = vmatpush1.bf16.msra.mxu0 %v2963
    %4308 = vmatprep.subr.bf16.mxu0 %v2968
    %4309 = vmatpush1.bf16.msra.mxu0 %v2967
    %4310 = vmatprep.subr.bf16.mxu0 %v2972
    %4311 = vmatpush1.bf16.msra.mxu0 %v2971
    %4312 = vmatprep.subr.bf16.mxu0 %v2976
    %4313 = vmatpush1.bf16.msra.mxu0 %v2975
    %4314 = vmatprep.subr.bf16.mxu0 %v2980
    %4315 = vmatpush1.bf16.msra.mxu0 %v2979
    %4316 = vmatprep.subr.bf16.mxu0 %v2984
    %4317 = vmatpush1.bf16.msra.mxu0 %v2983
    %4318 = vmatprep.subr.bf16.mxu0 %v2988
    %4319 = vmatpush1.bf16.msra.mxu0 %v2987
    %4320 = vmatprep.subr.bf16.mxu0 %v2992
    %4321 = vmatpush1.bf16.msra.mxu0 %v2991
    %4322 = vmatprep.subr.bf16.mxu0 %v2996
    %4323 = vmatpush1.bf16.msra.mxu0 %v2995
    %4324 = vmatprep.subr.bf16.mxu0 %v3000
    %4325 = vmatpush1.bf16.msra.mxu0 %v2999
    %4326 = vmatprep.subr.bf16.mxu0 %v3004
    %4327 = vmatpush1.bf16.msra.mxu0 %v3003
    %4328 = vmatprep.subr.bf16.mxu0 %v3008
    %4329 = vmatpush1.bf16.msra.mxu0 %v3007
    %4330 = vmatprep.subr.bf16.mxu0 %v3012
    %4331 = vmatpush1.bf16.msra.mxu0 %v3011
    %4332 = vmatprep.subr.bf16.mxu0 %v3016
    %4333 = vmatpush1.bf16.msra.mxu0 %v3015
    %4334 = vmatprep.subr.bf16.mxu0 %v3020
    %4335 = vmatpush1.bf16.msra.mxu0 %v3019
    %4336 = vmatprep.mubr.bf16.mxu0 %v810
    %4337 = vmatmul.mubr.bf16.gmra.mrb[0].mxu0 %v809
    %v4338 = vpop.f32.mrb[0].mxu0
    %v4339 = vadd.f32 %v4296, %v4338
    %v4340 = vpop.f32.mrb[0].mxu0
    %v4341 = vadd.f32 %v4298, %v4340
    %v4342 = vpop.f32.mrb[0].mxu0
    %v4343 = vadd.f32 %v4300, %v4342
    %v4344 = vpop.f32.mrb[0].mxu0
    %v4345 = vadd.f32 %v4302, %v4344
    %4346 = vdwg.mxu0
    %4347 = vmatprep.subr.bf16.mxu0 %v3024
    %4348 = vmatpush1.bf16.msra.mxu0 %v3023
    %4349 = vmatprep.subr.bf16.mxu0 %v3028
    %4350 = vmatpush1.bf16.msra.mxu0 %v3027
    %4351 = vmatprep.subr.bf16.mxu0 %v3032
    %4352 = vmatpush1.bf16.msra.mxu0 %v3031
    %4353 = vmatprep.subr.bf16.mxu0 %v3036
    %4354 = vmatpush1.bf16.msra.mxu0 %v3035
    %4355 = vmatprep.subr.bf16.mxu0 %v3040
    %4356 = vmatpush1.bf16.msra.mxu0 %v3039
    %4357 = vmatprep.subr.bf16.mxu0 %v3044
    %4358 = vmatpush1.bf16.msra.mxu0 %v3043
    %4359 = vmatprep.subr.bf16.mxu0 %v3048
    %4360 = vmatpush1.bf16.msra.mxu0 %v3047
    %4361 = vmatprep.subr.bf16.mxu0 %v3052
    %4362 = vmatpush1.bf16.msra.mxu0 %v3051
    %4363 = vmatprep.subr.bf16.mxu0 %v3056
    %4364 = vmatpush1.bf16.msra.mxu0 %v3055
    %4365 = vmatprep.subr.bf16.mxu0 %v3060
    %4366 = vmatpush1.bf16.msra.mxu0 %v3059
    %4367 = vmatprep.subr.bf16.mxu0 %v3064
    %4368 = vmatpush1.bf16.msra.mxu0 %v3063
    %4369 = vmatprep.subr.bf16.mxu0 %v3068
    %4370 = vmatpush1.bf16.msra.mxu0 %v3067
    %4371 = vmatprep.subr.bf16.mxu0 %v3072
    %4372 = vmatpush1.bf16.msra.mxu0 %v3071
    %4373 = vmatprep.subr.bf16.mxu0 %v3076
    %4374 = vmatpush1.bf16.msra.mxu0 %v3075
    %4375 = vmatprep.subr.bf16.mxu0 %v3080
    %4376 = vmatpush1.bf16.msra.mxu0 %v3079
    %4377 = vmatprep.subr.bf16.mxu0 %v3084
    %4378 = vmatpush1.bf16.msra.mxu0 %v3083
    %4379 = vmatprep.mubr.bf16.mxu0 %v812
    %4380 = vmatmul.mubr.bf16.gmra.mrb[0].mxu0 %v811
    %v4381 = vpop.f32.mrb[0].mxu0
    %v4382 = vadd.f32 %v4339, %v4381
    %v4383 = vpop.f32.mrb[0].mxu0
    %v4384 = vadd.f32 %v4341, %v4383
    %v4385 = vpop.f32.mrb[0].mxu0
    %v4386 = vadd.f32 %v4343, %v4385
    %v4387 = vpop.f32.mrb[0].mxu0
    %v4388 = vadd.f32 %v4345, %v4387
    %4389 = vdwg.mxu0
    %4390 = vmatprep.subr.bf16.mxu0 %v3088
    %4391 = vmatpush1.bf16.msra.mxu0 %v3087
    %4392 = vmatprep.subr.bf16.mxu0 %v3092
    %4393 = vmatpush1.bf16.msra.mxu0 %v3091
    %4394 = vmatprep.subr.bf16.mxu0 %v3096
    %4395 = vmatpush1.bf16.msra.mxu0 %v3095
    %4396 = vmatprep.subr.bf16.mxu0 %v3100
    %4397 = vmatpush1.bf16.msra.mxu0 %v3099
    %4398 = vmatprep.subr.bf16.mxu0 %v3104
    %4399 = vmatpush1.bf16.msra.mxu0 %v3103
    %4400 = vmatprep.subr.bf16.mxu0 %v3108
    %4401 = vmatpush1.bf16.msra.mxu0 %v3107
    %4402 = vmatprep.subr.bf16.mxu0 %v3112
    %4403 = vmatpush1.bf16.msra.mxu0 %v3111
    %4404 = vmatprep.subr.bf16.mxu0 %v3116
    %4405 = vmatpush1.bf16.msra.mxu0 %v3115
    %4406 = vmatprep.subr.bf16.mxu0 %v3120
    %4407 = vmatpush1.bf16.msra.mxu0 %v3119
    %4408 = vmatprep.subr.bf16.mxu0 %v3124
    %4409 = vmatpush1.bf16.msra.mxu0 %v3123
    %4410 = vmatprep.subr.bf16.mxu0 %v3128
    %4411 = vmatpush1.bf16.msra.mxu0 %v3127
    %4412 = vmatprep.subr.bf16.mxu0 %v3132
    %4413 = vmatpush1.bf16.msra.mxu0 %v3131
    %4414 = vmatprep.subr.bf16.mxu0 %v3136
    %4415 = vmatpush1.bf16.msra.mxu0 %v3135
    %4416 = vmatprep.subr.bf16.mxu0 %v3140
    %4417 = vmatpush1.bf16.msra.mxu0 %v3139
    %4418 = vmatprep.subr.bf16.mxu0 %v3144
    %4419 = vmatpush1.bf16.msra.mxu0 %v3143
    %4420 = vmatprep.subr.bf16.mxu0 %v3148
    %4421 = vmatpush1.bf16.msra.mxu0 %v3147
    %4422 = vmatprep.mubr.bf16.mxu0 %v814
    %4423 = vmatmul.mubr.bf16.gmra.mrb[0].mxu0 %v813
    %v4424 = vpop.f32.mrb[0].mxu0
    %v4425 = vadd.f32 %v4382, %v4424
    %v4426 = vpop.f32.mrb[0].mxu0
    %v4427 = vadd.f32 %v4384, %v4426
    %v4428 = vpop.f32.mrb[0].mxu0
    %v4429 = vadd.f32 %v4386, %v4428
    %v4430 = vpop.f32.mrb[0].mxu0
    %v4431 = vadd.f32 %v4388, %v4430
    %4432 = vdwg.mxu0
    %4433 = vmatprep.subr.bf16.mxu0 %v3152
    %4434 = vmatpush1.bf16.msra.mxu0 %v3151
    %4435 = vmatprep.subr.bf16.mxu0 %v3156
    %4436 = vmatpush1.bf16.msra.mxu0 %v3155
    %4437 = vmatprep.subr.bf16.mxu0 %v3160
    %4438 = vmatpush1.bf16.msra.mxu0 %v3159
    %4439 = vmatprep.subr.bf16.mxu0 %v3164
    %4440 = vmatpush1.bf16.msra.mxu0 %v3163
    %4441 = vmatprep.subr.bf16.mxu0 %v3168
    %4442 = vmatpush1.bf16.msra.mxu0 %v3167
    %4443 = vmatprep.subr.bf16.mxu0 %v3172
    %4444 = vmatpush1.bf16.msra.mxu0 %v3171
    %4445 = vmatprep.subr.bf16.mxu0 %v3176
    %4446 = vmatpush1.bf16.msra.mxu0 %v3175
    %4447 = vmatprep.subr.bf16.mxu0 %v3180
    %4448 = vmatpush1.bf16.msra.mxu0 %v3179
    %4449 = vmatprep.subr.bf16.mxu0 %v3184
    %4450 = vmatpush1.bf16.msra.mxu0 %v3183
    %4451 = vmatprep.subr.bf16.mxu0 %v3188
    %4452 = vmatpush1.bf16.msra.mxu0 %v3187
    %4453 = vmatprep.subr.bf16.mxu0 %v3192
    %4454 = vmatpush1.bf16.msra.mxu0 %v3191
    %4455 = vmatprep.subr.bf16.mxu0 %v3196
    %4456 = vmatpush1.bf16.msra.mxu0 %v3195
    %4457 = vmatprep.subr.bf16.mxu0 %v3200
    %4458 = vmatpush1.bf16.msra.mxu0 %v3199
    %4459 = vmatprep.subr.bf16.mxu0 %v3204
    %4460 = vmatpush1.bf16.msra.mxu0 %v3203
    %4461 = vmatprep.subr.bf16.mxu0 %v3208
    %4462 = vmatpush1.bf16.msra.mxu0 %v3207
    %4463 = vmatprep.subr.bf16.mxu0 %v3212
    %4464 = vmatpush1.bf16.msra.mxu0 %v3211
    %4465 = vmatprep.mubr.bf16.mxu0 %v816
    %4466 = vmatmul.mubr.bf16.gmra.mrb[0].mxu0 %v815
    %v4467 = vpop.f32.mrb[0].mxu0
    %v4468 = vadd.f32 %v4425, %v4467
    %v4469 = vpop.f32.mrb[0].mxu0
    %v4470 = vadd.f32 %v4427, %v4469
    %v4471 = vpop.f32.mrb[0].mxu0
    %v4472 = vadd.f32 %v4429, %v4471
    %v4473 = vpop.f32.mrb[0].mxu0
    %v4474 = vadd.f32 %v4431, %v4473
    %4475 = vdwg.mxu0
    %4476 = vmatprep.subr.bf16.mxu0 %v3216
    %4477 = vmatpush1.bf16.msra.mxu0 %v3215
    %4478 = vmatprep.subr.bf16.mxu0 %v3220
    %4479 = vmatpush1.bf16.msra.mxu0 %v3219
    %4480 = vmatprep.subr.bf16.mxu0 %v3224
    %4481 = vmatpush1.bf16.msra.mxu0 %v3223
    %4482 = vmatprep.subr.bf16.mxu0 %v3228
    %4483 = vmatpush1.bf16.msra.mxu0 %v3227
    %4484 = vmatprep.subr.bf16.mxu0 %v3232
    %4485 = vmatpush1.bf16.msra.mxu0 %v3231
    %4486 = vmatprep.subr.bf16.mxu0 %v3236
    %4487 = vmatpush1.bf16.msra.mxu0 %v3235
    %4488 = vmatprep.subr.bf16.mxu0 %v3240
    %4489 = vmatpush1.bf16.msra.mxu0 %v3239
    %4490 = vmatprep.subr.bf16.mxu0 %v3244
    %4491 = vmatpush1.bf16.msra.mxu0 %v3243
    %4492 = vmatprep.subr.bf16.mxu0 %v3248
    %4493 = vmatpush1.bf16.msra.mxu0 %v3247
    %4494 = vmatprep.subr.bf16.mxu0 %v3252
    %4495 = vmatpush1.bf16.msra.mxu0 %v3251
    %4496 = vmatprep.subr.bf16.mxu0 %v3256
    %4497 = vmatpush1.bf16.msra.mxu0 %v3255
    %4498 = vmatprep.subr.bf16.mxu0 %v3260
    %4499 = vmatpush1.bf16.msra.mxu0 %v3259
    %4500 = vmatprep.subr.bf16.mxu0 %v3264
    %4501 = vmatpush1.bf16.msra.mxu0 %v3263
    %4502 = vmatprep.subr.bf16.mxu0 %v3268
    %4503 = vmatpush1.bf16.msra.mxu0 %v3267
    %4504 = vmatprep.subr.bf16.mxu0 %v3272
    %4505 = vmatpush1.bf16.msra.mxu0 %v3271
    %4506 = vmatprep.subr.bf16.mxu0 %v3276
    %4507 = vmatpush1.bf16.msra.mxu0 %v3275
    %4508 = vmatprep.mubr.bf16.mxu0 %v818
    %4509 = vmatmul.mubr.bf16.gmra.mrb[0].mxu0 %v817
    %v4510 = vpop.f32.mrb[0].mxu0
    %v4511 = vadd.f32 %v4468, %v4510
    %v4512 = vpop.f32.mrb[0].mxu0
    %v4513 = vadd.f32 %v4470, %v4512
    %v4514 = vpop.f32.mrb[0].mxu0
    %v4515 = vadd.f32 %v4472, %v4514
    %v4516 = vpop.f32.mrb[0].mxu0
    %v4517 = vadd.f32 %v4474, %v4516
    %4518 = vdwg.mxu0
    %4519 = vmatprep.subr.bf16.mxu0 %v3280
    %4520 = vmatpush1.bf16.msra.mxu0 %v3279
    %4521 = vmatprep.subr.bf16.mxu0 %v3284
    %4522 = vmatpush1.bf16.msra.mxu0 %v3283
    %4523 = vmatprep.subr.bf16.mxu0 %v3288
    %4524 = vmatpush1.bf16.msra.mxu0 %v3287
    %4525 = vmatprep.subr.bf16.mxu0 %v3292
    %4526 = vmatpush1.bf16.msra.mxu0 %v3291
    %4527 = vmatprep.subr.bf16.mxu0 %v3296
    %4528 = vmatpush1.bf16.msra.mxu0 %v3295
    %4529 = vmatprep.subr.bf16.mxu0 %v3300
    %4530 = vmatpush1.bf16.msra.mxu0 %v3299
    %4531 = vmatprep.subr.bf16.mxu0 %v3304
    %4532 = vmatpush1.bf16.msra.mxu0 %v3303
    %4533 = vmatprep.subr.bf16.mxu0 %v3308
    %4534 = vmatpush1.bf16.msra.mxu0 %v3307
    %4535 = vmatprep.subr.bf16.mxu0 %v3312
    %4536 = vmatpush1.bf16.msra.mxu0 %v3311
    %4537 = vmatprep.subr.bf16.mxu0 %v3316
    %4538 = vmatpush1.bf16.msra.mxu0 %v3315
    %4539 = vmatprep.subr.bf16.mxu0 %v3320
    %4540 = vmatpush1.bf16.msra.mxu0 %v3319
    %4541 = vmatprep.subr.bf16.mxu0 %v3324
    %4542 = vmatpush1.bf16.msra.mxu0 %v3323
    %4543 = vmatprep.subr.bf16.mxu0 %v3328
    %4544 = vmatpush1.bf16.msra.mxu0 %v3327
    %4545 = vmatprep.subr.bf16.mxu0 %v3332
    %4546 = vmatpush1.bf16.msra.mxu0 %v3331
    %4547 = vmatprep.subr.bf16.mxu0 %v3336
    %4548 = vmatpush1.bf16.msra.mxu0 %v3335
    %4549 = vmatprep.subr.bf16.mxu0 %v3340
    %4550 = vmatpush1.bf16.msra.mxu0 %v3339
    %4551 = vmatprep.mubr.bf16.mxu0 %v820
    %4552 = vmatmul.mubr.bf16.gmra.mrb[0].mxu0 %v819
    %v4553 = vpop.f32.mrb[0].mxu0
    %v4554 = vadd.f32 %v4511, %v4553
    %v4555 = vpop.f32.mrb[0].mxu0
    %v4556 = vadd.f32 %v4513, %v4555
    %v4557 = vpop.f32.mrb[0].mxu0
    %v4558 = vadd.f32 %v4515, %v4557
    %v4559 = vpop.f32.mrb[0].mxu0
    %v4560 = vadd.f32 %v4517, %v4559
    %4561 = vdwg.mxu0
    %4562 = vmatprep.subr.bf16.mxu0 %v3344
    %4563 = vmatpush1.bf16.msra.mxu0 %v3343
    %4564 = vmatprep.subr.bf16.mxu0 %v3348
    %4565 = vmatpush1.bf16.msra.mxu0 %v3347
    %4566 = vmatprep.subr.bf16.mxu0 %v3352
    %4567 = vmatpush1.bf16.msra.mxu0 %v3351
    %4568 = vmatprep.subr.bf16.mxu0 %v3356
    %4569 = vmatpush1.bf16.msra.mxu0 %v3355
    %4570 = vmatprep.subr.bf16.mxu0 %v3360
    %4571 = vmatpush1.bf16.msra.mxu0 %v3359
    %4572 = vmatprep.subr.bf16.mxu0 %v3364
    %4573 = vmatpush1.bf16.msra.mxu0 %v3363
    %4574 = vmatprep.subr.bf16.mxu0 %v3368
    %4575 = vmatpush1.bf16.msra.mxu0 %v3367
    %4576 = vmatprep.subr.bf16.mxu0 %v3372
    %4577 = vmatpush1.bf16.msra.mxu0 %v3371
    %4578 = vmatprep.subr.bf16.mxu0 %v3376
    %4579 = vmatpush1.bf16.msra.mxu0 %v3375
    %4580 = vmatprep.subr.bf16.mxu0 %v3380
    %4581 = vmatpush1.bf16.msra.mxu0 %v3379
    %4582 = vmatprep.subr.bf16.mxu0 %v3384
    %4583 = vmatpush1.bf16.msra.mxu0 %v3383
    %4584 = vmatprep.subr.bf16.mxu0 %v3388
    %4585 = vmatpush1.bf16.msra.mxu0 %v3387
    %4586 = vmatprep.subr.bf16.mxu0 %v3392
    %4587 = vmatpush1.bf16.msra.mxu0 %v3391
    %4588 = vmatprep.subr.bf16.mxu0 %v3396
    %4589 = vmatpush1.bf16.msra.mxu0 %v3395
    %4590 = vmatprep.subr.bf16.mxu0 %v3400
    %4591 = vmatpush1.bf16.msra.mxu0 %v3399
    %4592 = vmatprep.subr.bf16.mxu0 %v3404
    %4593 = vmatpush1.bf16.msra.mxu0 %v3403
    %4594 = vmatprep.mubr.bf16.mxu0 %v822
    %4595 = vmatmul.mubr.bf16.gmra.mrb[0].mxu0 %v821
    %v4596 = vpop.f32.mrb[0].mxu0
    %v4597 = vadd.f32 %v4554, %v4596
    %v4598 = vpop.f32.mrb[0].mxu0
    %v4599 = vadd.f32 %v4556, %v4598
    %v4600 = vpop.f32.mrb[0].mxu0
    %v4601 = vadd.f32 %v4558, %v4600
    %v4602 = vpop.f32.mrb[0].mxu0
    %v4603 = vadd.f32 %v4560, %v4602
    %4604 = vdwg.mxu0
    %v4605 = vmax.f32 %v4253, 0.0
    %v4606 = vmax.f32 %v4255, 0.0
    %v4607 = vmax.f32 %v4597, 0.0
    %v4608 = vmax.f32 %v4599, 0.0
    %v4609 = vmax.f32 %v4257, 0.0
    %v4610 = vmax.f32 %v4259, 0.0
    %v4611 = vmax.f32 %v4601, 0.0
    %v4612 = vmax.f32 %v4603, 0.0
    %v4613 = vpack.c.bf16 %v4609, %v4605
    %v4614 = vpack.c.bf16 %v4610, %v4606
    %v4615 = vpack.c.bf16 %v4611, %v4607
    %v4616 = vpack.c.bf16 %v4612, %v4608
    %v4617 = vld [vmem:[#allocation11] sm:$0xff]
    %v4618 = vld [vmem:[#allocation11 + $0x8] sm:$0xff]
    %v4619 = vld [vmem:[#allocation11 + $0x10] sm:$0xff]
    %v4620 = vld [vmem:[#allocation11 + $0x18] sm:$0xff]
    %v4621 = vld [vmem:[#allocation11 + $0x20] sm:$0xff]
    %v4622 = vld [vmem:[#allocation11 + $0x28] sm:$0xff]
    %v4623 = vld [vmem:[#allocation11 + $0x30] sm:$0xff]
    %v4624 = vld [vmem:[#allocation11 + $0x38] sm:$0xff]
    %v4625 = vld [vmem:[#allocation11 + $0x40] sm:$0xff]
    %v4626 = vld [vmem:[#allocation11 + $0x48] sm:$0xff]
    %v4627 = vld [vmem:[#allocation11 + $0x50] sm:$0xff]
    %v4628 = vld [vmem:[#allocation11 + $0x58] sm:$0xff]
    %v4629 = vld [vmem:[#allocation11 + $0x60] sm:$0xff]
    %v4630 = vld [vmem:[#allocation11 + $0x68] sm:$0xff]
    %v4631 = vld [vmem:[#allocation11 + $0x70] sm:$0xff]
    %v4632 = vld [vmem:[#allocation11 + $0x78] sm:$0xff]
    %v4633 = vld [vmem:[#allocation11 + $0x80] sm:$0xff]
    %v4634 = vld [vmem:[#allocation11 + $0x88] sm:$0xff]
    %v4635 = vld [vmem:[#allocation11 + $0x90] sm:$0xff]
    %v4636 = vld [vmem:[#allocation11 + $0x98] sm:$0xff]
    %v4637 = vld [vmem:[#allocation11 + $0xa0] sm:$0xff]
    %v4638 = vld [vmem:[#allocation11 + $0xa8] sm:$0xff]
    %v4639 = vld [vmem:[#allocation11 + $0xb0] sm:$0xff]
    %v4640 = vld [vmem:[#allocation11 + $0xb8] sm:$0xff]
    %v4641 = vld [vmem:[#allocation11 + $0xc0] sm:$0xff]
    %v4642 = vld [vmem:[#allocation11 + $0xc8] sm:$0xff]
    %v4643 = vld [vmem:[#allocation11 + $0xd0] sm:$0xff]
    %v4644 = vld [vmem:[#allocation11 + $0xd8] sm:$0xff]
    %v4645 = vld [vmem:[#allocation11 + $0xe0] sm:$0xff]
    %v4646 = vld [vmem:[#allocation11 + $0xe8] sm:$0xff]
    %v4647 = vld [vmem:[#allocation11 + $0xf0] sm:$0xff]
    %v4648 = vld [vmem:[#allocation11 + $0xf8] sm:$0xff]
    %v4649 = vld [vmem:[#allocation11 + $0x100] sm:$0xff]
    %v4650 = vld [vmem:[#allocation11 + $0x108] sm:$0xff]
    %v4651 = vld [vmem:[#allocation11 + $0x110] sm:$0xff]
    %v4652 = vld [vmem:[#allocation11 + $0x118] sm:$0xff]
    %v4653 = vld [vmem:[#allocation11 + $0x120] sm:$0xff]
    %v4654 = vld [vmem:[#allocation11 + $0x128] sm:$0xff]
    %v4655 = vld [vmem:[#allocation11 + $0x130] sm:$0xff]
    %v4656 = vld [vmem:[#allocation11 + $0x138] sm:$0xff]
    %v4657 = vld [vmem:[#allocation11 + $0x140] sm:$0xff]
    %v4658 = vld [vmem:[#allocation11 + $0x148] sm:$0xff]
    %v4659 = vld [vmem:[#allocation11 + $0x150] sm:$0xff]
    %v4660 = vld [vmem:[#allocation11 + $0x158] sm:$0xff]
    %v4661 = vld [vmem:[#allocation11 + $0x160] sm:$0xff]
    %v4662 = vld [vmem:[#allocation11 + $0x168] sm:$0xff]
    %v4663 = vld [vmem:[#allocation11 + $0x170] sm:$0xff]
    %v4664 = vld [vmem:[#allocation11 + $0x178] sm:$0xff]
    %v4665 = vld [vmem:[#allocation11 + $0x180] sm:$0xff]
    %v4666 = vld [vmem:[#allocation11 + $0x188] sm:$0xff]
    %v4667 = vld [vmem:[#allocation11 + $0x190] sm:$0xff]
    %v4668 = vld [vmem:[#allocation11 + $0x198] sm:$0xff]
    %v4669 = vld [vmem:[#allocation11 + $0x1a0] sm:$0xff]
    %v4670 = vld [vmem:[#allocation11 + $0x1a8] sm:$0xff]
    %v4671 = vld [vmem:[#allocation11 + $0x1b0] sm:$0xff]
    %v4672 = vld [vmem:[#allocation11 + $0x1b8] sm:$0xff]
    %v4673 = vld [vmem:[#allocation11 + $0x1c0] sm:$0xff]
    %v4674 = vld [vmem:[#allocation11 + $0x1c8] sm:$0xff]
    %v4675 = vld [vmem:[#allocation11 + $0x1d0] sm:$0xff]
    %v4676 = vld [vmem:[#allocation11 + $0x1d8] sm:$0xff]
    %v4677 = vld [vmem:[#allocation11 + $0x1e0] sm:$0xff]
    %v4678 = vld [vmem:[#allocation11 + $0x1e8] sm:$0xff]
    %v4679 = vld [vmem:[#allocation11 + $0x1f0] sm:$0xff]
    %v4680 = vld [vmem:[#allocation11 + $0x1f8] sm:$0xff]
    %v4681 = vld [vmem:[#allocation11 + $0x200] sm:$0xff]
    %v4682 = vld [vmem:[#allocation11 + $0x208] sm:$0xff]
    %v4683 = vld [vmem:[#allocation11 + $0x210] sm:$0xff]
    %v4684 = vld [vmem:[#allocation11 + $0x218] sm:$0xff]
    %v4685 = vld [vmem:[#allocation11 + $0x220] sm:$0xff]
    %v4686 = vld [vmem:[#allocation11 + $0x228] sm:$0xff]
    %v4687 = vld [vmem:[#allocation11 + $0x230] sm:$0xff]
    %v4688 = vld [vmem:[#allocation11 + $0x238] sm:$0xff]
    %v4689 = vld [vmem:[#allocation11 + $0x240] sm:$0xff]
    %v4690 = vld [vmem:[#allocation11 + $0x248] sm:$0xff]
    %v4691 = vld [vmem:[#allocation11 + $0x250] sm:$0xff]
    %v4692 = vld [vmem:[#allocation11 + $0x258] sm:$0xff]
    %v4693 = vld [vmem:[#allocation11 + $0x260] sm:$0xff]
    %v4694 = vld [vmem:[#allocation11 + $0x268] sm:$0xff]
    %v4695 = vld [vmem:[#allocation11 + $0x270] sm:$0xff]
    %v4696 = vld [vmem:[#allocation11 + $0x278] sm:$0xff]
    %v4697 = vld [vmem:[#allocation11 + $0x280] sm:$0xff]
    %v4698 = vld [vmem:[#allocation11 + $0x288] sm:$0xff]
    %v4699 = vld [vmem:[#allocation11 + $0x290] sm:$0xff]
    %v4700 = vld [vmem:[#allocation11 + $0x298] sm:$0xff]
    %v4701 = vld [vmem:[#allocation11 + $0x2a0] sm:$0xff]
    %v4702 = vld [vmem:[#allocation11 + $0x2a8] sm:$0xff]
    %v4703 = vld [vmem:[#allocation11 + $0x2b0] sm:$0xff]
    %v4704 = vld [vmem:[#allocation11 + $0x2b8] sm:$0xff]
    %v4705 = vld [vmem:[#allocation11 + $0x2c0] sm:$0xff]
    %v4706 = vld [vmem:[#allocation11 + $0x2c8] sm:$0xff]
    %v4707 = vld [vmem:[#allocation11 + $0x2d0] sm:$0xff]
    %v4708 = vld [vmem:[#allocation11 + $0x2d8] sm:$0xff]
    %v4709 = vld [vmem:[#allocation11 + $0x2e0] sm:$0xff]
    %v4710 = vld [vmem:[#allocation11 + $0x2e8] sm:$0xff]
    %v4711 = vld [vmem:[#allocation11 + $0x2f0] sm:$0xff]
    %v4712 = vld [vmem:[#allocation11 + $0x2f8] sm:$0xff]
    %v4713 = vld [vmem:[#allocation11 + $0x300] sm:$0xff]
    %v4714 = vld [vmem:[#allocation11 + $0x308] sm:$0xff]
    %v4715 = vld [vmem:[#allocation11 + $0x310] sm:$0xff]
    %v4716 = vld [vmem:[#allocation11 + $0x318] sm:$0xff]
    %v4717 = vld [vmem:[#allocation11 + $0x320] sm:$0xff]
    %v4718 = vld [vmem:[#allocation11 + $0x328] sm:$0xff]
    %v4719 = vld [vmem:[#allocation11 + $0x330] sm:$0xff]
    %v4720 = vld [vmem:[#allocation11 + $0x338] sm:$0xff]
    %v4721 = vld [vmem:[#allocation11 + $0x340] sm:$0xff]
    %v4722 = vld [vmem:[#allocation11 + $0x348] sm:$0xff]
    %v4723 = vld [vmem:[#allocation11 + $0x350] sm:$0xff]
    %v4724 = vld [vmem:[#allocation11 + $0x358] sm:$0xff]
    %v4725 = vld [vmem:[#allocation11 + $0x360] sm:$0xff]
    %v4726 = vld [vmem:[#allocation11 + $0x368] sm:$0xff]
    %v4727 = vld [vmem:[#allocation11 + $0x370] sm:$0xff]
    %v4728 = vld [vmem:[#allocation11 + $0x378] sm:$0xff]
    %v4729 = vld [vmem:[#allocation11 + $0x380] sm:$0xff]
    %v4730 = vld [vmem:[#allocation11 + $0x388] sm:$0xff]
    %v4731 = vld [vmem:[#allocation11 + $0x390] sm:$0xff]
    %v4732 = vld [vmem:[#allocation11 + $0x398] sm:$0xff]
    %v4733 = vld [vmem:[#allocation11 + $0x3a0] sm:$0xff]
    %v4734 = vld [vmem:[#allocation11 + $0x3a8] sm:$0xff]
    %v4735 = vld [vmem:[#allocation11 + $0x3b0] sm:$0xff]
    %v4736 = vld [vmem:[#allocation11 + $0x3b8] sm:$0xff]
    %v4737 = vld [vmem:[#allocation11 + $0x3c0] sm:$0xff]
    %v4738 = vld [vmem:[#allocation11 + $0x3c8] sm:$0xff]
    %v4739 = vld [vmem:[#allocation11 + $0x3d0] sm:$0xff]
    %v4740 = vld [vmem:[#allocation11 + $0x3d8] sm:$0xff]
    %v4741 = vld [vmem:[#allocation11 + $0x3e0] sm:$0xff]
    %v4742 = vld [vmem:[#allocation11 + $0x3e8] sm:$0xff]
    %v4743 = vld [vmem:[#allocation11 + $0x3f0] sm:$0xff]
    %v4744 = vld [vmem:[#allocation11 + $0x3f8] sm:$0xff]
    %v4745 = vld [vmem:[#allocation13] sm:$0xf]
    %v4747 = vlaneseq
    %v4748 = vshrl.u32 %v4747, 7
    %v4749 = vsub.s32 0, %v4748
    %v4750 = vrot.slane %v4745, %v4749
    %v4751 = vlaneseq
    %v4752 = vshrl.u32 %v4751, 7
    %v4753 = vsub.s32 1, %v4752
    %v4754 = vrot.slane %v4745, %v4753
    %v4755 = vlaneseq
    %v4756 = vshrl.u32 %v4755, 7
    %v4757 = vsub.s32 2, %v4756
    %v4758 = vrot.slane %v4745, %v4757
    %v4759 = vlaneseq
    %v4760 = vshrl.u32 %v4759, 7
    %v4761 = vsub.s32 3, %v4760
    %v4762 = vrot.slane %v4745, %v4761
    %v4895 = vunpack.c.l.b16 %v4617
    %v4896 = vunpack.c.h.b16 %v4617
    %v4897 = vunpack.c.l.b16 %v4618
    %v4898 = vunpack.c.h.b16 %v4618
    %v4899 = vunpack.c.l.b16 %v4619
    %v4900 = vunpack.c.h.b16 %v4619
    %v4901 = vunpack.c.l.b16 %v4620
    %v4902 = vunpack.c.h.b16 %v4620
    %v4903 = vunpack.c.l.b16 %v4621
    %v4904 = vunpack.c.h.b16 %v4621
    %v4905 = vunpack.c.l.b16 %v4622
    %v4906 = vunpack.c.h.b16 %v4622
    %v4907 = vunpack.c.l.b16 %v4623
    %v4908 = vunpack.c.h.b16 %v4623
    %v4909 = vunpack.c.l.b16 %v4624
    %v4910 = vunpack.c.h.b16 %v4624
    %v4911 = vunpack.c.l.b16 %v4625
    %v4912 = vunpack.c.h.b16 %v4625
    %v4913 = vunpack.c.l.b16 %v4626
    %v4914 = vunpack.c.h.b16 %v4626
    %v4915 = vunpack.c.l.b16 %v4627
    %v4916 = vunpack.c.h.b16 %v4627
    %v4917 = vunpack.c.l.b16 %v4628
    %v4918 = vunpack.c.h.b16 %v4628
    %v4919 = vunpack.c.l.b16 %v4629
    %v4920 = vunpack.c.h.b16 %v4629
    %v4921 = vunpack.c.l.b16 %v4630
    %v4922 = vunpack.c.h.b16 %v4630
    %v4923 = vunpack.c.l.b16 %v4631
    %v4924 = vunpack.c.h.b16 %v4631
    %v4925 = vunpack.c.l.b16 %v4632
    %v4926 = vunpack.c.h.b16 %v4632
    %v4927 = vunpack.c.l.b16 %v4633
    %v4928 = vunpack.c.h.b16 %v4633
    %v4929 = vunpack.c.l.b16 %v4634
    %v4930 = vunpack.c.h.b16 %v4634
    %v4931 = vunpack.c.l.b16 %v4635
    %v4932 = vunpack.c.h.b16 %v4635
    %v4933 = vunpack.c.l.b16 %v4636
    %v4934 = vunpack.c.h.b16 %v4636
    %v4935 = vunpack.c.l.b16 %v4637
    %v4936 = vunpack.c.h.b16 %v4637
    %v4937 = vunpack.c.l.b16 %v4638
    %v4938 = vunpack.c.h.b16 %v4638
    %v4939 = vunpack.c.l.b16 %v4639
    %v4940 = vunpack.c.h.b16 %v4639
    %v4941 = vunpack.c.l.b16 %v4640
    %v4942 = vunpack.c.h.b16 %v4640
    %v4943 = vunpack.c.l.b16 %v4641
    %v4944 = vunpack.c.h.b16 %v4641
    %v4945 = vunpack.c.l.b16 %v4642
    %v4946 = vunpack.c.h.b16 %v4642
    %v4947 = vunpack.c.l.b16 %v4643
    %v4948 = vunpack.c.h.b16 %v4643
    %v4949 = vunpack.c.l.b16 %v4644
    %v4950 = vunpack.c.h.b16 %v4644
    %v4951 = vunpack.c.l.b16 %v4645
    %v4952 = vunpack.c.h.b16 %v4645
    %v4953 = vunpack.c.l.b16 %v4646
    %v4954 = vunpack.c.h.b16 %v4646
    %v4955 = vunpack.c.l.b16 %v4647
    %v4956 = vunpack.c.h.b16 %v4647
    %v4957 = vunpack.c.l.b16 %v4648
    %v4958 = vunpack.c.h.b16 %v4648
    %v4959 = vunpack.c.l.b16 %v4649
    %v4960 = vunpack.c.h.b16 %v4649
    %v4961 = vunpack.c.l.b16 %v4650
    %v4962 = vunpack.c.h.b16 %v4650
    %v4963 = vunpack.c.l.b16 %v4651
    %v4964 = vunpack.c.h.b16 %v4651
    %v4965 = vunpack.c.l.b16 %v4652
    %v4966 = vunpack.c.h.b16 %v4652
    %v4967 = vunpack.c.l.b16 %v4653
    %v4968 = vunpack.c.h.b16 %v4653
    %v4969 = vunpack.c.l.b16 %v4654
    %v4970 = vunpack.c.h.b16 %v4654
    %v4971 = vunpack.c.l.b16 %v4655
    %v4972 = vunpack.c.h.b16 %v4655
    %v4973 = vunpack.c.l.b16 %v4656
    %v4974 = vunpack.c.h.b16 %v4656
    %v4975 = vunpack.c.l.b16 %v4657
    %v4976 = vunpack.c.h.b16 %v4657
    %v4977 = vunpack.c.l.b16 %v4658
    %v4978 = vunpack.c.h.b16 %v4658
    %v4979 = vunpack.c.l.b16 %v4659
    %v4980 = vunpack.c.h.b16 %v4659
    %v4981 = vunpack.c.l.b16 %v4660
    %v4982 = vunpack.c.h.b16 %v4660
    %v4983 = vunpack.c.l.b16 %v4661
    %v4984 = vunpack.c.h.b16 %v4661
    %v4985 = vunpack.c.l.b16 %v4662
    %v4986 = vunpack.c.h.b16 %v4662
    %v4987 = vunpack.c.l.b16 %v4663
    %v4988 = vunpack.c.h.b16 %v4663
    %v4989 = vunpack.c.l.b16 %v4664
    %v4990 = vunpack.c.h.b16 %v4664
    %v4991 = vunpack.c.l.b16 %v4665
    %v4992 = vunpack.c.h.b16 %v4665
    %v4993 = vunpack.c.l.b16 %v4666
    %v4994 = vunpack.c.h.b16 %v4666
    %v4995 = vunpack.c.l.b16 %v4667
    %v4996 = vunpack.c.h.b16 %v4667
    %v4997 = vunpack.c.l.b16 %v4668
    %v4998 = vunpack.c.h.b16 %v4668
    %v4999 = vunpack.c.l.b16 %v4669
    %v5000 = vunpack.c.h.b16 %v4669
    %v5001 = vunpack.c.l.b16 %v4670
    %v5002 = vunpack.c.h.b16 %v4670
    %v5003 = vunpack.c.l.b16 %v4671
    %v5004 = vunpack.c.h.b16 %v4671
    %v5005 = vunpack.c.l.b16 %v4672
    %v5006 = vunpack.c.h.b16 %v4672
    %v5007 = vunpack.c.l.b16 %v4673
    %v5008 = vunpack.c.h.b16 %v4673
    %v5009 = vunpack.c.l.b16 %v4674
    %v5010 = vunpack.c.h.b16 %v4674
    %v5011 = vunpack.c.l.b16 %v4675
    %v5012 = vunpack.c.h.b16 %v4675
    %v5013 = vunpack.c.l.b16 %v4676
    %v5014 = vunpack.c.h.b16 %v4676
    %v5015 = vunpack.c.l.b16 %v4677
    %v5016 = vunpack.c.h.b16 %v4677
    %v5017 = vunpack.c.l.b16 %v4678
    %v5018 = vunpack.c.h.b16 %v4678
    %v5019 = vunpack.c.l.b16 %v4679
    %v5020 = vunpack.c.h.b16 %v4679
    %v5021 = vunpack.c.l.b16 %v4680
    %v5022 = vunpack.c.h.b16 %v4680
    %v5023 = vunpack.c.l.b16 %v4681
    %v5024 = vunpack.c.h.b16 %v4681
    %v5025 = vunpack.c.l.b16 %v4682
    %v5026 = vunpack.c.h.b16 %v4682
    %v5027 = vunpack.c.l.b16 %v4683
    %v5028 = vunpack.c.h.b16 %v4683
    %v5029 = vunpack.c.l.b16 %v4684
    %v5030 = vunpack.c.h.b16 %v4684
    %v5031 = vunpack.c.l.b16 %v4685
    %v5032 = vunpack.c.h.b16 %v4685
    %v5033 = vunpack.c.l.b16 %v4686
    %v5034 = vunpack.c.h.b16 %v4686
    %v5035 = vunpack.c.l.b16 %v4687
    %v5036 = vunpack.c.h.b16 %v4687
    %v5037 = vunpack.c.l.b16 %v4688
    %v5038 = vunpack.c.h.b16 %v4688
    %v5039 = vunpack.c.l.b16 %v4689
    %v5040 = vunpack.c.h.b16 %v4689
    %v5041 = vunpack.c.l.b16 %v4690
    %v5042 = vunpack.c.h.b16 %v4690
    %v5043 = vunpack.c.l.b16 %v4691
    %v5044 = vunpack.c.h.b16 %v4691
    %v5045 = vunpack.c.l.b16 %v4692
    %v5046 = vunpack.c.h.b16 %v4692
    %v5047 = vunpack.c.l.b16 %v4693
    %v5048 = vunpack.c.h.b16 %v4693
    %v5049 = vunpack.c.l.b16 %v4694
    %v5050 = vunpack.c.h.b16 %v4694
    %v5051 = vunpack.c.l.b16 %v4695
    %v5052 = vunpack.c.h.b16 %v4695
    %v5053 = vunpack.c.l.b16 %v4696
    %v5054 = vunpack.c.h.b16 %v4696
    %v5055 = vunpack.c.l.b16 %v4697
    %v5056 = vunpack.c.h.b16 %v4697
    %v5057 = vunpack.c.l.b16 %v4698
    %v5058 = vunpack.c.h.b16 %v4698
    %v5059 = vunpack.c.l.b16 %v4699
    %v5060 = vunpack.c.h.b16 %v4699
    %v5061 = vunpack.c.l.b16 %v4700
    %v5062 = vunpack.c.h.b16 %v4700
    %v5063 = vunpack.c.l.b16 %v4701
    %v5064 = vunpack.c.h.b16 %v4701
    %v5065 = vunpack.c.l.b16 %v4702
    %v5066 = vunpack.c.h.b16 %v4702
    %v5067 = vunpack.c.l.b16 %v4703
    %v5068 = vunpack.c.h.b16 %v4703
    %v5069 = vunpack.c.l.b16 %v4704
    %v5070 = vunpack.c.h.b16 %v4704
    %v5071 = vunpack.c.l.b16 %v4705
    %v5072 = vunpack.c.h.b16 %v4705
    %v5073 = vunpack.c.l.b16 %v4706
    %v5074 = vunpack.c.h.b16 %v4706
    %v5075 = vunpack.c.l.b16 %v4707
    %v5076 = vunpack.c.h.b16 %v4707
    %v5077 = vunpack.c.l.b16 %v4708
    %v5078 = vunpack.c.h.b16 %v4708
    %v5079 = vunpack.c.l.b16 %v4709
    %v5080 = vunpack.c.h.b16 %v4709
    %v5081 = vunpack.c.l.b16 %v4710
    %v5082 = vunpack.c.h.b16 %v4710
    %v5083 = vunpack.c.l.b16 %v4711
    %v5084 = vunpack.c.h.b16 %v4711
    %v5085 = vunpack.c.l.b16 %v4712
    %v5086 = vunpack.c.h.b16 %v4712
    %v5087 = vunpack.c.l.b16 %v4713
    %v5088 = vunpack.c.h.b16 %v4713
    %v5089 = vunpack.c.l.b16 %v4714
    %v5090 = vunpack.c.h.b16 %v4714
    %v5091 = vunpack.c.l.b16 %v4715
    %v5092 = vunpack.c.h.b16 %v4715
    %v5093 = vunpack.c.l.b16 %v4716
    %v5094 = vunpack.c.h.b16 %v4716
    %v5095 = vunpack.c.l.b16 %v4717
    %v5096 = vunpack.c.h.b16 %v4717
    %v5097 = vunpack.c.l.b16 %v4718
    %v5098 = vunpack.c.h.b16 %v4718
    %v5099 = vunpack.c.l.b16 %v4719
    %v5100 = vunpack.c.h.b16 %v4719
    %v5101 = vunpack.c.l.b16 %v4720
    %v5102 = vunpack.c.h.b16 %v4720
    %v5103 = vunpack.c.l.b16 %v4721
    %v5104 = vunpack.c.h.b16 %v4721
    %v5105 = vunpack.c.l.b16 %v4722
    %v5106 = vunpack.c.h.b16 %v4722
    %v5107 = vunpack.c.l.b16 %v4723
    %v5108 = vunpack.c.h.b16 %v4723
    %v5109 = vunpack.c.l.b16 %v4724
    %v5110 = vunpack.c.h.b16 %v4724
    %v5111 = vunpack.c.l.b16 %v4725
    %v5112 = vunpack.c.h.b16 %v4725
    %v5113 = vunpack.c.l.b16 %v4726
    %v5114 = vunpack.c.h.b16 %v4726
    %v5115 = vunpack.c.l.b16 %v4727
    %v5116 = vunpack.c.h.b16 %v4727
    %v5117 = vunpack.c.l.b16 %v4728
    %v5118 = vunpack.c.h.b16 %v4728
    %v5119 = vunpack.c.l.b16 %v4729
    %v5120 = vunpack.c.h.b16 %v4729
    %v5121 = vunpack.c.l.b16 %v4730
    %v5122 = vunpack.c.h.b16 %v4730
    %v5123 = vunpack.c.l.b16 %v4731
    %v5124 = vunpack.c.h.b16 %v4731
    %v5125 = vunpack.c.l.b16 %v4732
    %v5126 = vunpack.c.h.b16 %v4732
    %v5127 = vunpack.c.l.b16 %v4733
    %v5128 = vunpack.c.h.b16 %v4733
    %v5129 = vunpack.c.l.b16 %v4734
    %v5130 = vunpack.c.h.b16 %v4734
    %v5131 = vunpack.c.l.b16 %v4735
    %v5132 = vunpack.c.h.b16 %v4735
    %v5133 = vunpack.c.l.b16 %v4736
    %v5134 = vunpack.c.h.b16 %v4736
    %v5135 = vunpack.c.l.b16 %v4737
    %v5136 = vunpack.c.h.b16 %v4737
    %v5137 = vunpack.c.l.b16 %v4738
    %v5138 = vunpack.c.h.b16 %v4738
    %v5139 = vunpack.c.l.b16 %v4739
    %v5140 = vunpack.c.h.b16 %v4739
    %v5141 = vunpack.c.l.b16 %v4740
    %v5142 = vunpack.c.h.b16 %v4740
    %v5143 = vunpack.c.l.b16 %v4741
    %v5144 = vunpack.c.h.b16 %v4741
    %v5145 = vunpack.c.l.b16 %v4742
    %v5146 = vunpack.c.h.b16 %v4742
    %v5147 = vunpack.c.l.b16 %v4743
    %v5148 = vunpack.c.h.b16 %v4743
    %v5149 = vunpack.c.l.b16 %v4744
    %v5150 = vunpack.c.h.b16 %v4744
    %v5151 = vpack.c.b16 %v4899, %v4895
    %v5152 = vpack.c.b16 %v4900, %v4896
    %v5153 = vpack.c.b16 %v4901, %v4897
    %v5154 = vpack.c.b16 %v4902, %v4898
    %v5155 = vpack.c.b16 %v4907, %v4903
    %v5156 = vpack.c.b16 %v4908, %v4904
    %v5157 = vpack.c.b16 %v4909, %v4905
    %v5158 = vpack.c.b16 %v4910, %v4906
    %v5159 = vpack.c.b16 %v4915, %v4911
    %v5160 = vpack.c.b16 %v4916, %v4912
    %v5161 = vpack.c.b16 %v4917, %v4913
    %v5162 = vpack.c.b16 %v4918, %v4914
    %v5163 = vpack.c.b16 %v4923, %v4919
    %v5164 = vpack.c.b16 %v4924, %v4920
    %v5165 = vpack.c.b16 %v4925, %v4921
    %v5166 = vpack.c.b16 %v4926, %v4922
    %v5167 = vpack.c.b16 %v4931, %v4927
    %v5168 = vpack.c.b16 %v4932, %v4928
    %v5169 = vpack.c.b16 %v4933, %v4929
    %v5170 = vpack.c.b16 %v4934, %v4930
    %v5171 = vpack.c.b16 %v4939, %v4935
    %v5172 = vpack.c.b16 %v4940, %v4936
    %v5173 = vpack.c.b16 %v4941, %v4937
    %v5174 = vpack.c.b16 %v4942, %v4938
    %v5175 = vpack.c.b16 %v4947, %v4943
    %v5176 = vpack.c.b16 %v4948, %v4944
    %v5177 = vpack.c.b16 %v4949, %v4945
    %v5178 = vpack.c.b16 %v4950, %v4946
    %v5179 = vpack.c.b16 %v4955, %v4951
    %v5180 = vpack.c.b16 %v4956, %v4952
    %v5181 = vpack.c.b16 %v4957, %v4953
    %v5182 = vpack.c.b16 %v4958, %v4954
    %v5183 = vpack.c.b16 %v4963, %v4959
    %v5184 = vpack.c.b16 %v4964, %v4960
    %v5185 = vpack.c.b16 %v4965, %v4961
    %v5186 = vpack.c.b16 %v4966, %v4962
    %v5187 = vpack.c.b16 %v4971, %v4967
    %v5188 = vpack.c.b16 %v4972, %v4968
    %v5189 = vpack.c.b16 %v4973, %v4969
    %v5190 = vpack.c.b16 %v4974, %v4970
    %v5191 = vpack.c.b16 %v4979, %v4975
    %v5192 = vpack.c.b16 %v4980, %v4976
    %v5193 = vpack.c.b16 %v4981, %v4977
    %v5194 = vpack.c.b16 %v4982, %v4978
    %v5195 = vpack.c.b16 %v4987, %v4983
    %v5196 = vpack.c.b16 %v4988, %v4984
    %v5197 = vpack.c.b16 %v4989, %v4985
    %v5198 = vpack.c.b16 %v4990, %v4986
    %v5199 = vpack.c.b16 %v4995, %v4991
    %v5200 = vpack.c.b16 %v4996, %v4992
    %v5201 = vpack.c.b16 %v4997, %v4993
    %v5202 = vpack.c.b16 %v4998, %v4994
    %v5203 = vpack.c.b16 %v5003, %v4999
    %v5204 = vpack.c.b16 %v5004, %v5000
    %v5205 = vpack.c.b16 %v5005, %v5001
    %v5206 = vpack.c.b16 %v5006, %v5002
    %v5207 = vpack.c.b16 %v5011, %v5007
    %v5208 = vpack.c.b16 %v5012, %v5008
    %v5209 = vpack.c.b16 %v5013, %v5009
    %v5210 = vpack.c.b16 %v5014, %v5010
    %v5211 = vpack.c.b16 %v5019, %v5015
    %v5212 = vpack.c.b16 %v5020, %v5016
    %v5213 = vpack.c.b16 %v5021, %v5017
    %v5214 = vpack.c.b16 %v5022, %v5018
    %v5215 = vpack.c.b16 %v5027, %v5023
    %v5216 = vpack.c.b16 %v5028, %v5024
    %v5217 = vpack.c.b16 %v5029, %v5025
    %v5218 = vpack.c.b16 %v5030, %v5026
    %v5219 = vpack.c.b16 %v5035, %v5031
    %v5220 = vpack.c.b16 %v5036, %v5032
    %v5221 = vpack.c.b16 %v5037, %v5033
    %v5222 = vpack.c.b16 %v5038, %v5034
    %v5223 = vpack.c.b16 %v5043, %v5039
    %v5224 = vpack.c.b16 %v5044, %v5040
    %v5225 = vpack.c.b16 %v5045, %v5041
    %v5226 = vpack.c.b16 %v5046, %v5042
    %v5227 = vpack.c.b16 %v5051, %v5047
    %v5228 = vpack.c.b16 %v5052, %v5048
    %v5229 = vpack.c.b16 %v5053, %v5049
    %v5230 = vpack.c.b16 %v5054, %v5050
    %v5231 = vpack.c.b16 %v5059, %v5055
    %v5232 = vpack.c.b16 %v5060, %v5056
    %v5233 = vpack.c.b16 %v5061, %v5057
    %v5234 = vpack.c.b16 %v5062, %v5058
    %v5235 = vpack.c.b16 %v5067, %v5063
    %v5236 = vpack.c.b16 %v5068, %v5064
    %v5237 = vpack.c.b16 %v5069, %v5065
    %v5238 = vpack.c.b16 %v5070, %v5066
    %v5239 = vpack.c.b16 %v5075, %v5071
    %v5240 = vpack.c.b16 %v5076, %v5072
    %v5241 = vpack.c.b16 %v5077, %v5073
    %v5242 = vpack.c.b16 %v5078, %v5074
    %v5243 = vpack.c.b16 %v5083, %v5079
    %v5244 = vpack.c.b16 %v5084, %v5080
    %v5245 = vpack.c.b16 %v5085, %v5081
    %v5246 = vpack.c.b16 %v5086, %v5082
    %v5247 = vpack.c.b16 %v5091, %v5087
    %v5248 = vpack.c.b16 %v5092, %v5088
    %v5249 = vpack.c.b16 %v5093, %v5089
    %v5250 = vpack.c.b16 %v5094, %v5090
    %v5251 = vpack.c.b16 %v5099, %v5095
    %v5252 = vpack.c.b16 %v5100, %v5096
    %v5253 = vpack.c.b16 %v5101, %v5097
    %v5254 = vpack.c.b16 %v5102, %v5098
    %v5255 = vpack.c.b16 %v5107, %v5103
    %v5256 = vpack.c.b16 %v5108, %v5104
    %v5257 = vpack.c.b16 %v5109, %v5105
    %v5258 = vpack.c.b16 %v5110, %v5106
    %v5259 = vpack.c.b16 %v5115, %v5111
    %v5260 = vpack.c.b16 %v5116, %v5112
    %v5261 = vpack.c.b16 %v5117, %v5113
    %v5262 = vpack.c.b16 %v5118, %v5114
    %v5263 = vpack.c.b16 %v5123, %v5119
    %v5264 = vpack.c.b16 %v5124, %v5120
    %v5265 = vpack.c.b16 %v5125, %v5121
    %v5266 = vpack.c.b16 %v5126, %v5122
    %v5267 = vpack.c.b16 %v5131, %v5127
    %v5268 = vpack.c.b16 %v5132, %v5128
    %v5269 = vpack.c.b16 %v5133, %v5129
    %v5270 = vpack.c.b16 %v5134, %v5130
    %v5271 = vpack.c.b16 %v5139, %v5135
    %v5272 = vpack.c.b16 %v5140, %v5136
    %v5273 = vpack.c.b16 %v5141, %v5137
    %v5274 = vpack.c.b16 %v5142, %v5138
    %v5275 = vpack.c.b16 %v5147, %v5143
    %v5276 = vpack.c.b16 %v5148, %v5144
    %v5277 = vpack.c.b16 %v5149, %v5145
    %v5278 = vpack.c.b16 %v5150, %v5146
    %5407 = vmatprep.subr.bf16.mxu0 %v5152
    %5408 = vmatpush1.bf16.msra.mxu0 %v5151
    %5409 = vmatprep.subr.bf16.mxu0 %v5156
    %5410 = vmatpush1.bf16.msra.mxu0 %v5155
    %5411 = vmatprep.subr.bf16.mxu0 %v5160
    %5412 = vmatpush1.bf16.msra.mxu0 %v5159
    %5413 = vmatprep.subr.bf16.mxu0 %v5164
    %5414 = vmatpush1.bf16.msra.mxu0 %v5163
    %5415 = vmatprep.subr.bf16.mxu0 %v5168
    %5416 = vmatpush1.bf16.msra.mxu0 %v5167
    %5417 = vmatprep.subr.bf16.mxu0 %v5172
    %5418 = vmatpush1.bf16.msra.mxu0 %v5171
    %5419 = vmatprep.subr.bf16.mxu0 %v5176
    %5420 = vmatpush1.bf16.msra.mxu0 %v5175
    %5421 = vmatprep.subr.bf16.mxu0 %v5180
    %5422 = vmatpush1.bf16.msra.mxu0 %v5179
    %5423 = vmatprep.subr.bf16.mxu0 %v5184
    %5424 = vmatpush1.bf16.msra.mxu0 %v5183
    %5425 = vmatprep.subr.bf16.mxu0 %v5188
    %5426 = vmatpush1.bf16.msra.mxu0 %v5187
    %5427 = vmatprep.subr.bf16.mxu0 %v5192
    %5428 = vmatpush1.bf16.msra.mxu0 %v5191
    %5429 = vmatprep.subr.bf16.mxu0 %v5196
    %5430 = vmatpush1.bf16.msra.mxu0 %v5195
    %5431 = vmatprep.subr.bf16.mxu0 %v5200
    %5432 = vmatpush1.bf16.msra.mxu0 %v5199
    %5433 = vmatprep.subr.bf16.mxu0 %v5204
    %5434 = vmatpush1.bf16.msra.mxu0 %v5203
    %5435 = vmatprep.subr.bf16.mxu0 %v5208
    %5436 = vmatpush1.bf16.msra.mxu0 %v5207
    %5437 = vmatprep.subr.bf16.mxu0 %v5212
    %5438 = vmatpush1.bf16.msra.mxu0 %v5211
    %5439 = vmatprep.mubr.bf16.mxu0 %v4614
    %5440 = vmatmul.mubr.bf16.gmra.mrb[0].mxu0 %v4613
    %v5441 = vpop.f32.mrb[0].mxu0
    %v5442 = vadd.f32 %v4750, %v5441
    %v5443 = vpop.f32.mrb[0].mxu0
    %v5444 = vadd.f32 %v4754, %v5443
    %v5445 = vpop.f32.mrb[0].mxu0
    %v5446 = vadd.f32 %v4750, %v5445
    %v5447 = vpop.f32.mrb[0].mxu0
    %v5448 = vadd.f32 %v4754, %v5447
    %5449 = vdwg.mxu0
    %5450 = vmatprep.subr.bf16.mxu0 %v5216
    %5451 = vmatpush1.bf16.msra.mxu0 %v5215
    %5452 = vmatprep.subr.bf16.mxu0 %v5220
    %5453 = vmatpush1.bf16.msra.mxu0 %v5219
    %5454 = vmatprep.subr.bf16.mxu0 %v5224
    %5455 = vmatpush1.bf16.msra.mxu0 %v5223
    %5456 = vmatprep.subr.bf16.mxu0 %v5228
    %5457 = vmatpush1.bf16.msra.mxu0 %v5227
    %5458 = vmatprep.subr.bf16.mxu0 %v5232
    %5459 = vmatpush1.bf16.msra.mxu0 %v5231
    %5460 = vmatprep.subr.bf16.mxu0 %v5236
    %5461 = vmatpush1.bf16.msra.mxu0 %v5235
    %5462 = vmatprep.subr.bf16.mxu0 %v5240
    %5463 = vmatpush1.bf16.msra.mxu0 %v5239
    %5464 = vmatprep.subr.bf16.mxu0 %v5244
    %5465 = vmatpush1.bf16.msra.mxu0 %v5243
    %5466 = vmatprep.subr.bf16.mxu0 %v5248
    %5467 = vmatpush1.bf16.msra.mxu0 %v5247
    %5468 = vmatprep.subr.bf16.mxu0 %v5252
    %5469 = vmatpush1.bf16.msra.mxu0 %v5251
    %5470 = vmatprep.subr.bf16.mxu0 %v5256
    %5471 = vmatpush1.bf16.msra.mxu0 %v5255
    %5472 = vmatprep.subr.bf16.mxu0 %v5260
    %5473 = vmatpush1.bf16.msra.mxu0 %v5259
    %5474 = vmatprep.subr.bf16.mxu0 %v5264
    %5475 = vmatpush1.bf16.msra.mxu0 %v5263
    %5476 = vmatprep.subr.bf16.mxu0 %v5268
    %5477 = vmatpush1.bf16.msra.mxu0 %v5267
    %5478 = vmatprep.subr.bf16.mxu0 %v5272
    %5479 = vmatpush1.bf16.msra.mxu0 %v5271
    %5480 = vmatprep.subr.bf16.mxu0 %v5276
    %5481 = vmatpush1.bf16.msra.mxu0 %v5275
    %5482 = vmatprep.mubr.bf16.mxu0 %v4616
    %5483 = vmatmul.mubr.bf16.gmra.mrb[0].mxu0 %v4615
    %v5484 = vpop.f32.mrb[0].mxu0
    %v5485 = vadd.f32 %v5442, %v5484
    %v5486 = vpop.f32.mrb[0].mxu0
    %v5487 = vadd.f32 %v5444, %v5486
    %v5488 = vpop.f32.mrb[0].mxu0
    %v5489 = vadd.f32 %v5446, %v5488
    %v5490 = vpop.f32.mrb[0].mxu0
    %v5491 = vadd.f32 %v5448, %v5490
    %5492 = vdwg.mxu0
    %5493 = vmatprep.subr.bf16.mxu0 %v5154
    %5494 = vmatpush1.bf16.msra.mxu0 %v5153
    %5495 = vmatprep.subr.bf16.mxu0 %v5158
    %5496 = vmatpush1.bf16.msra.mxu0 %v5157
    %5497 = vmatprep.subr.bf16.mxu0 %v5162
    %5498 = vmatpush1.bf16.msra.mxu0 %v5161
    %5499 = vmatprep.subr.bf16.mxu0 %v5166
    %5500 = vmatpush1.bf16.msra.mxu0 %v5165
    %5501 = vmatprep.subr.bf16.mxu0 %v5170
    %5502 = vmatpush1.bf16.msra.mxu0 %v5169
    %5503 = vmatprep.subr.bf16.mxu0 %v5174
    %5504 = vmatpush1.bf16.msra.mxu0 %v5173
    %5505 = vmatprep.subr.bf16.mxu0 %v5178
    %5506 = vmatpush1.bf16.msra.mxu0 %v5177
    %5507 = vmatprep.subr.bf16.mxu0 %v5182
    %5508 = vmatpush1.bf16.msra.mxu0 %v5181
    %5509 = vmatprep.subr.bf16.mxu0 %v5186
    %5510 = vmatpush1.bf16.msra.mxu0 %v5185
    %5511 = vmatprep.subr.bf16.mxu0 %v5190
    %5512 = vmatpush1.bf16.msra.mxu0 %v5189
    %5513 = vmatprep.subr.bf16.mxu0 %v5194
    %5514 = vmatpush1.bf16.msra.mxu0 %v5193
    %5515 = vmatprep.subr.bf16.mxu0 %v5198
    %5516 = vmatpush1.bf16.msra.mxu0 %v5197
    %5517 = vmatprep.subr.bf16.mxu0 %v5202
    %5518 = vmatpush1.bf16.msra.mxu0 %v5201
    %5519 = vmatprep.subr.bf16.mxu0 %v5206
    %5520 = vmatpush1.bf16.msra.mxu0 %v5205
    %5521 = vmatprep.subr.bf16.mxu0 %v5210
    %5522 = vmatpush1.bf16.msra.mxu0 %v5209
    %5523 = vmatprep.subr.bf16.mxu0 %v5214
    %5524 = vmatpush1.bf16.msra.mxu0 %v5213
    %5525 = vmatprep.mubr.bf16.mxu0 %v4614
    %5526 = vmatmul.mubr.bf16.gmra.mrb[0].mxu0 %v4613
    %v5527 = vpop.f32.mrb[0].mxu0
    %v5528 = vadd.f32 %v4758, %v5527
    %v5529 = vpop.f32.mrb[0].mxu0
    %v5530 = vadd.f32 %v4762, %v5529
    %v5531 = vpop.f32.mrb[0].mxu0
    %v5532 = vadd.f32 %v4758, %v5531
    %v5533 = vpop.f32.mrb[0].mxu0
    %v5534 = vadd.f32 %v4762, %v5533
    %5535 = vdwg.mxu0
    %5536 = vmatprep.subr.bf16.mxu0 %v5218
    %5537 = vmatpush1.bf16.msra.mxu0 %v5217
    %5538 = vmatprep.subr.bf16.mxu0 %v5222
    %5539 = vmatpush1.bf16.msra.mxu0 %v5221
    %5540 = vmatprep.subr.bf16.mxu0 %v5226
    %5541 = vmatpush1.bf16.msra.mxu0 %v5225
    %5542 = vmatprep.subr.bf16.mxu0 %v5230
    %5543 = vmatpush1.bf16.msra.mxu0 %v5229
    %5544 = vmatprep.subr.bf16.mxu0 %v5234
    %5545 = vmatpush1.bf16.msra.mxu0 %v5233
    %5546 = vmatprep.subr.bf16.mxu0 %v5238
    %5547 = vmatpush1.bf16.msra.mxu0 %v5237
    %5548 = vmatprep.subr.bf16.mxu0 %v5242
    %5549 = vmatpush1.bf16.msra.mxu0 %v5241
    %5550 = vmatprep.subr.bf16.mxu0 %v5246
    %5551 = vmatpush1.bf16.msra.mxu0 %v5245
    %5552 = vmatprep.subr.bf16.mxu0 %v5250
    %5553 = vmatpush1.bf16.msra.mxu0 %v5249
    %5554 = vmatprep.subr.bf16.mxu0 %v5254
    %5555 = vmatpush1.bf16.msra.mxu0 %v5253
    %5556 = vmatprep.subr.bf16.mxu0 %v5258
    %5557 = vmatpush1.bf16.msra.mxu0 %v5257
    %5558 = vmatprep.subr.bf16.mxu0 %v5262
    %5559 = vmatpush1.bf16.msra.mxu0 %v5261
    %5560 = vmatprep.subr.bf16.mxu0 %v5266
    %5561 = vmatpush1.bf16.msra.mxu0 %v5265
    %5562 = vmatprep.subr.bf16.mxu0 %v5270
    %5563 = vmatpush1.bf16.msra.mxu0 %v5269
    %5564 = vmatprep.subr.bf16.mxu0 %v5274
    %5565 = vmatpush1.bf16.msra.mxu0 %v5273
    %5566 = vmatprep.subr.bf16.mxu0 %v5278
    %5567 = vmatpush1.bf16.msra.mxu0 %v5277
    %5568 = vmatprep.mubr.bf16.mxu0 %v4616
    %5569 = vmatmul.mubr.bf16.gmra.mrb[0].mxu0 %v4615
    %v5570 = vpop.f32.mrb[0].mxu0
    %v5571 = vadd.f32 %v5528, %v5570
    %v5572 = vpop.f32.mrb[0].mxu0
    %v5573 = vadd.f32 %v5530, %v5572
    %v5574 = vpop.f32.mrb[0].mxu0
    %v5575 = vadd.f32 %v5532, %v5574
    %v5576 = vpop.f32.mrb[0].mxu0
    %v5577 = vadd.f32 %v5534, %v5576
    %5578 = vdwg.mxu0
    %v5579 = vmax.f32 %v5485, 0.0
    %v5580 = vmax.f32 %v5487, 0.0
    %v5581 = vmax.f32 %v5571, 0.0
    %v5582 = vmax.f32 %v5573, 0.0
    %v5583 = vmax.f32 %v5489, 0.0
    %v5584 = vmax.f32 %v5491, 0.0
    %v5585 = vmax.f32 %v5575, 0.0
    %v5586 = vmax.f32 %v5577, 0.0
    %v5587 = vpack.c.bf16 %v5583, %v5579
    %v5588 = vpack.c.bf16 %v5584, %v5580
    %v5589 = vpack.c.bf16 %v5585, %v5581
    %v5590 = vpack.c.bf16 %v5586, %v5582
    %v5591 = vld [vmem:[#allocation14] sm:$0xf]
    %v5592 = vld [vmem:[#allocation14 + $0x4] sm:$0xf]
    %v5593 = vld [vmem:[#allocation14 + $0x8] sm:$0xf]
    %v5594 = vld [vmem:[#allocation14 + $0xc] sm:$0xf]
    %v5595 = vld [vmem:[#allocation14 + $0x10] sm:$0xf]
    %v5596 = vld [vmem:[#allocation14 + $0x14] sm:$0xf]
    %v5597 = vld [vmem:[#allocation14 + $0x18] sm:$0xf]
    %v5598 = vld [vmem:[#allocation14 + $0x1c] sm:$0xf]
    %v5599 = vld [vmem:[#allocation14 + $0x20] sm:$0xf]
    %v5600 = vld [vmem:[#allocation14 + $0x24] sm:$0xf]
    %v5601 = vld [vmem:[#allocation14 + $0x28] sm:$0xf]
    %v5602 = vld [vmem:[#allocation14 + $0x2c] sm:$0xf]
    %v5603 = vld [vmem:[#allocation14 + $0x30] sm:$0xf]
    %v5604 = vld [vmem:[#allocation14 + $0x34] sm:$0xf]
    %v5605 = vld [vmem:[#allocation14 + $0x38] sm:$0xf]
    %v5606 = vld [vmem:[#allocation14 + $0x3c] sm:$0xf]
    %v5607 = vld [vmem:[#allocation14 + $0x40] sm:$0xf]
    %v5608 = vld [vmem:[#allocation14 + $0x44] sm:$0xf]
    %v5609 = vld [vmem:[#allocation14 + $0x48] sm:$0xf]
    %v5610 = vld [vmem:[#allocation14 + $0x4c] sm:$0xf]
    %v5611 = vld [vmem:[#allocation14 + $0x50] sm:$0xf]
    %v5612 = vld [vmem:[#allocation14 + $0x54] sm:$0xf]
    %v5613 = vld [vmem:[#allocation14 + $0x58] sm:$0xf]
    %v5614 = vld [vmem:[#allocation14 + $0x5c] sm:$0xf]
    %v5615 = vld [vmem:[#allocation14 + $0x60] sm:$0xf]
    %v5616 = vld [vmem:[#allocation14 + $0x64] sm:$0xf]
    %v5617 = vld [vmem:[#allocation14 + $0x68] sm:$0xf]
    %v5618 = vld [vmem:[#allocation14 + $0x6c] sm:$0xf]
    %v5619 = vld [vmem:[#allocation14 + $0x70] sm:$0xf]
    %v5620 = vld [vmem:[#allocation14 + $0x74] sm:$0xf]
    %v5621 = vld [vmem:[#allocation14 + $0x78] sm:$0xf]
    %v5622 = vld [vmem:[#allocation14 + $0x7c] sm:$0xf]
    %v5623 = vld [vmem:[#allocation14 + $0x80] sm:$0xf]
    %v5624 = vld [vmem:[#allocation14 + $0x84] sm:$0xf]
    %v5625 = vld [vmem:[#allocation14 + $0x88] sm:$0xf]
    %v5626 = vld [vmem:[#allocation14 + $0x8c] sm:$0xf]
    %v5627 = vld [vmem:[#allocation14 + $0x90] sm:$0xf]
    %v5628 = vld [vmem:[#allocation14 + $0x94] sm:$0xf]
    %v5629 = vld [vmem:[#allocation14 + $0x98] sm:$0xf]
    %v5630 = vld [vmem:[#allocation14 + $0x9c] sm:$0xf]
    %v5631 = vld [vmem:[#allocation14 + $0xa0] sm:$0xf]
    %v5632 = vld [vmem:[#allocation14 + $0xa4] sm:$0xf]
    %v5633 = vld [vmem:[#allocation14 + $0xa8] sm:$0xf]
    %v5634 = vld [vmem:[#allocation14 + $0xac] sm:$0xf]
    %v5635 = vld [vmem:[#allocation14 + $0xb0] sm:$0xf]
    %v5636 = vld [vmem:[#allocation14 + $0xb4] sm:$0xf]
    %v5637 = vld [vmem:[#allocation14 + $0xb8] sm:$0xf]
    %v5638 = vld [vmem:[#allocation14 + $0xbc] sm:$0xf]
    %v5639 = vld [vmem:[#allocation14 + $0xc0] sm:$0xf]
    %v5640 = vld [vmem:[#allocation14 + $0xc4] sm:$0xf]
    %v5641 = vld [vmem:[#allocation14 + $0xc8] sm:$0xf]
    %v5642 = vld [vmem:[#allocation14 + $0xcc] sm:$0xf]
    %v5643 = vld [vmem:[#allocation14 + $0xd0] sm:$0xf]
    %v5644 = vld [vmem:[#allocation14 + $0xd4] sm:$0xf]
    %v5645 = vld [vmem:[#allocation14 + $0xd8] sm:$0xf]
    %v5646 = vld [vmem:[#allocation14 + $0xdc] sm:$0xf]
    %v5647 = vld [vmem:[#allocation14 + $0xe0] sm:$0xf]
    %v5648 = vld [vmem:[#allocation14 + $0xe4] sm:$0xf]
    %v5649 = vld [vmem:[#allocation14 + $0xe8] sm:$0xf]
    %v5650 = vld [vmem:[#allocation14 + $0xec] sm:$0xf]
    %v5651 = vld [vmem:[#allocation14 + $0xf0] sm:$0xf]
    %v5652 = vld [vmem:[#allocation14 + $0xf4] sm:$0xf]
    %v5653 = vld [vmem:[#allocation14 + $0xf8] sm:$0xf]
    %v5654 = vld [vmem:[#allocation14 + $0xfc] sm:$0xf]
    %v5655 = vld [vmem:[#allocation16] sm:$0x1]
    %v5657 = vlaneseq
    %v5658 = vshrl.u32 %v5657, 7
    %v5659 = vsub.s32 0, %v5658
    %v5660 = vrot.slane %v5655, %v5659
    %v5726 = vunpack.c.l.b16 %v5591
    %v5727 = vunpack.c.l.b16 %v5592
    %v5728 = vunpack.c.l.b16 %v5593
    %v5729 = vunpack.c.l.b16 %v5594
    %v5730 = vunpack.c.l.b16 %v5595
    %v5731 = vunpack.c.l.b16 %v5596
    %v5732 = vunpack.c.l.b16 %v5597
    %v5733 = vunpack.c.l.b16 %v5598
    %v5734 = vunpack.c.l.b16 %v5599
    %v5735 = vunpack.c.l.b16 %v5600
    %v5736 = vunpack.c.l.b16 %v5601
    %v5737 = vunpack.c.l.b16 %v5602
    %v5738 = vunpack.c.l.b16 %v5603
    %v5739 = vunpack.c.l.b16 %v5604
    %v5740 = vunpack.c.l.b16 %v5605
    %v5741 = vunpack.c.l.b16 %v5606
    %v5742 = vunpack.c.l.b16 %v5607
    %v5743 = vunpack.c.l.b16 %v5608
    %v5744 = vunpack.c.l.b16 %v5609
    %v5745 = vunpack.c.l.b16 %v5610
    %v5746 = vunpack.c.l.b16 %v5611
    %v5747 = vunpack.c.l.b16 %v5612
    %v5748 = vunpack.c.l.b16 %v5613
    %v5749 = vunpack.c.l.b16 %v5614
    %v5750 = vunpack.c.l.b16 %v5615
    %v5751 = vunpack.c.l.b16 %v5616
    %v5752 = vunpack.c.l.b16 %v5617
    %v5753 = vunpack.c.l.b16 %v5618
    %v5754 = vunpack.c.l.b16 %v5619
    %v5755 = vunpack.c.l.b16 %v5620
    %v5756 = vunpack.c.l.b16 %v5621
    %v5757 = vunpack.c.l.b16 %v5622
    %v5758 = vunpack.c.l.b16 %v5623
    %v5759 = vunpack.c.l.b16 %v5624
    %v5760 = vunpack.c.l.b16 %v5625
    %v5761 = vunpack.c.l.b16 %v5626
    %v5762 = vunpack.c.l.b16 %v5627
    %v5763 = vunpack.c.l.b16 %v5628
    %v5764 = vunpack.c.l.b16 %v5629
    %v5765 = vunpack.c.l.b16 %v5630
    %v5766 = vunpack.c.l.b16 %v5631
    %v5767 = vunpack.c.l.b16 %v5632
    %v5768 = vunpack.c.l.b16 %v5633
    %v5769 = vunpack.c.l.b16 %v5634
    %v5770 = vunpack.c.l.b16 %v5635
    %v5771 = vunpack.c.l.b16 %v5636
    %v5772 = vunpack.c.l.b16 %v5637
    %v5773 = vunpack.c.l.b16 %v5638
    %v5774 = vunpack.c.l.b16 %v5639
    %v5775 = vunpack.c.l.b16 %v5640
    %v5776 = vunpack.c.l.b16 %v5641
    %v5777 = vunpack.c.l.b16 %v5642
    %v5778 = vunpack.c.l.b16 %v5643
    %v5779 = vunpack.c.l.b16 %v5644
    %v5780 = vunpack.c.l.b16 %v5645
    %v5781 = vunpack.c.l.b16 %v5646
    %v5782 = vunpack.c.l.b16 %v5647
    %v5783 = vunpack.c.l.b16 %v5648
    %v5784 = vunpack.c.l.b16 %v5649
    %v5785 = vunpack.c.l.b16 %v5650
    %v5786 = vunpack.c.l.b16 %v5651
    %v5787 = vunpack.c.l.b16 %v5652
    %v5788 = vunpack.c.l.b16 %v5653
    %v5789 = vunpack.c.l.b16 %v5654
    %v5790 = vpack.c.b16 %v5727, %v5726
    %v5791 = vpack.c.b16 %v5729, %v5728
    %v5792 = vpack.c.b16 %v5731, %v5730
    %v5793 = vpack.c.b16 %v5733, %v5732
    %v5794 = vpack.c.b16 %v5735, %v5734
    %v5795 = vpack.c.b16 %v5737, %v5736
    %v5796 = vpack.c.b16 %v5739, %v5738
    %v5797 = vpack.c.b16 %v5741, %v5740
    %v5798 = vpack.c.b16 %v5743, %v5742
    %v5799 = vpack.c.b16 %v5745, %v5744
    %v5800 = vpack.c.b16 %v5747, %v5746
    %v5801 = vpack.c.b16 %v5749, %v5748
    %v5802 = vpack.c.b16 %v5751, %v5750
    %v5803 = vpack.c.b16 %v5753, %v5752
    %v5804 = vpack.c.b16 %v5755, %v5754
    %v5805 = vpack.c.b16 %v5757, %v5756
    %v5806 = vpack.c.b16 %v5759, %v5758
    %v5807 = vpack.c.b16 %v5761, %v5760
    %v5808 = vpack.c.b16 %v5763, %v5762
    %v5809 = vpack.c.b16 %v5765, %v5764
    %v5810 = vpack.c.b16 %v5767, %v5766
    %v5811 = vpack.c.b16 %v5769, %v5768
    %v5812 = vpack.c.b16 %v5771, %v5770
    %v5813 = vpack.c.b16 %v5773, %v5772
    %v5814 = vpack.c.b16 %v5775, %v5774
    %v5815 = vpack.c.b16 %v5777, %v5776
    %v5816 = vpack.c.b16 %v5779, %v5778
    %v5817 = vpack.c.b16 %v5781, %v5780
    %v5818 = vpack.c.b16 %v5783, %v5782
    %v5819 = vpack.c.b16 %v5785, %v5784
    %v5820 = vpack.c.b16 %v5787, %v5786
    %v5821 = vpack.c.b16 %v5789, %v5788
    %5854 = vmatprep.subr.bf16.mxu0 0
    %5855 = vmatpush1.bf16.msra.mxu0 %v5790
    %5856 = vmatprep.subr.bf16.mxu0 0
    %5857 = vmatpush1.bf16.msra.mxu0 %v5791
    %5858 = vmatprep.subr.bf16.mxu0 0
    %5859 = vmatpush1.bf16.msra.mxu0 %v5792
    %5860 = vmatprep.subr.bf16.mxu0 0
    %5861 = vmatpush1.bf16.msra.mxu0 %v5793
    %5862 = vmatprep.subr.bf16.mxu0 0
    %5863 = vmatpush1.bf16.msra.mxu0 %v5794
    %5864 = vmatprep.subr.bf16.mxu0 0
    %5865 = vmatpush1.bf16.msra.mxu0 %v5795
    %5866 = vmatprep.subr.bf16.mxu0 0
    %5867 = vmatpush1.bf16.msra.mxu0 %v5796
    %5868 = vmatprep.subr.bf16.mxu0 0
    %5869 = vmatpush1.bf16.msra.mxu0 %v5797
    %5870 = vmatprep.subr.bf16.mxu0 0
    %5871 = vmatpush1.bf16.msra.mxu0 %v5798
    %5872 = vmatprep.subr.bf16.mxu0 0
    %5873 = vmatpush1.bf16.msra.mxu0 %v5799
    %5874 = vmatprep.subr.bf16.mxu0 0
    %5875 = vmatpush1.bf16.msra.mxu0 %v5800
    %5876 = vmatprep.subr.bf16.mxu0 0
    %5877 = vmatpush1.bf16.msra.mxu0 %v5801
    %5878 = vmatprep.subr.bf16.mxu0 0
    %5879 = vmatpush1.bf16.msra.mxu0 %v5802
    %5880 = vmatprep.subr.bf16.mxu0 0
    %5881 = vmatpush1.bf16.msra.mxu0 %v5803
    %5882 = vmatprep.subr.bf16.mxu0 0
    %5883 = vmatpush1.bf16.msra.mxu0 %v5804
    %5884 = vmatprep.subr.bf16.mxu0 0
    %5885 = vmatpush1.bf16.msra.mxu0 %v5805
    %5886 = vmatprep.mubr.bf16.mxu0 %v5588
    %5887 = vmatmul.mubr.bf16.gmra.mrb[0].mxu0 %v5587
    %v5888 = vpop.f32.mrb[0].mxu0
    %v5889 = vadd.f32 %v5660, %v5888
    %v5890 = vpop.f32.mrb[0].mxu0
    %v5891 = vpop.f32.mrb[0].mxu0
    %v5892 = vadd.f32 %v5660, %v5891
    %v5893 = vpop.f32.mrb[0].mxu0
    %5894 = vdwg.mxu0
    %5895 = vmatprep.subr.bf16.mxu0 0
    %5896 = vmatpush1.bf16.msra.mxu0 %v5806
    %5897 = vmatprep.subr.bf16.mxu0 0
    %5898 = vmatpush1.bf16.msra.mxu0 %v5807
    %5899 = vmatprep.subr.bf16.mxu0 0
    %5900 = vmatpush1.bf16.msra.mxu0 %v5808
    %5901 = vmatprep.subr.bf16.mxu0 0
    %5902 = vmatpush1.bf16.msra.mxu0 %v5809
    %5903 = vmatprep.subr.bf16.mxu0 0
    %5904 = vmatpush1.bf16.msra.mxu0 %v5810
    %5905 = vmatprep.subr.bf16.mxu0 0
    %5906 = vmatpush1.bf16.msra.mxu0 %v5811
    %5907 = vmatprep.subr.bf16.mxu0 0
    %5908 = vmatpush1.bf16.msra.mxu0 %v5812
    %5909 = vmatprep.subr.bf16.mxu0 0
    %5910 = vmatpush1.bf16.msra.mxu0 %v5813
    %5911 = vmatprep.subr.bf16.mxu0 0
    %5912 = vmatpush1.bf16.msra.mxu0 %v5814
    %5913 = vmatprep.subr.bf16.mxu0 0
    %5914 = vmatpush1.bf16.msra.mxu0 %v5815
    %5915 = vmatprep.subr.bf16.mxu0 0
    %5916 = vmatpush1.bf16.msra.mxu0 %v5816
    %5917 = vmatprep.subr.bf16.mxu0 0
    %5918 = vmatpush1.bf16.msra.mxu0 %v5817
    %5919 = vmatprep.subr.bf16.mxu0 0
    %5920 = vmatpush1.bf16.msra.mxu0 %v5818
    %5921 = vmatprep.subr.bf16.mxu0 0
    %5922 = vmatpush1.bf16.msra.mxu0 %v5819
    %5923 = vmatprep.subr.bf16.mxu0 0
    %5924 = vmatpush1.bf16.msra.mxu0 %v5820
    %5925 = vmatprep.subr.bf16.mxu0 0
    %5926 = vmatpush1.bf16.msra.mxu0 %v5821
    %5927 = vmatprep.mubr.bf16.mxu0 %v5590
    %5928 = vmatmul.mubr.bf16.gmra.mrb[0].mxu0 %v5589
    %v5929 = vpop.f32.mrb[0].mxu0
    %v5930 = vadd.f32 %v5889, %v5929
    %v5931 = vpop.f32.mrb[0].mxu0
    %v5932 = vpop.f32.mrb[0].mxu0
    %v5933 = vadd.f32 %v5892, %v5932
    %v5934 = vpop.f32.mrb[0].mxu0
    %5935 = vdwg.mxu0
    %5936 = vst [vmem:[#allocation17] sm:$0xff] %v5930
    %5937 = vst [vmem:[#allocation17 + $0x8] sm:$0xff] %v5933
    // Predicated region
    $region74: #{tpu_custom_call.1} parent=1 // pred_check
      _
    $region75: #{tpu_custom_call.1} parent=1 // pred_check_branch
      %5939 = sbr.rel (0) target = $region77
    $region76: #{tpu_custom_call.1} parent=1 // pred_region
      %s5941 = ssub.s32 256, 256
      %5942 = vsyncadd [#allocation4], %s5941
      %s5943 = sshll.u32 [#allocation17], 4
      %s5944 = int_to_ptr.vmem [resolvable:$true] %s5943
      %5949 = dma.vmem_to_hbm [thread:$0]  %s5944, 256, %s9, [#allocation4], 128, 128, 8
    $region77: #{tpu_custom_call.1} parent=1 // pred_fallthru
      _
    // Predicated region
    $region78: #{tpu_custom_call.1} parent=1 // pred_check
      _
    $region79: #{tpu_custom_call.1} parent=1 // pred_check_branch
      %5951 = sbr.rel (0) target = $region81
    $region80: #{tpu_custom_call.1} parent=1 // pred_region
      %5952 = dma.done [#allocation4], 256
    $region81: #{tpu_custom_call.1} parent=1 // pred_fallthru
      _
    %5953 = vsyncpa [#allocation3], 1
    %5954 = vsyncpa [#allocation6], 1
    %5955 = vsyncpa [#allocation9], 1
    %5956 = vsyncpa [#allocation12], 1
    %5957 = vsyncpa [#allocation15], 1
    %5958 = vsyncpa [#allocation4], 1

// kernel: tpu_custom_call.1
$region0: #{tpu_custom_call.1}
  #allocation0 [shape = 'u32[]', space=smem, size = 0x4, offset = 0x4, fixed_abs, tag = 'smem constant byte address 0x4 - core index']
  #allocation1 [shape = 'u32[144,128]{1,0:T(1,128)}', space=vmem, size = 0x12000, scoped, tag = 'internal scratch']
  %s0 = inlined_call_operand.hbm [shape: f32[16,32], index: 0, kind: input, shape index: {}]
  %s1 = inlined_call_operand.hbm [shape: bf16[32,2048], index: 1, kind: input, shape index: {}]
  %s2 = inlined_call_operand.hbm [shape: f32[1,2048], index: 2, kind: input, shape index: {}]
  %s3 = inlined_call_operand.hbm [shape: bf16[2048,512], index: 3, kind: input, shape index: {}]
  %s4 = inlined_call_operand.hbm [shape: f32[1,512], index: 4, kind: input, shape index: {}]
  %s5 = inlined_call_operand.hbm [shape: bf16[512,512], index: 5, kind: input, shape index: {}]
  %s6 = inlined_call_operand.hbm [shape: f32[1,512], index: 6, kind: input, shape index: {}]
  %s7 = inlined_call_operand.hbm [shape: bf16[512,128], index: 7, kind: input, shape index: {}]
  %s8 = inlined_call_operand.hbm [shape: f32[1,128], index: 8, kind: input, shape index: {}]
  %s9 = inlined_call_operand.hbm [shape: f32[16,128], index: 9, kind: output, shape index: {}]
  %s10 = sld [smem:[#allocation0]]
  $region82: #{tpu_custom_call.1} parent=0
    _
  %s12 = ssub.s32 1, %s10
  %s13 = scalar_select 0, %s12, %s10
  $region1: #{tpu_custom_call.1} parent=0
    #allocation2 [shape = 'u8[8192]{0}', space=vmem, size = 0x2000, scoped, tag = 'input window, operand 0, single buffered']
    #allocation3 [shape = 's32[1]{0}', space=sflag, size = 0x4, scoped, tag = 'scoped memory for tpu_custom_call.1']
    #allocation4 [shape = 's32[1]{0}', space=sflag, size = 0x4, scoped, tag = 'scoped memory for tpu_custom_call.1']
    #allocation5 [shape = 'u8[131072]{0}', space=vmem, size = 0x20000, scoped, tag = 'input window, operand 1, single buffered']
    #allocation6 [shape = 's32[1]{0}', space=sflag, size = 0x4, scoped, tag = 'scoped memory for tpu_custom_call.1']
    #allocation7 [shape = 'u8[8192]{0}', space=vmem, size = 0x2000, scoped, tag = 'input window, operand 2, single buffered']
    #allocation8 [shape = 'u8[2097152]{0}', space=vmem, size = 0x200000, scoped, tag = 'input window, operand 3, single buffered']
    #allocation9 [shape = 's32[1]{0}', space=sflag, size = 0x4, scoped, tag = 'scoped memory for tpu_custom_call.1']
    #allocation10 [shape = 'u8[2048]{0}', space=vmem, size = 0x800, scoped, tag = 'input window, operand 4, single buffered']
    #allocation11 [shape = 'u8[524288]{0}', space=vmem, size = 0x80000, scoped, tag = 'input window, operand 5, single buffered']
    #allocation12 [shape = 's32[1]{0}', space=sflag, size = 0x4, scoped, tag = 'scoped memory for tpu_custom_call.1']
    #allocation13 [shape = 'u8[2048]{0}', space=vmem, size = 0x800, scoped, tag = 'input window, operand 6, single buffered']
    #allocation14 [shape = 'u8[131072]{0}', space=vmem, size = 0x20000, scoped, tag = 'input window, operand 7, single buffered']
    #allocation15 [shape = 's32[1]{0}', space=sflag, size = 0x4, scoped, tag = 'scoped memory for tpu_custom_call.1']
    #allocation16 [shape = 'u8[512]{0}', space=vmem, size = 0x400, scoped, tag = 'input window, operand 8, single buffered']
    #allocation17 [shape = 'u8[8192]{0}', space=vmem, size = 0x2000, scoped, tag = 'output window, operand 0, single buffered']
    %14 = vsyncpa [#allocation3], 0
    %15 = vsyncpa [#allocation6], 0
    %16 = vsyncpa [#allocation9], 0
    %17 = vsyncpa [#allocation12], 0
    %18 = vsyncpa [#allocation15], 0
    %19 = vsyncpa [#allocation4], 0
    // Predicated region
    $region2: #{tpu_custom_call.1} parent=1 // pred_check
      _
    $region3: #{tpu_custom_call.1} parent=1 // pred_check_branch
      %21 = sbr.rel (0) target = $region5
    $region4: #{tpu_custom_call.1} parent=1 // pred_region
      %s23 = ssub.s32 256, 256
      %24 = vsyncadd [#allocation3], %s23
      %s25 = sshll.u32 [#allocation2], 4
      %s26 = int_to_ptr.vmem [resolvable:$true] %s25
      %31 = dma.hbm_to_vmem [thread:$0]  %s0, 256, %s26, [#allocation3], 128, 128, 8
    $region5: #{tpu_custom_call.1} parent=1 // pred_fallthru
      _
    // Predicated region
    $region6: #{tpu_custom_call.1} parent=1 // pred_check
      _
    $region7: #{tpu_custom_call.1} parent=1 // pred_check_branch
      %33 = sbr.rel (0) target = $region9
    $region8: #{tpu_custom_call.1} parent=1 // pred_region
      %s35 = ssub.s32 4096, 4096
      %36 = vsyncadd [#allocation6], %s35
      %s37 = sshll.u32 [#allocation5], 4
      %s38 = int_to_ptr.vmem [resolvable:$true] %s37
      %43 = dma.hbm_to_vmem [thread:$0]  %s1, 4096, %s38, [#allocation6], 1024, 1024, 64
    $region9: #{tpu_custom_call.1} parent=1 // pred_fallthru
      _
    // Predicated region
    $region10: #{tpu_custom_call.1} parent=1 // pred_check
      _
    $region11: #{tpu_custom_call.1} parent=1 // pred_check_branch
      %45 = sbr.rel (0) target = $region13
    $region12: #{tpu_custom_call.1} parent=1 // pred_region
      %s47 = ssub.s32 256, 256
      %48 = vsyncadd [#allocation6], %s47
      %s50 = sshll.u32 [#allocation7], 4
      %s51 = int_to_ptr.vmem [resolvable:$true] %s50
      %53 = dma.hbm_to_vmem [thread:$0]  %s2, 256, %s51, [#allocation6]
    $region13: #{tpu_custom_call.1} parent=1 // pred_fallthru
      _
    // Predicated region
    $region14: #{tpu_custom_call.1} parent=1 // pred_check
      _
    $region15: #{tpu_custom_call.1} parent=1 // pred_check_branch
      %55 = sbr.rel (0) target = $region17
    $region16: #{tpu_custom_call.1} parent=1 // pred_region
      %s57 = ssub.s32 65536, 65536
      %58 = vsyncadd [#allocation9], %s57
      %s59 = sshll.u32 [#allocation8], 4
      %s60 = int_to_ptr.vmem [resolvable:$true] %s59
      %65 = dma.hbm_to_vmem [thread:$0]  %s3, 65536, %s60, [#allocation9], 256, 256, 16
    $region17: #{tpu_custom_call.1} parent=1 // pred_fallthru
      _
    // Predicated region
    $region18: #{tpu_custom_call.1} parent=1 // pred_check
      _
    $region19: #{tpu_custom_call.1} parent=1 // pred_check_branch
      %67 = sbr.rel (0) target = $region21
    $region20: #{tpu_custom_call.1} parent=1 // pred_region
      %s69 = ssub.s32 64, 64
      %70 = vsyncadd [#allocation9], %s69
      %s72 = sshll.u32 [#allocation10], 4
      %s73 = int_to_ptr.vmem [resolvable:$true] %s72
      %75 = dma.hbm_to_vmem [thread:$0]  %s4, 64, %s73, [#allocation9]
    $region21: #{tpu_custom_call.1} parent=1 // pred_fallthru
      _
    // Predicated region
    $region22: #{tpu_custom_call.1} parent=1 // pred_check
      _
    $region23: #{tpu_custom_call.1} parent=1 // pred_check_branch
      %77 = sbr.rel (0) target = $region25
    $region24: #{tpu_custom_call.1} parent=1 // pred_region
      %s79 = ssub.s32 16384, 16384
      %80 = vsyncadd [#allocation12], %s79
      %s81 = sshll.u32 [#allocation11], 4
      %s82 = int_to_ptr.vmem [resolvable:$true] %s81
      %87 = dma.hbm_to_vmem [thread:$0]  %s5, 16384, %s82, [#allocation12], 256, 256, 16
    $region25: #{tpu_custom_call.1} parent=1 // pred_fallthru
      _
    // Predicated region
    $region26: #{tpu_custom_call.1} parent=1 // pred_check
      _
    $region27: #{tpu_custom_call.1} parent=1 // pred_check_branch
      %89 = sbr.rel (0) target = $region29
    $region28: #{tpu_custom_call.1} parent=1 // pred_region
      %s91 = ssub.s32 64, 64
      %92 = vsyncadd [#allocation12], %s91
      %s94 = sshll.u32 [#allocation13], 4
      %s95 = int_to_ptr.vmem [resolvable:$true] %s94
      %97 = dma.hbm_to_vmem [thread:$0]  %s6, 64, %s95, [#allocation12]
    $region29: #{tpu_custom_call.1} parent=1 // pred_fallthru
      _
    // Predicated region
    $region30: #{tpu_custom_call.1} parent=1 // pred_check
      _
    $region31: #{tpu_custom_call.1} parent=1 // pred_check_branch
      %99 = sbr.rel (0) target = $region33
    $region32: #{tpu_custom_call.1} parent=1 // pred_region
      %s101 = ssub.s32 4096, 4096
      %102 = vsyncadd [#allocation15], %s101
      %s103 = sshll.u32 [#allocation14], 4
      %s104 = int_to_ptr.vmem [resolvable:$true] %s103
      %109 = dma.hbm_to_vmem [thread:$0]  %s7, 4096, %s104, [#allocation15], 64, 64, 4
    $region33: #{tpu_custom_call.1} parent=1 // pred_fallthru
      _
    // Predicated region
    $region34: #{tpu_custom_call.1} parent=1 // pred_check
      _
    $region35: #{tpu_custom_call.1} parent=1 // pred_check_branch
      %111 = sbr.rel (0) target = $region37
    $region36: #{tpu_custom_call.1} parent=1 // pred_region
      %s113 = ssub.s32 16, 16
      %114 = vsyncadd [#allocation15], %s113
      %s116 = sshll.u32 [#allocation16], 4
      %s117 = int_to_ptr.vmem [resolvable:$true] %s116
      %119 = dma.hbm_to_vmem [thread:$0]  %s8, 16, %s117, [#allocation15]
    $region37: #{tpu_custom_call.1} parent=1 // pred_fallthru
      _
    // Predicated region
    $region38: #{tpu_custom_call.1} parent=1 // pred_check
      _
    $region39: #{tpu_custom_call.1} parent=1 // pred_check_branch
      %121 = sbr.rel (0) target = $region41
    $region40: #{tpu_custom_call.1} parent=1 // pred_region
      %122 = dma.done [#allocation3], 256
    $region41: #{tpu_custom_call.1} parent=1 // pred_fallthru
      _
    // Predicated region
    $region42: #{tpu_custom_call.1} parent=1 // pred_check
      _
    $region43: #{tpu_custom_call.1} parent=1 // pred_check_branch
      %124 = sbr.rel (0) target = $region45
    $region44: #{tpu_custom_call.1} parent=1 // pred_region
      %125 = dma.done [#allocation6], 4096
    $region45: #{tpu_custom_call.1} parent=1 // pred_fallthru
      _
    // Predicated region
    $region46: #{tpu_custom_call.1} parent=1 // pred_check
      _
    $region47: #{tpu_custom_call.1} parent=1 // pred_check_branch
      %127 = sbr.rel (0) target = $region49
    $region48: #{tpu_custom_call.1} parent=1 // pred_region
      %128 = dma.done [#allocation6], 256
    $region49: #{tpu_custom_call.1} parent=1 // pred_fallthru
      _
    // Predicated region
    $region50: #{tpu_custom_call.1} parent=1 // pred_check
      _
    $region51: #{tpu_custom_call.1} parent=1 // pred_check_branch
      %130 = sbr.rel (0) target = $region53
    $region52: #{tpu_custom_call.1} parent=1 // pred_region
      %131 = dma.done [#allocation9], 65536
    $region53: #{tpu_custom_call.1} parent=1 // pred_fallthru
      _
    // Predicated region
    $region54: #{tpu_custom_call.1} parent=1 // pred_check
      _
    $region55: #{tpu_custom_call.1} parent=1 // pred_check_branch
      %133 = sbr.rel (0) target = $region57
    $region56: #{tpu_custom_call.1} parent=1 // pred_region
      %134 = dma.done [#allocation9], 64
    $region57: #{tpu_custom_call.1} parent=1 // pred_fallthru
      _
    // Predicated region
    $region58: #{tpu_custom_call.1} parent=1 // pred_check
      _
    $region59: #{tpu_custom_call.1} parent=1 // pred_check_branch
      %136 = sbr.rel (0) target = $region61
    $region60: #{tpu_custom_call.1} parent=1 // pred_region
      %137 = dma.done [#allocation12], 16384
    $region61: #{tpu_custom_call.1} parent=1 // pred_fallthru
      _
    // Predicated region
    $region62: #{tpu_custom_call.1} parent=1 // pred_check
      _
    $region63: #{tpu_custom_call.1} parent=1 // pred_check_branch
      %139 = sbr.rel (0) target = $region65
    $region64: #{tpu_custom_call.1} parent=1 // pred_region
      %140 = dma.done [#allocation12], 64
    $region65: #{tpu_custom_call.1} parent=1 // pred_fallthru
      _
    // Predicated region
    $region66: #{tpu_custom_call.1} parent=1 // pred_check
      _
    $region67: #{tpu_custom_call.1} parent=1 // pred_check_branch
      %142 = sbr.rel (0) target = $region69
    $region68: #{tpu_custom_call.1} parent=1 // pred_region
      %143 = dma.done [#allocation15], 4096
    $region69: #{tpu_custom_call.1} parent=1 // pred_fallthru
      _
    // Predicated region
    $region70: #{tpu_custom_call.1} parent=1 // pred_check
      _
    $region71: #{tpu_custom_call.1} parent=1 // pred_check_branch
      %145 = sbr.rel (0) target = $region73
    $region72: #{tpu_custom_call.1} parent=1 // pred_region
      %146 = dma.done [#allocation15], 16
    $region73: #{tpu_custom_call.1} parent=1 // pred_fallthru
      _
    %v148 = vld [vmem:[#allocation2] sm:$0xff]
    %v149 = vld [vmem:[#allocation2 + $0x8] sm:$0xff]
    %v150 = vpack.c.bf16 %v149, %v148
    %v151 = vld [vmem:[#allocation5] sm:$0xff]
    %v152 = vld [vmem:[#allocation5 + $0x8] sm:$0xff]
    %v153 = vld [vmem:[#allocation5 + $0x10] sm:$0xff]
    %v154 = vld [vmem:[#allocation5 + $0x18] sm:$0xff]
    %v155 = vld [vmem:[#allocation5 + $0x20] sm:$0xff]
    %v156 = vld [vmem:[#allocation5 + $0x28] sm:$0xff]
    %v157 = vld [vmem:[#allocation5 + $0x30] sm:$0xff]
    %v158 = vld [vmem:[#allocation5 + $0x38] sm:$0xff]
    %v159 = vld [vmem:[#allocation5 + $0x40] sm:$0xff]
    %v160 = vld [vmem:[#allocation5 + $0x48] sm:$0xff]
    %v161 = vld [vmem:[#allocation5 + $0x50] sm:$0xff]
    %v162 = vld [vmem:[#allocation5 + $0x58] sm:$0xff]
    %v163 = vld [vmem:[#allocation5 + $0x60] sm:$0xff]
    %v164 = vld [vmem:[#allocation5 + $0x68] sm:$0xff]
    %v165 = vld [vmem:[#allocation5 + $0x70] sm:$0xff]
    %v166 = vld [vmem:[#allocation5 + $0x78] sm:$0xff]
    %v167 = vld [vmem:[#allocation5 + $0x80] sm:$0xff]
    %v168 = vld [vmem:[#allocation5 + $0x88] sm:$0xff]
    %v169 = vld [vmem:[#allocation5 + $0x90] sm:$0xff]
    %v170 = vld [vmem:[#allocation5 + $0x98] sm:$0xff]
    %v171 = vld [vmem:[#allocation5 + $0xa0] sm:$0xff]
    %v172 = vld [vmem:[#allocation5 + $0xa8] sm:$0xff]
    %v173 = vld [vmem:[#allocation5 + $0xb0] sm:$0xff]
    %v174 = vld [vmem:[#allocation5 + $0xb8] sm:$0xff]
    %v175 = vld [vmem:[#allocation5 + $0xc0] sm:$0xff]
    %v176 = vld [vmem:[#allocation5 + $0xc8] sm:$0xff]
    %v177 = vld [vmem:[#allocation5 + $0xd0] sm:$0xff]
    %v178 = vld [vmem:[#allocation5 + $0xd8] sm:$0xff]
    %v179 = vld [vmem:[#allocation5 + $0xe0] sm:$0xff]
    %v180 = vld [vmem:[#allocation5 + $0xe8] sm:$0xff]
    %v181 = vld [vmem:[#allocation5 + $0xf0] sm:$0xff]
    %v182 = vld [vmem:[#allocation5 + $0xf8] sm:$0xff]
    %v183 = vld [vmem:[#allocation7] sm:$0xff]
    %v184 = vld [vmem:[#allocation7 + $0x8] sm:$0xff]
    %v187 = vlaneseq
    %v188 = vshrl.u32 %v187, 7
    %v189 = vsub.s32 0, %v188
    %v190 = vrot.slane %v183, %v189
    %v191 = vlaneseq
    %v192 = vshrl.u32 %v191, 7
    %v193 = vsub.s32 1, %v192
    %v194 = vrot.slane %v183, %v193
    %v195 = vlaneseq
    %v196 = vshrl.u32 %v195, 7
    %v197 = vsub.s32 2, %v196
    %v198 = vrot.slane %v183, %v197
    %v199 = vlaneseq
    %v200 = vshrl.u32 %v199, 7
    %v201 = vsub.s32 3, %v200
    %v202 = vrot.slane %v183, %v201
    %v203 = vlaneseq
    %v204 = vshrl.u32 %v203, 7
    %v205 = vsub.s32 4, %v204
    %v206 = vrot.slane %v183, %v205
    %v207 = vlaneseq
    %v208 = vshrl.u32 %v207, 7
    %v209 = vsub.s32 5, %v208
    %v210 = vrot.slane %v183, %v209
    %v211 = vlaneseq
    %v212 = vshrl.u32 %v211, 7
    %v213 = vsub.s32 6, %v212
    %v214 = vrot.slane %v183, %v213
    %v215 = vlaneseq
    %v216 = vshrl.u32 %v215, 7
    %v217 = vsub.s32 7, %v216
    %v218 = vrot.slane %v183, %v217
    %v219 = vlaneseq
    %v220 = vshrl.u32 %v219, 7
    %v221 = vsub.s32 0, %v220
    %v222 = vrot.slane %v184, %v221
    %v223 = vlaneseq
    %v224 = vshrl.u32 %v223, 7
    %v225 = vsub.s32 1, %v224
    %v226 = vrot.slane %v184, %v225
    %v227 = vlaneseq
    %v228 = vshrl.u32 %v227, 7
    %v229 = vsub.s32 2, %v228
    %v230 = vrot.slane %v184, %v229
    %v231 = vlaneseq
    %v232 = vshrl.u32 %v231, 7
    %v233 = vsub.s32 3, %v232
    %v234 = vrot.slane %v184, %v233
    %v235 = vlaneseq
    %v236 = vshrl.u32 %v235, 7
    %v237 = vsub.s32 4, %v236
    %v238 = vrot.slane %v184, %v237
    %v239 = vlaneseq
    %v240 = vshrl.u32 %v239, 7
    %v241 = vsub.s32 5, %v240
    %v242 = vrot.slane %v184, %v241
    %v243 = vlaneseq
    %v244 = vshrl.u32 %v243, 7
    %v245 = vsub.s32 6, %v244
    %v246 = vrot.slane %v184, %v245
    %v247 = vlaneseq
    %v248 = vshrl.u32 %v247, 7
    %v249 = vsub.s32 7, %v248
    %v250 = vrot.slane %v184, %v249
    %v299 = vunpack.c.l.b16 %v151
    %v300 = vunpack.c.h.b16 %v151
    %v301 = vunpack.c.l.b16 %v152
    %v302 = vunpack.c.h.b16 %v152
    %v303 = vunpack.c.l.b16 %v153
    %v304 = vunpack.c.h.b16 %v153
    %v305 = vunpack.c.l.b16 %v154
    %v306 = vunpack.c.h.b16 %v154
    %v307 = vunpack.c.l.b16 %v155
    %v308 = vunpack.c.h.b16 %v155
    %v309 = vunpack.c.l.b16 %v156
    %v310 = vunpack.c.h.b16 %v156
    %v311 = vunpack.c.l.b16 %v157
    %v312 = vunpack.c.h.b16 %v157
    %v313 = vunpack.c.l.b16 %v158
    %v314 = vunpack.c.h.b16 %v158
    %v315 = vunpack.c.l.b16 %v159
    %v316 = vunpack.c.h.b16 %v159
    %v317 = vunpack.c.l.b16 %v160
    %v318 = vunpack.c.h.b16 %v160
    %v319 = vunpack.c.l.b16 %v161
    %v320 = vunpack.c.h.b16 %v161
    %v321 = vunpack.c.l.b16 %v162
    %v322 = vunpack.c.h.b16 %v162
    %v323 = vunpack.c.l.b16 %v163
    %v324 = vunpack.c.h.b16 %v163
    %v325 = vunpack.c.l.b16 %v164
    %v326 = vunpack.c.h.b16 %v164
    %v327 = vunpack.c.l.b16 %v165
    %v328 = vunpack.c.h.b16 %v165
    %v329 = vunpack.c.l.b16 %v166
    %v330 = vunpack.c.h.b16 %v166
    %v331 = vunpack.c.l.b16 %v167
    %v332 = vunpack.c.h.b16 %v167
    %v333 = vunpack.c.l.b16 %v168
    %v334 = vunpack.c.h.b16 %v168
    %v335 = vunpack.c.l.b16 %v169
    %v336 = vunpack.c.h.b16 %v169
    %v337 = vunpack.c.l.b16 %v170
    %v338 = vunpack.c.h.b16 %v170
    %v339 = vunpack.c.l.b16 %v171
    %v340 = vunpack.c.h.b16 %v171
    %v341 = vunpack.c.l.b16 %v172
    %v342 = vunpack.c.h.b16 %v172
    %v343 = vunpack.c.l.b16 %v173
    %v344 = vunpack.c.h.b16 %v173
    %v345 = vunpack.c.l.b16 %v174
    %v346 = vunpack.c.h.b16 %v174
    %v347 = vunpack.c.l.b16 %v175
    %v348 = vunpack.c.h.b16 %v175
    %v349 = vunpack.c.l.b16 %v176
    %v350 = vunpack.c.h.b16 %v176
    %v351 = vunpack.c.l.b16 %v177
    %v352 = vunpack.c.h.b16 %v177
    %v353 = vunpack.c.l.b16 %v178
    %v354 = vunpack.c.h.b16 %v178
    %v355 = vunpack.c.l.b16 %v179
    %v356 = vunpack.c.h.b16 %v179
    %v357 = vunpack.c.l.b16 %v180
    %v358 = vunpack.c.h.b16 %v180
    %v359 = vunpack.c.l.b16 %v181
    %v360 = vunpack.c.h.b16 %v181
    %v361 = vunpack.c.l.b16 %v182
    %v362 = vunpack.c.h.b16 %v182
    %v363 = vpack.c.b16 %v315, %v299
    %v364 = vpack.c.b16 %v316, %v300
    %v365 = vpack.c.b16 %v317, %v301
    %v366 = vpack.c.b16 %v318, %v302
    %v367 = vpack.c.b16 %v319, %v303
    %v368 = vpack.c.b16 %v320, %v304
    %v369 = vpack.c.b16 %v321, %v305
    %v370 = vpack.c.b16 %v322, %v306
    %v371 = vpack.c.b16 %v323, %v307
    %v372 = vpack.c.b16 %v324, %v308
    %v373 = vpack.c.b16 %v325, %v309
    %v374 = vpack.c.b16 %v326, %v310
    %v375 = vpack.c.b16 %v327, %v311
    %v376 = vpack.c.b16 %v328, %v312
    %v377 = vpack.c.b16 %v329, %v313
    %v378 = vpack.c.b16 %v330, %v314
    %v379 = vpack.c.b16 %v347, %v331
    %v380 = vpack.c.b16 %v348, %v332
    %v381 = vpack.c.b16 %v349, %v333
    %v382 = vpack.c.b16 %v350, %v334
    %v383 = vpack.c.b16 %v351, %v335
    %v384 = vpack.c.b16 %v352, %v336
    %v385 = vpack.c.b16 %v353, %v337
    %v386 = vpack.c.b16 %v354, %v338
    %v387 = vpack.c.b16 %v355, %v339
    %v388 = vpack.c.b16 %v356, %v340
    %v389 = vpack.c.b16 %v357, %v341
    %v390 = vpack.c.b16 %v358, %v342
    %v391 = vpack.c.b16 %v359, %v343
    %v392 = vpack.c.b16 %v360, %v344
    %v393 = vpack.c.b16 %v361, %v345
    %v394 = vpack.c.b16 %v362, %v346
    %vm427 = vcmask 261120
    %v429 = vsel %vm427, %v150, 0
    %431 = vmatprep.subr.bf16.mxu0 %v364
    %432 = vmatpush1.bf16.msra.mxu0 %v363
    %433 = vmatprep.subr.bf16.mxu0 %v380
    %434 = vmatpush1.bf16.msra.mxu0 %v379
    %435 = vmatprep.subr.bf16.mxu0 0
    %436 = vmatpush1.bf16.msra.mxu0 0
    %437 = vmatprep.subr.bf16.mxu0 0
    %438 = vmatpush1.bf16.msra.mxu0 0
    %439 = vmatprep.subr.bf16.mxu0 0
    %440 = vmatpush1.bf16.msra.mxu0 0
    %441 = vmatprep.subr.bf16.mxu0 0
    %442 = vmatpush1.bf16.msra.mxu0 0
    %443 = vmatprep.subr.bf16.mxu0 0
    %444 = vmatpush1.bf16.msra.mxu0 0
    %445 = vmatprep.subr.bf16.mxu0 0
    %446 = vmatpush1.bf16.msra.mxu0 0
    %447 = vmatprep.subr.bf16.mxu0 0
    %448 = vmatpush1.bf16.msra.mxu0 0
    %449 = vmatprep.subr.bf16.mxu0 0
    %450 = vmatpush1.bf16.msra.mxu0 0
    %451 = vmatprep.subr.bf16.mxu0 0
    %452 = vmatpush1.bf16.msra.mxu0 0
    %453 = vmatprep.subr.bf16.mxu0 0
    %454 = vmatpush1.bf16.msra.mxu0 0
    %455 = vmatprep.subr.bf16.mxu0 0
    %456 = vmatpush1.bf16.msra.mxu0 0
    %457 = vmatprep.subr.bf16.mxu0 0
    %458 = vmatpush1.bf16.msra.mxu0 0
    %459 = vmatprep.subr.bf16.mxu0 0
    %460 = vmatpush1.bf16.msra.mxu0 0
    %461 = vmatprep.subr.bf16.mxu0 0
    %462 = vmatpush1.bf16.msra.mxu0 0
    %463 = vmatprep.mubr.bf16.mxu0 0
    %464 = vmatmul.mubr.bf16.gmra.mrb[0].mxu0 %v429
    %v465 = vpop.f32.mrb[0].mxu0
    %v466 = vadd.f32 %v190, %v465
    %v467 = vpop.f32.mrb[0].mxu0
    %v468 = vadd.f32 %v194, %v467
    %v469 = vpop.f32.mrb[0].mxu0
    %v470 = vadd.f32 %v190, %v469
    %v471 = vpop.f32.mrb[0].mxu0
    %v472 = vadd.f32 %v194, %v471
    %473 = vdwg.mxu0
    %474 = vmatprep.subr.bf16.mxu0 %v366
    %475 = vmatpush1.bf16.msra.mxu0 %v365
    %476 = vmatprep.subr.bf16.mxu0 %v382
    %477 = vmatpush1.bf16.msra.mxu0 %v381
    %478 = vmatprep.subr.bf16.mxu0 0
    %479 = vmatpush1.bf16.msra.mxu0 0
    %480 = vmatprep.subr.bf16.mxu0 0
    %481 = vmatpush1.bf16.msra.mxu0 0
    %482 = vmatprep.subr.bf16.mxu0 0
    %483 = vmatpush1.bf16.msra.mxu0 0
    %484 = vmatprep.subr.bf16.mxu0 0
    %485 = vmatpush1.bf16.msra.mxu0 0
    %486 = vmatprep.subr.bf16.mxu0 0
    %487 = vmatpush1.bf16.msra.mxu0 0
    %488 = vmatprep.subr.bf16.mxu0 0
    %489 = vmatpush1.bf16.msra.mxu0 0
    %490 = vmatprep.subr.bf16.mxu0 0
    %491 = vmatpush1.bf16.msra.mxu0 0
    %492 = vmatprep.subr.bf16.mxu0 0
    %493 = vmatpush1.bf16.msra.mxu0 0
    %494 = vmatprep.subr.bf16.mxu0 0
    %495 = vmatpush1.bf16.msra.mxu0 0
    %496 = vmatprep.subr.bf16.mxu0 0
    %497 = vmatpush1.bf16.msra.mxu0 0
    %498 = vmatprep.subr.bf16.mxu0 0
    %499 = vmatpush1.bf16.msra.mxu0 0
    %500 = vmatprep.subr.bf16.mxu0 0
    %501 = vmatpush1.bf16.msra.mxu0 0
    %502 = vmatprep.subr.bf16.mxu0 0
    %503 = vmatpush1.bf16.msra.mxu0 0
    %504 = vmatprep.subr.bf16.mxu0 0
    %505 = vmatpush1.bf16.msra.mxu0 0
    %506 = vmatprep.mubr.bf16.mxu0 0
    %507 = vmatmul.mubr.bf16.gmra.mrb[0].mxu0 %v429
    %v508 = vpop.f32.mrb[0].mxu0
    %v509 = vadd.f32 %v198, %v508
    %v510 = vpop.f32.mrb[0].mxu0
    %v511 = vadd.f32 %v202, %v510
    %v512 = vpop.f32.mrb[0].mxu0
    %v513 = vadd.f32 %v198, %v512
    %v514 = vpop.f32.mrb[0].mxu0
    %v515 = vadd.f32 %v202, %v514
    %516 = vdwg.mxu0
    %517 = vmatprep.subr.bf16.mxu0 %v368
    %518 = vmatpush1.bf16.msra.mxu0 %v367
    %519 = vmatprep.subr.bf16.mxu0 %v384
    %520 = vmatpush1.bf16.msra.mxu0 %v383
    %521 = vmatprep.subr.bf16.mxu0 0
    %522 = vmatpush1.bf16.msra.mxu0 0
    %523 = vmatprep.subr.bf16.mxu0 0
    %524 = vmatpush1.bf16.msra.mxu0 0
    %525 = vmatprep.subr.bf16.mxu0 0
    %526 = vmatpush1.bf16.msra.mxu0 0
    %527 = vmatprep.subr.bf16.mxu0 0
    %528 = vmatpush1.bf16.msra.mxu0 0
    %529 = vmatprep.subr.bf16.mxu0 0
    %530 = vmatpush1.bf16.msra.mxu0 0
    %531 = vmatprep.subr.bf16.mxu0 0
    %532 = vmatpush1.bf16.msra.mxu0 0
    %533 = vmatprep.subr.bf16.mxu0 0
    %534 = vmatpush1.bf16.msra.mxu0 0
    %535 = vmatprep.subr.bf16.mxu0 0
    %536 = vmatpush1.bf16.msra.mxu0 0
    %537 = vmatprep.subr.bf16.mxu0 0
    %538 = vmatpush1.bf16.msra.mxu0 0
    %539 = vmatprep.subr.bf16.mxu0 0
    %540 = vmatpush1.bf16.msra.mxu0 0
    %541 = vmatprep.subr.bf16.mxu0 0
    %542 = vmatpush1.bf16.msra.mxu0 0
    %543 = vmatprep.subr.bf16.mxu0 0
    %544 = vmatpush1.bf16.msra.mxu0 0
    %545 = vmatprep.subr.bf16.mxu0 0
    %546 = vmatpush1.bf16.msra.mxu0 0
    %547 = vmatprep.subr.bf16.mxu0 0
    %548 = vmatpush1.bf16.msra.mxu0 0
    %549 = vmatprep.mubr.bf16.mxu0 0
    %550 = vmatmul.mubr.bf16.gmra.mrb[0].mxu0 %v429
    %v551 = vpop.f32.mrb[0].mxu0
    %v552 = vadd.f32 %v206, %v551
    %v553 = vpop.f32.mrb[0].mxu0
    %v554 = vadd.f32 %v210, %v553
    %v555 = vpop.f32.mrb[0].mxu0
    %v556 = vadd.f32 %v206, %v555
    %v557 = vpop.f32.mrb[0].mxu0
    %v558 = vadd.f32 %v210, %v557
    %559 = vdwg.mxu0
    %560 = vmatprep.subr.bf16.mxu0 %v370
    %561 = vmatpush1.bf16.msra.mxu0 %v369
    %562 = vmatprep.subr.bf16.mxu0 %v386
    %563 = vmatpush1.bf16.msra.mxu0 %v385
    %564 = vmatprep.subr.bf16.mxu0 0
    %565 = vmatpush1.bf16.msra.mxu0 0
    %566 = vmatprep.subr.bf16.mxu0 0
    %567 = vmatpush1.bf16.msra.mxu0 0
    %568 = vmatprep.subr.bf16.mxu0 0
    %569 = vmatpush1.bf16.msra.mxu0 0
    %570 = vmatprep.subr.bf16.mxu0 0
    %571 = vmatpush1.bf16.msra.mxu0 0
    %572 = vmatprep.subr.bf16.mxu0 0
    %573 = vmatpush1.bf16.msra.mxu0 0
    %574 = vmatprep.subr.bf16.mxu0 0
    %575 = vmatpush1.bf16.msra.mxu0 0
    %576 = vmatprep.subr.bf16.mxu0 0
    %577 = vmatpush1.bf16.msra.mxu0 0
    %578 = vmatprep.subr.bf16.mxu0 0
    %579 = vmatpush1.bf16.msra.mxu0 0
    %580 = vmatprep.subr.bf16.mxu0 0
    %581 = vmatpush1.bf16.msra.mxu0 0
    %582 = vmatprep.subr.bf16.mxu0 0
    %583 = vmatpush1.bf16.msra.mxu0 0
    %584 = vmatprep.subr.bf16.mxu0 0
    %585 = vmatpush1.bf16.msra.mxu0 0
    %586 = vmatprep.subr.bf16.mxu0 0
    %587 = vmatpush1.bf16.msra.mxu0 0
    %588 = vmatprep.subr.bf16.mxu0 0
    %589 = vmatpush1.bf16.msra.mxu0 0
    %590 = vmatprep.subr.bf16.mxu0 0
    %591 = vmatpush1.bf16.msra.mxu0 0
    %592 = vmatprep.mubr.bf16.mxu0 0
    %593 = vmatmul.mubr.bf16.gmra.mrb[0].mxu0 %v429
    %v594 = vpop.f32.mrb[0].mxu0
    %v595 = vadd.f32 %v214, %v594
    %v596 = vpop.f32.mrb[0].mxu0
    %v597 = vadd.f32 %v218, %v596
    %v598 = vpop.f32.mrb[0].mxu0
    %v599 = vadd.f32 %v214, %v598
    %v600 = vpop.f32.mrb[0].mxu0
    %v601 = vadd.f32 %v218, %v600
    %602 = vdwg.mxu0
    %603 = vmatprep.subr.bf16.mxu0 %v372
    %604 = vmatpush1.bf16.msra.mxu0 %v371
    %605 = vmatprep.subr.bf16.mxu0 %v388
    %606 = vmatpush1.bf16.msra.mxu0 %v387
    %607 = vmatprep.subr.bf16.mxu0 0
    %608 = vmatpush1.bf16.msra.mxu0 0
    %609 = vmatprep.subr.bf16.mxu0 0
    %610 = vmatpush1.bf16.msra.mxu0 0
    %611 = vmatprep.subr.bf16.mxu0 0
    %612 = vmatpush1.bf16.msra.mxu0 0
    %613 = vmatprep.subr.bf16.mxu0 0
    %614 = vmatpush1.bf16.msra.mxu0 0
    %615 = vmatprep.subr.bf16.mxu0 0
    %616 = vmatpush1.bf16.msra.mxu0 0
    %617 = vmatprep.subr.bf16.mxu0 0
    %618 = vmatpush1.bf16.msra.mxu0 0
    %619 = vmatprep.subr.bf16.mxu0 0
    %620 = vmatpush1.bf16.msra.mxu0 0
    %621 = vmatprep.subr.bf16.mxu0 0
    %622 = vmatpush1.bf16.msra.mxu0 0
    %623 = vmatprep.subr.bf16.mxu0 0
    %624 = vmatpush1.bf16.msra.mxu0 0
    %625 = vmatprep.subr.bf16.mxu0 0
    %626 = vmatpush1.bf16.msra.mxu0 0
    %627 = vmatprep.subr.bf16.mxu0 0
    %628 = vmatpush1.bf16.msra.mxu0 0
    %629 = vmatprep.subr.bf16.mxu0 0
    %630 = vmatpush1.bf16.msra.mxu0 0
    %631 = vmatprep.subr.bf16.mxu0 0
    %632 = vmatpush1.bf16.msra.mxu0 0
    %633 = vmatprep.subr.bf16.mxu0 0
    %634 = vmatpush1.bf16.msra.mxu0 0
    %635 = vmatprep.mubr.bf16.mxu0 0
    %636 = vmatmul.mubr.bf16.gmra.mrb[0].mxu0 %v429
    %v637 = vpop.f32.mrb[0].mxu0
    %v638 = vadd.f32 %v222, %v637
    %v639 = vpop.f32.mrb[0].mxu0
    %v640 = vadd.f32 %v226, %v639
    %v641 = vpop.f32.mrb[0].mxu0
    %v642 = vadd.f32 %v222, %v641
    %v643 = vpop.f32.mrb[0].mxu0
    %v644 = vadd.f32 %v226, %v643
    %645 = vdwg.mxu0
    %646 = vmatprep.subr.bf16.mxu0 %v374
    %647 = vmatpush1.bf16.msra.mxu0 %v373
    %648 = vmatprep.subr.bf16.mxu0 %v390
    %649 = vmatpush1.bf16.msra.mxu0 %v389
    %650 = vmatprep.subr.bf16.mxu0 0
    %651 = vmatpush1.bf16.msra.mxu0 0
    %652 = vmatprep.subr.bf16.mxu0 0
    %653 = vmatpush1.bf16.msra.mxu0 0
    %654 = vmatprep.subr.bf16.mxu0 0
    %655 = vmatpush1.bf16.msra.mxu0 0
    %656 = vmatprep.subr.bf16.mxu0 0
    %657 = vmatpush1.bf16.msra.mxu0 0
    %658 = vmatprep.subr.bf16.mxu0 0
    %659 = vmatpush1.bf16.msra.mxu0 0
    %660 = vmatprep.subr.bf16.mxu0 0
    %661 = vmatpush1.bf16.msra.mxu0 0
    %662 = vmatprep.subr.bf16.mxu0 0
    %663 = vmatpush1.bf16.msra.mxu0 0
    %664 = vmatprep.subr.bf16.mxu0 0
    %665 = vmatpush1.bf16.msra.mxu0 0
    %666 = vmatprep.subr.bf16.mxu0 0
    %667 = vmatpush1.bf16.msra.mxu0 0
    %668 = vmatprep.subr.bf16.mxu0 0
    %669 = vmatpush1.bf16.msra.mxu0 0
    %670 = vmatprep.subr.bf16.mxu0 0
    %671 = vmatpush1.bf16.msra.mxu0 0
    %672 = vmatprep.subr.bf16.mxu0 0
    %673 = vmatpush1.bf16.msra.mxu0 0
    %674 = vmatprep.subr.bf16.mxu0 0
    %675 = vmatpush1.bf16.msra.mxu0 0
    %676 = vmatprep.subr.bf16.mxu0 0
    %677 = vmatpush1.bf16.msra.mxu0 0
    %678 = vmatprep.mubr.bf16.mxu0 0
    %679 = vmatmul.mubr.bf16.gmra.mrb[0].mxu0 %v429
    %v680 = vpop.f32.mrb[0].mxu0
    %v681 = vadd.f32 %v230, %v680
    %v682 = vpop.f32.mrb[0].mxu0
    %v683 = vadd.f32 %v234, %v682
    %v684 = vpop.f32.mrb[0].mxu0
    %v685 = vadd.f32 %v230, %v684
    %v686 = vpop.f32.mrb[0].mxu0
    %v687 = vadd.f32 %v234, %v686
    %688 = vdwg.mxu0
    %689 = vmatprep.subr.bf16.mxu0 %v376
    %690 = vmatpush1.bf16.msra.mxu0 %v375
    %691 = vmatprep.subr.bf16.mxu0 %v392
    %692 = vmatpush1.bf16.msra.mxu0 %v391
    %693 = vmatprep.subr.bf16.mxu0 0
    %694 = vmatpush1.bf16.msra.mxu0 0
    %695 = vmatprep.subr.bf16.mxu0 0
    %696 = vmatpush1.bf16.msra.mxu0 0
    %697 = vmatprep.subr.bf16.mxu0 0
    %698 = vmatpush1.bf16.msra.mxu0 0
    %699 = vmatprep.subr.bf16.mxu0 0
    %700 = vmatpush1.bf16.msra.mxu0 0
    %701 = vmatprep.subr.bf16.mxu0 0
    %702 = vmatpush1.bf16.msra.mxu0 0
    %703 = vmatprep.subr.bf16.mxu0 0
    %704 = vmatpush1.bf16.msra.mxu0 0
    %705 = vmatprep.subr.bf16.mxu0 0
    %706 = vmatpush1.bf16.msra.mxu0 0
    %707 = vmatprep.subr.bf16.mxu0 0
    %708 = vmatpush1.bf16.msra.mxu0 0
    %709 = vmatprep.subr.bf16.mxu0 0
    %710 = vmatpush1.bf16.msra.mxu0 0
    %711 = vmatprep.subr.bf16.mxu0 0
    %712 = vmatpush1.bf16.msra.mxu0 0
    %713 = vmatprep.subr.bf16.mxu0 0
    %714 = vmatpush1.bf16.msra.mxu0 0
    %715 = vmatprep.subr.bf16.mxu0 0
    %716 = vmatpush1.bf16.msra.mxu0 0
    %717 = vmatprep.subr.bf16.mxu0 0
    %718 = vmatpush1.bf16.msra.mxu0 0
    %719 = vmatprep.subr.bf16.mxu0 0
    %720 = vmatpush1.bf16.msra.mxu0 0
    %721 = vmatprep.mubr.bf16.mxu0 0
    %722 = vmatmul.mubr.bf16.gmra.mrb[0].mxu0 %v429
    %v723 = vpop.f32.mrb[0].mxu0
    %v724 = vadd.f32 %v238, %v723
    %v725 = vpop.f32.mrb[0].mxu0
    %v726 = vadd.f32 %v242, %v725
    %v727 = vpop.f32.mrb[0].mxu0
    %v728 = vadd.f32 %v238, %v727
    %v729 = vpop.f32.mrb[0].mxu0
    %v730 = vadd.f32 %v242, %v729
    %731 = vdwg.mxu0
    %732 = vmatprep.subr.bf16.mxu0 %v378
    %733 = vmatpush1.bf16.msra.mxu0 %v377
    %734 = vmatprep.subr.bf16.mxu0 %v394
    %735 = vmatpush1.bf16.msra.mxu0 %v393
    %736 = vmatprep.subr.bf16.mxu0 0
    %737 = vmatpush1.bf16.msra.mxu0 0
    %738 = vmatprep.subr.bf16.mxu0 0
    %739 = vmatpush1.bf16.msra.mxu0 0
    %740 = vmatprep.subr.bf16.mxu0 0
    %741 = vmatpush1.bf16.msra.mxu0 0
    %742 = vmatprep.subr.bf16.mxu0 0
    %743 = vmatpush1.bf16.msra.mxu0 0
    %744 = vmatprep.subr.bf16.mxu0 0
    %745 = vmatpush1.bf16.msra.mxu0 0
    %746 = vmatprep.subr.bf16.mxu0 0
    %747 = vmatpush1.bf16.msra.mxu0 0
    %748 = vmatprep.subr.bf16.mxu0 0
    %749 = vmatpush1.bf16.msra.mxu0 0
    %750 = vmatprep.subr.bf16.mxu0 0
    %751 = vmatpush1.bf16.msra.mxu0 0
    %752 = vmatprep.subr.bf16.mxu0 0
    %753 = vmatpush1.bf16.msra.mxu0 0
    %754 = vmatprep.subr.bf16.mxu0 0
    %755 = vmatpush1.bf16.msra.mxu0 0
    %756 = vmatprep.subr.bf16.mxu0 0
    %757 = vmatpush1.bf16.msra.mxu0 0
    %758 = vmatprep.subr.bf16.mxu0 0
    %759 = vmatpush1.bf16.msra.mxu0 0
    %760 = vmatprep.subr.bf16.mxu0 0
    %761 = vmatpush1.bf16.msra.mxu0 0
    %762 = vmatprep.subr.bf16.mxu0 0
    %763 = vmatpush1.bf16.msra.mxu0 0
    %764 = vmatprep.mubr.bf16.mxu0 0
    %765 = vmatmul.mubr.bf16.gmra.mrb[0].mxu0 %v429
    %v766 = vpop.f32.mrb[0].mxu0
    %v767 = vadd.f32 %v246, %v766
    %v768 = vpop.f32.mrb[0].mxu0
    %v769 = vadd.f32 %v250, %v768
    %v770 = vpop.f32.mrb[0].mxu0
    %v771 = vadd.f32 %v246, %v770
    %v772 = vpop.f32.mrb[0].mxu0
    %v773 = vadd.f32 %v250, %v772
    %774 = vdwg.mxu0
    %v775 = vmax.f32 %v466, 0.0
    %v776 = vmax.f32 %v468, 0.0
    %v777 = vmax.f32 %v509, 0.0
    %v778 = vmax.f32 %v511, 0.0
    %v779 = vmax.f32 %v552, 0.0
    %v780 = vmax.f32 %v554, 0.0
    %v781 = vmax.f32 %v595, 0.0
    %v782 = vmax.f32 %v597, 0.0
    %v783 = vmax.f32 %v638, 0.0
    %v784 = vmax.f32 %v640, 0.0
    %v785 = vmax.f32 %v681, 0.0
    %v786 = vmax.f32 %v683, 0.0
    %v787 = vmax.f32 %v724, 0.0
    %v788 = vmax.f32 %v726, 0.0
    %v789 = vmax.f32 %v767, 0.0
    %v790 = vmax.f32 %v769, 0.0
    %v791 = vmax.f32 %v470, 0.0
    %v792 = vmax.f32 %v472, 0.0
    %v793 = vmax.f32 %v513, 0.0
    %v794 = vmax.f32 %v515, 0.0
    %v795 = vmax.f32 %v556, 0.0
    %v796 = vmax.f32 %v558, 0.0
    %v797 = vmax.f32 %v599, 0.0
    %v798 = vmax.f32 %v601, 0.0
    %v799 = vmax.f32 %v642, 0.0
    %v800 = vmax.f32 %v644, 0.0
    %v801 = vmax.f32 %v685, 0.0
    %v802 = vmax.f32 %v687, 0.0
    %v803 = vmax.f32 %v728, 0.0
    %v804 = vmax.f32 %v730, 0.0
    %v805 = vmax.f32 %v771, 0.0
    %v806 = vmax.f32 %v773, 0.0
    %v807 = vpack.c.bf16 %v791, %v775
    %v808 = vpack.c.bf16 %v792, %v776
    %v809 = vpack.c.bf16 %v793, %v777
    %v810 = vpack.c.bf16 %v794, %v778
    %v811 = vpack.c.bf16 %v795, %v779
    %v812 = vpack.c.bf16 %v796, %v780
    %v813 = vpack.c.bf16 %v797, %v781
    %v814 = vpack.c.bf16 %v798, %v782
    %v815 = vpack.c.bf16 %v799, %v783
    %v816 = vpack.c.bf16 %v800, %v784
    %v817 = vpack.c.bf16 %v801, %v785
    %v818 = vpack.c.bf16 %v802, %v786
    %v819 = vpack.c.bf16 %v803, %v787
    %v820 = vpack.c.bf16 %v804, %v788
    %v821 = vpack.c.bf16 %v805, %v789
    %v822 = vpack.c.bf16 %v806, %v790
    %v823 = vld [vmem:[#allocation8] sm:$0xff]
    %v824 = vld [vmem:[#allocation8 + $0x8] sm:$0xff]
    %v825 = vld [vmem:[#allocation8 + $0x10] sm:$0xff]
    %v826 = vld [vmem:[#allocation8 + $0x18] sm:$0xff]
    %v827 = vld [vmem:[#allocation8 + $0x20] sm:$0xff]
    %v828 = vld [vmem:[#allocation8 + $0x28] sm:$0xff]
    %v829 = vld [vmem:[#allocation8 + $0x30] sm:$0xff]
    %v830 = vld [vmem:[#allocation8 + $0x38] sm:$0xff]
    %v831 = vld [vmem:[#allocation8 + $0x40] sm:$0xff]
    %v832 = vld [vmem:[#allocation8 + $0x48] sm:$0xff]
    %v833 = vld [vmem:[#allocation8 + $0x50] sm:$0xff]
    %v834 = vld [vmem:[#allocation8 + $0x58] sm:$0xff]
    %v835 = vld [vmem:[#allocation8 + $0x60] sm:$0xff]
    %v836 = vld [vmem:[#allocation8 + $0x68] sm:$0xff]
    %v837 = vld [vmem:[#allocation8 + $0x70] sm:$0xff]
    %v838 = vld [vmem:[#allocation8 + $0x78] sm:$0xff]
    %v839 = vld [vmem:[#allocation8 + $0x80] sm:$0xff]
    %v840 = vld [vmem:[#allocation8 + $0x88] sm:$0xff]
    %v841 = vld [vmem:[#allocation8 + $0x90] sm:$0xff]
    %v842 = vld [vmem:[#allocation8 + $0x98] sm:$0xff]
    %v843 = vld [vmem:[#allocation8 + $0xa0] sm:$0xff]
    %v844 = vld [vmem:[#allocation8 + $0xa8] sm:$0xff]
    %v845 = vld [vmem:[#allocation8 + $0xb0] sm:$0xff]
    %v846 = vld [vmem:[#allocation8 + $0xb8] sm:$0xff]
    %v847 = vld [vmem:[#allocation8 + $0xc0] sm:$0xff]
    %v848 = vld [vmem:[#allocation8 + $0xc8] sm:$0xff]
    %v849 = vld [vmem:[#allocation8 + $0xd0] sm:$0xff]
    %v850 = vld [vmem:[#allocation8 + $0xd8] sm:$0xff]
    %v851 = vld [vmem:[#allocation8 + $0xe0] sm:$0xff]
    %v852 = vld [vmem:[#allocation8 + $0xe8] sm:$0xff]
    %v853 = vld [vmem:[#allocation8 + $0xf0] sm:$0xff]
    %v854 = vld [vmem:[#allocation8 + $0xf8] sm:$0xff]
    %v855 = vld [vmem:[#allocation8 + $0x100] sm:$0xff]
    %v856 = vld [vmem:[#allocation8 + $0x108] sm:$0xff]
    %v857 = vld [vmem:[#allocation8 + $0x110] sm:$0xff]
    %v858 = vld [vmem:[#allocation8 + $0x118] sm:$0xff]
    %v859 = vld [vmem:[#allocation8 + $0x120] sm:$0xff]
    %v860 = vld [vmem:[#allocation8 + $0x128] sm:$0xff]
    %v861 = vld [vmem:[#allocation8 + $0x130] sm:$0xff]
    %v862 = vld [vmem:[#allocation8 + $0x138] sm:$0xff]
    %v863 = vld [vmem:[#allocation8 + $0x140] sm:$0xff]
    %v864 = vld [vmem:[#allocation8 + $0x148] sm:$0xff]
    %v865 = vld [vmem:[#allocation8 + $0x150] sm:$0xff]
    %v866 = vld [vmem:[#allocation8 + $0x158] sm:$0xff]
    %v867 = vld [vmem:[#allocation8 + $0x160] sm:$0xff]
    %v868 = vld [vmem:[#allocation8 + $0x168] sm:$0xff]
    %v869 = vld [vmem:[#allocation8 + $0x170] sm:$0xff]
    %v870 = vld [vmem:[#allocation8 + $0x178] sm:$0xff]
    %v871 = vld [vmem:[#allocation8 + $0x180] sm:$0xff]
    %v872 = vld [vmem:[#allocation8 + $0x188] sm:$0xff]
    %v873 = vld [vmem:[#allocation8 + $0x190] sm:$0xff]
    %v874 = vld [vmem:[#allocation8 + $0x198] sm:$0xff]
    %v875 = vld [vmem:[#allocation8 + $0x1a0] sm:$0xff]
    %v876 = vld [vmem:[#allocation8 + $0x1a8] sm:$0xff]
    %v877 = vld [vmem:[#allocation8 + $0x1b0] sm:$0xff]
    %v878 = vld [vmem:[#allocation8 + $0x1b8] sm:$0xff]
    %v879 = vld [vmem:[#allocation8 + $0x1c0] sm:$0xff]
    %v880 = vld [vmem:[#allocation8 + $0x1c8] sm:$0xff]
    %v881 = vld [vmem:[#allocation8 + $0x1d0] sm:$0xff]
    %v882 = vld [vmem:[#allocation8 + $0x1d8] sm:$0xff]
    %v883 = vld [vmem:[#allocation8 + $0x1e0] sm:$0xff]
    %v884 = vld [vmem:[#allocation8 + $0x1e8] sm:$0xff]
    %v885 = vld [vmem:[#allocation8 + $0x1f0] sm:$0xff]
    %v886 = vld [vmem:[#allocation8 + $0x1f8] sm:$0xff]
    %v887 = vld [vmem:[#allocation8 + $0x200] sm:$0xff]
    %v888 = vld [vmem:[#allocation8 + $0x208] sm:$0xff]
    %v889 = vld [vmem:[#allocation8 + $0x210] sm:$0xff]
    %v890 = vld [vmem:[#allocation8 + $0x218] sm:$0xff]
    %v891 = vld [vmem:[#allocation8 + $0x220] sm:$0xff]
    %v892 = vld [vmem:[#allocation8 + $0x228] sm:$0xff]
    %v893 = vld [vmem:[#allocation8 + $0x230] sm:$0xff]
    %v894 = vld [vmem:[#allocation8 + $0x238] sm:$0xff]
    %v895 = vld [vmem:[#allocation8 + $0x240] sm:$0xff]
    %v896 = vld [vmem:[#allocation8 + $0x248] sm:$0xff]
    %v897 = vld [vmem:[#allocation8 + $0x250] sm:$0xff]
    %v898 = vld [vmem:[#allocation8 + $0x258] sm:$0xff]
    %v899 = vld [vmem:[#allocation8 + $0x260] sm:$0xff]
    %v900 = vld [vmem:[#allocation8 + $0x268] sm:$0xff]
    %v901 = vld [vmem:[#allocation8 + $0x270] sm:$0xff]
    %v902 = vld [vmem:[#allocation8 + $0x278] sm:$0xff]
    %v903 = vld [vmem:[#allocation8 + $0x280] sm:$0xff]
    %v904 = vld [vmem:[#allocation8 + $0x288] sm:$0xff]
    %v905 = vld [vmem:[#allocation8 + $0x290] sm:$0xff]
    %v906 = vld [vmem:[#allocation8 + $0x298] sm:$0xff]
    %v907 = vld [vmem:[#allocation8 + $0x2a0] sm:$0xff]
    %v908 = vld [vmem:[#allocation8 + $0x2a8] sm:$0xff]
    %v909 = vld [vmem:[#allocation8 + $0x2b0] sm:$0xff]
    %v910 = vld [vmem:[#allocation8 + $0x2b8] sm:$0xff]
    %v911 = vld [vmem:[#allocation8 + $0x2c0] sm:$0xff]
    %v912 = vld [vmem:[#allocation8 + $0x2c8] sm:$0xff]
    %v913 = vld [vmem:[#allocation8 + $0x2d0] sm:$0xff]
    %v914 = vld [vmem:[#allocation8 + $0x2d8] sm:$0xff]
    %v915 = vld [vmem:[#allocation8 + $0x2e0] sm:$0xff]
    %v916 = vld [vmem:[#allocation8 + $0x2e8] sm:$0xff]
    %v917 = vld [vmem:[#allocation8 + $0x2f0] sm:$0xff]
    %v918 = vld [vmem:[#allocation8 + $0x2f8] sm:$0xff]
    %v919 = vld [vmem:[#allocation8 + $0x300] sm:$0xff]
    %v920 = vld [vmem:[#allocation8 + $0x308] sm:$0xff]
    %v921 = vld [vmem:[#allocation8 + $0x310] sm:$0xff]
    %v922 = vld [vmem:[#allocation8 + $0x318] sm:$0xff]
    %v923 = vld [vmem:[#allocation8 + $0x320] sm:$0xff]
    %v924 = vld [vmem:[#allocation8 + $0x328] sm:$0xff]
    %v925 = vld [vmem:[#allocation8 + $0x330] sm:$0xff]
    %v926 = vld [vmem:[#allocation8 + $0x338] sm:$0xff]
    %v927 = vld [vmem:[#allocation8 + $0x340] sm:$0xff]
    %v928 = vld [vmem:[#allocation8 + $0x348] sm:$0xff]
    %v929 = vld [vmem:[#allocation8 + $0x350] sm:$0xff]
    %v930 = vld [vmem:[#allocation8 + $0x358] sm:$0xff]
    %v931 = vld [vmem:[#allocation8 + $0x360] sm:$0xff]
    %v932 = vld [vmem:[#allocation8 + $0x368] sm:$0xff]
    %v933 = vld [vmem:[#allocation8 + $0x370] sm:$0xff]
    %v934 = vld [vmem:[#allocation8 + $0x378] sm:$0xff]
    %v935 = vld [vmem:[#allocation8 + $0x380] sm:$0xff]
    %v936 = vld [vmem:[#allocation8 + $0x388] sm:$0xff]
    %v937 = vld [vmem:[#allocation8 + $0x390] sm:$0xff]
    %v938 = vld [vmem:[#allocation8 + $0x398] sm:$0xff]
    %v939 = vld [vmem:[#allocation8 + $0x3a0] sm:$0xff]
    %v940 = vld [vmem:[#allocation8 + $0x3a8] sm:$0xff]
    %v941 = vld [vmem:[#allocation8 + $0x3b0] sm:$0xff]
    %v942 = vld [vmem:[#allocation8 + $0x3b8] sm:$0xff]
    %v943 = vld [vmem:[#allocation8 + $0x3c0] sm:$0xff]
    %v944 = vld [vmem:[#allocation8 + $0x3c8] sm:$0xff]
    %v945 = vld [vmem:[#allocation8 + $0x3d0] sm:$0xff]
    %v946 = vld [vmem:[#allocation8 + $0x3d8] sm:$0xff]
    %v947 = vld [vmem:[#allocation8 + $0x3e0] sm:$0xff]
    %v948 = vld [vmem:[#allocation8 + $0x3e8] sm:$0xff]
    %v949 = vld [vmem:[#allocation8 + $0x3f0] sm:$0xff]
    %v950 = vld [vmem:[#allocation8 + $0x3f8] sm:$0xff]
    %v951 = vld [vmem:[#allocation8 + $0x400] sm:$0xff]
    %v952 = vld [vmem:[#allocation8 + $0x408] sm:$0xff]
    %v953 = vld [vmem:[#allocation8 + $0x410] sm:$0xff]
    %v954 = vld [vmem:[#allocation8 + $0x418] sm:$0xff]
    %v955 = vld [vmem:[#allocation8 + $0x420] sm:$0xff]
    %v956 = vld [vmem:[#allocation8 + $0x428] sm:$0xff]
    %v957 = vld [vmem:[#allocation8 + $0x430] sm:$0xff]
    %v958 = vld [vmem:[#allocation8 + $0x438] sm:$0xff]
    %v959 = vld [vmem:[#allocation8 + $0x440] sm:$0xff]
    %v960 = vld [vmem:[#allocation8 + $0x448] sm:$0xff]
    %v961 = vld [vmem:[#allocation8 + $0x450] sm:$0xff]
    %v962 = vld [vmem:[#allocation8 + $0x458] sm:$0xff]
    %v963 = vld [vmem:[#allocation8 + $0x460] sm:$0xff]
    %v964 = vld [vmem:[#allocation8 + $0x468] sm:$0xff]
    %v965 = vld [vmem:[#allocation8 + $0x470] sm:$0xff]
    %v966 = vld [vmem:[#allocation8 + $0x478] sm:$0xff]
    %v967 = vld [vmem:[#allocation8 + $0x480] sm:$0xff]
    %v968 = vld [vmem:[#allocation8 + $0x488] sm:$0xff]
    %v969 = vld [vmem:[#allocation8 + $0x490] sm:$0xff]
    %v970 = vld [vmem:[#allocation8 + $0x498] sm:$0xff]
    %v971 = vld [vmem:[#allocation8 + $0x4a0] sm:$0xff]
    %v972 = vld [vmem:[#allocation8 + $0x4a8] sm:$0xff]
    %v973 = vld [vmem:[#allocation8 + $0x4b0] sm:$0xff]
    %v974 = vld [vmem:[#allocation8 + $0x4b8] sm:$0xff]
    %v975 = vld [vmem:[#allocation8 + $0x4c0] sm:$0xff]
    %v976 = vld [vmem:[#allocation8 + $0x4c8] sm:$0xff]
    %v977 = vld [vmem:[#allocation8 + $0x4d0] sm:$0xff]
    %v978 = vld [vmem:[#allocation8 + $0x4d8] sm:$0xff]
    %v979 = vld [vmem:[#allocation8 + $0x4e0] sm:$0xff]
    %v980 = vld [vmem:[#allocation8 + $0x4e8] sm:$0xff]
    %v981 = vld [vmem:[#allocation8 + $0x4f0] sm:$0xff]
    %v982 = vld [vmem:[#allocation8 + $0x4f8] sm:$0xff]
    %v983 = vld [vmem:[#allocation8 + $0x500] sm:$0xff]
    %v984 = vld [vmem:[#allocation8 + $0x508] sm:$0xff]
    %v985 = vld [vmem:[#allocation8 + $0x510] sm:$0xff]
    %v986 = vld [vmem:[#allocation8 + $0x518] sm:$0xff]
    %v987 = vld [vmem:[#allocation8 + $0x520] sm:$0xff]
    %v988 = vld [vmem:[#allocation8 + $0x528] sm:$0xff]
    %v989 = vld [vmem:[#allocation8 + $0x530] sm:$0xff]
    %v990 = vld [vmem:[#allocation8 + $0x538] sm:$0xff]
    %v991 = vld [vmem:[#allocation8 + $0x540] sm:$0xff]
    %v992 = vld [vmem:[#allocation8 + $0x548] sm:$0xff]
    %v993 = vld [vmem:[#allocation8 + $0x550] sm:$0xff]
    %v994 = vld [vmem:[#allocation8 + $0x558] sm:$0xff]
    %v995 = vld [vmem:[#allocation8 + $0x560] sm:$0xff]
    %v996 = vld [vmem:[#allocation8 + $0x568] sm:$0xff]
    %v997 = vld [vmem:[#allocation8 + $0x570] sm:$0xff]
    %v998 = vld [vmem:[#allocation8 + $0x578] sm:$0xff]
    %v999 = vld [vmem:[#allocation8 + $0x580] sm:$0xff]
    %v1000 = vld [vmem:[#allocation8 + $0x588] sm:$0xff]
    %v1001 = vld [vmem:[#allocation8 + $0x590] sm:$0xff]
    %v1002 = vld [vmem:[#allocation8 + $0x598] sm:$0xff]
    %v1003 = vld [vmem:[#allocation8 + $0x5a0] sm:$0xff]
    %v1004 = vld [vmem:[#allocation8 + $0x5a8] sm:$0xff]
    %v1005 = vld [vmem:[#allocation8 + $0x5b0] sm:$0xff]
    %v1006 = vld [vmem:[#allocation8 + $0x5b8] sm:$0xff]
    %v1007 = vld [vmem:[#allocation8 + $0x5c0] sm:$0xff]
    %v1008 = vld [vmem:[#allocation8 + $0x5c8] sm:$0xff]
    %v1009 = vld [vmem:[#allocation8 + $0x5d0] sm:$0xff]
    %v1010 = vld [vmem:[#allocation8 + $0x5d8] sm:$0xff]
    %v1011 = vld [vmem:[#allocation8 + $0x5e0] sm:$0xff]
    %v1012 = vld [vmem:[#allocation8 + $0x5e8] sm:$0xff]
    %v1013 = vld [vmem:[#allocation8 + $0x5f0] sm:$0xff]
    %v1014 = vld [vmem:[#allocation8 + $0x5f8] sm:$0xff]
    %v1015 = vld [vmem:[#allocation8 + $0x600] sm:$0xff]
    %v1016 = vld [vmem:[#allocation8 + $0x608] sm:$0xff]
    %v1017 = vld [vmem:[#allocation8 + $0x610] sm:$0xff]
    %v1018 = vld [vmem:[#allocation8 + $0x618] sm:$0xff]
    %v1019 = vld [vmem:[#allocation8 + $0x620] sm:$0xff]
    %v1020 = vld [vmem:[#allocation8 + $0x628] sm:$0xff]
    %v1021 = vld [vmem:[#allocation8 + $0x630] sm:$0xff]
    %v1022 = vld [vmem:[#allocation8 + $0x638] sm:$0xff]
    %v1023 = vld [vmem:[#allocation8 + $0x640] sm:$0xff]
    %v1024 = vld [vmem:[#allocation8 + $0x648] sm:$0xff]
    %v1025 = vld [vmem:[#allocation8 + $0x650] sm:$0xff]
    %v1026 = vld [vmem:[#allocation8 + $0x658] sm:$0xff]
    %v1027 = vld [vmem:[#allocation8 + $0x660] sm:$0xff]
    %v1028 = vld [vmem:[#allocation8 + $0x668] sm:$0xff]
    %v1029 = vld [vmem:[#allocation8 + $0x670] sm:$0xff]
    %v1030 = vld [vmem:[#allocation8 + $0x678] sm:$0xff]
    %v1031 = vld [vmem:[#allocation8 + $0x680] sm:$0xff]
    %v1032 = vld [vmem:[#allocation8 + $0x688] sm:$0xff]
    %v1033 = vld [vmem:[#allocation8 + $0x690] sm:$0xff]
    %v1034 = vld [vmem:[#allocation8 + $0x698] sm:$0xff]
    %v1035 = vld [vmem:[#allocation8 + $0x6a0] sm:$0xff]
    %v1036 = vld [vmem:[#allocation8 + $0x6a8] sm:$0xff]
    %v1037 = vld [vmem:[#allocation8 + $0x6b0] sm:$0xff]
    %v1038 = vld [vmem:[#allocation8 + $0x6b8] sm:$0xff]
    %v1039 = vld [vmem:[#allocation8 + $0x6c0] sm:$0xff]
    %v1040 = vld [vmem:[#allocation8 + $0x6c8] sm:$0xff]
    %v1041 = vld [vmem:[#allocation8 + $0x6d0] sm:$0xff]
    %v1042 = vld [vmem:[#allocation8 + $0x6d8] sm:$0xff]
    %v1043 = vld [vmem:[#allocation8 + $0x6e0] sm:$0xff]
    %v1044 = vld [vmem:[#allocation8 + $0x6e8] sm:$0xff]
    %v1045 = vld [vmem:[#allocation8 + $0x6f0] sm:$0xff]
    %v1046 = vld [vmem:[#allocation8 + $0x6f8] sm:$0xff]
    %v1047 = vld [vmem:[#allocation8 + $0x700] sm:$0xff]
    %v1048 = vld [vmem:[#allocation8 + $0x708] sm:$0xff]
    %v1049 = vld [vmem:[#allocation8 + $0x710] sm:$0xff]
    %v1050 = vld [vmem:[#allocation8 + $0x718] sm:$0xff]
    %v1051 = vld [vmem:[#allocation8 + $0x720] sm:$0xff]
    %v1052 = vld [vmem:[#allocation8 + $0x728] sm:$0xff]
    %v1053 = vld [vmem:[#allocation8 + $0x730] sm:$0xff]
    %v1054 = vld [vmem:[#allocation8 + $0x738] sm:$0xff]
    %v1055 = vld [vmem:[#allocation8 + $0x740] sm:$0xff]
    %v1056 = vld [vmem:[#allocation8 + $0x748] sm:$0xff]
    %v1057 = vld [vmem:[#allocation8 + $0x750] sm:$0xff]
    %v1058 = vld [vmem:[#allocation8 + $0x758] sm:$0xff]
    %v1059 = vld [vmem:[#allocation8 + $0x760] sm:$0xff]
    %v1060 = vld [vmem:[#allocation8 + $0x768] sm:$0xff]
    %v1061 = vld [vmem:[#allocation8 + $0x770] sm:$0xff]
    %v1062 = vld [vmem:[#allocation8 + $0x778] sm:$0xff]
    %v1063 = vld [vmem:[#allocation8 + $0x780] sm:$0xff]
    %v1064 = vld [vmem:[#allocation8 + $0x788] sm:$0xff]
    %v1065 = vld [vmem:[#allocation8 + $0x790] sm:$0xff]
    %v1066 = vld [vmem:[#allocation8 + $0x798] sm:$0xff]
    %v1067 = vld [vmem:[#allocation8 + $0x7a0] sm:$0xff]
    %v1068 = vld [vmem:[#allocation8 + $0x7a8] sm:$0xff]
    %v1069 = vld [vmem:[#allocation8 + $0x7b0] sm:$0xff]
    %v1070 = vld [vmem:[#allocation8 + $0x7b8] sm:$0xff]
    %v1071 = vld [vmem:[#allocation8 + $0x7c0] sm:$0xff]
    %v1072 = vld [vmem:[#allocation8 + $0x7c8] sm:$0xff]
    %v1073 = vld [vmem:[#allocation8 + $0x7d0] sm:$0xff]
    %v1074 = vld [vmem:[#allocation8 + $0x7d8] sm:$0xff]
    %v1075 = vld [vmem:[#allocation8 + $0x7e0] sm:$0xff]
    %v1076 = vld [vmem:[#allocation8 + $0x7e8] sm:$0xff]
    %v1077 = vld [vmem:[#allocation8 + $0x7f0] sm:$0xff]
    %v1078 = vld [vmem:[#allocation8 + $0x7f8] sm:$0xff]
    %v1079 = vld [vmem:[#allocation8 + $0x800] sm:$0xff]
    %v1080 = vld [vmem:[#allocation8 + $0x808] sm:$0xff]
    %v1081 = vld [vmem:[#allocation8 + $0x810] sm:$0xff]
    %v1082 = vld [vmem:[#allocation8 + $0x818] sm:$0xff]
    %v1083 = vld [vmem:[#allocation8 + $0x820] sm:$0xff]
    %v1084 = vld [vmem:[#allocation8 + $0x828] sm:$0xff]
    %v1085 = vld [vmem:[#allocation8 + $0x830] sm:$0xff]
    %v1086 = vld [vmem:[#allocation8 + $0x838] sm:$0xff]
    %v1087 = vld [vmem:[#allocation8 + $0x840] sm:$0xff]
    %v1088 = vld [vmem:[#allocation8 + $0x848] sm:$0xff]
    %v1089 = vld [vmem:[#allocation8 + $0x850] sm:$0xff]
    %v1090 = vld [vmem:[#allocation8 + $0x858] sm:$0xff]
    %v1091 = vld [vmem:[#allocation8 + $0x860] sm:$0xff]
    %v1092 = vld [vmem:[#allocation8 + $0x868] sm:$0xff]
    %v1093 = vld [vmem:[#allocation8 + $0x870] sm:$0xff]
    %v1094 = vld [vmem:[#allocation8 + $0x878] sm:$0xff]
    %v1095 = vld [vmem:[#allocation8 + $0x880] sm:$0xff]
    %v1096 = vld [vmem:[#allocation8 + $0x888] sm:$0xff]
    %v1097 = vld [vmem:[#allocation8 + $0x890] sm:$0xff]
    %v1098 = vld [vmem:[#allocation8 + $0x898] sm:$0xff]
    %v1099 = vld [vmem:[#allocation8 + $0x8a0] sm:$0xff]
    %v1100 = vld [vmem:[#allocation8 + $0x8a8] sm:$0xff]
    %v1101 = vld [vmem:[#allocation8 + $0x8b0] sm:$0xff]
    %v1102 = vld [vmem:[#allocation8 + $0x8b8] sm:$0xff]
    %v1103 = vld [vmem:[#allocation8 + $0x8c0] sm:$0xff]
    %v1104 = vld [vmem:[#allocation8 + $0x8c8] sm:$0xff]
    %v1105 = vld [vmem:[#allocation8 + $0x8d0] sm:$0xff]
    %v1106 = vld [vmem:[#allocation8 + $0x8d8] sm:$0xff]
    %v1107 = vld [vmem:[#allocation8 + $0x8e0] sm:$0xff]
    %v1108 = vld [vmem:[#allocation8 + $0x8e8] sm:$0xff]
    %v1109 = vld [vmem:[#allocation8 + $0x8f0] sm:$0xff]
    %v1110 = vld [vmem:[#allocation8 + $0x8f8] sm:$0xff]
    %v1111 = vld [vmem:[#allocation8 + $0x900] sm:$0xff]
    %v1112 = vld [vmem:[#allocation8 + $0x908] sm:$0xff]
    %v1113 = vld [vmem:[#allocation8 + $0x910] sm:$0xff]
    %v1114 = vld [vmem:[#allocation8 + $0x918] sm:$0xff]
    %v1115 = vld [vmem:[#allocation8 + $0x920] sm:$0xff]
    %v1116 = vld [vmem:[#allocation8 + $0x928] sm:$0xff]
    %v1117 = vld [vmem:[#allocation8 + $0x930] sm:$0xff]
    %v1118 = vld [vmem:[#allocation8 + $0x938] sm:$0xff]
    %v1119 = vld [vmem:[#allocation8 + $0x940] sm:$0xff]
    %v1120 = vld [vmem:[#allocation8 + $0x948] sm:$0xff]
    %v1121 = vld [vmem:[#allocation8 + $0x950] sm:$0xff]
    %v1122 = vld [vmem:[#allocation8 + $0x958] sm:$0xff]
    %v1123 = vld [vmem:[#allocation8 + $0x960] sm:$0xff]
    %v1124 = vld [vmem:[#allocation8 + $0x968] sm:$0xff]
    %v1125 = vld [vmem:[#allocation8 + $0x970] sm:$0xff]
    %v1126 = vld [vmem:[#allocation8 + $0x978] sm:$0xff]
    %v1127 = vld [vmem:[#allocation8 + $0x980] sm:$0xff]
    %v1128 = vld [vmem:[#allocation8 + $0x988] sm:$0xff]
    %v1129 = vld [vmem:[#allocation8 + $0x990] sm:$0xff]
    %v1130 = vld [vmem:[#allocation8 + $0x998] sm:$0xff]
    %v1131 = vld [vmem:[#allocation8 + $0x9a0] sm:$0xff]
    %v1132 = vld [vmem:[#allocation8 + $0x9a8] sm:$0xff]
    %v1133 = vld [vmem:[#allocation8 + $0x9b0] sm:$0xff]
    %v1134 = vld [vmem:[#allocation8 + $0x9b8] sm:$0xff]
    %v1135 = vld [vmem:[#allocation8 + $0x9c0] sm:$0xff]
    %v1136 = vld [vmem:[#allocation8 + $0x9c8] sm:$0xff]
    %v1137 = vld [vmem:[#allocation8 + $0x9d0] sm:$0xff]
    %v1138 = vld [vmem:[#allocation8 + $0x9d8] sm:$0xff]
    %v1139 = vld [vmem:[#allocation8 + $0x9e0] sm:$0xff]
    %v1140 = vld [vmem:[#allocation8 + $0x9e8] sm:$0xff]
    %v1141 = vld [vmem:[#allocation8 + $0x9f0] sm:$0xff]
    %v1142 = vld [vmem:[#allocation8 + $0x9f8] sm:$0xff]
    %v1143 = vld [vmem:[#allocation8 + $0xa00] sm:$0xff]
    %v1144 = vld [vmem:[#allocation8 + $0xa08] sm:$0xff]
    %v1145 = vld [vmem:[#allocation8 + $0xa10] sm:$0xff]
    %v1146 = vld [vmem:[#allocation8 + $0xa18] sm:$0xff]
    %v1147 = vld [vmem:[#allocation8 + $0xa20] sm:$0xff]
    %v1148 = vld [vmem:[#allocation8 + $0xa28] sm:$0xff]
    %v1149 = vld [vmem:[#allocation8 + $0xa30] sm:$0xff]
    %v1150 = vld [vmem:[#allocation8 + $0xa38] sm:$0xff]
    %v1151 = vld [vmem:[#allocation8 + $0xa40] sm:$0xff]
    %v1152 = vld [vmem:[#allocation8 + $0xa48] sm:$0xff]
    %v1153 = vld [vmem:[#allocation8 + $0xa50] sm:$0xff]
    %v1154 = vld [vmem:[#allocation8 + $0xa58] sm:$0xff]
    %v1155 = vld [vmem:[#allocation8 + $0xa60] sm:$0xff]
    %v1156 = vld [vmem:[#allocation8 + $0xa68] sm:$0xff]
    %v1157 = vld [vmem:[#allocation8 + $0xa70] sm:$0xff]
    %v1158 = vld [vmem:[#allocation8 + $0xa78] sm:$0xff]
    %v1159 = vld [vmem:[#allocation8 + $0xa80] sm:$0xff]
    %v1160 = vld [vmem:[#allocation8 + $0xa88] sm:$0xff]
    %v1161 = vld [vmem:[#allocation8 + $0xa90] sm:$0xff]
    %v1162 = vld [vmem:[#allocation8 + $0xa98] sm:$0xff]
    %v1163 = vld [vmem:[#allocation8 + $0xaa0] sm:$0xff]
    %v1164 = vld [vmem:[#allocation8 + $0xaa8] sm:$0xff]
    %v1165 = vld [vmem:[#allocation8 + $0xab0] sm:$0xff]
    %v1166 = vld [vmem:[#allocation8 + $0xab8] sm:$0xff]
    %v1167 = vld [vmem:[#allocation8 + $0xac0] sm:$0xff]
    %v1168 = vld [vmem:[#allocation8 + $0xac8] sm:$0xff]
    %v1169 = vld [vmem:[#allocation8 + $0xad0] sm:$0xff]
    %v1170 = vld [vmem:[#allocation8 + $0xad8] sm:$0xff]
    %v1171 = vld [vmem:[#allocation8 + $0xae0] sm:$0xff]
    %v1172 = vld [vmem:[#allocation8 + $0xae8] sm:$0xff]
    %v1173 = vld [vmem:[#allocation8 + $0xaf0] sm:$0xff]
    %v1174 = vld [vmem:[#allocation8 + $0xaf8] sm:$0xff]
    %v1175 = vld [vmem:[#allocation8 + $0xb00] sm:$0xff]
    %v1176 = vld [vmem:[#allocation8 + $0xb08] sm:$0xff]
    %v1177 = vld [vmem:[#allocation8 + $0xb10] sm:$0xff]
    %v1178 = vld [vmem:[#allocation8 + $0xb18] sm:$0xff]
    %v1179 = vld [vmem:[#allocation8 + $0xb20] sm:$0xff]
    %v1180 = vld [vmem:[#allocation8 + $0xb28] sm:$0xff]
    %v1181 = vld [vmem:[#allocation8 + $0xb30] sm:$0xff]
    %v1182 = vld [vmem:[#allocation8 + $0xb38] sm:$0xff]
    %v1183 = vld [vmem:[#allocation8 + $0xb40] sm:$0xff]
    %v1184 = vld [vmem:[#allocation8 + $0xb48] sm:$0xff]
    %v1185 = vld [vmem:[#allocation8 + $0xb50] sm:$0xff]
    %v1186 = vld [vmem:[#allocation8 + $0xb58] sm:$0xff]
    %v1187 = vld [vmem:[#allocation8 + $0xb60] sm:$0xff]
    %v1188 = vld [vmem:[#allocation8 + $0xb68] sm:$0xff]
    %v1189 = vld [vmem:[#allocation8 + $0xb70] sm:$0xff]
    %v1190 = vld [vmem:[#allocation8 + $0xb78] sm:$0xff]
    %v1191 = vld [vmem:[#allocation8 + $0xb80] sm:$0xff]
    %v1192 = vld [vmem:[#allocation8 + $0xb88] sm:$0xff]
    %v1193 = vld [vmem:[#allocation8 + $0xb90] sm:$0xff]
    %v1194 = vld [vmem:[#allocation8 + $0xb98] sm:$0xff]
    %v1195 = vld [vmem:[#allocation8 + $0xba0] sm:$0xff]
    %v1196 = vld [vmem:[#allocation8 + $0xba8] sm:$0xff]
    %v1197 = vld [vmem:[#allocation8 + $0xbb0] sm:$0xff]
    %v1198 = vld [vmem:[#allocation8 + $0xbb8] sm:$0xff]
    %v1199 = vld [vmem:[#allocation8 + $0xbc0] sm:$0xff]
    %v1200 = vld [vmem:[#allocation8 + $0xbc8] sm:$0xff]
    %v1201 = vld [vmem:[#allocation8 + $0xbd0] sm:$0xff]
    %v1202 = vld [vmem:[#allocation8 + $0xbd8] sm:$0xff]
    %v1203 = vld [vmem:[#allocation8 + $0xbe0] sm:$0xff]
    %v1204 = vld [vmem:[#allocation8 + $0xbe8] sm:$0xff]
    %v1205 = vld [vmem:[#allocation8 + $0xbf0] sm:$0xff]
    %v1206 = vld [vmem:[#allocation8 + $0xbf8] sm:$0xff]
    %v1207 = vld [vmem:[#allocation8 + $0xc00] sm:$0xff]
    %v1208 = vld [vmem:[#allocation8 + $0xc08] sm:$0xff]
    %v1209 = vld [vmem:[#allocation8 + $0xc10] sm:$0xff]
    %v1210 = vld [vmem:[#allocation8 + $0xc18] sm:$0xff]
    %v1211 = vld [vmem:[#allocation8 + $0xc20] sm:$0xff]
    %v1212 = vld [vmem:[#allocation8 + $0xc28] sm:$0xff]
    %v1213 = vld [vmem:[#allocation8 + $0xc30] sm:$0xff]
    %v1214 = vld [vmem:[#allocation8 + $0xc38] sm:$0xff]
    %v1215 = vld [vmem:[#allocation8 + $0xc40] sm:$0xff]
    %v1216 = vld [vmem:[#allocation8 + $0xc48] sm:$0xff]
    %v1217 = vld [vmem:[#allocation8 + $0xc50] sm:$0xff]
    %v1218 = vld [vmem:[#allocation8 + $0xc58] sm:$0xff]
    %v1219 = vld [vmem:[#allocation8 + $0xc60] sm:$0xff]
    %v1220 = vld [vmem:[#allocation8 + $0xc68] sm:$0xff]
    %v1221 = vld [vmem:[#allocation8 + $0xc70] sm:$0xff]
    %v1222 = vld [vmem:[#allocation8 + $0xc78] sm:$0xff]
    %v1223 = vld [vmem:[#allocation8 + $0xc80] sm:$0xff]
    %v1224 = vld [vmem:[#allocation8 + $0xc88] sm:$0xff]
    %v1225 = vld [vmem:[#allocation8 + $0xc90] sm:$0xff]
    %v1226 = vld [vmem:[#allocation8 + $0xc98] sm:$0xff]
    %v1227 = vld [vmem:[#allocation8 + $0xca0] sm:$0xff]
    %v1228 = vld [vmem:[#allocation8 + $0xca8] sm:$0xff]
    %v1229 = vld [vmem:[#allocation8 + $0xcb0] sm:$0xff]
    %v1230 = vld [vmem:[#allocation8 + $0xcb8] sm:$0xff]
    %v1231 = vld [vmem:[#allocation8 + $0xcc0] sm:$0xff]
    %v1232 = vld [vmem:[#allocation8 + $0xcc8] sm:$0xff]
    %v1233 = vld [vmem:[#allocation8 + $0xcd0] sm:$0xff]
    %v1234 = vld [vmem:[#allocation8 + $0xcd8] sm:$0xff]
    %v1235 = vld [vmem:[#allocation8 + $0xce0] sm:$0xff]
    %v1236 = vld [vmem:[#allocation8 + $0xce8] sm:$0xff]
    %v1237 = vld [vmem:[#allocation8 + $0xcf0] sm:$0xff]
    %v1238 = vld [vmem:[#allocation8 + $0xcf8] sm:$0xff]
    %v1239 = vld [vmem:[#allocation8 + $0xd00] sm:$0xff]
    %v1240 = vld [vmem:[#allocation8 + $0xd08] sm:$0xff]
    %v1241 = vld [vmem:[#allocation8 + $0xd10] sm:$0xff]
    %v1242 = vld [vmem:[#allocation8 + $0xd18] sm:$0xff]
    %v1243 = vld [vmem:[#allocation8 + $0xd20] sm:$0xff]
    %v1244 = vld [vmem:[#allocation8 + $0xd28] sm:$0xff]
    %v1245 = vld [vmem:[#allocation8 + $0xd30] sm:$0xff]
    %v1246 = vld [vmem:[#allocation8 + $0xd38] sm:$0xff]
    %v1247 = vld [vmem:[#allocation8 + $0xd40] sm:$0xff]
    %v1248 = vld [vmem:[#allocation8 + $0xd48] sm:$0xff]
    %v1249 = vld [vmem:[#allocation8 + $0xd50] sm:$0xff]
    %v1250 = vld [vmem:[#allocation8 + $0xd58] sm:$0xff]
    %v1251 = vld [vmem:[#allocation8 + $0xd60] sm:$0xff]
    %v1252 = vld [vmem:[#allocation8 + $0xd68] sm:$0xff]
    %v1253 = vld [vmem:[#allocation8 + $0xd70] sm:$0xff]
    %v1254 = vld [vmem:[#allocation8 + $0xd78] sm:$0xff]
    %v1255 = vld [vmem:[#allocation8 + $0xd80] sm:$0xff]
    %v1256 = vld [vmem:[#allocation8 + $0xd88] sm:$0xff]
    %v1257 = vld [vmem:[#allocation8 + $0xd90] sm:$0xff]
    %v1258 = vld [vmem:[#allocation8 + $0xd98] sm:$0xff]
    %v1259 = vld [vmem:[#allocation8 + $0xda0] sm:$0xff]
    %v1260 = vld [vmem:[#allocation8 + $0xda8] sm:$0xff]
    %v1261 = vld [vmem:[#allocation8 + $0xdb0] sm:$0xff]
    %v1262 = vld [vmem:[#allocation8 + $0xdb8] sm:$0xff]
    %v1263 = vld [vmem:[#allocation8 + $0xdc0] sm:$0xff]
    %v1264 = vld [vmem:[#allocation8 + $0xdc8] sm:$0xff]
    %v1265 = vld [vmem:[#allocation8 + $0xdd0] sm:$0xff]
    %v1266 = vld [vmem:[#allocation8 + $0xdd8] sm:$0xff]
    %v1267 = vld [vmem:[#allocation8 + $0xde0] sm:$0xff]
    %v1268 = vld [vmem:[#allocation8 + $0xde8] sm:$0xff]
    %v1269 = vld [vmem:[#allocation8 + $0xdf0] sm:$0xff]
    %v1270 = vld [vmem:[#allocation8 + $0xdf8] sm:$0xff]
    %v1271 = vld [vmem:[#allocation8 + $0xe00] sm:$0xff]
    %v1272 = vld [vmem:[#allocation8 + $0xe08] sm:$0xff]
    %v1273 = vld [vmem:[#allocation8 + $0xe10] sm:$0xff]
    %v1274 = vld [vmem:[#allocation8 + $0xe18] sm:$0xff]
    %v1275 = vld [vmem:[#allocation8 + $0xe20] sm:$0xff]
    %v1276 = vld [vmem:[#allocation8 + $0xe28] sm:$0xff]
    %v1277 = vld [vmem:[#allocation8 + $0xe30] sm:$0xff]
    %v1278 = vld [vmem:[#allocation8 + $0xe38] sm:$0xff]
    %v1279 = vld [vmem:[#allocation8 + $0xe40] sm:$0xff]
    %v1280 = vld [vmem:[#allocation8 + $0xe48] sm:$0xff]
    %v1281 = vld [vmem:[#allocation8 + $0xe50] sm:$0xff]
    %v1282 = vld [vmem:[#allocation8 + $0xe58] sm:$0xff]
    %v1283 = vld [vmem:[#allocation8 + $0xe60] sm:$0xff]
    %v1284 = vld [vmem:[#allocation8 + $0xe68] sm:$0xff]
    %v1285 = vld [vmem:[#allocation8 + $0xe70] sm:$0xff]
    %v1286 = vld [vmem:[#allocation8 + $0xe78] sm:$0xff]
    %v1287 = vld [vmem:[#allocation8 + $0xe80] sm:$0xff]
    %v1288 = vld [vmem:[#allocation8 + $0xe88] sm:$0xff]
    %v1289 = vld [vmem:[#allocation8 + $0xe90] sm:$0xff]
    %v1290 = vld [vmem:[#allocation8 + $0xe98] sm:$0xff]
    %v1291 = vld [vmem:[#allocation8 + $0xea0] sm:$0xff]
    %v1292 = vld [vmem:[#allocation8 + $0xea8] sm:$0xff]
    %v1293 = vld [vmem:[#allocation8 + $0xeb0] sm:$0xff]
    %v1294 = vld [vmem:[#allocation8 + $0xeb8] sm:$0xff]
    %v1295 = vld [vmem:[#allocation8 + $0xec0] sm:$0xff]
    %v1296 = vld [vmem:[#allocation8 + $0xec8] sm:$0xff]
    %v1297 = vld [vmem:[#allocation8 + $0xed0] sm:$0xff]
    %v1298 = vld [vmem:[#allocation8 + $0xed8] sm:$0xff]
    %v1299 = vld [vmem:[#allocation8 + $0xee0] sm:$0xff]
    %v1300 = vld [vmem:[#allocation8 + $0xee8] sm:$0xff]
    %v1301 = vld [vmem:[#allocation8 + $0xef0] sm:$0xff]
    %v1302 = vld [vmem:[#allocation8 + $0xef8] sm:$0xff]
    %v1303 = vld [vmem:[#allocation8 + $0xf00] sm:$0xff]
    %v1304 = vld [vmem:[#allocation8 + $0xf08] sm:$0xff]
    %v1305 = vld [vmem:[#allocation8 + $0xf10] sm:$0xff]
    %v1306 = vld [vmem:[#allocation8 + $0xf18] sm:$0xff]
    %v1307 = vld [vmem:[#allocation8 + $0xf20] sm:$0xff]
    %v1308 = vld [vmem:[#allocation8 + $0xf28] sm:$0xff]
    %v1309 = vld [vmem:[#allocation8 + $0xf30] sm:$0xff]
    %v1310 = vld [vmem:[#allocation8 + $0xf38] sm:$0xff]
    %v1311 = vld [vmem:[#allocation8 + $0xf40] sm:$0xff]
    %v1312 = vld [vmem:[#allocation8 + $0xf48] sm:$0xff]
    %v1313 = vld [vmem:[#allocation8 + $0xf50] sm:$0xff]
    %v1314 = vld [vmem:[#allocation8 + $0xf58] sm:$0xff]
    %v1315 = vld [vmem:[#allocation8 + $0xf60] sm:$0xff]
    %v1316 = vld [vmem:[#allocation8 + $0xf68] sm:$0xff]
    %v1317 = vld [vmem:[#allocation8 + $0xf70] sm:$0xff]
    %v1318 = vld [vmem:[#allocation8 + $0xf78] sm:$0xff]
    %v1319 = vld [vmem:[#allocation8 + $0xf80] sm:$0xff]
    %v1320 = vld [vmem:[#allocation8 + $0xf88] sm:$0xff]
    %v1321 = vld [vmem:[#allocation8 + $0xf90] sm:$0xff]
    %v1322 = vld [vmem:[#allocation8 + $0xf98] sm:$0xff]
    %v1323 = vld [vmem:[#allocation8 + $0xfa0] sm:$0xff]
    %v1324 = vld [vmem:[#allocation8 + $0xfa8] sm:$0xff]
    %v1325 = vld [vmem:[#allocation8 + $0xfb0] sm:$0xff]
    %v1326 = vld [vmem:[#allocation8 + $0xfb8] sm:$0xff]
    %v1327 = vld [vmem:[#allocation8 + $0xfc0] sm:$0xff]
    %v1328 = vld [vmem:[#allocation8 + $0xfc8] sm:$0xff]
    %v1329 = vld [vmem:[#allocation8 + $0xfd0] sm:$0xff]
    %v1330 = vld [vmem:[#allocation8 + $0xfd8] sm:$0xff]
    %v1331 = vld [vmem:[#allocation8 + $0xfe0] sm:$0xff]
    %v1332 = vld [vmem:[#allocation8 + $0xfe8] sm:$0xff]
    %v1333 = vld [vmem:[#allocation8 + $0xff0] sm:$0xff]
    %v1334 = vld [vmem:[#allocation8 + $0xff8] sm:$0xff]
    %v1335 = vld [vmem:[#allocation10] sm:$0xf]
    %v1337 = vlaneseq
    %v1338 = vshrl.u32 %v1337, 7
    %v1339 = vsub.s32 0, %v1338
    %v1340 = vrot.slane %v1335, %v1339
    %v1341 = vlaneseq
    %v1342 = vshrl.u32 %v1341, 7
    %v1343 = vsub.s32 1, %v1342
    %v1344 = vrot.slane %v1335, %v1343
    %v1345 = vlaneseq
    %v1346 = vshrl.u32 %v1345, 7
    %v1347 = vsub.s32 2, %v1346
    %v1348 = vrot.slane %v1335, %v1347
    %v1349 = vlaneseq
    %v1350 = vshrl.u32 %v1349, 7
    %v1351 = vsub.s32 3, %v1350
    %v1352 = vrot.slane %v1335, %v1351
    %v1869 = vunpack.c.l.b16 %v823
    %v1870 = vunpack.c.h.b16 %v823
    %v1871 = vunpack.c.l.b16 %v824
    %v1872 = vunpack.c.h.b16 %v824
    %v1873 = vunpack.c.l.b16 %v825
    %v1874 = vunpack.c.h.b16 %v825
    %v1875 = vunpack.c.l.b16 %v826
    %v1876 = vunpack.c.h.b16 %v826
    %v1877 = vunpack.c.l.b16 %v827
    %v1878 = vunpack.c.h.b16 %v827
    %v1879 = vunpack.c.l.b16 %v828
    %v1880 = vunpack.c.h.b16 %v828
    %v1881 = vunpack.c.l.b16 %v829
    %v1882 = vunpack.c.h.b16 %v829
    %v1883 = vunpack.c.l.b16 %v830
    %v1884 = vunpack.c.h.b16 %v830
    %v1885 = vunpack.c.l.b16 %v831
    %v1886 = vunpack.c.h.b16 %v831
    %v1887 = vunpack.c.l.b16 %v832
    %v1888 = vunpack.c.h.b16 %v832
    %v1889 = vunpack.c.l.b16 %v833
    %v1890 = vunpack.c.h.b16 %v833
    %v1891 = vunpack.c.l.b16 %v834
    %v1892 = vunpack.c.h.b16 %v834
    %v1893 = vunpack.c.l.b16 %v835
    %v1894 = vunpack.c.h.b16 %v835
    %v1895 = vunpack.c.l.b16 %v836
    %v1896 = vunpack.c.h.b16 %v836
    %v1897 = vunpack.c.l.b16 %v837
    %v1898 = vunpack.c.h.b16 %v837
    %v1899 = vunpack.c.l.b16 %v838
    %v1900 = vunpack.c.h.b16 %v838
    %v1901 = vunpack.c.l.b16 %v839
    %v1902 = vunpack.c.h.b16 %v839
    %v1903 = vunpack.c.l.b16 %v840
    %v1904 = vunpack.c.h.b16 %v840
    %v1905 = vunpack.c.l.b16 %v841
    %v1906 = vunpack.c.h.b16 %v841
    %v1907 = vunpack.c.l.b16 %v842
    %v1908 = vunpack.c.h.b16 %v842
    %v1909 = vunpack.c.l.b16 %v843
    %v1910 = vunpack.c.h.b16 %v843
    %v1911 = vunpack.c.l.b16 %v844
    %v1912 = vunpack.c.h.b16 %v844
    %v1913 = vunpack.c.l.b16 %v845
    %v1914 = vunpack.c.h.b16 %v845
    %v1915 = vunpack.c.l.b16 %v846
    %v1916 = vunpack.c.h.b16 %v846
    %v1917 = vunpack.c.l.b16 %v847
    %v1918 = vunpack.c.h.b16 %v847
    %v1919 = vunpack.c.l.b16 %v848
    %v1920 = vunpack.c.h.b16 %v848
    %v1921 = vunpack.c.l.b16 %v849
    %v1922 = vunpack.c.h.b16 %v849
    %v1923 = vunpack.c.l.b16 %v850
    %v1924 = vunpack.c.h.b16 %v850
    %v1925 = vunpack.c.l.b16 %v851
    %v1926 = vunpack.c.h.b16 %v851
    %v1927 = vunpack.c.l.b16 %v852
    %v1928 = vunpack.c.h.b16 %v852
    %v1929 = vunpack.c.l.b16 %v853
    %v1930 = vunpack.c.h.b16 %v853
    %v1931 = vunpack.c.l.b16 %v854
    %v1932 = vunpack.c.h.b16 %v854
    %v1933 = vunpack.c.l.b16 %v855
    %v1934 = vunpack.c.h.b16 %v855
    %v1935 = vunpack.c.l.b16 %v856
    %v1936 = vunpack.c.h.b16 %v856
    %v1937 = vunpack.c.l.b16 %v857
    %v1938 = vunpack.c.h.b16 %v857
    %v1939 = vunpack.c.l.b16 %v858
    %v1940 = vunpack.c.h.b16 %v858
    %v1941 = vunpack.c.l.b16 %v859
    %v1942 = vunpack.c.h.b16 %v859
    %v1943 = vunpack.c.l.b16 %v860
    %v1944 = vunpack.c.h.b16 %v860
    %v1945 = vunpack.c.l.b16 %v861
    %v1946 = vunpack.c.h.b16 %v861
    %v1947 = vunpack.c.l.b16 %v862
    %v1948 = vunpack.c.h.b16 %v862
    %v1949 = vunpack.c.l.b16 %v863
    %v1950 = vunpack.c.h.b16 %v863
    %v1951 = vunpack.c.l.b16 %v864
    %v1952 = vunpack.c.h.b16 %v864
    %v1953 = vunpack.c.l.b16 %v865
    %v1954 = vunpack.c.h.b16 %v865
    %v1955 = vunpack.c.l.b16 %v866
    %v1956 = vunpack.c.h.b16 %v866
    %v1957 = vunpack.c.l.b16 %v867
    %v1958 = vunpack.c.h.b16 %v867
    %v1959 = vunpack.c.l.b16 %v868
    %v1960 = vunpack.c.h.b16 %v868
    %v1961 = vunpack.c.l.b16 %v869
    %v1962 = vunpack.c.h.b16 %v869
    %v1963 = vunpack.c.l.b16 %v870
    %v1964 = vunpack.c.h.b16 %v870
    %v1965 = vunpack.c.l.b16 %v871
    %v1966 = vunpack.c.h.b16 %v871
    %v1967 = vunpack.c.l.b16 %v872
    %v1968 = vunpack.c.h.b16 %v872
    %v1969 = vunpack.c.l.b16 %v873
    %v1970 = vunpack.c.h.b16 %v873
    %v1971 = vunpack.c.l.b16 %v874
    %v1972 = vunpack.c.h.b16 %v874
    %v1973 = vunpack.c.l.b16 %v875
    %v1974 = vunpack.c.h.b16 %v875
    %v1975 = vunpack.c.l.b16 %v876
    %v1976 = vunpack.c.h.b16 %v876
    %v1977 = vunpack.c.l.b16 %v877
    %v1978 = vunpack.c.h.b16 %v877
    %v1979 = vunpack.c.l.b16 %v878
    %v1980 = vunpack.c.h.b16 %v878
    %v1981 = vunpack.c.l.b16 %v879
    %v1982 = vunpack.c.h.b16 %v879
    %v1983 = vunpack.c.l.b16 %v880
    %v1984 = vunpack.c.h.b16 %v880
    %v1985 = vunpack.c.l.b16 %v881
    %v1986 = vunpack.c.h.b16 %v881
    %v1987 = vunpack.c.l.b16 %v882
    %v1988 = vunpack.c.h.b16 %v882
    %v1989 = vunpack.c.l.b16 %v883
    %v1990 = vunpack.c.h.b16 %v883
    %v1991 = vunpack.c.l.b16 %v884
    %v1992 = vunpack.c.h.b16 %v884
    %v1993 = vunpack.c.l.b16 %v885
    %v1994 = vunpack.c.h.b16 %v885
    %v1995 = vunpack.c.l.b16 %v886
    %v1996 = vunpack.c.h.b16 %v886
    %v1997 = vunpack.c.l.b16 %v887
    %v1998 = vunpack.c.h.b16 %v887
    %v1999 = vunpack.c.l.b16 %v888
    %v2000 = vunpack.c.h.b16 %v888
    %v2001 = vunpack.c.l.b16 %v889
    %v2002 = vunpack.c.h.b16 %v889
    %v2003 = vunpack.c.l.b16 %v890
    %v2004 = vunpack.c.h.b16 %v890
    %v2005 = vunpack.c.l.b16 %v891
    %v2006 = vunpack.c.h.b16 %v891
    %v2007 = vunpack.c.l.b16 %v892
    %v2008 = vunpack.c.h.b16 %v892
    %v2009 = vunpack.c.l.b16 %v893
    %v2010 = vunpack.c.h.b16 %v893
    %v2011 = vunpack.c.l.b16 %v894
    %v2012 = vunpack.c.h.b16 %v894
    %v2013 = vunpack.c.l.b16 %v895
    %v2014 = vunpack.c.h.b16 %v895
    %v2015 = vunpack.c.l.b16 %v896
    %v2016 = vunpack.c.h.b16 %v896
    %v2017 = vunpack.c.l.b16 %v897
    %v2018 = vunpack.c.h.b16 %v897
    %v2019 = vunpack.c.l.b16 %v898
    %v2020 = vunpack.c.h.b16 %v898
    %v2021 = vunpack.c.l.b16 %v899
    %v2022 = vunpack.c.h.b16 %v899
    %v2023 = vunpack.c.l.b16 %v900
    %v2024 = vunpack.c.h.b16 %v900
    %v2025 = vunpack.c.l.b16 %v901
    %v2026 = vunpack.c.h.b16 %v901
    %v2027 = vunpack.c.l.b16 %v902
    %v2028 = vunpack.c.h.b16 %v902
    %v2029 = vunpack.c.l.b16 %v903
    %v2030 = vunpack.c.h.b16 %v903
    %v2031 = vunpack.c.l.b16 %v904
    %v2032 = vunpack.c.h.b16 %v904
    %v2033 = vunpack.c.l.b16 %v905
    %v2034 = vunpack.c.h.b16 %v905
    %v2035 = vunpack.c.l.b16 %v906
    %v2036 = vunpack.c.h.b16 %v906
    %v2037 = vunpack.c.l.b16 %v907
    %v2038 = vunpack.c.h.b16 %v907
    %v2039 = vunpack.c.l.b16 %v908
    %v2040 = vunpack.c.h.b16 %v908
    %v2041 = vunpack.c.l.b16 %v909
    %v2042 = vunpack.c.h.b16 %v909
    %v2043 = vunpack.c.l.b16 %v910
    %v2044 = vunpack.c.h.b16 %v910
    %v2045 = vunpack.c.l.b16 %v911
    %v2046 = vunpack.c.h.b16 %v911
    %v2047 = vunpack.c.l.b16 %v912
    %v2048 = vunpack.c.h.b16 %v912
    %v2049 = vunpack.c.l.b16 %v913
    %v2050 = vunpack.c.h.b16 %v913
    %v2051 = vunpack.c.l.b16 %v914
    %v2052 = vunpack.c.h.b16 %v914
    %v2053 = vunpack.c.l.b16 %v915
    %v2054 = vunpack.c.h.b16 %v915
    %v2055 = vunpack.c.l.b16 %v916
    %v2056 = vunpack.c.h.b16 %v916
    %v2057 = vunpack.c.l.b16 %v917
    %v2058 = vunpack.c.h.b16 %v917
    %v2059 = vunpack.c.l.b16 %v918
    %v2060 = vunpack.c.h.b16 %v918
    %v2061 = vunpack.c.l.b16 %v919
    %v2062 = vunpack.c.h.b16 %v919
    %v2063 = vunpack.c.l.b16 %v920
    %v2064 = vunpack.c.h.b16 %v920
    %v2065 = vunpack.c.l.b16 %v921
    %v2066 = vunpack.c.h.b16 %v921
    %v2067 = vunpack.c.l.b16 %v922
    %v2068 = vunpack.c.h.b16 %v922
    %v2069 = vunpack.c.l.b16 %v923
    %v2070 = vunpack.c.h.b16 %v923
    %v2071 = vunpack.c.l.b16 %v924
    %v2072 = vunpack.c.h.b16 %v924
    %v2073 = vunpack.c.l.b16 %v925
    %v2074 = vunpack.c.h.b16 %v925
    %v2075 = vunpack.c.l.b16 %v926
    %v2076 = vunpack.c.h.b16 %v926
    %v2077 = vunpack.c.l.b16 %v927
    %v2078 = vunpack.c.h.b16 %v927
    %v2079 = vunpack.c.l.b16 %v928
    %v2080 = vunpack.c.h.b16 %v928
    %v2081 = vunpack.c.l.b16 %v929
    %v2082 = vunpack.c.h.b16 %v929
    %v2083 = vunpack.c.l.b16 %v930
    %v2084 = vunpack.c.h.b16 %v930
    %v2085 = vunpack.c.l.b16 %v931
    %v2086 = vunpack.c.h.b16 %v931
    %v2087 = vunpack.c.l.b16 %v932
    %v2088 = vunpack.c.h.b16 %v932
    %v2089 = vunpack.c.l.b16 %v933
    %v2090 = vunpack.c.h.b16 %v933
    %v2091 = vunpack.c.l.b16 %v934
    %v2092 = vunpack.c.h.b16 %v934
    %v2093 = vunpack.c.l.b16 %v935
    %v2094 = vunpack.c.h.b16 %v935
    %v2095 = vunpack.c.l.b16 %v936
    %v2096 = vunpack.c.h.b16 %v936
    %v2097 = vunpack.c.l.b16 %v937
    %v2098 = vunpack.c.h.b16 %v937
    %v2099 = vunpack.c.l.b16 %v938
    %v2100 = vunpack.c.h.b16 %v938
    %v2101 = vunpack.c.l.b16 %v939
    %v2102 = vunpack.c.h.b16 %v939
    %v2103 = vunpack.c.l.b16 %v940
    %v2104 = vunpack.c.h.b16 %v940
    %v2105 = vunpack.c.l.b16 %v941
    %v2106 = vunpack.c.h.b16 %v941
    %v2107 = vunpack.c.l.b16 %v942
    %v2108 = vunpack.c.h.b16 %v942
    %v2109 = vunpack.c.l.b16 %v943
    %v2110 = vunpack.c.h.b16 %v943
    %v2111 = vunpack.c.l.b16 %v944
    %v2112 = vunpack.c.h.b16 %v944
    %v2113 = vunpack.c.l.b16 %v945
    %v2114 = vunpack.c.h.b16 %v945
    %v2115 = vunpack.c.l.b16 %v946
    %v2116 = vunpack.c.h.b16 %v946
    %v2117 = vunpack.c.l.b16 %v947
    %v2118 = vunpack.c.h.b16 %v947
    %v2119 = vunpack.c.l.b16 %v948
    %v2120 = vunpack.c.h.b16 %v948
    %v2121 = vunpack.c.l.b16 %v949
    %v2122 = vunpack.c.h.b16 %v949
    %v2123 = vunpack.c.l.b16 %v950
    %v2124 = vunpack.c.h.b16 %v950
    %v2125 = vunpack.c.l.b16 %v951
    %v2126 = vunpack.c.h.b16 %v951
    %v2127 = vunpack.c.l.b16 %v952
    %v2128 = vunpack.c.h.b16 %v952
    %v2129 = vunpack.c.l.b16 %v953
    %v2130 = vunpack.c.h.b16 %v953
    %v2131 = vunpack.c.l.b16 %v954
    %v2132 = vunpack.c.h.b16 %v954
    %v2133 = vunpack.c.l.b16 %v955
    %v2134 = vunpack.c.h.b16 %v955
    %v2135 = vunpack.c.l.b16 %v956
    %v2136 = vunpack.c.h.b16 %v956
    %v2137 = vunpack.c.l.b16 %v957
    %v2138 = vunpack.c.h.b16 %v957
    %v2139 = vunpack.c.l.b16 %v958
    %v2140 = vunpack.c.h.b16 %v958
    %v2141 = vunpack.c.l.b16 %v959
    %v2142 = vunpack.c.h.b16 %v959
    %v2143 = vunpack.c.l.b16 %v960
    %v2144 = vunpack.c.h.b16 %v960
    %v2145 = vunpack.c.l.b16 %v961
    %v2146 = vunpack.c.h.b16 %v961
    %v2147 = vunpack.c.l.b16 %v962
    %v2148 = vunpack.c.h.b16 %v962
    %v2149 = vunpack.c.l.b16 %v963
    %v2150 = vunpack.c.h.b16 %v963
    %v2151 = vunpack.c.l.b16 %v964
    %v2152 = vunpack.c.h.b16 %v964
    %v2153 = vunpack.c.l.b16 %v965
    %v2154 = vunpack.c.h.b16 %v965
    %v2155 = vunpack.c.l.b16 %v966
    %v2156 = vunpack.c.h.b16 %v966
    %v2157 = vunpack.c.l.b16 %v967
    %v2158 = vunpack.c.h.b16 %v967
    %v2159 = vunpack.c.l.b16 %v968
    %v2160 = vunpack.c.h.b16 %v968
    %v2161 = vunpack.c.l.b16 %v969
    %v2162 = vunpack.c.h.b16 %v969
    %v2163 = vunpack.c.l.b16 %v970
    %v2164 = vunpack.c.h.b16 %v970
    %v2165 = vunpack.c.l.b16 %v971
    %v2166 = vunpack.c.h.b16 %v971
    %v2167 = vunpack.c.l.b16 %v972
    %v2168 = vunpack.c.h.b16 %v972
    %v2169 = vunpack.c.l.b16 %v973
    %v2170 = vunpack.c.h.b16 %v973
    %v2171 = vunpack.c.l.b16 %v974
    %v2172 = vunpack.c.h.b16 %v974
    %v2173 = vunpack.c.l.b16 %v975
    %v2174 = vunpack.c.h.b16 %v975
    %v2175 = vunpack.c.l.b16 %v976
    %v2176 = vunpack.c.h.b16 %v976
    %v2177 = vunpack.c.l.b16 %v977
    %v2178 = vunpack.c.h.b16 %v977
    %v2179 = vunpack.c.l.b16 %v978
    %v2180 = vunpack.c.h.b16 %v978
    %v2181 = vunpack.c.l.b16 %v979
    %v2182 = vunpack.c.h.b16 %v979
    %v2183 = vunpack.c.l.b16 %v980
    %v2184 = vunpack.c.h.b16 %v980
    %v2185 = vunpack.c.l.b16 %v981
    %v2186 = vunpack.c.h.b16 %v981
    %v2187 = vunpack.c.l.b16 %v982
    %v2188 = vunpack.c.h.b16 %v982
    %v2189 = vunpack.c.l.b16 %v983
    %v2190 = vunpack.c.h.b16 %v983
    %v2191 = vunpack.c.l.b16 %v984
    %v2192 = vunpack.c.h.b16 %v984
    %v2193 = vunpack.c.l.b16 %v985
    %v2194 = vunpack.c.h.b16 %v985
    %v2195 = vunpack.c.l.b16 %v986
    %v2196 = vunpack.c.h.b16 %v986
    %v2197 = vunpack.c.l.b16 %v987
    %v2198 = vunpack.c.h.b16 %v987
    %v2199 = vunpack.c.l.b16 %v988
    %v2200 = vunpack.c.h.b16 %v988
    %v2201 = vunpack.c.l.b16 %v989
    %v2202 = vunpack.c.h.b16 %v989
    %v2203 = vunpack.c.l.b16 %v990
    %v2204 = vunpack.c.h.b16 %v990
    %v2205 = vunpack.c.l.b16 %v991
    %v2206 = vunpack.c.h.b16 %v991
    %v2207 = vunpack.c.l.b16 %v992
    %v2208 = vunpack.c.h.b16 %v992
    %v2209 = vunpack.c.l.b16 %v993
    %v2210 = vunpack.c.h.b16 %v993
    %v2211 = vunpack.c.l.b16 %v994
    %v2212 = vunpack.c.h.b16 %v994
    %v2213 = vunpack.c.l.b16 %v995
    %v2214 = vunpack.c.h.b16 %v995
    %v2215 = vunpack.c.l.b16 %v996
    %v2216 = vunpack.c.h.b16 %v996
    %v2217 = vunpack.c.l.b16 %v997
    %v2218 = vunpack.c.h.b16 %v997
    %v2219 = vunpack.c.l.b16 %v998
    %v2220 = vunpack.c.h.b16 %v998
    %v2221 = vunpack.c.l.b16 %v999
    %v2222 = vunpack.c.h.b16 %v999
    %v2223 = vunpack.c.l.b16 %v1000
    %v2224 = vunpack.c.h.b16 %v1000
    %v2225 = vunpack.c.l.b16 %v1001
    %v2226 = vunpack.c.h.b16 %v1001
    %v2227 = vunpack.c.l.b16 %v1002
    %v2228 = vunpack.c.h.b16 %v1002
    %v2229 = vunpack.c.l.b16 %v1003
    %v2230 = vunpack.c.h.b16 %v1003
    %v2231 = vunpack.c.l.b16 %v1004
    %v2232 = vunpack.c.h.b16 %v1004
    %v2233 = vunpack.c.l.b16 %v1005
    %v2234 = vunpack.c.h.b16 %v1005
    %v2235 = vunpack.c.l.b16 %v1006
    %v2236 = vunpack.c.h.b16 %v1006
    %v2237 = vunpack.c.l.b16 %v1007
    %v2238 = vunpack.c.h.b16 %v1007
    %v2239 = vunpack.c.l.b16 %v1008
    %v2240 = vunpack.c.h.b16 %v1008
    %v2241 = vunpack.c.l.b16 %v1009
    %v2242 = vunpack.c.h.b16 %v1009
    %v2243 = vunpack.c.l.b16 %v1010
    %v2244 = vunpack.c.h.b16 %v1010
    %v2245 = vunpack.c.l.b16 %v1011
    %v2246 = vunpack.c.h.b16 %v1011
    %v2247 = vunpack.c.l.b16 %v1012
    %v2248 = vunpack.c.h.b16 %v1012
    %v2249 = vunpack.c.l.b16 %v1013
    %v2250 = vunpack.c.h.b16 %v1013
    %v2251 = vunpack.c.l.b16 %v1014
    %v2252 = vunpack.c.h.b16 %v1014
    %v2253 = vunpack.c.l.b16 %v1015
    %v2254 = vunpack.c.h.b16 %v1015
    %v2255 = vunpack.c.l.b16 %v1016
    %v2256 = vunpack.c.h.b16 %v1016
    %v2257 = vunpack.c.l.b16 %v1017
    %v2258 = vunpack.c.h.b16 %v1017
    %v2259 = vunpack.c.l.b16 %v1018
    %v2260 = vunpack.c.h.b16 %v1018
    %v2261 = vunpack.c.l.b16 %v1019
    %v2262 = vunpack.c.h.b16 %v1019
    %v2263 = vunpack.c.l.b16 %v1020
    %v2264 = vunpack.c.h.b16 %v1020
    %v2265 = vunpack.c.l.b16 %v1021
    %v2266 = vunpack.c.h.b16 %v1021
    %v2267 = vunpack.c.l.b16 %v1022
    %v2268 = vunpack.c.h.b16 %v1022
    %v2269 = vunpack.c.l.b16 %v1023
    %v2270 = vunpack.c.h.b16 %v1023
    %v2271 = vunpack.c.l.b16 %v1024
    %v2272 = vunpack.c.h.b16 %v1024
    %v2273 = vunpack.c.l.b16 %v1025
    %v2274 = vunpack.c.h.b16 %v1025
    %v2275 = vunpack.c.l.b16 %v1026
    %v2276 = vunpack.c.h.b16 %v1026
    %v2277 = vunpack.c.l.b16 %v1027
    %v2278 = vunpack.c.h.b16 %v1027
    %v2279 = vunpack.c.l.b16 %v1028
    %v2280 = vunpack.c.h.b16 %v1028
    %v2281 = vunpack.c.l.b16 %v1029
    %v2282 = vunpack.c.h.b16 %v1029
    %v2283 = vunpack.c.l.b16 %v1030
    %v2284 = vunpack.c.h.b16 %v1030
    %v2285 = vunpack.c.l.b16 %v1031
    %v2286 = vunpack.c.h.b16 %v1031
    %v2287 = vunpack.c.l.b16 %v1032
    %v2288 = vunpack.c.h.b16 %v1032
    %v2289 = vunpack.c.l.b16 %v1033
    %v2290 = vunpack.c.h.b16 %v1033
    %v2291 = vunpack.c.l.b16 %v1034
    %v2292 = vunpack.c.h.b16 %v1034
    %v2293 = vunpack.c.l.b16 %v1035
    %v2294 = vunpack.c.h.b16 %v1035
    %v2295 = vunpack.c.l.b16 %v1036
    %v2296 = vunpack.c.h.b16 %v1036
    %v2297 = vunpack.c.l.b16 %v1037
    %v2298 = vunpack.c.h.b16 %v1037
    %v2299 = vunpack.c.l.b16 %v1038
    %v2300 = vunpack.c.h.b16 %v1038
    %v2301 = vunpack.c.l.b16 %v1039
    %v2302 = vunpack.c.h.b16 %v1039
    %v2303 = vunpack.c.l.b16 %v1040
    %v2304 = vunpack.c.h.b16 %v1040
    %v2305 = vunpack.c.l.b16 %v1041
    %v2306 = vunpack.c.h.b16 %v1041
    %v2307 = vunpack.c.l.b16 %v1042
    %v2308 = vunpack.c.h.b16 %v1042
    %v2309 = vunpack.c.l.b16 %v1043
    %v2310 = vunpack.c.h.b16 %v1043
    %v2311 = vunpack.c.l.b16 %v1044
    %v2312 = vunpack.c.h.b16 %v1044
    %v2313 = vunpack.c.l.b16 %v1045
    %v2314 = vunpack.c.h.b16 %v1045
    %v2315 = vunpack.c.l.b16 %v1046
    %v2316 = vunpack.c.h.b16 %v1046
    %v2317 = vunpack.c.l.b16 %v1047
    %v2318 = vunpack.c.h.b16 %v1047
    %v2319 = vunpack.c.l.b16 %v1048
    %v2320 = vunpack.c.h.b16 %v1048
    %v2321 = vunpack.c.l.b16 %v1049
    %v2322 = vunpack.c.h.b16 %v1049
    %v2323 = vunpack.c.l.b16 %v1050
    %v2324 = vunpack.c.h.b16 %v1050
    %v2325 = vunpack.c.l.b16 %v1051
    %v2326 = vunpack.c.h.b16 %v1051
    %v2327 = vunpack.c.l.b16 %v1052
    %v2328 = vunpack.c.h.b16 %v1052
    %v2329 = vunpack.c.l.b16 %v1053
    %v2330 = vunpack.c.h.b16 %v1053
    %v2331 = vunpack.c.l.b16 %v1054
    %v2332 = vunpack.c.h.b16 %v1054
    %v2333 = vunpack.c.l.b16 %v1055
    %v2334 = vunpack.c.h.b16 %v1055
    %v2335 = vunpack.c.l.b16 %v1056
    %v2336 = vunpack.c.h.b16 %v1056
    %v2337 = vunpack.c.l.b16 %v1057
    %v2338 = vunpack.c.h.b16 %v1057
    %v2339 = vunpack.c.l.b16 %v1058
    %v2340 = vunpack.c.h.b16 %v1058
    %v2341 = vunpack.c.l.b16 %v1059
    %v2342 = vunpack.c.h.b16 %v1059
    %v2343 = vunpack.c.l.b16 %v1060
    %v2344 = vunpack.c.h.b16 %v1060
    %v2345 = vunpack.c.l.b16 %v1061
    %v2346 = vunpack.c.h.b16 %v1061
    %v2347 = vunpack.c.l.b16 %v1062
    %v2348 = vunpack.c.h.b16 %v1062
    %v2349 = vunpack.c.l.b16 %v1063
    %v2350 = vunpack.c.h.b16 %v1063
    %v2351 = vunpack.c.l.b16 %v1064
    %v2352 = vunpack.c.h.b16 %v1064
    %v2353 = vunpack.c.l.b16 %v1065
    %v2354 = vunpack.c.h.b16 %v1065
    %v2355 = vunpack.c.l.b16 %v1066
    %v2356 = vunpack.c.h.b16 %v1066
    %v2357 = vunpack.c.l.b16 %v1067
    %v2358 = vunpack.c.h.b16 %v1067
    %v2359 = vunpack.c.l.b16 %v1068
    %v2360 = vunpack.c.h.b16 %v1068
    %v2361 = vunpack.c.l.b16 %v1069
    %v2362 = vunpack.c.h.b16 %v1069
    %v2363 = vunpack.c.l.b16 %v1070
    %v2364 = vunpack.c.h.b16 %v1070
    %v2365 = vunpack.c.l.b16 %v1071
    %v2366 = vunpack.c.h.b16 %v1071
    %v2367 = vunpack.c.l.b16 %v1072
    %v2368 = vunpack.c.h.b16 %v1072
    %v2369 = vunpack.c.l.b16 %v1073
    %v2370 = vunpack.c.h.b16 %v1073
    %v2371 = vunpack.c.l.b16 %v1074
    %v2372 = vunpack.c.h.b16 %v1074
    %v2373 = vunpack.c.l.b16 %v1075
    %v2374 = vunpack.c.h.b16 %v1075
    %v2375 = vunpack.c.l.b16 %v1076
    %v2376 = vunpack.c.h.b16 %v1076
    %v2377 = vunpack.c.l.b16 %v1077
    %v2378 = vunpack.c.h.b16 %v1077
    %v2379 = vunpack.c.l.b16 %v1078
    %v2380 = vunpack.c.h.b16 %v1078
    %v2381 = vunpack.c.l.b16 %v1079
    %v2382 = vunpack.c.h.b16 %v1079
    %v2383 = vunpack.c.l.b16 %v1080
    %v2384 = vunpack.c.h.b16 %v1080
    %v2385 = vunpack.c.l.b16 %v1081
    %v2386 = vunpack.c.h.b16 %v1081
    %v2387 = vunpack.c.l.b16 %v1082
    %v2388 = vunpack.c.h.b16 %v1082
    %v2389 = vunpack.c.l.b16 %v1083
    %v2390 = vunpack.c.h.b16 %v1083
    %v2391 = vunpack.c.l.b16 %v1084
    %v2392 = vunpack.c.h.b16 %v1084
    %v2393 = vunpack.c.l.b16 %v1085
    %v2394 = vunpack.c.h.b16 %v1085
    %v2395 = vunpack.c.l.b16 %v1086
    %v2396 = vunpack.c.h.b16 %v1086
    %v2397 = vunpack.c.l.b16 %v1087
    %v2398 = vunpack.c.h.b16 %v1087
    %v2399 = vunpack.c.l.b16 %v1088
    %v2400 = vunpack.c.h.b16 %v1088
    %v2401 = vunpack.c.l.b16 %v1089
    %v2402 = vunpack.c.h.b16 %v1089
    %v2403 = vunpack.c.l.b16 %v1090
    %v2404 = vunpack.c.h.b16 %v1090
    %v2405 = vunpack.c.l.b16 %v1091
    %v2406 = vunpack.c.h.b16 %v1091
    %v2407 = vunpack.c.l.b16 %v1092
    %v2408 = vunpack.c.h.b16 %v1092
    %v2409 = vunpack.c.l.b16 %v1093
    %v2410 = vunpack.c.h.b16 %v1093
    %v2411 = vunpack.c.l.b16 %v1094
    %v2412 = vunpack.c.h.b16 %v1094
    %v2413 = vunpack.c.l.b16 %v1095
    %v2414 = vunpack.c.h.b16 %v1095
    %v2415 = vunpack.c.l.b16 %v1096
    %v2416 = vunpack.c.h.b16 %v1096
    %v2417 = vunpack.c.l.b16 %v1097
    %v2418 = vunpack.c.h.b16 %v1097
    %v2419 = vunpack.c.l.b16 %v1098
    %v2420 = vunpack.c.h.b16 %v1098
    %v2421 = vunpack.c.l.b16 %v1099
    %v2422 = vunpack.c.h.b16 %v1099
    %v2423 = vunpack.c.l.b16 %v1100
    %v2424 = vunpack.c.h.b16 %v1100
    %v2425 = vunpack.c.l.b16 %v1101
    %v2426 = vunpack.c.h.b16 %v1101
    %v2427 = vunpack.c.l.b16 %v1102
    %v2428 = vunpack.c.h.b16 %v1102
    %v2429 = vunpack.c.l.b16 %v1103
    %v2430 = vunpack.c.h.b16 %v1103
    %v2431 = vunpack.c.l.b16 %v1104
    %v2432 = vunpack.c.h.b16 %v1104
    %v2433 = vunpack.c.l.b16 %v1105
    %v2434 = vunpack.c.h.b16 %v1105
    %v2435 = vunpack.c.l.b16 %v1106
    %v2436 = vunpack.c.h.b16 %v1106
    %v2437 = vunpack.c.l.b16 %v1107
    %v2438 = vunpack.c.h.b16 %v1107
    %v2439 = vunpack.c.l.b16 %v1108
    %v2440 = vunpack.c.h.b16 %v1108
    %v2441 = vunpack.c.l.b16 %v1109
    %v2442 = vunpack.c.h.b16 %v1109
    %v2443 = vunpack.c.l.b16 %v1110
    %v2444 = vunpack.c.h.b16 %v1110
    %v2445 = vunpack.c.l.b16 %v1111
    %v2446 = vunpack.c.h.b16 %v1111
    %v2447 = vunpack.c.l.b16 %v1112
    %v2448 = vunpack.c.h.b16 %v1112
    %v2449 = vunpack.c.l.b16 %v1113
    %v2450 = vunpack.c.h.b16 %v1113
    %v2451 = vunpack.c.l.b16 %v1114
    %v2452 = vunpack.c.h.b16 %v1114
    %v2453 = vunpack.c.l.b16 %v1115
    %v2454 = vunpack.c.h.b16 %v1115
    %v2455 = vunpack.c.l.b16 %v1116
    %v2456 = vunpack.c.h.b16 %v1116
    %v2457 = vunpack.c.l.b16 %v1117
    %v2458 = vunpack.c.h.b16 %v1117
    %v2459 = vunpack.c.l.b16 %v1118
    %v2460 = vunpack.c.h.b16 %v1118
    %v2461 = vunpack.c.l.b16 %v1119
    %v2462 = vunpack.c.h.b16 %v1119
    %v2463 = vunpack.c.l.b16 %v1120
    %v2464 = vunpack.c.h.b16 %v1120
    %v2465 = vunpack.c.l.b16 %v1121
    %v2466 = vunpack.c.h.b16 %v1121
    %v2467 = vunpack.c.l.b16 %v1122
    %v2468 = vunpack.c.h.b16 %v1122
    %v2469 = vunpack.c.l.b16 %v1123
    %v2470 = vunpack.c.h.b16 %v1123
    %v2471 = vunpack.c.l.b16 %v1124
    %v2472 = vunpack.c.h.b16 %v1124
    %v2473 = vunpack.c.l.b16 %v1125
    %v2474 = vunpack.c.h.b16 %v1125
    %v2475 = vunpack.c.l.b16 %v1126
    %v2476 = vunpack.c.h.b16 %v1126
    %v2477 = vunpack.c.l.b16 %v1127
    %v2478 = vunpack.c.h.b16 %v1127
    %v2479 = vunpack.c.l.b16 %v1128
    %v2480 = vunpack.c.h.b16 %v1128
    %v2481 = vunpack.c.l.b16 %v1129
    %v2482 = vunpack.c.h.b16 %v1129
    %v2483 = vunpack.c.l.b16 %v1130
    %v2484 = vunpack.c.h.b16 %v1130
    %v2485 = vunpack.c.l.b16 %v1131
    %v2486 = vunpack.c.h.b16 %v1131
    %v2487 = vunpack.c.l.b16 %v1132
    %v2488 = vunpack.c.h.b16 %v1132
    %v2489 = vunpack.c.l.b16 %v1133
    %v2490 = vunpack.c.h.b16 %v1133
    %v2491 = vunpack.c.l.b16 %v1134
    %v2492 = vunpack.c.h.b16 %v1134
    %v2493 = vunpack.c.l.b16 %v1135
    %v2494 = vunpack.c.h.b16 %v1135
    %v2495 = vunpack.c.l.b16 %v1136
    %v2496 = vunpack.c.h.b16 %v1136
    %v2497 = vunpack.c.l.b16 %v1137
    %v2498 = vunpack.c.h.b16 %v1137
    %v2499 = vunpack.c.l.b16 %v1138
    %v2500 = vunpack.c.h.b16 %v1138
    %v2501 = vunpack.c.l.b16 %v1139
    %v2502 = vunpack.c.h.b16 %v1139
    %v2503 = vunpack.c.l.b16 %v1140
    %v2504 = vunpack.c.h.b16 %v1140
    %v2505 = vunpack.c.l.b16 %v1141
    %v2506 = vunpack.c.h.b16 %v1141
    %v2507 = vunpack.c.l.b16 %v1142
    %v2508 = vunpack.c.h.b16 %v1142
    %v2509 = vunpack.c.l.b16 %v1143
    %v2510 = vunpack.c.h.b16 %v1143
    %v2511 = vunpack.c.l.b16 %v1144
    %v2512 = vunpack.c.h.b16 %v1144
    %v2513 = vunpack.c.l.b16 %v1145
    %v2514 = vunpack.c.h.b16 %v1145
    %v2515 = vunpack.c.l.b16 %v1146
    %v2516 = vunpack.c.h.b16 %v1146
    %v2517 = vunpack.c.l.b16 %v1147
    %v2518 = vunpack.c.h.b16 %v1147
    %v2519 = vunpack.c.l.b16 %v1148
    %v2520 = vunpack.c.h.b16 %v1148
    %v2521 = vunpack.c.l.b16 %v1149
    %v2522 = vunpack.c.h.b16 %v1149
    %v2523 = vunpack.c.l.b16 %v1150
    %v2524 = vunpack.c.h.b16 %v1150
    %v2525 = vunpack.c.l.b16 %v1151
    %v2526 = vunpack.c.h.b16 %v1151
    %v2527 = vunpack.c.l.b16 %v1152
    %v2528 = vunpack.c.h.b16 %v1152
    %v2529 = vunpack.c.l.b16 %v1153
    %v2530 = vunpack.c.h.b16 %v1153
    %v2531 = vunpack.c.l.b16 %v1154
    %v2532 = vunpack.c.h.b16 %v1154
    %v2533 = vunpack.c.l.b16 %v1155
    %v2534 = vunpack.c.h.b16 %v1155
    %v2535 = vunpack.c.l.b16 %v1156
    %v2536 = vunpack.c.h.b16 %v1156
    %v2537 = vunpack.c.l.b16 %v1157
    %v2538 = vunpack.c.h.b16 %v1157
    %v2539 = vunpack.c.l.b16 %v1158
    %v2540 = vunpack.c.h.b16 %v1158
    %v2541 = vunpack.c.l.b16 %v1159
    %v2542 = vunpack.c.h.b16 %v1159
    %v2543 = vunpack.c.l.b16 %v1160
    %v2544 = vunpack.c.h.b16 %v1160
    %v2545 = vunpack.c.l.b16 %v1161
    %v2546 = vunpack.c.h.b16 %v1161
    %v2547 = vunpack.c.l.b16 %v1162
    %v2548 = vunpack.c.h.b16 %v1162
    %v2549 = vunpack.c.l.b16 %v1163
    %v2550 = vunpack.c.h.b16 %v1163
    %v2551 = vunpack.c.l.b16 %v1164
    %v2552 = vunpack.c.h.b16 %v1164
    %v2553 = vunpack.c.l.b16 %v1165
    %v2554 = vunpack.c.h.b16 %v1165
    %v2555 = vunpack.c.l.b16 %v1166
    %v2556 = vunpack.c.h.b16 %v1166
    %v2557 = vunpack.c.l.b16 %v1167
    %v2558 = vunpack.c.h.b16 %v1167
    %v2559 = vunpack.c.l.b16 %v1168
    %v2560 = vunpack.c.h.b16 %v1168
    %v2561 = vunpack.c.l.b16 %v1169
    %v2562 = vunpack.c.h.b16 %v1169
    %v2563 = vunpack.c.l.b16 %v1170
    %v2564 = vunpack.c.h.b16 %v1170
    %v2565 = vunpack.c.l.b16 %v1171
    %v2566 = vunpack.c.h.b16 %v1171
    %v2567 = vunpack.c.l.b16 %v1172
    %v2568 = vunpack.c.h.b16 %v1172
    %v2569 = vunpack.c.l.b16 %v1173
    %v2570 = vunpack.c.h.b16 %v1173
    %v2571 = vunpack.c.l.b16 %v1174
    %v2572 = vunpack.c.h.b16 %v1174
    %v2573 = vunpack.c.l.b16 %v1175
    %v2574 = vunpack.c.h.b16 %v1175
    %v2575 = vunpack.c.l.b16 %v1176
    %v2576 = vunpack.c.h.b16 %v1176
    %v2577 = vunpack.c.l.b16 %v1177
    %v2578 = vunpack.c.h.b16 %v1177
    %v2579 = vunpack.c.l.b16 %v1178
    %v2580 = vunpack.c.h.b16 %v1178
    %v2581 = vunpack.c.l.b16 %v1179
    %v2582 = vunpack.c.h.b16 %v1179
    %v2583 = vunpack.c.l.b16 %v1180
    %v2584 = vunpack.c.h.b16 %v1180
    %v2585 = vunpack.c.l.b16 %v1181
    %v2586 = vunpack.c.h.b16 %v1181
    %v2587 = vunpack.c.l.b16 %v1182
    %v2588 = vunpack.c.h.b16 %v1182
    %v2589 = vunpack.c.l.b16 %v1183
    %v2590 = vunpack.c.h.b16 %v1183
    %v2591 = vunpack.c.l.b16 %v1184
    %v2592 = vunpack.c.h.b16 %v1184
    %v2593 = vunpack.c.l.b16 %v1185
    %v2594 = vunpack.c.h.b16 %v1185
    %v2595 = vunpack.c.l.b16 %v1186
    %v2596 = vunpack.c.h.b16 %v1186
    %v2597 = vunpack.c.l.b16 %v1187
    %v2598 = vunpack.c.h.b16 %v1187
    %v2599 = vunpack.c.l.b16 %v1188
    %v2600 = vunpack.c.h.b16 %v1188
    %v2601 = vunpack.c.l.b16 %v1189
    %v2602 = vunpack.c.h.b16 %v1189
    %v2603 = vunpack.c.l.b16 %v1190
    %v2604 = vunpack.c.h.b16 %v1190
    %v2605 = vunpack.c.l.b16 %v1191
    %v2606 = vunpack.c.h.b16 %v1191
    %v2607 = vunpack.c.l.b16 %v1192
    %v2608 = vunpack.c.h.b16 %v1192
    %v2609 = vunpack.c.l.b16 %v1193
    %v2610 = vunpack.c.h.b16 %v1193
    %v2611 = vunpack.c.l.b16 %v1194
    %v2612 = vunpack.c.h.b16 %v1194
    %v2613 = vunpack.c.l.b16 %v1195
    %v2614 = vunpack.c.h.b16 %v1195
    %v2615 = vunpack.c.l.b16 %v1196
    %v2616 = vunpack.c.h.b16 %v1196
    %v2617 = vunpack.c.l.b16 %v1197
    %v2618 = vunpack.c.h.b16 %v1197
    %v2619 = vunpack.c.l.b16 %v1198
    %v2620 = vunpack.c.h.b16 %v1198
    %v2621 = vunpack.c.l.b16 %v1199
    %v2622 = vunpack.c.h.b16 %v1199
    %v2623 = vunpack.c.l.b16 %v1200
    %v2624 = vunpack.c.h.b16 %v1200
    %v2625 = vunpack.c.l.b16 %v1201
    %v2626 = vunpack.c.h.b16 %v1201
    %v2627 = vunpack.c.l.b16 %v1202
    %v2628 = vunpack.c.h.b16 %v1202
    %v2629 = vunpack.c.l.b16 %v1203
    %v2630 = vunpack.c.h.b16 %v1203
    %v2631 = vunpack.c.l.b16 %v1204
    %v2632 = vunpack.c.h.b16 %v1204
    %v2633 = vunpack.c.l.b16 %v1205
    %v2634 = vunpack.c.h.b16 %v1205
    %v2635 = vunpack.c.l.b16 %v1206
    %v2636 = vunpack.c.h.b16 %v1206
    %v2637 = vunpack.c.l.b16 %v1207
    %v2638 = vunpack.c.h.b16 %v1207
    %v2639 = vunpack.c.l.b16 %v1208
    %v2640 = vunpack.c.h.b16 %v1208
    %v2641 = vunpack.c.l.b16 %v1209
    %v2642 = vunpack.c.h.b16 %v1209
    %v2643 = vunpack.c.l.b16 %v1210
    %v2644 = vunpack.c.h.b16 %v1210
    %v2645 = vunpack.c.l.b16 %v1211
    %v2646 = vunpack.c.h.b16 %v1211
    %v2647 = vunpack.c.l.b16 %v1212
    %v2648 = vunpack.c.h.b16 %v1212
    %v2649 = vunpack.c.l.b16 %v1213
    %v2650 = vunpack.c.h.b16 %v1213
    %v2651 = vunpack.c.l.b16 %v1214
    %v2652 = vunpack.c.h.b16 %v1214
    %v2653 = vunpack.c.l.b16 %v1215
    %v2654 = vunpack.c.h.b16 %v1215
    %v2655 = vunpack.c.l.b16 %v1216
    %v2656 = vunpack.c.h.b16 %v1216
    %v2657 = vunpack.c.l.b16 %v1217
    %v2658 = vunpack.c.h.b16 %v1217
    %v2659 = vunpack.c.l.b16 %v1218
    %v2660 = vunpack.c.h.b16 %v1218
    %v2661 = vunpack.c.l.b16 %v1219
    %v2662 = vunpack.c.h.b16 %v1219
    %v2663 = vunpack.c.l.b16 %v1220
    %v2664 = vunpack.c.h.b16 %v1220
    %v2665 = vunpack.c.l.b16 %v1221
    %v2666 = vunpack.c.h.b16 %v1221
    %v2667 = vunpack.c.l.b16 %v1222
    %v2668 = vunpack.c.h.b16 %v1222
    %v2669 = vunpack.c.l.b16 %v1223
    %v2670 = vunpack.c.h.b16 %v1223
    %v2671 = vunpack.c.l.b16 %v1224
    %v2672 = vunpack.c.h.b16 %v1224
    %v2673 = vunpack.c.l.b16 %v1225
    %v2674 = vunpack.c.h.b16 %v1225
    %v2675 = vunpack.c.l.b16 %v1226
    %v2676 = vunpack.c.h.b16 %v1226
    %v2677 = vunpack.c.l.b16 %v1227
    %v2678 = vunpack.c.h.b16 %v1227
    %v2679 = vunpack.c.l.b16 %v1228
    %v2680 = vunpack.c.h.b16 %v1228
    %v2681 = vunpack.c.l.b16 %v1229
    %v2682 = vunpack.c.h.b16 %v1229
    %v2683 = vunpack.c.l.b16 %v1230
    %v2684 = vunpack.c.h.b16 %v1230
    %v2685 = vunpack.c.l.b16 %v1231
    %v2686 = vunpack.c.h.b16 %v1231
    %v2687 = vunpack.c.l.b16 %v1232
    %v2688 = vunpack.c.h.b16 %v1232
    %v2689 = vunpack.c.l.b16 %v1233
    %v2690 = vunpack.c.h.b16 %v1233
    %v2691 = vunpack.c.l.b16 %v1234
    %v2692 = vunpack.c.h.b16 %v1234
    %v2693 = vunpack.c.l.b16 %v1235
    %v2694 = vunpack.c.h.b16 %v1235
    %v2695 = vunpack.c.l.b16 %v1236
    %v2696 = vunpack.c.h.b16 %v1236
    %v2697 = vunpack.c.l.b16 %v1237
    %v2698 = vunpack.c.h.b16 %v1237
    %v2699 = vunpack.c.l.b16 %v1238
    %v2700 = vunpack.c.h.b16 %v1238
    %v2701 = vunpack.c.l.b16 %v1239
    %v2702 = vunpack.c.h.b16 %v1239
    %v2703 = vunpack.c.l.b16 %v1240
    %v2704 = vunpack.c.h.b16 %v1240
    %v2705 = vunpack.c.l.b16 %v1241
    %v2706 = vunpack.c.h.b16 %v1241
    %v2707 = vunpack.c.l.b16 %v1242
    %v2708 = vunpack.c.h.b16 %v1242
    %v2709 = vunpack.c.l.b16 %v1243
    %v2710 = vunpack.c.h.b16 %v1243
    %v2711 = vunpack.c.l.b16 %v1244
    %v2712 = vunpack.c.h.b16 %v1244
    %v2713 = vunpack.c.l.b16 %v1245
    %v2714 = vunpack.c.h.b16 %v1245
    %v2715 = vunpack.c.l.b16 %v1246
    %v2716 = vunpack.c.h.b16 %v1246
    %v2717 = vunpack.c.l.b16 %v1247
    %v2718 = vunpack.c.h.b16 %v1247
    %v2719 = vunpack.c.l.b16 %v1248
    %v2720 = vunpack.c.h.b16 %v1248
    %v2721 = vunpack.c.l.b16 %v1249
    %v2722 = vunpack.c.h.b16 %v1249
    %v2723 = vunpack.c.l.b16 %v1250
    %v2724 = vunpack.c.h.b16 %v1250
    %v2725 = vunpack.c.l.b16 %v1251
    %v2726 = vunpack.c.h.b16 %v1251
    %v2727 = vunpack.c.l.b16 %v1252
    %v2728 = vunpack.c.h.b16 %v1252
    %v2729 = vunpack.c.l.b16 %v1253
    %v2730 = vunpack.c.h.b16 %v1253
    %v2731 = vunpack.c.l.b16 %v1254
    %v2732 = vunpack.c.h.b16 %v1254
    %v2733 = vunpack.c.l.b16 %v1255
    %v2734 = vunpack.c.h.b16 %v1255
    %v2735 = vunpack.c.l.b16 %v1256
    %v2736 = vunpack.c.h.b16 %v1256
    %v2737 = vunpack.c.l.b16 %v1257
    %v2738 = vunpack.c.h.b16 %v1257
    %v2739 = vunpack.c.l.b16 %v1258
    %v2740 = vunpack.c.h.b16 %v1258
    %v2741 = vunpack.c.l.b16 %v1259
    %v2742 = vunpack.c.h.b16 %v1259
    %v2743 = vunpack.c.l.b16 %v1260
    %v2744 = vunpack.c.h.b16 %v1260
    %v2745 = vunpack.c.l.b16 %v1261
    %v2746 = vunpack.c.h.b16 %v1261
    %v2747 = vunpack.c.l.b16 %v1262
    %v2748 = vunpack.c.h.b16 %v1262
    %v2749 = vunpack.c.l.b16 %v1263
    %v2750 = vunpack.c.h.b16 %v1263
    %v2751 = vunpack.c.l.b16 %v1264
    %v2752 = vunpack.c.h.b16 %v1264
    %v2753 = vunpack.c.l.b16 %v1265
    %v2754 = vunpack.c.h.b16 %v1265
    %v2755 = vunpack.c.l.b16 %v1266
    %v2756 = vunpack.c.h.b16 %v1266
    %v2757 = vunpack.c.l.b16 %v1267
    %v2758 = vunpack.c.h.b16 %v1267
    %v2759 = vunpack.c.l.b16 %v1268
    %v2760 = vunpack.c.h.b16 %v1268
    %v2761 = vunpack.c.l.b16 %v1269
    %v2762 = vunpack.c.h.b16 %v1269
    %v2763 = vunpack.c.l.b16 %v1270
    %v2764 = vunpack.c.h.b16 %v1270
    %v2765 = vunpack.c.l.b16 %v1271
    %v2766 = vunpack.c.h.b16 %v1271
    %v2767 = vunpack.c.l.b16 %v1272
    %v2768 = vunpack.c.h.b16 %v1272
    %v2769 = vunpack.c.l.b16 %v1273
    %v2770 = vunpack.c.h.b16 %v1273
    %v2771 = vunpack.c.l.b16 %v1274
    %v2772 = vunpack.c.h.b16 %v1274
    %v2773 = vunpack.c.l.b16 %v1275
    %v2774 = vunpack.c.h.b16 %v1275
    %v2775 = vunpack.c.l.b16 %v1276
    %v2776 = vunpack.c.h.b16 %v1276
    %v2777 = vunpack.c.l.b16 %v1277
    %v2778 = vunpack.c.h.b16 %v1277
    %v2779 = vunpack.c.l.b16 %v1278
    %v2780 = vunpack.c.h.b16 %v1278
    %v2781 = vunpack.c.l.b16 %v1279
    %v2782 = vunpack.c.h.b16 %v1279
    %v2783 = vunpack.c.l.b16 %v1280
    %v2784 = vunpack.c.h.b16 %v1280
    %v2785 = vunpack.c.l.b16 %v1281
    %v2786 = vunpack.c.h.b16 %v1281
    %v2787 = vunpack.c.l.b16 %v1282
    %v2788 = vunpack.c.h.b16 %v1282
    %v2789 = vunpack.c.l.b16 %v1283
    %v2790 = vunpack.c.h.b16 %v1283
    %v2791 = vunpack.c.l.b16 %v1284
    %v2792 = vunpack.c.h.b16 %v1284
    %v2793 = vunpack.c.l.b16 %v1285
    %v2794 = vunpack.c.h.b16 %v1285
    %v2795 = vunpack.c.l.b16 %v1286
    %v2796 = vunpack.c.h.b16 %v1286
    %v2797 = vunpack.c.l.b16 %v1287
    %v2798 = vunpack.c.h.b16 %v1287
    %v2799 = vunpack.c.l.b16 %v1288
    %v2800 = vunpack.c.h.b16 %v1288
    %v2801 = vunpack.c.l.b16 %v1289
    %v2802 = vunpack.c.h.b16 %v1289
    %v2803 = vunpack.c.l.b16 %v1290
    %v2804 = vunpack.c.h.b16 %v1290
    %v2805 = vunpack.c.l.b16 %v1291
    %v2806 = vunpack.c.h.b16 %v1291
    %v2807 = vunpack.c.l.b16 %v1292
    %v2808 = vunpack.c.h.b16 %v1292
    %v2809 = vunpack.c.l.b16 %v1293
    %v2810 = vunpack.c.h.b16 %v1293
    %v2811 = vunpack.c.l.b16 %v1294
    %v2812 = vunpack.c.h.b16 %v1294
    %v2813 = vunpack.c.l.b16 %v1295
    %v2814 = vunpack.c.h.b16 %v1295
    %v2815 = vunpack.c.l.b16 %v1296
    %v2816 = vunpack.c.h.b16 %v1296
    %v2817 = vunpack.c.l.b16 %v1297
    %v2818 = vunpack.c.h.b16 %v1297
    %v2819 = vunpack.c.l.b16 %v1298
    %v2820 = vunpack.c.h.b16 %v1298
    %v2821 = vunpack.c.l.b16 %v1299
    %v2822 = vunpack.c.h.b16 %v1299
    %v2823 = vunpack.c.l.b16 %v1300
    %v2824 = vunpack.c.h.b16 %v1300
    %v2825 = vunpack.c.l.b16 %v1301
    %v2826 = vunpack.c.h.b16 %v1301
    %v2827 = vunpack.c.l.b16 %v1302
    %v2828 = vunpack.c.h.b16 %v1302
    %v2829 = vunpack.c.l.b16 %v1303
    %v2830 = vunpack.c.h.b16 %v1303
    %v2831 = vunpack.c.l.b16 %v1304
    %v2832 = vunpack.c.h.b16 %v1304
    %v2833 = vunpack.c.l.b16 %v1305
    %v2834 = vunpack.c.h.b16 %v1305
    %v2835 = vunpack.c.l.b16 %v1306
    %v2836 = vunpack.c.h.b16 %v1306
    %v2837 = vunpack.c.l.b16 %v1307
    %v2838 = vunpack.c.h.b16 %v1307
    %v2839 = vunpack.c.l.b16 %v1308
    %v2840 = vunpack.c.h.b16 %v1308
    %v2841 = vunpack.c.l.b16 %v1309
    %v2842 = vunpack.c.h.b16 %v1309
    %v2843 = vunpack.c.l.b16 %v1310
    %v2844 = vunpack.c.h.b16 %v1310
    %v2845 = vunpack.c.l.b16 %v1311
    %v2846 = vunpack.c.h.b16 %v1311
    %v2847 = vunpack.c.l.b16 %v1312
    %v2848 = vunpack.c.h.b16 %v1312
    %v2849 = vunpack.c.l.b16 %v1313
    %v2850 = vunpack.c.h.b16 %v1313
    %v2851 = vunpack.c.l.b16 %v1314
    %v2852 = vunpack.c.h.b16 %v1314
    %v2853 = vunpack.c.l.b16 %v1315
    %v2854 = vunpack.c.h.b16 %v1315
    %v2855 = vunpack.c.l.b16 %v1316
    %v2856 = vunpack.c.h.b16 %v1316
    %v2857 = vunpack.c.l.b16 %v1317
    %v2858 = vunpack.c.h.b16 %v1317
    %v2859 = vunpack.c.l.b16 %v1318
    %v2860 = vunpack.c.h.b16 %v1318
    %v2861 = vunpack.c.l.b16 %v1319
    %v2862 = vunpack.c.h.b16 %v1319
    %v2863 = vunpack.c.l.b16 %v1320
    %v2864 = vunpack.c.h.b16 %v1320
    %v2865 = vunpack.c.l.b16 %v1321
    %v2866 = vunpack.c.h.b16 %v1321
    %v2867 = vunpack.c.l.b16 %v1322
    %v2868 = vunpack.c.h.b16 %v1322
    %v2869 = vunpack.c.l.b16 %v1323
    %v2870 = vunpack.c.h.b16 %v1323
    %v2871 = vunpack.c.l.b16 %v1324
    %v2872 = vunpack.c.h.b16 %v1324
    %v2873 = vunpack.c.l.b16 %v1325
    %v2874 = vunpack.c.h.b16 %v1325
    %v2875 = vunpack.c.l.b16 %v1326
    %v2876 = vunpack.c.h.b16 %v1326
    %v2877 = vunpack.c.l.b16 %v1327
    %v2878 = vunpack.c.h.b16 %v1327
    %v2879 = vunpack.c.l.b16 %v1328
    %v2880 = vunpack.c.h.b16 %v1328
    %v2881 = vunpack.c.l.b16 %v1329
    %v2882 = vunpack.c.h.b16 %v1329
    %v2883 = vunpack.c.l.b16 %v1330
    %v2884 = vunpack.c.h.b16 %v1330
    %v2885 = vunpack.c.l.b16 %v1331
    %v2886 = vunpack.c.h.b16 %v1331
    %v2887 = vunpack.c.l.b16 %v1332
    %v2888 = vunpack.c.h.b16 %v1332
    %v2889 = vunpack.c.l.b16 %v1333
    %v2890 = vunpack.c.h.b16 %v1333
    %v2891 = vunpack.c.l.b16 %v1334
    %v2892 = vunpack.c.h.b16 %v1334
    %v2893 = vpack.c.b16 %v1873, %v1869
    %v2894 = vpack.c.b16 %v1874, %v1870
    %v2895 = vpack.c.b16 %v1875, %v1871
    %v2896 = vpack.c.b16 %v1876, %v1872
    %v2897 = vpack.c.b16 %v1881, %v1877
    %v2898 = vpack.c.b16 %v1882, %v1878
    %v2899 = vpack.c.b16 %v1883, %v1879
    %v2900 = vpack.c.b16 %v1884, %v1880
    %v2901 = vpack.c.b16 %v1889, %v1885
    %v2902 = vpack.c.b16 %v1890, %v1886
    %v2903 = vpack.c.b16 %v1891, %v1887
    %v2904 = vpack.c.b16 %v1892, %v1888
    %v2905 = vpack.c.b16 %v1897, %v1893
    %v2906 = vpack.c.b16 %v1898, %v1894
    %v2907 = vpack.c.b16 %v1899, %v1895
    %v2908 = vpack.c.b16 %v1900, %v1896
    %v2909 = vpack.c.b16 %v1905, %v1901
    %v2910 = vpack.c.b16 %v1906, %v1902
    %v2911 = vpack.c.b16 %v1907, %v1903
    %v2912 = vpack.c.b16 %v1908, %v1904
    %v2913 = vpack.c.b16 %v1913, %v1909
    %v2914 = vpack.c.b16 %v1914, %v1910
    %v2915 = vpack.c.b16 %v1915, %v1911
    %v2916 = vpack.c.b16 %v1916, %v1912
    %v2917 = vpack.c.b16 %v1921, %v1917
    %v2918 = vpack.c.b16 %v1922, %v1918
    %v2919 = vpack.c.b16 %v1923, %v1919
    %v2920 = vpack.c.b16 %v1924, %v1920
    %v2921 = vpack.c.b16 %v1929, %v1925
    %v2922 = vpack.c.b16 %v1930, %v1926
    %v2923 = vpack.c.b16 %v1931, %v1927
    %v2924 = vpack.c.b16 %v1932, %v1928
    %v2925 = vpack.c.b16 %v1937, %v1933
    %v2926 = vpack.c.b16 %v1938, %v1934
    %v2927 = vpack.c.b16 %v1939, %v1935
    %v2928 = vpack.c.b16 %v1940, %v1936
    %v2929 = vpack.c.b16 %v1945, %v1941
    %v2930 = vpack.c.b16 %v1946, %v1942
    %v2931 = vpack.c.b16 %v1947, %v1943
    %v2932 = vpack.c.b16 %v1948, %v1944
    %v2933 = vpack.c.b16 %v1953, %v1949
    %v2934 = vpack.c.b16 %v1954, %v1950
    %v2935 = vpack.c.b16 %v1955, %v1951
    %v2936 = vpack.c.b16 %v1956, %v1952
    %v2937 = vpack.c.b16 %v1961, %v1957
    %v2938 = vpack.c.b16 %v1962, %v1958
    %v2939 = vpack.c.b16 %v1963, %v1959
    %v2940 = vpack.c.b16 %v1964, %v1960
    %v2941 = vpack.c.b16 %v1969, %v1965
    %v2942 = vpack.c.b16 %v1970, %v1966
    %v2943 = vpack.c.b16 %v1971, %v1967
    %v2944 = vpack.c.b16 %v1972, %v1968
    %v2945 = vpack.c.b16 %v1977, %v1973
    %v2946 = vpack.c.b16 %v1978, %v1974
    %v2947 = vpack.c.b16 %v1979, %v1975
    %v2948 = vpack.c.b16 %v1980, %v1976
    %v2949 = vpack.c.b16 %v1985, %v1981
    %v2950 = vpack.c.b16 %v1986, %v1982
    %v2951 = vpack.c.b16 %v1987, %v1983
    %v2952 = vpack.c.b16 %v1988, %v1984
    %v2953 = vpack.c.b16 %v1993, %v1989
    %v2954 = vpack.c.b16 %v1994, %v1990
    %v2955 = vpack.c.b16 %v1995, %v1991
    %v2956 = vpack.c.b16 %v1996, %v1992
    %v2957 = vpack.c.b16 %v2001, %v1997
    %v2958 = vpack.c.b16 %v2002, %v1998
    %v2959 = vpack.c.b16 %v2003, %v1999
    %v2960 = vpack.c.b16 %v2004, %v2000
    %v2961 = vpack.c.b16 %v2009, %v2005
    %v2962 = vpack.c.b16 %v2010, %v2006
    %v2963 = vpack.c.b16 %v2011, %v2007
    %v2964 = vpack.c.b16 %v2012, %v2008
    %v2965 = vpack.c.b16 %v2017, %v2013
    %v2966 = vpack.c.b16 %v2018, %v2014
    %v2967 = vpack.c.b16 %v2019, %v2015
    %v2968 = vpack.c.b16 %v2020, %v2016
    %v2969 = vpack.c.b16 %v2025, %v2021
    %v2970 = vpack.c.b16 %v2026, %v2022
    %v2971 = vpack.c.b16 %v2027, %v2023
    %v2972 = vpack.c.b16 %v2028, %v2024
    %v2973 = vpack.c.b16 %v2033, %v2029
    %v2974 = vpack.c.b16 %v2034, %v2030
    %v2975 = vpack.c.b16 %v2035, %v2031
    %v2976 = vpack.c.b16 %v2036, %v2032
    %v2977 = vpack.c.b16 %v2041, %v2037
    %v2978 = vpack.c.b16 %v2042, %v2038
    %v2979 = vpack.c.b16 %v2043, %v2039
    %v2980 = vpack.c.b16 %v2044, %v2040
    %v2981 = vpack.c.b16 %v2049, %v2045
    %v2982 = vpack.c.b16 %v2050, %v2046
    %v2983 = vpack.c.b16 %v2051, %v2047
    %v2984 = vpack.c.b16 %v2052, %v2048
    %v2985 = vpack.c.b16 %v2057, %v2053
    %v2986 = vpack.c.b16 %v2058, %v2054
    %v2987 = vpack.c.b16 %v2059, %v2055
    %v2988 = vpack.c.b16 %v2060, %v2056
    %v2989 = vpack.c.b16 %v2065, %v2061
    %v2990 = vpack.c.b16 %v2066, %v2062
    %v2991 = vpack.c.b16 %v2067, %v2063
    %v2992 = vpack.c.b16 %v2068, %v2064
    %v2993 = vpack.c.b16 %v2073, %v2069
    %v2994 = vpack.c.b16 %v2074, %v2070
    %v2995 = vpack.c.b16 %v2075, %v2071
    %v2996 = vpack.c.b16 %v2076, %v2072
    %v2997 = vpack.c.b16 %v2081, %v2077
    %v2998 = vpack.c.b16 %v2082, %v2078
    %v2999 = vpack.c.b16 %v2083, %v2079
    %v3000 = vpack.c.b16 %v2084, %v2080
    %v3001 = vpack.c.b16 %v2089, %v2085
    %v3002 = vpack.c.b16 %v2090, %v2086
    %v3003 = vpack.c.b16 %v2091, %v2087
    %v3004 = vpack.c.b16 %v2092, %v2088
    %v3005 = vpack.c.b16 %v2097, %v2093
    %v3006 = vpack.c.b16 %v2098, %v2094
    %v3007 = vpack.c.b16 %v2099, %v2095
    %v3008 = vpack.c.b16 %v2100, %v2096
    %v3009 = vpack.c.b16 %v2105, %v2101
    %v3010 = vpack.c.b16 %v2106, %v2102
    %v3011 = vpack.c.b16 %v2107, %v2103
    %v3012 = vpack.c.b16 %v2108, %v2104
    %v3013 = vpack.c.b16 %v2113, %v2109
    %v3014 = vpack.c.b16 %v2114, %v2110
    %v3015 = vpack.c.b16 %v2115, %v2111
    %v3016 = vpack.c.b16 %v2116, %v2112
    %v3017 = vpack.c.b16 %v2121, %v2117
    %v3018 = vpack.c.b16 %v2122, %v2118
    %v3019 = vpack.c.b16 %v2123, %v2119
    %v3020 = vpack.c.b16 %v2124, %v2120
    %v3021 = vpack.c.b16 %v2129, %v2125
    %v3022 = vpack.c.b16 %v2130, %v2126
    %v3023 = vpack.c.b16 %v2131, %v2127
    %v3024 = vpack.c.b16 %v2132, %v2128
    %v3025 = vpack.c.b16 %v2137, %v2133
    %v3026 = vpack.c.b16 %v2138, %v2134
    %v3027 = vpack.c.b16 %v2139, %v2135
    %v3028 = vpack.c.b16 %v2140, %v2136
    %v3029 = vpack.c.b16 %v2145, %v2141
    %v3030 = vpack.c.b16 %v2146, %v2142
    %v3031 = vpack.c.b16 %v2147, %v2143
    %v3032 = vpack.c.b16 %v2148, %v2144
    %v3033 = vpack.c.b16 %v2153, %v2149
    %v3034 = vpack.c.b16 %v2154, %v2150
    %v3035 = vpack.c.b16 %v2155, %v2151
    %v3036 = vpack.c.b16 %v2156, %v2152
    %v3037 = vpack.c.b16 %v2161, %v2157
    %v3038 = vpack.c.b16 %v2162, %v2158
    %v3039 = vpack.c.b16 %v2163, %v2159
    %v3040 = vpack.c.b16 %v2164, %v2160
    %v3041 = vpack.c.b16 %v2169, %v2165
    %v3042 = vpack.c.b16 %v2170, %v2166
    %v3043 = vpack.c.b16 %v2171, %v2167
    %v3044 = vpack.c.b16 %v2172, %v2168
    %v3045 = vpack.c.b16 %v2177, %v2173
    %v3046 = vpack.c.b16 %v2178, %v2174
    %v3047 = vpack.c.b16 %v2179, %v2175
    %v3048 = vpack.c.b16 %v2180, %v2176
    %v3049 = vpack.c.b16 %v2185, %v2181
    %v3050 = vpack.c.b16 %v2186, %v2182
    %v3051 = vpack.c.b16 %v2187, %v2183
    %v3052 = vpack.c.b16 %v2188, %v2184
    %v3053 = vpack.c.b16 %v2193, %v2189
    %v3054 = vpack.c.b16 %v2194, %v2190
    %v3055 = vpack.c.b16 %v2195, %v2191
    %v3056 = vpack.c.b16 %v2196, %v2192
    %v3057 = vpack.c.b16 %v2201, %v2197
    %v3058 = vpack.c.b16 %v2202, %v2198
    %v3059 = vpack.c.b16 %v2203, %v2199
    %v3060 = vpack.c.b16 %v2204, %v2200
    %v3061 = vpack.c.b16 %v2209, %v2205
    %v3062 = vpack.c.b16 %v2210, %v2206
    %v3063 = vpack.c.b16 %v2211, %v2207
    %v3064 = vpack.c.b16 %v2212, %v2208
    %v3065 = vpack.c.b16 %v2217, %v2213
    %v3066 = vpack.c.b16 %v2218, %v2214
    %v3067 = vpack.c.b16 %v2219, %v2215
    %v3068 = vpack.c.b16 %v2220, %v2216
    %v3069 = vpack.c.b16 %v2225, %v2221
    %v3070 = vpack.c.b16 %v2226, %v2222
    %v3071 = vpack.c.b16 %v2227, %v2223
    %v3072 = vpack.c.b16 %v2228, %v2224
    %v3073 = vpack.c.b16 %v2233, %v2229
    %v3074 = vpack.c.b16 %v2234, %v2230
    %v3075 = vpack.c.b16 %v2235, %v2231
    %v3076 = vpack.c.b16 %v2236, %v2232
    %v3077 = vpack.c.b16 %v2241, %v2237
    %v3078 = vpack.c.b16 %v2242, %v2238
    %v3079 = vpack.c.b16 %v2243, %v2239
    %v3080 = vpack.c.b16 %v2244, %v2240
    %v3081 = vpack.c.b16 %v2249, %v2245
    %v3082 = vpack.c.b16 %v2250, %v2246
    %v3083 = vpack.c.b16 %v2251, %v2247
    %v3084 = vpack.c.b16 %v2252, %v2248
    %v3085 = vpack.c.b16 %v2257, %v2253
    %v3086 = vpack.c.b16 %v2258, %v2254
    %v3087 = vpack.c.b16 %v2259, %v2255
    %v3088 = vpack.c.b16 %v2260, %v2256
    %v3089 = vpack.c.b16 %v2265, %v2261
    %v3090 = vpack.c.b16 %v2266, %v2262
    %v3091 = vpack.c.b16 %v2267, %v2263
    %v3092 = vpack.c.b16 %v2268, %v2264
    %v3093 = vpack.c.b16 %v2273, %v2269
    %v3094 = vpack.c.b16 %v2274, %v2270
    %v3095 = vpack.c.b16 %v2275, %v2271
    %v3096 = vpack.c.b16 %v2276, %v2272
    %v3097 = vpack.c.b16 %v2281, %v2277
    %v3098 = vpack.c.b16 %v2282, %v2278
    %v3099 = vpack.c.b16 %v2283, %v2279
    %v3100 = vpack.c.b16 %v2284, %v2280
    %v3101 = vpack.c.b16 %v2289, %v2285
    %v3102 = vpack.c.b16 %v2290, %v2286
    %v3103 = vpack.c.b16 %v2291, %v2287
    %v3104 = vpack.c.b16 %v2292, %v2288
    %v3105 = vpack.c.b16 %v2297, %v2293
    %v3106 = vpack.c.b16 %v2298, %v2294
    %v3107 = vpack.c.b16 %v2299, %v2295
    %v3108 = vpack.c.b16 %v2300, %v2296
    %v3109 = vpack.c.b16 %v2305, %v2301
    %v3110 = vpack.c.b16 %v2306, %v2302
    %v3111 = vpack.c.b16 %v2307, %v2303
    %v3112 = vpack.c.b16 %v2308, %v2304
    %v3113 = vpack.c.b16 %v2313, %v2309
    %v3114 = vpack.c.b16 %v2314, %v2310
    %v3115 = vpack.c.b16 %v2315, %v2311
    %v3116 = vpack.c.b16 %v2316, %v2312
    %v3117 = vpack.c.b16 %v2321, %v2317
    %v3118 = vpack.c.b16 %v2322, %v2318
    %v3119 = vpack.c.b16 %v2323, %v2319
    %v3120 = vpack.c.b16 %v2324, %v2320
    %v3121 = vpack.c.b16 %v2329, %v2325
    %v3122 = vpack.c.b16 %v2330, %v2326
    %v3123 = vpack.c.b16 %v2331, %v2327
    %v3124 = vpack.c.b16 %v2332, %v2328
    %v3125 = vpack.c.b16 %v2337, %v2333
    %v3126 = vpack.c.b16 %v2338, %v2334
    %v3127 = vpack.c.b16 %v2339, %v2335
    %v3128 = vpack.c.b16 %v2340, %v2336
    %v3129 = vpack.c.b16 %v2345, %v2341
    %v3130 = vpack.c.b16 %v2346, %v2342
    %v3131 = vpack.c.b16 %v2347, %v2343
    %v3132 = vpack.c.b16 %v2348, %v2344
    %v3133 = vpack.c.b16 %v2353, %v2349
    %v3134 = vpack.c.b16 %v2354, %v2350
    %v3135 = vpack.c.b16 %v2355, %v2351
    %v3136 = vpack.c.b16 %v2356, %v2352
    %v3137 = vpack.c.b16 %v2361, %v2357
    %v3138 = vpack.c.b16 %v2362, %v2358
    %v3139 = vpack.c.b16 %v2363, %v2359
    %v3140 = vpack.c.b16 %v2364, %v2360
    %v3141 = vpack.c.b16 %v2369, %v2365
    %v3142 = vpack.c.b16 %v2370, %v2366
    %v3143 = vpack.c.b16 %v2371, %v2367
    %v3144 = vpack.c.b16 %v2372, %v2368
    %v3145 = vpack.c.b16 %v2377, %v2373
    %v3146 = vpack.c.b16 %v2378, %v2374
    %v3147 = vpack.c.b16 %v2379, %v2375
    %v3148 = vpack.c.b16 %v2380, %v2376
    %v3149 = vpack.c.b16 %v2385, %v2381
    %v3150 = vpack.c.b16 %v2386, %v2382
    %v3151 = vpack.c.b16 %v2387, %v2383
    %v3152 = vpack.c.b16 %v2388, %v2384
    %v3153 = vpack.c.b16 %v2393, %v2389
    %v3154 = vpack.c.b16 %v2394, %v2390
    %v3155 = vpack.c.b16 %v2395, %v2391
    %v3156 = vpack.c.b16 %v2396, %v2392
    %v3157 = vpack.c.b16 %v2401, %v2397
    %v3158 = vpack.c.b16 %v2402, %v2398
    %v3159 = vpack.c.b16 %v2403, %v2399
    %v3160 = vpack.c.b16 %v2404, %v2400
    %v3161 = vpack.c.b16 %v2409, %v2405
    %v3162 = vpack.c.b16 %v2410, %v2406
    %v3163 = vpack.c.b16 %v2411, %v2407
    %v3164 = vpack.c.b16 %v2412, %v2408
    %v3165 = vpack.c.b16 %v2417, %v2413
    %v3166 = vpack.c.b16 %v2418, %v2414
    %v3167 = vpack.c.b16 %v2419, %v2415
    %v3168 = vpack.c.b16 %v2420, %v2416
    %v3169 = vpack.c.b16 %v2425, %v2421
    %v3170 = vpack.c.b16 %v2426, %v2422
    %v3171 = vpack.c.b16 %v2427, %v2423
    %v3172 = vpack.c.b16 %v2428, %v2424
    %v3173 = vpack.c.b16 %v2433, %v2429
    %v3174 = vpack.c.b16 %v2434, %v2430
    %v3175 = vpack.c.b16 %v2435, %v2431
    %v3176 = vpack.c.b16 %v2436, %v2432
    %v3177 = vpack.c.b16 %v2441, %v2437
    %v3178 = vpack.c.b16 %v2442, %v2438
    %v3179 = vpack.c.b16 %v2443, %v2439
    %v3180 = vpack.c.b16 %v2444, %v2440
    %v3181 = vpack.c.b16 %v2449, %v2445
    %v3182 = vpack.c.b16 %v2450, %v2446
    %v3183 = vpack.c.b16 %v2451, %v2447
    %v3184 = vpack.c.b16 %v2452, %v2448
    %v3185 = vpack.c.b16 %v2457, %v2453
    %v3186 = vpack.c.b16 %v2458, %v2454
    %v3187 = vpack.c.b16 %v2459, %v2455
    %v3188 = vpack.c.b16 %v2460, %v2456
    %v3189 = vpack.c.b16 %v2465, %v2461
    %v3190 = vpack.c.b16 %v2466, %v2462
    %v3191 = vpack.c.b16 %v2467, %v2463
    %v3192 = vpack.c.b16 %v2468, %v2464
    %v3193 = vpack.c.b16 %v2473, %v2469
    %v3194 = vpack.c.b16 %v2474, %v2470
    %v3195 = vpack.c.b16 %v2475, %v2471
    %v3196 = vpack.c.b16 %v2476, %v2472
    %v3197 = vpack.c.b16 %v2481, %v2477
    %v3198 = vpack.c.b16 %v2482, %v2478
    %v3199 = vpack.c.b16 %v2483, %v2479
    %v3200 = vpack.c.b16 %v2484, %v2480
    %v3201 = vpack.c.b16 %v2489, %v2485
    %v3202 = vpack.c.b16 %v2490, %v2486
    %v3203 = vpack.c.b16 %v2491, %v2487
    %v3204 = vpack.c.b16 %v2492, %v2488
    %v3205 = vpack.c.b16 %v2497, %v2493
    %v3206 = vpack.c.b16 %v2498, %v2494
    %v3207 = vpack.c.b16 %v2499, %v2495
    %v3208 = vpack.c.b16 %v2500, %v2496
    %v3209 = vpack.c.b16 %v2505, %v2501
    %v3210 = vpack.c.b16 %v2506, %v2502
    %v3211 = vpack.c.b16 %v2507, %v2503
    %v3212 = vpack.c.b16 %v2508, %v2504
    %v3213 = vpack.c.b16 %v2513, %v2509
    %v3214 = vpack.c.b16 %v2514, %v2510
    %v3215 = vpack.c.b16 %v2515, %v2511
    %v3216 = vpack.c.b16 %v2516, %v2512
    %v3217 = vpack.c.b16 %v2521, %v2517
    %v3218 = vpack.c.b16 %v2522, %v2518
    %v3219 = vpack.c.b16 %v2523, %v2519
    %v3220 = vpack.c.b16 %v2524, %v2520
    %v3221 = vpack.c.b16 %v2529, %v2525
    %v3222 = vpack.c.b16 %v2530, %v2526
    %v3223 = vpack.c.b16 %v2531, %v2527
    %v3224 = vpack.c.b16 %v2532, %v2528
    %v3225 = vpack.c.b16 %v2537, %v2533
    %v3226 = vpack.c.b16 %v2538, %v2534
    %v3227 = vpack.c.b16 %v2539, %v2535
    %v3228 = vpack.c.b16 %v2540, %v2536
    %v3229 = vpack.c.b16 %v2545, %v2541
    %v3230 = vpack.c.b16 %v2546, %v2542
    %v3231 = vpack.c.b16 %v2547, %v2543
    %v3232 = vpack.c.b16 %v2548, %v2544
    %v3233 = vpack.c.b16 %v2553, %v2549
    %v3234 = vpack.c.b16 %v2554, %v2550
    %v3235 = vpack.c.b16 %v2555, %v2551
    %v3236 = vpack.c.b16 %v2556, %v2552
    %v3237 = vpack.c.b16 %v2561, %v2557
    %v3238 = vpack.c.b16 %v2562, %v2558
    %v3239 = vpack.c.b16 %v2563, %v2559
    %v3240 = vpack.c.b16 %v2564, %v2560
    %v3241 = vpack.c.b16 %v2569, %v2565
    %v3242 = vpack.c.b16 %v2570, %v2566
    %v3243 = vpack.c.b16 %v2571, %v2567
    %v3244 = vpack.c.b16 %v2572, %v2568
    %v3245 = vpack.c.b16 %v2577, %v2573
    %v3246 = vpack.c.b16 %v2578, %v2574
    %v3247 = vpack.c.b16 %v2579, %v2575
    %v3248 = vpack.c.b16 %v2580, %v2576
    %v3249 = vpack.c.b16 %v2585, %v2581
    %v3250 = vpack.c.b16 %v2586, %v2582
    %v3251 = vpack.c.b16 %v2587, %v2583
    %v3252 = vpack.c.b16 %v2588, %v2584
    %v3253 = vpack.c.b16 %v2593, %v2589
    %v3254 = vpack.c.b16 %v2594, %v2590
    %v3255 = vpack.c.b16 %v2595, %v2591
    %v3256 = vpack.c.b16 %v2596, %v2592
    %v3257 = vpack.c.b16 %v2601, %v2597
    %v3258 = vpack.c.b16 %v2602, %v2598
    %v3259 = vpack.c.b16 %v2603, %v2599
    %v3260 = vpack.c.b16 %v2604, %v2600
    %v3261 = vpack.c.b16 %v2609, %v2605
    %v3262 = vpack.c.b16 %v2610, %v2606
    %v3263 = vpack.c.b16 %v2611, %v2607
    %v3264 = vpack.c.b16 %v2612, %v2608
    %v3265 = vpack.c.b16 %v2617, %v2613
    %v3266 = vpack.c.b16 %v2618, %v2614
    %v3267 = vpack.c.b16 %v2619, %v2615
    %v3268 = vpack.c.b16 %v2620, %v2616
    %v3269 = vpack.c.b16 %v2625, %v2621
    %v3270 = vpack.c.b16 %v2626, %v2622
    %v3271 = vpack.c.b16 %v2627, %v2623
    %v3272 = vpack.c.b16 %v2628, %v2624
    %v3273 = vpack.c.b16 %v2633, %v2629
    %v3274 = vpack.c.b16 %v2634, %v2630
    %v3275 = vpack.c.b16 %v2635, %v2631
    %v3276 = vpack.c.b16 %v2636, %v2632
    %v3277 = vpack.c.b16 %v2641, %v2637
    %v3278 = vpack.c.b16 %v2642, %v2638
    %v3279 = vpack.c.b16 %v2643, %v2639
    %v3280 = vpack.c.b16 %v2644, %v2640
    %v3281 = vpack.c.b16 %v2649, %v2645
    %v3282 = vpack.c.b16 %v2650, %v2646
    %v3283 = vpack.c.b16 %v2651, %v2647
    %v3284 = vpack.c.b16 %v2652, %v2648
    %v3285 = vpack.c.b16 %v2657, %v2653
    %v3286 = vpack.c.b16 %v2658, %v2654
    %v3287 = vpack.c.b16 %v2659, %v2655
    %v3288 = vpack.c.b16 %v2660, %v2656
    %v3289 = vpack.c.b16 %v2665, %v2661
    %v3290 = vpack.c.b16 %v2666, %v2662
    %v3291 = vpack.c.b16 %v2667, %v2663
    %v3292 = vpack.c.b16 %v2668, %v2664
    %v3293 = vpack.c.b16 %v2673, %v2669
    %v3294 = vpack.c.b16 %v2674, %v2670
    %v3295 = vpack.c.b16 %v2675, %v2671
    %v3296 = vpack.c.b16 %v2676, %v2672
    %v3297 = vpack.c.b16 %v2681, %v2677
    %v3298 = vpack.c.b16 %v2682, %v2678
    %v3299 = vpack.c.b16 %v2683, %v2679
    %v3300 = vpack.c.b16 %v2684, %v2680
    %v3301 = vpack.c.b16 %v2689, %v2685
    %v3302 = vpack.c.b16 %v2690, %v2686
    %v3303 = vpack.c.b16 %v2691, %v2687
    %v3304 = vpack.c.b16 %v2692, %v2688
    %v3305 = vpack.c.b16 %v2697, %v2693
    %v3306 = vpack.c.b16 %v2698, %v2694
    %v3307 = vpack.c.b16 %v2699, %v2695
    %v3308 = vpack.c.b16 %v2700, %v2696
    %v3309 = vpack.c.b16 %v2705, %v2701
    %v3310 = vpack.c.b16 %v2706, %v2702
    %v3311 = vpack.c.b16 %v2707, %v2703
    %v3312 = vpack.c.b16 %v2708, %v2704
    %v3313 = vpack.c.b16 %v2713, %v2709
    %v3314 = vpack.c.b16 %v2714, %v2710
    %v3315 = vpack.c.b16 %v2715, %v2711
    %v3316 = vpack.c.b16 %v2716, %v2712
    %v3317 = vpack.c.b16 %v2721, %v2717
    %v3318 = vpack.c.b16 %v2722, %v2718
    %v3319 = vpack.c.b16 %v2723, %v2719
    %v3320 = vpack.c.b16 %v2724, %v2720
    %v3321 = vpack.c.b16 %v2729, %v2725
    %v3322 = vpack.c.b16 %v2730, %v2726
    %v3323 = vpack.c.b16 %v2731, %v2727
    %v3324 = vpack.c.b16 %v2732, %v2728
    %v3325 = vpack.c.b16 %v2737, %v2733
    %v3326 = vpack.c.b16 %v2738, %v2734
    %v3327 = vpack.c.b16 %v2739, %v2735
    %v3328 = vpack.c.b16 %v2740, %v2736
    %v3329 = vpack.c.b16 %v2745, %v2741
    %v3330 = vpack.c.b16 %v2746, %v2742
    %v3331 = vpack.c.b16 %v2747, %v2743
    %v3332 = vpack.c.b16 %v2748, %v2744
    %v3333 = vpack.c.b16 %v2753, %v2749
    %v3334 = vpack.c.b16 %v2754, %v2750
    %v3335 = vpack.c.b16 %v2755, %v2751
    %v3336 = vpack.c.b16 %v2756, %v2752
    %v3337 = vpack.c.b16 %v2761, %v2757
    %v3338 = vpack.c.b16 %v2762, %v2758
    %v3339 = vpack.c.b16 %v2763, %v2759
    %v3340 = vpack.c.b16 %v2764, %v2760
    %v3341 = vpack.c.b16 %v2769, %v2765
    %v3342 = vpack.c.b16 %v2770, %v2766
    %v3343 = vpack.c.b16 %v2771, %v2767
    %v3344 = vpack.c.b16 %v2772, %v2768
    %v3345 = vpack.c.b16 %v2777, %v2773
    %v3346 = vpack.c.b16 %v2778, %v2774
    %v3347 = vpack.c.b16 %v2779, %v2775
    %v3348 = vpack.c.b16 %v2780, %v2776
    %v3349 = vpack.c.b16 %v2785, %v2781
    %v3350 = vpack.c.b16 %v2786, %v2782
    %v3351 = vpack.c.b16 %v2787, %v2783
    %v3352 = vpack.c.b16 %v2788, %v2784
    %v3353 = vpack.c.b16 %v2793, %v2789
    %v3354 = vpack.c.b16 %v2794, %v2790
    %v3355 = vpack.c.b16 %v2795, %v2791
    %v3356 = vpack.c.b16 %v2796, %v2792
    %v3357 = vpack.c.b16 %v2801, %v2797
    %v3358 = vpack.c.b16 %v2802, %v2798
    %v3359 = vpack.c.b16 %v2803, %v2799
    %v3360 = vpack.c.b16 %v2804, %v2800
    %v3361 = vpack.c.b16 %v2809, %v2805
    %v3362 = vpack.c.b16 %v2810, %v2806
    %v3363 = vpack.c.b16 %v2811, %v2807
    %v3364 = vpack.c.b16 %v2812, %v2808
    %v3365 = vpack.c.b16 %v2817, %v2813
    %v3366 = vpack.c.b16 %v2818, %v2814
    %v3367 = vpack.c.b16 %v2819, %v2815
    %v3368 = vpack.c.b16 %v2820, %v2816
    %v3369 = vpack.c.b16 %v2825, %v2821
    %v3370 = vpack.c.b16 %v2826, %v2822
    %v3371 = vpack.c.b16 %v2827, %v2823
    %v3372 = vpack.c.b16 %v2828, %v2824
    %v3373 = vpack.c.b16 %v2833, %v2829
    %v3374 = vpack.c.b16 %v2834, %v2830
    %v3375 = vpack.c.b16 %v2835, %v2831
    %v3376 = vpack.c.b16 %v2836, %v2832
    %v3377 = vpack.c.b16 %v2841, %v2837
    %v3378 = vpack.c.b16 %v2842, %v2838
    %v3379 = vpack.c.b16 %v2843, %v2839
    %v3380 = vpack.c.b16 %v2844, %v2840
    %v3381 = vpack.c.b16 %v2849, %v2845
    %v3382 = vpack.c.b16 %v2850, %v2846
    %v3383 = vpack.c.b16 %v2851, %v2847
    %v3384 = vpack.c.b16 %v2852, %v2848
    %v3385 = vpack.c.b16 %v2857, %v2853
    %v3386 = vpack.c.b16 %v2858, %v2854
    %v3387 = vpack.c.b16 %v2859, %v2855
    %v3388 = vpack.c.b16 %v2860, %v2856
    %v3389 = vpack.c.b16 %v2865, %v2861
    %v3390 = vpack.c.b16 %v2866, %v2862
    %v3391 = vpack.c.b16 %v2867, %v2863
    %v3392 = vpack.c.b16 %v2868, %v2864
    %v3393 = vpack.c.b16 %v2873, %v2869
    %v3394 = vpack.c.b16 %v2874, %v2870
    %v3395 = vpack.c.b16 %v2875, %v2871
    %v3396 = vpack.c.b16 %v2876, %v2872
    %v3397 = vpack.c.b16 %v2881, %v2877
    %v3398 = vpack.c.b16 %v2882, %v2878
    %v3399 = vpack.c.b16 %v2883, %v2879
    %v3400 = vpack.c.b16 %v2884, %v2880
    %v3401 = vpack.c.b16 %v2889, %v2885
    %v3402 = vpack.c.b16 %v2890, %v2886
    %v3403 = vpack.c.b16 %v2891, %v2887
    %v3404 = vpack.c.b16 %v2892, %v2888
    %3917 = vmatprep.subr.bf16.mxu0 %v2894
    %3918 = vmatpush1.bf16.msra.mxu0 %v2893
    %3919 = vmatprep.subr.bf16.mxu0 %v2898
    %3920 = vmatpush1.bf16.msra.mxu0 %v2897
    %3921 = vmatprep.subr.bf16.mxu0 %v2902
    %3922 = vmatpush1.bf16.msra.mxu0 %v2901
    %3923 = vmatprep.subr.bf16.mxu0 %v2906
    %3924 = vmatpush1.bf16.msra.mxu0 %v2905
    %3925 = vmatprep.subr.bf16.mxu0 %v2910
    %3926 = vmatpush1.bf16.msra.mxu0 %v2909
    %3927 = vmatprep.subr.bf16.mxu0 %v2914
    %3928 = vmatpush1.bf16.msra.mxu0 %v2913
    %3929 = vmatprep.subr.bf16.mxu0 %v2918
    %3930 = vmatpush1.bf16.msra.mxu0 %v2917
    %3931 = vmatprep.subr.bf16.mxu0 %v2922
    %3932 = vmatpush1.bf16.msra.mxu0 %v2921
    %3933 = vmatprep.subr.bf16.mxu0 %v2926
    %3934 = vmatpush1.bf16.msra.mxu0 %v2925
    %3935 = vmatprep.subr.bf16.mxu0 %v2930
    %3936 = vmatpush1.bf16.msra.mxu0 %v2929
    %3937 = vmatprep.subr.bf16.mxu0 %v2934
    %3938 = vmatpush1.bf16.msra.mxu0 %v2933
    %3939 = vmatprep.subr.bf16.mxu0 %v2938
    %3940 = vmatpush1.bf16.msra.mxu0 %v2937
    %3941 = vmatprep.subr.bf16.mxu0 %v2942
    %3942 = vmatpush1.bf16.msra.mxu0 %v2941
    %3943 = vmatprep.subr.bf16.mxu0 %v2946
    %3944 = vmatpush1.bf16.msra.mxu0 %v2945
    %3945 = vmatprep.subr.bf16.mxu0 %v2950
    %3946 = vmatpush1.bf16.msra.mxu0 %v2949
    %3947 = vmatprep.subr.bf16.mxu0 %v2954
    %3948 = vmatpush1.bf16.msra.mxu0 %v2953
    %3949 = vmatprep.mubr.bf16.mxu0 %v808
    %3950 = vmatmul.mubr.bf16.gmra.mrb[0].mxu0 %v807
    %v3951 = vpop.f32.mrb[0].mxu0
    %v3952 = vadd.f32 %v1340, %v3951
    %v3953 = vpop.f32.mrb[0].mxu0
    %v3954 = vadd.f32 %v1344, %v3953
    %v3955 = vpop.f32.mrb[0].mxu0
    %v3956 = vadd.f32 %v1340, %v3955
    %v3957 = vpop.f32.mrb[0].mxu0
    %v3958 = vadd.f32 %v1344, %v3957
    %3959 = vdwg.mxu0
    %3960 = vmatprep.subr.bf16.mxu0 %v2958
    %3961 = vmatpush1.bf16.msra.mxu0 %v2957
    %3962 = vmatprep.subr.bf16.mxu0 %v2962
    %3963 = vmatpush1.bf16.msra.mxu0 %v2961
    %3964 = vmatprep.subr.bf16.mxu0 %v2966
    %3965 = vmatpush1.bf16.msra.mxu0 %v2965
    %3966 = vmatprep.subr.bf16.mxu0 %v2970
    %3967 = vmatpush1.bf16.msra.mxu0 %v2969
    %3968 = vmatprep.subr.bf16.mxu0 %v2974
    %3969 = vmatpush1.bf16.msra.mxu0 %v2973
    %3970 = vmatprep.subr.bf16.mxu0 %v2978
    %3971 = vmatpush1.bf16.msra.mxu0 %v2977
    %3972 = vmatprep.subr.bf16.mxu0 %v2982
    %3973 = vmatpush1.bf16.msra.mxu0 %v2981
    %3974 = vmatprep.subr.bf16.mxu0 %v2986
    %3975 = vmatpush1.bf16.msra.mxu0 %v2985
    %3976 = vmatprep.subr.bf16.mxu0 %v2990
    %3977 = vmatpush1.bf16.msra.mxu0 %v2989
    %3978 = vmatprep.subr.bf16.mxu0 %v2994
    %3979 = vmatpush1.bf16.msra.mxu0 %v2993
    %3980 = vmatprep.subr.bf16.mxu0 %v2998
    %3981 = vmatpush1.bf16.msra.mxu0 %v2997
    %3982 = vmatprep.subr.bf16.mxu0 %v3002
    %3983 = vmatpush1.bf16.msra.mxu0 %v3001
    %3984 = vmatprep.subr.bf16.mxu0 %v3006
    %3985 = vmatpush1.bf16.msra.mxu0 %v3005
    %3986 = vmatprep.subr.bf16.mxu0 %v3010
    %3987 = vmatpush1.bf16.msra.mxu0 %v3009
    %3988 = vmatprep.subr.bf16.mxu0 %v3014
    %3989 = vmatpush1.bf16.msra.mxu0 %v3013
    %3990 = vmatprep.subr.bf16.mxu0 %v3018
    %3991 = vmatpush1.bf16.msra.mxu0 %v3017
    %3992 = vmatprep.mubr.bf16.mxu0 %v810
    %3993 = vmatmul.mubr.bf16.gmra.mrb[0].mxu0 %v809
    %v3994 = vpop.f32.mrb[0].mxu0
    %v3995 = vadd.f32 %v3952, %v3994
    %v3996 = vpop.f32.mrb[0].mxu0
    %v3997 = vadd.f32 %v3954, %v3996
    %v3998 = vpop.f32.mrb[0].mxu0
    %v3999 = vadd.f32 %v3956, %v3998
    %v4000 = vpop.f32.mrb[0].mxu0
    %v4001 = vadd.f32 %v3958, %v4000
    %4002 = vdwg.mxu0
    %4003 = vmatprep.subr.bf16.mxu0 %v3022
    %4004 = vmatpush1.bf16.msra.mxu0 %v3021
    %4005 = vmatprep.subr.bf16.mxu0 %v3026
    %4006 = vmatpush1.bf16.msra.mxu0 %v3025
    %4007 = vmatprep.subr.bf16.mxu0 %v3030
    %4008 = vmatpush1.bf16.msra.mxu0 %v3029
    %4009 = vmatprep.subr.bf16.mxu0 %v3034
    %4010 = vmatpush1.bf16.msra.mxu0 %v3033
    %4011 = vmatprep.subr.bf16.mxu0 %v3038
    %4012 = vmatpush1.bf16.msra.mxu0 %v3037
    %4013 = vmatprep.subr.bf16.mxu0 %v3042
    %4014 = vmatpush1.bf16.msra.mxu0 %v3041
    %4015 = vmatprep.subr.bf16.mxu0 %v3046
    %4016 = vmatpush1.bf16.msra.mxu0 %v3045
    %4017 = vmatprep.subr.bf16.mxu0 %v3050
    %4018 = vmatpush1.bf16.msra.mxu0 %v3049
    %4019 = vmatprep.subr.bf16.mxu0 %v3054
    %4020 = vmatpush1.bf16.msra.mxu0 %v3053
    %4021 = vmatprep.subr.bf16.mxu0 %v3058
    %4022 = vmatpush1.bf16.msra.mxu0 %v3057
    %4023 = vmatprep.subr.bf16.mxu0 %v3062
    %4024 = vmatpush1.bf16.msra.mxu0 %v3061
    %4025 = vmatprep.subr.bf16.mxu0 %v3066
    %4026 = vmatpush1.bf16.msra.mxu0 %v3065
    %4027 = vmatprep.subr.bf16.mxu0 %v3070
    %4028 = vmatpush1.bf16.msra.mxu0 %v3069
    %4029 = vmatprep.subr.bf16.mxu0 %v3074
    %4030 = vmatpush1.bf16.msra.mxu0 %v3073
    %4031 = vmatprep.subr.bf16.mxu0 %v3078
    %4032 = vmatpush1.bf16.msra.mxu0 %v3077
    %4033 = vmatprep.subr.bf16.mxu0 %v3082
    %4034 = vmatpush1.bf16.msra.mxu0 %v3081
    %4035 = vmatprep.mubr.bf16.mxu0 %v812
    %4036 = vmatmul.mubr.bf16.gmra.mrb[0].mxu0 %v811
    %v4037 = vpop.f32.mrb[0].mxu0
    %v4038 = vadd.f32 %v3995, %v4037
    %v4039 = vpop.f32.mrb[0].mxu0
    %v4040 = vadd.f32 %v3997, %v4039
    %v4041 = vpop.f32.mrb[0].mxu0
    %v4042 = vadd.f32 %v3999, %v4041
    %v4043 = vpop.f32.mrb[0].mxu0
    %v4044 = vadd.f32 %v4001, %v4043
    %4045 = vdwg.mxu0
    %4046 = vmatprep.subr.bf16.mxu0 %v3086
    %4047 = vmatpush1.bf16.msra.mxu0 %v3085
    %4048 = vmatprep.subr.bf16.mxu0 %v3090
    %4049 = vmatpush1.bf16.msra.mxu0 %v3089
    %4050 = vmatprep.subr.bf16.mxu0 %v3094
    %4051 = vmatpush1.bf16.msra.mxu0 %v3093
    %4052 = vmatprep.subr.bf16.mxu0 %v3098
    %4053 = vmatpush1.bf16.msra.mxu0 %v3097
    %4054 = vmatprep.subr.bf16.mxu0 %v3102
    %4055 = vmatpush1.bf16.msra.mxu0 %v3101
    %4056 = vmatprep.subr.bf16.mxu0 %v3106
    %4057 = vmatpush1.bf16.msra.mxu0 %v3105
    %4058 = vmatprep.subr.bf16.mxu0 %v3110
    %4059 = vmatpush1.bf16.msra.mxu0 %v3109
    %4060 = vmatprep.subr.bf16.mxu0 %v3114
    %4061 = vmatpush1.bf16.msra.mxu0 %v3113
    %4062 = vmatprep.subr.bf16.mxu0 %v3118
    %4063 = vmatpush1.bf16.msra.mxu0 %v3117
    %4064 = vmatprep.subr.bf16.mxu0 %v3122
    %4065 = vmatpush1.bf16.msra.mxu0 %v3121
    %4066 = vmatprep.subr.bf16.mxu0 %v3126
    %4067 = vmatpush1.bf16.msra.mxu0 %v3125
    %4068 = vmatprep.subr.bf16.mxu0 %v3130
    %4069 = vmatpush1.bf16.msra.mxu0 %v3129
    %4070 = vmatprep.subr.bf16.mxu0 %v3134
    %4071 = vmatpush1.bf16.msra.mxu0 %v3133
    %4072 = vmatprep.subr.bf16.mxu0 %v3138
    %4073 = vmatpush1.bf16.msra.mxu0 %v3137
    %4074 = vmatprep.subr.bf16.mxu0 %v3142
    %4075 = vmatpush1.bf16.msra.mxu0 %v3141
    %4076 = vmatprep.subr.bf16.mxu0 %v3146
    %4077 = vmatpush1.bf16.msra.mxu0 %v3145
    %4078 = vmatprep.mubr.bf16.mxu0 %v814
    %4079 = vmatmul.mubr.bf16.gmra.mrb[0].mxu0 %v813
    %v4080 = vpop.f32.mrb[0].mxu0
    %v4081 = vadd.f32 %v4038, %v4080
    %v4082 = vpop.f32.mrb[0].mxu0
    %v4083 = vadd.f32 %v4040, %v4082
    %v4084 = vpop.f32.mrb[0].mxu0
    %v4085 = vadd.f32 %v4042, %v4084
    %v4086 = vpop.f32.mrb[0].mxu0
    %v4087 = vadd.f32 %v4044, %v4086
    %4088 = vdwg.mxu0
    %4089 = vmatprep.subr.bf16.mxu0 %v3150
    %4090 = vmatpush1.bf16.msra.mxu0 %v3149
    %4091 = vmatprep.subr.bf16.mxu0 %v3154
    %4092 = vmatpush1.bf16.msra.mxu0 %v3153
    %4093 = vmatprep.subr.bf16.mxu0 %v3158
    %4094 = vmatpush1.bf16.msra.mxu0 %v3157
    %4095 = vmatprep.subr.bf16.mxu0 %v3162
    %4096 = vmatpush1.bf16.msra.mxu0 %v3161
    %4097 = vmatprep.subr.bf16.mxu0 %v3166
    %4098 = vmatpush1.bf16.msra.mxu0 %v3165
    %4099 = vmatprep.subr.bf16.mxu0 %v3170
    %4100 = vmatpush1.bf16.msra.mxu0 %v3169
    %4101 = vmatprep.subr.bf16.mxu0 %v3174
    %4102 = vmatpush1.bf16.msra.mxu0 %v3173
    %4103 = vmatprep.subr.bf16.mxu0 %v3178
    %4104 = vmatpush1.bf16.msra.mxu0 %v3177
    %4105 = vmatprep.subr.bf16.mxu0 %v3182
    %4106 = vmatpush1.bf16.msra.mxu0 %v3181
    %4107 = vmatprep.subr.bf16.mxu0 %v3186
    %4108 = vmatpush1.bf16.msra.mxu0 %v3185
    %4109 = vmatprep.subr.bf16.mxu0 %v3190
    %4110 = vmatpush1.bf16.msra.mxu0 %v3189
    %4111 = vmatprep.subr.bf16.mxu0 %v3194
    %4112 = vmatpush1.bf16.msra.mxu0 %v3193
    %4113 = vmatprep.subr.bf16.mxu0 %v3198
    %4114 = vmatpush1.bf16.msra.mxu0 %v3197
    %4115 = vmatprep.subr.bf16.mxu0 %v3202
    %4116 = vmatpush1.bf16.msra.mxu0 %v3201
    %4117 = vmatprep.subr.bf16.mxu0 %v3206
    %4118 = vmatpush1.bf16.msra.mxu0 %v3205
    %4119 = vmatprep.subr.bf16.mxu0 %v3210
    %4120 = vmatpush1.bf16.msra.mxu0 %v3209
    %4121 = vmatprep.mubr.bf16.mxu0 %v816
    %4122 = vmatmul.mubr.bf16.gmra.mrb[0].mxu0 %v815
    %v4123 = vpop.f32.mrb[0].mxu0
    %v4124 = vadd.f32 %v4081, %v4123
    %v4125 = vpop.f32.mrb[0].mxu0
    %v4126 = vadd.f32 %v4083, %v4125
    %v4127 = vpop.f32.mrb[0].mxu0
    %v4128 = vadd.f32 %v4085, %v4127
    %v4129 = vpop.f32.mrb[0].mxu0
    %v4130 = vadd.f32 %v4087, %v4129
    %4131 = vdwg.mxu0
    %4132 = vmatprep.subr.bf16.mxu0 %v3214
    %4133 = vmatpush1.bf16.msra.mxu0 %v3213
    %4134 = vmatprep.subr.bf16.mxu0 %v3218
    %4135 = vmatpush1.bf16.msra.mxu0 %v3217
    %4136 = vmatprep.subr.bf16.mxu0 %v3222
    %4137 = vmatpush1.bf16.msra.mxu0 %v3221
    %4138 = vmatprep.subr.bf16.mxu0 %v3226
    %4139 = vmatpush1.bf16.msra.mxu0 %v3225
    %4140 = vmatprep.subr.bf16.mxu0 %v3230
    %4141 = vmatpush1.bf16.msra.mxu0 %v3229
    %4142 = vmatprep.subr.bf16.mxu0 %v3234
    %4143 = vmatpush1.bf16.msra.mxu0 %v3233
    %4144 = vmatprep.subr.bf16.mxu0 %v3238
    %4145 = vmatpush1.bf16.msra.mxu0 %v3237
    %4146 = vmatprep.subr.bf16.mxu0 %v3242
    %4147 = vmatpush1.bf16.msra.mxu0 %v3241
    %4148 = vmatprep.subr.bf16.mxu0 %v3246
    %4149 = vmatpush1.bf16.msra.mxu0 %v3245
    %4150 = vmatprep.subr.bf16.mxu0 %v3250
    %4151 = vmatpush1.bf16.msra.mxu0 %v3249
    %4152 = vmatprep.subr.bf16.mxu0 %v3254
    %4153 = vmatpush1.bf16.msra.mxu0 %v3253
    %4154 = vmatprep.subr.bf16.mxu0 %v3258
    %4155 = vmatpush1.bf16.msra.mxu0 %v3257
    %4156 = vmatprep.subr.bf16.mxu0 %v3262
    %4157 = vmatpush1.bf16.msra.mxu0 %v3261
    %4158 = vmatprep.subr.bf16.mxu0 %v3266
    %4159 = vmatpush1.bf16.msra.mxu0 %v3265
    %4160 = vmatprep.subr.bf16.mxu0 %v3270
    %4161 = vmatpush1.bf16.msra.mxu0 %v3269
    %4162 = vmatprep.subr.bf16.mxu0 %v3274
    %4163 = vmatpush1.bf16.msra.mxu0 %v3273
    %4164 = vmatprep.mubr.bf16.mxu0 %v818
    %4165 = vmatmul.mubr.bf16.gmra.mrb[0].mxu0 %v817
    %v4166 = vpop.f32.mrb[0].mxu0
    %v4167 = vadd.f32 %v4124, %v4166
    %v4168 = vpop.f32.mrb[0].mxu0
    %v4169 = vadd.f32 %v4126, %v4168
    %v4170 = vpop.f32.mrb[0].mxu0
    %v4171 = vadd.f32 %v4128, %v4170
    %v4172 = vpop.f32.mrb[0].mxu0
    %v4173 = vadd.f32 %v4130, %v4172
    %4174 = vdwg.mxu0
    %4175 = vmatprep.subr.bf16.mxu0 %v3278
    %4176 = vmatpush1.bf16.msra.mxu0 %v3277
    %4177 = vmatprep.subr.bf16.mxu0 %v3282
    %4178 = vmatpush1.bf16.msra.mxu0 %v3281
    %4179 = vmatprep.subr.bf16.mxu0 %v3286
    %4180 = vmatpush1.bf16.msra.mxu0 %v3285
    %4181 = vmatprep.subr.bf16.mxu0 %v3290
    %4182 = vmatpush1.bf16.msra.mxu0 %v3289
    %4183 = vmatprep.subr.bf16.mxu0 %v3294
    %4184 = vmatpush1.bf16.msra.mxu0 %v3293
    %4185 = vmatprep.subr.bf16.mxu0 %v3298
    %4186 = vmatpush1.bf16.msra.mxu0 %v3297
    %4187 = vmatprep.subr.bf16.mxu0 %v3302
    %4188 = vmatpush1.bf16.msra.mxu0 %v3301
    %4189 = vmatprep.subr.bf16.mxu0 %v3306
    %4190 = vmatpush1.bf16.msra.mxu0 %v3305
    %4191 = vmatprep.subr.bf16.mxu0 %v3310
    %4192 = vmatpush1.bf16.msra.mxu0 %v3309
    %4193 = vmatprep.subr.bf16.mxu0 %v3314
    %4194 = vmatpush1.bf16.msra.mxu0 %v3313
    %4195 = vmatprep.subr.bf16.mxu0 %v3318
    %4196 = vmatpush1.bf16.msra.mxu0 %v3317
    %4197 = vmatprep.subr.bf16.mxu0 %v3322
    %4198 = vmatpush1.bf16.msra.mxu0 %v3321
    %4199 = vmatprep.subr.bf16.mxu0 %v3326
    %4200 = vmatpush1.bf16.msra.mxu0 %v3325
    %4201 = vmatprep.subr.bf16.mxu0 %v3330
    %4202 = vmatpush1.bf16.msra.mxu0 %v3329
    %4203 = vmatprep.subr.bf16.mxu0 %v3334
    %4204 = vmatpush1.bf16.msra.mxu0 %v3333
    %4205 = vmatprep.subr.bf16.mxu0 %v3338
    %4206 = vmatpush1.bf16.msra.mxu0 %v3337
    %4207 = vmatprep.mubr.bf16.mxu0 %v820
    %4208 = vmatmul.mubr.bf16.gmra.mrb[0].mxu0 %v819
    %v4209 = vpop.f32.mrb[0].mxu0
    %v4210 = vadd.f32 %v4167, %v4209
    %v4211 = vpop.f32.mrb[0].mxu0
    %v4212 = vadd.f32 %v4169, %v4211
    %v4213 = vpop.f32.mrb[0].mxu0
    %v4214 = vadd.f32 %v4171, %v4213
    %v4215 = vpop.f32.mrb[0].mxu0
    %v4216 = vadd.f32 %v4173, %v4215
    %4217 = vdwg.mxu0
    %4218 = vmatprep.subr.bf16.mxu0 %v3342
    %4219 = vmatpush1.bf16.msra.mxu0 %v3341
    %4220 = vmatprep.subr.bf16.mxu0 %v3346
    %4221 = vmatpush1.bf16.msra.mxu0 %v3345
    %4222 = vmatprep.subr.bf16.mxu0 %v3350
    %4223 = vmatpush1.bf16.msra.mxu0 %v3349
    %4224 = vmatprep.subr.bf16.mxu0 %v3354
    %4225 = vmatpush1.bf16.msra.mxu0 %v3353
    %4226 = vmatprep.subr.bf16.mxu0 %v3358
    %4227 = vmatpush1.bf16.msra.mxu0 %v3357
    %4228 = vmatprep.subr.bf16.mxu0 %v3362
    %4229 = vmatpush1.bf16.msra.mxu0 %v3361
    %4230 = vmatprep.subr.bf16.mxu0 %v3366
    %4231 = vmatpush1.bf16.msra.mxu0 %v3365
    %4232 = vmatprep.subr.bf16.mxu0 %v3370
    %4233 = vmatpush1.bf16.msra.mxu0 %v3369
    %4234 = vmatprep.subr.bf16.mxu0 %v3374
    %4235 = vmatpush1.bf16.msra.mxu0 %v3373
    %4236 = vmatprep.subr.bf16.mxu0 %v3378
    %4237 = vmatpush1.bf16.msra.mxu0 %v3377
    %4238 = vmatprep.subr.bf16.mxu0 %v3382
    %4239 = vmatpush1.bf16.msra.mxu0 %v3381
    %4240 = vmatprep.subr.bf16.mxu0 %v3386
    %4241 = vmatpush1.bf16.msra.mxu0 %v3385
    %4242 = vmatprep.subr.bf16.mxu0 %v3390
    %4243 = vmatpush1.bf16.msra.mxu0 %v3389
    %4244 = vmatprep.subr.bf16.mxu0 %v3394
    %4245 = vmatpush1.bf16.msra.mxu0 %v3393
    %4246 = vmatprep.subr.bf16.mxu0 %v3398
    %4247 = vmatpush1.bf16.msra.mxu0 %v3397
    %4248 = vmatprep.subr.bf16.mxu0 %v3402
    %4249 = vmatpush1.bf16.msra.mxu0 %v3401
    %4250 = vmatprep.mubr.bf16.mxu0 %v822
    %4251 = vmatmul.mubr.bf16.gmra.mrb[0].mxu0 %v821
    %v4252 = vpop.f32.mrb[0].mxu0
    %v4253 = vadd.f32 %v4210, %v4252
    %v4254 = vpop.f32.mrb[0].mxu0
    %v4255 = vadd.f32 %v4212, %v4254
    %v4256 = vpop.f32.mrb[0].mxu0
    %v4257 = vadd.f32 %v4214, %v4256
    %v4258 = vpop.f32.mrb[0].mxu0
    %v4259 = vadd.f32 %v4216, %v4258
    %4260 = vdwg.mxu0
    %4261 = vmatprep.subr.bf16.mxu0 %v2896
    %4262 = vmatpush1.bf16.msra.mxu0 %v2895
    %4263 = vmatprep.subr.bf16.mxu0 %v2900
    %4264 = vmatpush1.bf16.msra.mxu0 %v2899
    %4265 = vmatprep.subr.bf16.mxu0 %v2904
    %4266 = vmatpush1.bf16.msra.mxu0 %v2903
    %4267 = vmatprep.subr.bf16.mxu0 %v2908
    %4268 = vmatpush1.bf16.msra.mxu0 %v2907
    %4269 = vmatprep.subr.bf16.mxu0 %v2912
    %4270 = vmatpush1.bf16.msra.mxu0 %v2911
    %4271 = vmatprep.subr.bf16.mxu0 %v2916
    %4272 = vmatpush1.bf16.msra.mxu0 %v2915
    %4273 = vmatprep.subr.bf16.mxu0 %v2920
    %4274 = vmatpush1.bf16.msra.mxu0 %v2919
    %4275 = vmatprep.subr.bf16.mxu0 %v2924
    %4276 = vmatpush1.bf16.msra.mxu0 %v2923
    %4277 = vmatprep.subr.bf16.mxu0 %v2928
    %4278 = vmatpush1.bf16.msra.mxu0 %v2927
    %4279 = vmatprep.subr.bf16.mxu0 %v2932
    %4280 = vmatpush1.bf16.msra.mxu0 %v2931
    %4281 = vmatprep.subr.bf16.mxu0 %v2936
    %4282 = vmatpush1.bf16.msra.mxu0 %v2935
    %4283 = vmatprep.subr.bf16.mxu0 %v2940
    %4284 = vmatpush1.bf16.msra.mxu0 %v2939
    %4285 = vmatprep.subr.bf16.mxu0 %v2944
    %4286 = vmatpush1.bf16.msra.mxu0 %v2943
    %4287 = vmatprep.subr.bf16.mxu0 %v2948
    %4288 = vmatpush1.bf16.msra.mxu0 %v2947
    %4289 = vmatprep.subr.bf16.mxu0 %v2952
    %4290 = vmatpush1.bf16.msra.mxu0 %v2951
    %4291 = vmatprep.subr.bf16.mxu0 %v2956
    %4292 = vmatpush1.bf16.msra.mxu0 %v2955
    %4293 = vmatprep.mubr.bf16.mxu0 %v808
    %4294 = vmatmul.mubr.bf16.gmra.mrb[0].mxu0 %v807
    %v4295 = vpop.f32.mrb[0].mxu0
    %v4296 = vadd.f32 %v1348, %v4295
    %v4297 = vpop.f32.mrb[0].mxu0
    %v4298 = vadd.f32 %v1352, %v4297
    %v4299 = vpop.f32.mrb[0].mxu0
    %v4300 = vadd.f32 %v1348, %v4299
    %v4301 = vpop.f32.mrb[0].mxu0
    %v4302 = vadd.f32 %v1352, %v4301
    %4303 = vdwg.mxu0
    %4304 = vmatprep.subr.bf16.mxu0 %v2960
    %4305 = vmatpush1.bf16.msra.mxu0 %v2959
    %4306 = vmatprep.subr.bf16.mxu0 %v2964
    %4307 = vmatpush1.bf16.msra.mxu0 %v2963
    %4308 = vmatprep.subr.bf16.mxu0 %v2968
    %4309 = vmatpush1.bf16.msra.mxu0 %v2967
    %4310 = vmatprep.subr.bf16.mxu0 %v2972
    %4311 = vmatpush1.bf16.msra.mxu0 %v2971
    %4312 = vmatprep.subr.bf16.mxu0 %v2976
    %4313 = vmatpush1.bf16.msra.mxu0 %v2975
    %4314 = vmatprep.subr.bf16.mxu0 %v2980
    %4315 = vmatpush1.bf16.msra.mxu0 %v2979
    %4316 = vmatprep.subr.bf16.mxu0 %v2984
    %4317 = vmatpush1.bf16.msra.mxu0 %v2983
    %4318 = vmatprep.subr.bf16.mxu0 %v2988
    %4319 = vmatpush1.bf16.msra.mxu0 %v2987
    %4320 = vmatprep.subr.bf16.mxu0 %v2992
    %4321 = vmatpush1.bf16.msra.mxu0 %v2991
    %4322 = vmatprep.subr.bf16.mxu0 %v2996
    %4323 = vmatpush1.bf16.msra.mxu0 %v2995
    %4324 = vmatprep.subr.bf16.mxu0 %v3000
    %4325 = vmatpush1.bf16.msra.mxu0 %v2999
    %4326 = vmatprep.subr.bf16.mxu0 %v3004
    %4327 = vmatpush1.bf16.msra.mxu0 %v3003
    %4328 = vmatprep.subr.bf16.mxu0 %v3008
    %4329 = vmatpush1.bf16.msra.mxu0 %v3007
    %4330 = vmatprep.subr.bf16.mxu0 %v3012
    %4331 = vmatpush1.bf16.msra.mxu0 %v3011
    %4332 = vmatprep.subr.bf16.mxu0 %v3016
    %4333 = vmatpush1.bf16.msra.mxu0 %v3015
    %4334 = vmatprep.subr.bf16.mxu0 %v3020
    %4335 = vmatpush1.bf16.msra.mxu0 %v3019
    %4336 = vmatprep.mubr.bf16.mxu0 %v810
    %4337 = vmatmul.mubr.bf16.gmra.mrb[0].mxu0 %v809
    %v4338 = vpop.f32.mrb[0].mxu0
    %v4339 = vadd.f32 %v4296, %v4338
    %v4340 = vpop.f32.mrb[0].mxu0
    %v4341 = vadd.f32 %v4298, %v4340
    %v4342 = vpop.f32.mrb[0].mxu0
    %v4343 = vadd.f32 %v4300, %v4342
    %v4344 = vpop.f32.mrb[0].mxu0
    %v4345 = vadd.f32 %v4302, %v4344
    %4346 = vdwg.mxu0
    %4347 = vmatprep.subr.bf16.mxu0 %v3024
    %4348 = vmatpush1.bf16.msra.mxu0 %v3023
    %4349 = vmatprep.subr.bf16.mxu0 %v3028
    %4350 = vmatpush1.bf16.msra.mxu0 %v3027
    %4351 = vmatprep.subr.bf16.mxu0 %v3032
    %4352 = vmatpush1.bf16.msra.mxu0 %v3031
    %4353 = vmatprep.subr.bf16.mxu0 %v3036
    %4354 = vmatpush1.bf16.msra.mxu0 %v3035
    %4355 = vmatprep.subr.bf16.mxu0 %v3040
    %4356 = vmatpush1.bf16.msra.mxu0 %v3039
    %4357 = vmatprep.subr.bf16.mxu0 %v3044
    %4358 = vmatpush1.bf16.msra.mxu0 %v3043
    %4359 = vmatprep.subr.bf16.mxu0 %v3048
    %4360 = vmatpush1.bf16.msra.mxu0 %v3047
    %4361 = vmatprep.subr.bf16.mxu0 %v3052
    %4362 = vmatpush1.bf16.msra.mxu0 %v3051
    %4363 = vmatprep.subr.bf16.mxu0 %v3056
    %4364 = vmatpush1.bf16.msra.mxu0 %v3055
    %4365 = vmatprep.subr.bf16.mxu0 %v3060
    %4366 = vmatpush1.bf16.msra.mxu0 %v3059
    %4367 = vmatprep.subr.bf16.mxu0 %v3064
    %4368 = vmatpush1.bf16.msra.mxu0 %v3063
    %4369 = vmatprep.subr.bf16.mxu0 %v3068
    %4370 = vmatpush1.bf16.msra.mxu0 %v3067
    %4371 = vmatprep.subr.bf16.mxu0 %v3072
    %4372 = vmatpush1.bf16.msra.mxu0 %v3071
    %4373 = vmatprep.subr.bf16.mxu0 %v3076
    %4374 = vmatpush1.bf16.msra.mxu0 %v3075
    %4375 = vmatprep.subr.bf16.mxu0 %v3080
    %4376 = vmatpush1.bf16.msra.mxu0 %v3079
    %4377 = vmatprep.subr.bf16.mxu0 %v3084
    %4378 = vmatpush1.bf16.msra.mxu0 %v3083
    %4379 = vmatprep.mubr.bf16.mxu0 %v812
    %4380 = vmatmul.mubr.bf16.gmra.mrb[0].mxu0 %v811
    %v4381 = vpop.f32.mrb[0].mxu0
    %v4382 = vadd.f32 %v4339, %v4381
    %v4383 = vpop.f32.mrb[0].mxu0
    %v4384 = vadd.f32 %v4341, %v4383
    %v4385 = vpop.f32.mrb[0].mxu0
    %v4386 = vadd.f32 %v4343, %v4385
    %v4387 = vpop.f32.mrb[0].mxu0
    %v4388 = vadd.f32 %v4345, %v4387
    %4389 = vdwg.mxu0
    %4390 = vmatprep.subr.bf16.mxu0 %v3088
    %4391 = vmatpush1.bf16.msra.mxu0 %v3087
    %4392 = vmatprep.subr.bf16.mxu0 %v3092
    %4393 = vmatpush1.bf16.msra.mxu0 %v3091
    %4394 = vmatprep.subr.bf16.mxu0 %v3096
    %4395 = vmatpush1.bf16.msra.mxu0 %v3095
    %4396 = vmatprep.subr.bf16.mxu0 %v3100
    %4397 = vmatpush1.bf16.msra.mxu0 %v3099
    %4398 = vmatprep.subr.bf16.mxu0 %v3104
    %4399 = vmatpush1.bf16.msra.mxu0 %v3103
    %4400 = vmatprep.subr.bf16.mxu0 %v3108
    %4401 = vmatpush1.bf16.msra.mxu0 %v3107
    %4402 = vmatprep.subr.bf16.mxu0 %v3112
    %4403 = vmatpush1.bf16.msra.mxu0 %v3111
    %4404 = vmatprep.subr.bf16.mxu0 %v3116
    %4405 = vmatpush1.bf16.msra.mxu0 %v3115
    %4406 = vmatprep.subr.bf16.mxu0 %v3120
    %4407 = vmatpush1.bf16.msra.mxu0 %v3119
    %4408 = vmatprep.subr.bf16.mxu0 %v3124
    %4409 = vmatpush1.bf16.msra.mxu0 %v3123
    %4410 = vmatprep.subr.bf16.mxu0 %v3128
    %4411 = vmatpush1.bf16.msra.mxu0 %v3127
    %4412 = vmatprep.subr.bf16.mxu0 %v3132
    %4413 = vmatpush1.bf16.msra.mxu0 %v3131
    %4414 = vmatprep.subr.bf16.mxu0 %v3136
    %4415 = vmatpush1.bf16.msra.mxu0 %v3135
    %4416 = vmatprep.subr.bf16.mxu0 %v3140
    %4417 = vmatpush1.bf16.msra.mxu0 %v3139
    %4418 = vmatprep.subr.bf16.mxu0 %v3144
    %4419 = vmatpush1.bf16.msra.mxu0 %v3143
    %4420 = vmatprep.subr.bf16.mxu0 %v3148
    %4421 = vmatpush1.bf16.msra.mxu0 %v3147
    %4422 = vmatprep.mubr.bf16.mxu0 %v814
    %4423 = vmatmul.mubr.bf16.gmra.mrb[0].mxu0 %v813
    %v4424 = vpop.f32.mrb[0].mxu0
    %v4425 = vadd.f32 %v4382, %v4424
    %v4426 = vpop.f32.mrb[0].mxu0
    %v4427 = vadd.f32 %v4384, %v4426
    %v4428 = vpop.f32.mrb[0].mxu0
    %v4429 = vadd.f32 %v4386, %v4428
    %v4430 = vpop.f32.mrb[0].mxu0
    %v4431 = vadd.f32 %v4388, %v4430
    %4432 = vdwg.mxu0
    %4433 = vmatprep.subr.bf16.mxu0 %v3152
    %4434 = vmatpush1.bf16.msra.mxu0 %v3151
    %4435 = vmatprep.subr.bf16.mxu0 %v3156
    %4436 = vmatpush1.bf16.msra.mxu0 %v3155
    %4437 = vmatprep.subr.bf16.mxu0 %v3160
    %4438 = vmatpush1.bf16.msra.mxu0 %v3159
    %4439 = vmatprep.subr.bf16.mxu0 %v3164
    %4440 = vmatpush1.bf16.msra.mxu0 %v3163
    %4441 = vmatprep.subr.bf16.mxu0 %v3168
    %4442 = vmatpush1.bf16.msra.mxu0 %v3167
    %4443 = vmatprep.subr.bf16.mxu0 %v3172
    %4444 = vmatpush1.bf16.msra.mxu0 %v3171
    %4445 = vmatprep.subr.bf16.mxu0 %v3176
    %4446 = vmatpush1.bf16.msra.mxu0 %v3175
    %4447 = vmatprep.subr.bf16.mxu0 %v3180
    %4448 = vmatpush1.bf16.msra.mxu0 %v3179
    %4449 = vmatprep.subr.bf16.mxu0 %v3184
    %4450 = vmatpush1.bf16.msra.mxu0 %v3183
    %4451 = vmatprep.subr.bf16.mxu0 %v3188
    %4452 = vmatpush1.bf16.msra.mxu0 %v3187
    %4453 = vmatprep.subr.bf16.mxu0 %v3192
    %4454 = vmatpush1.bf16.msra.mxu0 %v3191
    %4455 = vmatprep.subr.bf16.mxu0 %v3196
    %4456 = vmatpush1.bf16.msra.mxu0 %v3195
    %4457 = vmatprep.subr.bf16.mxu0 %v3200
    %4458 = vmatpush1.bf16.msra.mxu0 %v3199
    %4459 = vmatprep.subr.bf16.mxu0 %v3204
    %4460 = vmatpush1.bf16.msra.mxu0 %v3203
    %4461 = vmatprep.subr.bf16.mxu0 %v3208
    %4462 = vmatpush1.bf16.msra.mxu0 %v3207
    %4463 = vmatprep.subr.bf16.mxu0 %v3212
    %4464 = vmatpush1.bf16.msra.mxu0 %v3211
    %4465 = vmatprep.mubr.bf16.mxu0 %v816
    %4466 = vmatmul.mubr.bf16.gmra.mrb[0].mxu0 %v815
    %v4467 = vpop.f32.mrb[0].mxu0
    %v4468 = vadd.f32 %v4425, %v4467
    %v4469 = vpop.f32.mrb[0].mxu0
    %v4470 = vadd.f32 %v4427, %v4469
    %v4471 = vpop.f32.mrb[0].mxu0
    %v4472 = vadd.f32 %v4429, %v4471
    %v4473 = vpop.f32.mrb[0].mxu0
    %v4474 = vadd.f32 %v4431, %v4473
    %4475 = vdwg.mxu0
    %4476 = vmatprep.subr.bf16.mxu0 %v3216
    %4477 = vmatpush1.bf16.msra.mxu0 %v3215
    %4478 = vmatprep.subr.bf16.mxu0 %v3220
    %4479 = vmatpush1.bf16.msra.mxu0 %v3219
    %4480 = vmatprep.subr.bf16.mxu0 %v3224
    %4481 = vmatpush1.bf16.msra.mxu0 %v3223
    %4482 = vmatprep.subr.bf16.mxu0 %v3228
    %4483 = vmatpush1.bf16.msra.mxu0 %v3227
    %4484 = vmatprep.subr.bf16.mxu0 %v3232
    %4485 = vmatpush1.bf16.msra.mxu0 %v3231
    %4486 = vmatprep.subr.bf16.mxu0 %v3236
    %4487 = vmatpush1.bf16.msra.mxu0 %v3235
    %4488 = vmatprep.subr.bf16.mxu0 %v3240
    %4489 = vmatpush1.bf16.msra.mxu0 %v3239
    %4490 = vmatprep.subr.bf16.mxu0 %v3244
    %4491 = vmatpush1.bf16.msra.mxu0 %v3243
    %4492 = vmatprep.subr.bf16.mxu0 %v3248
    %4493 = vmatpush1.bf16.msra.mxu0 %v3247
    %4494 = vmatprep.subr.bf16.mxu0 %v3252
    %4495 = vmatpush1.bf16.msra.mxu0 %v3251
    %4496 = vmatprep.subr.bf16.mxu0 %v3256
    %4497 = vmatpush1.bf16.msra.mxu0 %v3255
    %4498 = vmatprep.subr.bf16.mxu0 %v3260
    %4499 = vmatpush1.bf16.msra.mxu0 %v3259
    %4500 = vmatprep.subr.bf16.mxu0 %v3264
    %4501 = vmatpush1.bf16.msra.mxu0 %v3263
    %4502 = vmatprep.subr.bf16.mxu0 %v3268
    %4503 = vmatpush1.bf16.msra.mxu0 %v3267
    %4504 = vmatprep.subr.bf16.mxu0 %v3272
    %4505 = vmatpush1.bf16.msra.mxu0 %v3271
    %4506 = vmatprep.subr.bf16.mxu0 %v3276
    %4507 = vmatpush1.bf16.msra.mxu0 %v3275
    %4508 = vmatprep.mubr.bf16.mxu0 %v818
    %4509 = vmatmul.mubr.bf16.gmra.mrb[0].mxu0 %v817
    %v4510 = vpop.f32.mrb[0].mxu0
    %v4511 = vadd.f32 %v4468, %v4510
    %v4512 = vpop.f32.mrb[0].mxu0
    %v4513 = vadd.f32 %v4470, %v4512
    %v4514 = vpop.f32.mrb[0].mxu0
    %v4515 = vadd.f32 %v4472, %v4514
    %v4516 = vpop.f32.mrb[0].mxu0
    %v4517 = vadd.f32 %v4474, %v4516
    %4518 = vdwg.mxu0
    %4519 = vmatprep.subr.bf16.mxu0 %v3280
    %4520 = vmatpush1.bf16.msra.mxu0 %v3279
    %4521 = vmatprep.subr.bf16.mxu0 %v3284
    %4522 = vmatpush1.bf16.msra.mxu0 %v3283
    %4523 = vmatprep.subr.bf16.mxu0 %v3288
    %4524 = vmatpush1.bf16.msra.mxu0 %v3287
    %4525 = vmatprep.subr.bf16.mxu0 %v3292
    %4526 = vmatpush1.bf16.msra.mxu0 %v3291
    %4527 = vmatprep.subr.bf16.mxu0 %v3296
    %4528 = vmatpush1.bf16.msra.mxu0 %v3295
    %4529 = vmatprep.subr.bf16.mxu0 %v3300
    %4530 = vmatpush1.bf16.msra.mxu0 %v3299
    %4531 = vmatprep.subr.bf16.mxu0 %v3304
    %4532 = vmatpush1.bf16.msra.mxu0 %v3303
    %4533 = vmatprep.subr.bf16.mxu0 %v3308
    %4534 = vmatpush1.bf16.msra.mxu0 %v3307
    %4535 = vmatprep.subr.bf16.mxu0 %v3312
    %4536 = vmatpush1.bf16.msra.mxu0 %v3311
    %4537 = vmatprep.subr.bf16.mxu0 %v3316
    %4538 = vmatpush1.bf16.msra.mxu0 %v3315
    %4539 = vmatprep.subr.bf16.mxu0 %v3320
    %4540 = vmatpush1.bf16.msra.mxu0 %v3319
    %4541 = vmatprep.subr.bf16.mxu0 %v3324
    %4542 = vmatpush1.bf16.msra.mxu0 %v3323
    %4543 = vmatprep.subr.bf16.mxu0 %v3328
    %4544 = vmatpush1.bf16.msra.mxu0 %v3327
    %4545 = vmatprep.subr.bf16.mxu0 %v3332
    %4546 = vmatpush1.bf16.msra.mxu0 %v3331
    %4547 = vmatprep.subr.bf16.mxu0 %v3336
    %4548 = vmatpush1.bf16.msra.mxu0 %v3335
    %4549 = vmatprep.subr.bf16.mxu0 %v3340
    %4550 = vmatpush1.bf16.msra.mxu0 %v3339
    %4551 = vmatprep.mubr.bf16.mxu0 %v820
    %4552 = vmatmul.mubr.bf16.gmra.mrb[0].mxu0 %v819
    %v4553 = vpop.f32.mrb[0].mxu0
    %v4554 = vadd.f32 %v4511, %v4553
    %v4555 = vpop.f32.mrb[0].mxu0
    %v4556 = vadd.f32 %v4513, %v4555
    %v4557 = vpop.f32.mrb[0].mxu0
    %v4558 = vadd.f32 %v4515, %v4557
    %v4559 = vpop.f32.mrb[0].mxu0
    %v4560 = vadd.f32 %v4517, %v4559
    %4561 = vdwg.mxu0
    %4562 = vmatprep.subr.bf16.mxu0 %v3344
    %4563 = vmatpush1.bf16.msra.mxu0 %v3343
    %4564 = vmatprep.subr.bf16.mxu0 %v3348
    %4565 = vmatpush1.bf16.msra.mxu0 %v3347
    %4566 = vmatprep.subr.bf16.mxu0 %v3352
    %4567 = vmatpush1.bf16.msra.mxu0 %v3351
    %4568 = vmatprep.subr.bf16.mxu0 %v3356
    %4569 = vmatpush1.bf16.msra.mxu0 %v3355
    %4570 = vmatprep.subr.bf16.mxu0 %v3360
    %4571 = vmatpush1.bf16.msra.mxu0 %v3359
    %4572 = vmatprep.subr.bf16.mxu0 %v3364
    %4573 = vmatpush1.bf16.msra.mxu0 %v3363
    %4574 = vmatprep.subr.bf16.mxu0 %v3368
    %4575 = vmatpush1.bf16.msra.mxu0 %v3367
    %4576 = vmatprep.subr.bf16.mxu0 %v3372
    %4577 = vmatpush1.bf16.msra.mxu0 %v3371
    %4578 = vmatprep.subr.bf16.mxu0 %v3376
    %4579 = vmatpush1.bf16.msra.mxu0 %v3375
    %4580 = vmatprep.subr.bf16.mxu0 %v3380
    %4581 = vmatpush1.bf16.msra.mxu0 %v3379
    %4582 = vmatprep.subr.bf16.mxu0 %v3384
    %4583 = vmatpush1.bf16.msra.mxu0 %v3383
    %4584 = vmatprep.subr.bf16.mxu0 %v3388
    %4585 = vmatpush1.bf16.msra.mxu0 %v3387
    %4586 = vmatprep.subr.bf16.mxu0 %v3392
    %4587 = vmatpush1.bf16.msra.mxu0 %v3391
    %4588 = vmatprep.subr.bf16.mxu0 %v3396
    %4589 = vmatpush1.bf16.msra.mxu0 %v3395
    %4590 = vmatprep.subr.bf16.mxu0 %v3400
    %4591 = vmatpush1.bf16.msra.mxu0 %v3399
    %4592 = vmatprep.subr.bf16.mxu0 %v3404
    %4593 = vmatpush1.bf16.msra.mxu0 %v3403
    %4594 = vmatprep.mubr.bf16.mxu0 %v822
    %4595 = vmatmul.mubr.bf16.gmra.mrb[0].mxu0 %v821
    %v4596 = vpop.f32.mrb[0].mxu0
    %v4597 = vadd.f32 %v4554, %v4596
    %v4598 = vpop.f32.mrb[0].mxu0
    %v4599 = vadd.f32 %v4556, %v4598
    %v4600 = vpop.f32.mrb[0].mxu0
    %v4601 = vadd.f32 %v4558, %v4600
    %v4602 = vpop.f32.mrb[0].mxu0
    %v4603 = vadd.f32 %v4560, %v4602
    %4604 = vdwg.mxu0
    %v4605 = vmax.f32 %v4253, 0.0
    %v4606 = vmax.f32 %v4255, 0.0
    %v4607 = vmax.f32 %v4597, 0.0
    %v4608 = vmax.f32 %v4599, 0.0
    %v4609 = vmax.f32 %v4257, 0.0
    %v4610 = vmax.f32 %v4259, 0.0
    %v4611 = vmax.f32 %v4601, 0.0
    %v4612 = vmax.f32 %v4603, 0.0
    %v4613 = vpack.c.bf16 %v4609, %v4605
    %v4614 = vpack.c.bf16 %v4610, %v4606
    %v4615 = vpack.c.bf16 %v4611, %v4607
    %v4616 = vpack.c.bf16 %v4612, %v4608
    %v4617 = vld [vmem:[#allocation11] sm:$0xff]
    %v4618 = vld [vmem:[#allocation11 + $0x8] sm:$0xff]
    %v4619 = vld [vmem:[#allocation11 + $0x10] sm:$0xff]
    %v4620 = vld [vmem:[#allocation11 + $0x18] sm:$0xff]
    %v4621 = vld [vmem:[#allocation11 + $0x20] sm:$0xff]
    %v4622 = vld [vmem:[#allocation11 + $0x28] sm:$0xff]
    %v4623 = vld [vmem:[#allocation11 + $0x30] sm:$0xff]
    %v4624 = vld [vmem:[#allocation11 + $0x38] sm:$0xff]
    %v4625 = vld [vmem:[#allocation11 + $0x40] sm:$0xff]
    %v4626 = vld [vmem:[#allocation11 + $0x48] sm:$0xff]
    %v4627 = vld [vmem:[#allocation11 + $0x50] sm:$0xff]
    %v4628 = vld [vmem:[#allocation11 + $0x58] sm:$0xff]
    %v4629 = vld [vmem:[#allocation11 + $0x60] sm:$0xff]
    %v4630 = vld [vmem:[#allocation11 + $0x68] sm:$0xff]
    %v4631 = vld [vmem:[#allocation11 + $0x70] sm:$0xff]
    %v4632 = vld [vmem:[#allocation11 + $0x78] sm:$0xff]
    %v4633 = vld [vmem:[#allocation11 + $0x80] sm:$0xff]
    %v4634 = vld [vmem:[#allocation11 + $0x88] sm:$0xff]
    %v4635 = vld [vmem:[#allocation11 + $0x90] sm:$0xff]
    %v4636 = vld [vmem:[#allocation11 + $0x98] sm:$0xff]
    %v4637 = vld [vmem:[#allocation11 + $0xa0] sm:$0xff]
    %v4638 = vld [vmem:[#allocation11 + $0xa8] sm:$0xff]
    %v4639 = vld [vmem:[#allocation11 + $0xb0] sm:$0xff]
    %v4640 = vld [vmem:[#allocation11 + $0xb8] sm:$0xff]
    %v4641 = vld [vmem:[#allocation11 + $0xc0] sm:$0xff]
    %v4642 = vld [vmem:[#allocation11 + $0xc8] sm:$0xff]
    %v4643 = vld [vmem:[#allocation11 + $0xd0] sm:$0xff]
    %v4644 = vld [vmem:[#allocation11 + $0xd8] sm:$0xff]
    %v4645 = vld [vmem:[#allocation11 + $0xe0] sm:$0xff]
    %v4646 = vld [vmem:[#allocation11 + $0xe8] sm:$0xff]
    %v4647 = vld [vmem:[#allocation11 + $0xf0] sm:$0xff]
    %v4648 = vld [vmem:[#allocation11 + $0xf8] sm:$0xff]
    %v4649 = vld [vmem:[#allocation11 + $0x100] sm:$0xff]
    %v4650 = vld [vmem:[#allocation11 + $0x108] sm:$0xff]
    %v4651 = vld [vmem:[#allocation11 + $0x110] sm:$0xff]
    %v4652 = vld [vmem:[#allocation11 + $0x118] sm:$0xff]
    %v4653 = vld [vmem:[#allocation11 + $0x120] sm:$0xff]
    %v4654 = vld [vmem:[#allocation11 + $0x128] sm:$0xff]
    %v4655 = vld [vmem:[#allocation11 + $0x130] sm:$0xff]
    %v4656 = vld [vmem:[#allocation11 + $0x138] sm:$0xff]
    %v4657 = vld [vmem:[#allocation11 + $0x140] sm:$0xff]
    %v4658 = vld [vmem:[#allocation11 + $0x148] sm:$0xff]
    %v4659 = vld [vmem:[#allocation11 + $0x150] sm:$0xff]
    %v4660 = vld [vmem:[#allocation11 + $0x158] sm:$0xff]
    %v4661 = vld [vmem:[#allocation11 + $0x160] sm:$0xff]
    %v4662 = vld [vmem:[#allocation11 + $0x168] sm:$0xff]
    %v4663 = vld [vmem:[#allocation11 + $0x170] sm:$0xff]
    %v4664 = vld [vmem:[#allocation11 + $0x178] sm:$0xff]
    %v4665 = vld [vmem:[#allocation11 + $0x180] sm:$0xff]
    %v4666 = vld [vmem:[#allocation11 + $0x188] sm:$0xff]
    %v4667 = vld [vmem:[#allocation11 + $0x190] sm:$0xff]
    %v4668 = vld [vmem:[#allocation11 + $0x198] sm:$0xff]
    %v4669 = vld [vmem:[#allocation11 + $0x1a0] sm:$0xff]
    %v4670 = vld [vmem:[#allocation11 + $0x1a8] sm:$0xff]
    %v4671 = vld [vmem:[#allocation11 + $0x1b0] sm:$0xff]
    %v4672 = vld [vmem:[#allocation11 + $0x1b8] sm:$0xff]
    %v4673 = vld [vmem:[#allocation11 + $0x1c0] sm:$0xff]
    %v4674 = vld [vmem:[#allocation11 + $0x1c8] sm:$0xff]
    %v4675 = vld [vmem:[#allocation11 + $0x1d0] sm:$0xff]
    %v4676 = vld [vmem:[#allocation11 + $0x1d8] sm:$0xff]
    %v4677 = vld [vmem:[#allocation11 + $0x1e0] sm:$0xff]
    %v4678 = vld [vmem:[#allocation11 + $0x1e8] sm:$0xff]
    %v4679 = vld [vmem:[#allocation11 + $0x1f0] sm:$0xff]
    %v4680 = vld [vmem:[#allocation11 + $0x1f8] sm:$0xff]
    %v4681 = vld [vmem:[#allocation11 + $0x200] sm:$0xff]
    %v4682 = vld [vmem:[#allocation11 + $0x208] sm:$0xff]
    %v4683 = vld [vmem:[#allocation11 + $0x210] sm:$0xff]
    %v4684 = vld [vmem:[#allocation11 + $0x218] sm:$0xff]
    %v4685 = vld [vmem:[#allocation11 + $0x220] sm:$0xff]
    %v4686 = vld [vmem:[#allocation11 + $0x228] sm:$0xff]
    %v4687 = vld [vmem:[#allocation11 + $0x230] sm:$0xff]
    %v4688 = vld [vmem:[#allocation11 + $0x238] sm:$0xff]
    %v4689 = vld [vmem:[#allocation11 + $0x240] sm:$0xff]
    %v4690 = vld [vmem:[#allocation11 + $0x248] sm:$0xff]
    %v4691 = vld [vmem:[#allocation11 + $0x250] sm:$0xff]
    %v4692 = vld [vmem:[#allocation11 + $0x258] sm:$0xff]
    %v4693 = vld [vmem:[#allocation11 + $0x260] sm:$0xff]
    %v4694 = vld [vmem:[#allocation11 + $0x268] sm:$0xff]
    %v4695 = vld [vmem:[#allocation11 + $0x270] sm:$0xff]
    %v4696 = vld [vmem:[#allocation11 + $0x278] sm:$0xff]
    %v4697 = vld [vmem:[#allocation11 + $0x280] sm:$0xff]
    %v4698 = vld [vmem:[#allocation11 + $0x288] sm:$0xff]
    %v4699 = vld [vmem:[#allocation11 + $0x290] sm:$0xff]
    %v4700 = vld [vmem:[#allocation11 + $0x298] sm:$0xff]
    %v4701 = vld [vmem:[#allocation11 + $0x2a0] sm:$0xff]
    %v4702 = vld [vmem:[#allocation11 + $0x2a8] sm:$0xff]
    %v4703 = vld [vmem:[#allocation11 + $0x2b0] sm:$0xff]
    %v4704 = vld [vmem:[#allocation11 + $0x2b8] sm:$0xff]
    %v4705 = vld [vmem:[#allocation11 + $0x2c0] sm:$0xff]
    %v4706 = vld [vmem:[#allocation11 + $0x2c8] sm:$0xff]
    %v4707 = vld [vmem:[#allocation11 + $0x2d0] sm:$0xff]
    %v4708 = vld [vmem:[#allocation11 + $0x2d8] sm:$0xff]
    %v4709 = vld [vmem:[#allocation11 + $0x2e0] sm:$0xff]
    %v4710 = vld [vmem:[#allocation11 + $0x2e8] sm:$0xff]
    %v4711 = vld [vmem:[#allocation11 + $0x2f0] sm:$0xff]
    %v4712 = vld [vmem:[#allocation11 + $0x2f8] sm:$0xff]
    %v4713 = vld [vmem:[#allocation11 + $0x300] sm:$0xff]
    %v4714 = vld [vmem:[#allocation11 + $0x308] sm:$0xff]
    %v4715 = vld [vmem:[#allocation11 + $0x310] sm:$0xff]
    %v4716 = vld [vmem:[#allocation11 + $0x318] sm:$0xff]
    %v4717 = vld [vmem:[#allocation11 + $0x320] sm:$0xff]
    %v4718 = vld [vmem:[#allocation11 + $0x328] sm:$0xff]
    %v4719 = vld [vmem:[#allocation11 + $0x330] sm:$0xff]
    %v4720 = vld [vmem:[#allocation11 + $0x338] sm:$0xff]
    %v4721 = vld [vmem:[#allocation11 + $0x340] sm:$0xff]
    %v4722 = vld [vmem:[#allocation11 + $0x348] sm:$0xff]
    %v4723 = vld [vmem:[#allocation11 + $0x350] sm:$0xff]
    %v4724 = vld [vmem:[#allocation11 + $0x358] sm:$0xff]
    %v4725 = vld [vmem:[#allocation11 + $0x360] sm:$0xff]
    %v4726 = vld [vmem:[#allocation11 + $0x368] sm:$0xff]
    %v4727 = vld [vmem:[#allocation11 + $0x370] sm:$0xff]
    %v4728 = vld [vmem:[#allocation11 + $0x378] sm:$0xff]
    %v4729 = vld [vmem:[#allocation11 + $0x380] sm:$0xff]
    %v4730 = vld [vmem:[#allocation11 + $0x388] sm:$0xff]
    %v4731 = vld [vmem:[#allocation11 + $0x390] sm:$0xff]
    %v4732 = vld [vmem:[#allocation11 + $0x398] sm:$0xff]
    %v4733 = vld [vmem:[#allocation11 + $0x3a0] sm:$0xff]
    %v4734 = vld [vmem:[#allocation11 + $0x3a8] sm:$0xff]
    %v4735 = vld [vmem:[#allocation11 + $0x3b0] sm:$0xff]
    %v4736 = vld [vmem:[#allocation11 + $0x3b8] sm:$0xff]
    %v4737 = vld [vmem:[#allocation11 + $0x3c0] sm:$0xff]
    %v4738 = vld [vmem:[#allocation11 + $0x3c8] sm:$0xff]
    %v4739 = vld [vmem:[#allocation11 + $0x3d0] sm:$0xff]
    %v4740 = vld [vmem:[#allocation11 + $0x3d8] sm:$0xff]
    %v4741 = vld [vmem:[#allocation11 + $0x3e0] sm:$0xff]
    %v4742 = vld [vmem:[#allocation11 + $0x3e8] sm:$0xff]
    %v4743 = vld [vmem:[#allocation11 + $0x3f0] sm:$0xff]
    %v4744 = vld [vmem:[#allocation11 + $0x3f8] sm:$0xff]
    %v4745 = vld [vmem:[#allocation13] sm:$0xf]
    %v4747 = vlaneseq
    %v4748 = vshrl.u32 %v4747, 7
    %v4749 = vsub.s32 0, %v4748
    %v4750 = vrot.slane %v4745, %v4749
    %v4751 = vlaneseq
    %v4752 = vshrl.u32 %v4751, 7
    %v4753 = vsub.s32 1, %v4752
    %v4754 = vrot.slane %v4745, %v4753
    %v4755 = vlaneseq
    %v4756 = vshrl.u32 %v4755, 7
    %v4757 = vsub.s32 2, %v4756
    %v4758 = vrot.slane %v4745, %v4757
    %v4759 = vlaneseq
    %v4760 = vshrl.u32 %v4759, 7
    %v4761 = vsub.s32 3, %v4760
    %v4762 = vrot.slane %v4745, %v4761
    %v4895 = vunpack.c.l.b16 %v4617
    %v4896 = vunpack.c.h.b16 %v4617
    %v4897 = vunpack.c.l.b16 %v4618
    %v4898 = vunpack.c.h.b16 %v4618
    %v4899 = vunpack.c.l.b16 %v4619
    %v4900 = vunpack.c.h.b16 %v4619
    %v4901 = vunpack.c.l.b16 %v4620
    %v4902 = vunpack.c.h.b16 %v4620
    %v4903 = vunpack.c.l.b16 %v4621
    %v4904 = vunpack.c.h.b16 %v4621
    %v4905 = vunpack.c.l.b16 %v4622
    %v4906 = vunpack.c.h.b16 %v4622
    %v4907 = vunpack.c.l.b16 %v4623
    %v4908 = vunpack.c.h.b16 %v4623
    %v4909 = vunpack.c.l.b16 %v4624
    %v4910 = vunpack.c.h.b16 %v4624
    %v4911 = vunpack.c.l.b16 %v4625
    %v4912 = vunpack.c.h.b16 %v4625
    %v4913 = vunpack.c.l.b16 %v4626
    %v4914 = vunpack.c.h.b16 %v4626
    %v4915 = vunpack.c.l.b16 %v4627
    %v4916 = vunpack.c.h.b16 %v4627
    %v4917 = vunpack.c.l.b16 %v4628
    %v4918 = vunpack.c.h.b16 %v4628
    %v4919 = vunpack.c.l.b16 %v4629
    %v4920 = vunpack.c.h.b16 %v4629
    %v4921 = vunpack.c.l.b16 %v4630
    %v4922 = vunpack.c.h.b16 %v4630
    %v4923 = vunpack.c.l.b16 %v4631
    %v4924 = vunpack.c.h.b16 %v4631
    %v4925 = vunpack.c.l.b16 %v4632
    %v4926 = vunpack.c.h.b16 %v4632
    %v4927 = vunpack.c.l.b16 %v4633
    %v4928 = vunpack.c.h.b16 %v4633
    %v4929 = vunpack.c.l.b16 %v4634
    %v4930 = vunpack.c.h.b16 %v4634
    %v4931 = vunpack.c.l.b16 %v4635
    %v4932 = vunpack.c.h.b16 %v4635
    %v4933 = vunpack.c.l.b16 %v4636
    %v4934 = vunpack.c.h.b16 %v4636
    %v4935 = vunpack.c.l.b16 %v4637
    %v4936 = vunpack.c.h.b16 %v4637
    %v4937 = vunpack.c.l.b16 %v4638
    %v4938 = vunpack.c.h.b16 %v4638
    %v4939 = vunpack.c.l.b16 %v4639
    %v4940 = vunpack.c.h.b16 %v4639
    %v4941 = vunpack.c.l.b16 %v4640
    %v4942 = vunpack.c.h.b16 %v4640
    %v4943 = vunpack.c.l.b16 %v4641
    %v4944 = vunpack.c.h.b16 %v4641
    %v4945 = vunpack.c.l.b16 %v4642
    %v4946 = vunpack.c.h.b16 %v4642
    %v4947 = vunpack.c.l.b16 %v4643
    %v4948 = vunpack.c.h.b16 %v4643
    %v4949 = vunpack.c.l.b16 %v4644
    %v4950 = vunpack.c.h.b16 %v4644
    %v4951 = vunpack.c.l.b16 %v4645
    %v4952 = vunpack.c.h.b16 %v4645
    %v4953 = vunpack.c.l.b16 %v4646
    %v4954 = vunpack.c.h.b16 %v4646
    %v4955 = vunpack.c.l.b16 %v4647
    %v4956 = vunpack.c.h.b16 %v4647
    %v4957 = vunpack.c.l.b16 %v4648
    %v4958 = vunpack.c.h.b16 %v4648
    %v4959 = vunpack.c.l.b16 %v4649
    %v4960 = vunpack.c.h.b16 %v4649
    %v4961 = vunpack.c.l.b16 %v4650
    %v4962 = vunpack.c.h.b16 %v4650
    %v4963 = vunpack.c.l.b16 %v4651
    %v4964 = vunpack.c.h.b16 %v4651
    %v4965 = vunpack.c.l.b16 %v4652
    %v4966 = vunpack.c.h.b16 %v4652
    %v4967 = vunpack.c.l.b16 %v4653
    %v4968 = vunpack.c.h.b16 %v4653
    %v4969 = vunpack.c.l.b16 %v4654
    %v4970 = vunpack.c.h.b16 %v4654
    %v4971 = vunpack.c.l.b16 %v4655
    %v4972 = vunpack.c.h.b16 %v4655
    %v4973 = vunpack.c.l.b16 %v4656
    %v4974 = vunpack.c.h.b16 %v4656
    %v4975 = vunpack.c.l.b16 %v4657
    %v4976 = vunpack.c.h.b16 %v4657
    %v4977 = vunpack.c.l.b16 %v4658
    %v4978 = vunpack.c.h.b16 %v4658
    %v4979 = vunpack.c.l.b16 %v4659
    %v4980 = vunpack.c.h.b16 %v4659
    %v4981 = vunpack.c.l.b16 %v4660
    %v4982 = vunpack.c.h.b16 %v4660
    %v4983 = vunpack.c.l.b16 %v4661
    %v4984 = vunpack.c.h.b16 %v4661
    %v4985 = vunpack.c.l.b16 %v4662
    %v4986 = vunpack.c.h.b16 %v4662
    %v4987 = vunpack.c.l.b16 %v4663
    %v4988 = vunpack.c.h.b16 %v4663
    %v4989 = vunpack.c.l.b16 %v4664
    %v4990 = vunpack.c.h.b16 %v4664
    %v4991 = vunpack.c.l.b16 %v4665
    %v4992 = vunpack.c.h.b16 %v4665
    %v4993 = vunpack.c.l.b16 %v4666
    %v4994 = vunpack.c.h.b16 %v4666
    %v4995 = vunpack.c.l.b16 %v4667
    %v4996 = vunpack.c.h.b16 %v4667
    %v4997 = vunpack.c.l.b16 %v4668
    %v4998 = vunpack.c.h.b16 %v4668
    %v4999 = vunpack.c.l.b16 %v4669
    %v5000 = vunpack.c.h.b16 %v4669
    %v5001 = vunpack.c.l.b16 %v4670
    %v5002 = vunpack.c.h.b16 %v4670
    %v5003 = vunpack.c.l.b16 %v4671
    %v5004 = vunpack.c.h.b16 %v4671
    %v5005 = vunpack.c.l.b16 %v4672
    %v5006 = vunpack.c.h.b16 %v4672
    %v5007 = vunpack.c.l.b16 %v4673
    %v5008 = vunpack.c.h.b16 %v4673
    %v5009 = vunpack.c.l.b16 %v4674
    %v5010 = vunpack.c.h.b16 %v4674
    %v5011 = vunpack.c.l.b16 %v4675
    %v5012 = vunpack.c.h.b16 %v4675
    %v5013 = vunpack.c.l.b16 %v4676
    %v5014 = vunpack.c.h.b16 %v4676
    %v5015 = vunpack.c.l.b16 %v4677
    %v5016 = vunpack.c.h.b16 %v4677
    %v5017 = vunpack.c.l.b16 %v4678
    %v5018 = vunpack.c.h.b16 %v4678
    %v5019 = vunpack.c.l.b16 %v4679
    %v5020 = vunpack.c.h.b16 %v4679
    %v5021 = vunpack.c.l.b16 %v4680
    %v5022 = vunpack.c.h.b16 %v4680
    %v5023 = vunpack.c.l.b16 %v4681
    %v5024 = vunpack.c.h.b16 %v4681
    %v5025 = vunpack.c.l.b16 %v4682
    %v5026 = vunpack.c.h.b16 %v4682
    %v5027 = vunpack.c.l.b16 %v4683
    %v5028 = vunpack.c.h.b16 %v4683
    %v5029 = vunpack.c.l.b16 %v4684
    %v5030 = vunpack.c.h.b16 %v4684
    %v5031 = vunpack.c.l.b16 %v4685
    %v5032 = vunpack.c.h.b16 %v4685
    %v5033 = vunpack.c.l.b16 %v4686
    %v5034 = vunpack.c.h.b16 %v4686
    %v5035 = vunpack.c.l.b16 %v4687
    %v5036 = vunpack.c.h.b16 %v4687
    %v5037 = vunpack.c.l.b16 %v4688
    %v5038 = vunpack.c.h.b16 %v4688
    %v5039 = vunpack.c.l.b16 %v4689
    %v5040 = vunpack.c.h.b16 %v4689
    %v5041 = vunpack.c.l.b16 %v4690
    %v5042 = vunpack.c.h.b16 %v4690
    %v5043 = vunpack.c.l.b16 %v4691
    %v5044 = vunpack.c.h.b16 %v4691
    %v5045 = vunpack.c.l.b16 %v4692
    %v5046 = vunpack.c.h.b16 %v4692
    %v5047 = vunpack.c.l.b16 %v4693
    %v5048 = vunpack.c.h.b16 %v4693
    %v5049 = vunpack.c.l.b16 %v4694
    %v5050 = vunpack.c.h.b16 %v4694
    %v5051 = vunpack.c.l.b16 %v4695
    %v5052 = vunpack.c.h.b16 %v4695
    %v5053 = vunpack.c.l.b16 %v4696
    %v5054 = vunpack.c.h.b16 %v4696
    %v5055 = vunpack.c.l.b16 %v4697
    %v5056 = vunpack.c.h.b16 %v4697
    %v5057 = vunpack.c.l.b16 %v4698
    %v5058 = vunpack.c.h.b16 %v4698
    %v5059 = vunpack.c.l.b16 %v4699
    %v5060 = vunpack.c.h.b16 %v4699
    %v5061 = vunpack.c.l.b16 %v4700
    %v5062 = vunpack.c.h.b16 %v4700
    %v5063 = vunpack.c.l.b16 %v4701
    %v5064 = vunpack.c.h.b16 %v4701
    %v5065 = vunpack.c.l.b16 %v4702
    %v5066 = vunpack.c.h.b16 %v4702
    %v5067 = vunpack.c.l.b16 %v4703
    %v5068 = vunpack.c.h.b16 %v4703
    %v5069 = vunpack.c.l.b16 %v4704
    %v5070 = vunpack.c.h.b16 %v4704
    %v5071 = vunpack.c.l.b16 %v4705
    %v5072 = vunpack.c.h.b16 %v4705
    %v5073 = vunpack.c.l.b16 %v4706
    %v5074 = vunpack.c.h.b16 %v4706
    %v5075 = vunpack.c.l.b16 %v4707
    %v5076 = vunpack.c.h.b16 %v4707
    %v5077 = vunpack.c.l.b16 %v4708
    %v5078 = vunpack.c.h.b16 %v4708
    %v5079 = vunpack.c.l.b16 %v4709
    %v5080 = vunpack.c.h.b16 %v4709
    %v5081 = vunpack.c.l.b16 %v4710
    %v5082 = vunpack.c.h.b16 %v4710
    %v5083 = vunpack.c.l.b16 %v4711
    %v5084 = vunpack.c.h.b16 %v4711
    %v5085 = vunpack.c.l.b16 %v4712
    %v5086 = vunpack.c.h.b16 %v4712
    %v5087 = vunpack.c.l.b16 %v4713
    %v5088 = vunpack.c.h.b16 %v4713
    %v5089 = vunpack.c.l.b16 %v4714
    %v5090 = vunpack.c.h.b16 %v4714
    %v5091 = vunpack.c.l.b16 %v4715
    %v5092 = vunpack.c.h.b16 %v4715
    %v5093 = vunpack.c.l.b16 %v4716
    %v5094 = vunpack.c.h.b16 %v4716
    %v5095 = vunpack.c.l.b16 %v4717
    %v5096 = vunpack.c.h.b16 %v4717
    %v5097 = vunpack.c.l.b16 %v4718
    %v5098 = vunpack.c.h.b16 %v4718
    %v5099 = vunpack.c.l.b16 %v4719
    %v5100 = vunpack.c.h.b16 %v4719
    %v5101 = vunpack.c.l.b16 %v4720
    %v5102 = vunpack.c.h.b16 %v4720
    %v5103 = vunpack.c.l.b16 %v4721
    %v5104 = vunpack.c.h.b16 %v4721
    %v5105 = vunpack.c.l.b16 %v4722
    %v5106 = vunpack.c.h.b16 %v4722
    %v5107 = vunpack.c.l.b16 %v4723
    %v5108 = vunpack.c.h.b16 %v4723
    %v5109 = vunpack.c.l.b16 %v4724
    %v5110 = vunpack.c.h.b16 %v4724
    %v5111 = vunpack.c.l.b16 %v4725
    %v5112 = vunpack.c.h.b16 %v4725
    %v5113 = vunpack.c.l.b16 %v4726
    %v5114 = vunpack.c.h.b16 %v4726
    %v5115 = vunpack.c.l.b16 %v4727
    %v5116 = vunpack.c.h.b16 %v4727
    %v5117 = vunpack.c.l.b16 %v4728
    %v5118 = vunpack.c.h.b16 %v4728
    %v5119 = vunpack.c.l.b16 %v4729
    %v5120 = vunpack.c.h.b16 %v4729
    %v5121 = vunpack.c.l.b16 %v4730
    %v5122 = vunpack.c.h.b16 %v4730
    %v5123 = vunpack.c.l.b16 %v4731
    %v5124 = vunpack.c.h.b16 %v4731
    %v5125 = vunpack.c.l.b16 %v4732
    %v5126 = vunpack.c.h.b16 %v4732
    %v5127 = vunpack.c.l.b16 %v4733
    %v5128 = vunpack.c.h.b16 %v4733
    %v5129 = vunpack.c.l.b16 %v4734
    %v5130 = vunpack.c.h.b16 %v4734
    %v5131 = vunpack.c.l.b16 %v4735
    %v5132 = vunpack.c.h.b16 %v4735
    %v5133 = vunpack.c.l.b16 %v4736
    %v5134 = vunpack.c.h.b16 %v4736
    %v5135 = vunpack.c.l.b16 %v4737
    %v5136 = vunpack.c.h.b16 %v4737
    %v5137 = vunpack.c.l.b16 %v4738
    %v5138 = vunpack.c.h.b16 %v4738
    %v5139 = vunpack.c.l.b16 %v4739
    %v5140 = vunpack.c.h.b16 %v4739
    %v5141 = vunpack.c.l.b16 %v4740
    %v5142 = vunpack.c.h.b16 %v4740
    %v5143 = vunpack.c.l.b16 %v4741
    %v5144 = vunpack.c.h.b16 %v4741
    %v5145 = vunpack.c.l.b16 %v4742
    %v5146 = vunpack.c.h.b16 %v4742
    %v5147 = vunpack.c.l.b16 %v4743
    %v5148 = vunpack.c.h.b16 %v4743
    %v5149 = vunpack.c.l.b16 %v4744
    %v5150 = vunpack.c.h.b16 %v4744
    %v5151 = vpack.c.b16 %v4899, %v4895
    %v5152 = vpack.c.b16 %v4900, %v4896
    %v5153 = vpack.c.b16 %v4901, %v4897
    %v5154 = vpack.c.b16 %v4902, %v4898
    %v5155 = vpack.c.b16 %v4907, %v4903
    %v5156 = vpack.c.b16 %v4908, %v4904
    %v5157 = vpack.c.b16 %v4909, %v4905
    %v5158 = vpack.c.b16 %v4910, %v4906
    %v5159 = vpack.c.b16 %v4915, %v4911
    %v5160 = vpack.c.b16 %v4916, %v4912
    %v5161 = vpack.c.b16 %v4917, %v4913
    %v5162 = vpack.c.b16 %v4918, %v4914
    %v5163 = vpack.c.b16 %v4923, %v4919
    %v5164 = vpack.c.b16 %v4924, %v4920
    %v5165 = vpack.c.b16 %v4925, %v4921
    %v5166 = vpack.c.b16 %v4926, %v4922
    %v5167 = vpack.c.b16 %v4931, %v4927
    %v5168 = vpack.c.b16 %v4932, %v4928
    %v5169 = vpack.c.b16 %v4933, %v4929
    %v5170 = vpack.c.b16 %v4934, %v4930
    %v5171 = vpack.c.b16 %v4939, %v4935
    %v5172 = vpack.c.b16 %v4940, %v4936
    %v5173 = vpack.c.b16 %v4941, %v4937
    %v5174 = vpack.c.b16 %v4942, %v4938
    %v5175 = vpack.c.b16 %v4947, %v4943
    %v5176 = vpack.c.b16 %v4948, %v4944
    %v5177 = vpack.c.b16 %v4949, %v4945
    %v5178 = vpack.c.b16 %v4950, %v4946
    %v5179 = vpack.c.b16 %v4955, %v4951
    %v5180 = vpack.c.b16 %v4956, %v4952
    %v5181 = vpack.c.b16 %v4957, %v4953
    %v5182 = vpack.c.b16 %v4958, %v4954
    %v5183 = vpack.c.b16 %v4963, %v4959
    %v5184 = vpack.c.b16 %v4964, %v4960
    %v5185 = vpack.c.b16 %v4965, %v4961
    %v5186 = vpack.c.b16 %v4966, %v4962
    %v5187 = vpack.c.b16 %v4971, %v4967
    %v5188 = vpack.c.b16 %v4972, %v4968
    %v5189 = vpack.c.b16 %v4973, %v4969
    %v5190 = vpack.c.b16 %v4974, %v4970
    %v5191 = vpack.c.b16 %v4979, %v4975
    %v5192 = vpack.c.b16 %v4980, %v4976
    %v5193 = vpack.c.b16 %v4981, %v4977
    %v5194 = vpack.c.b16 %v4982, %v4978
    %v5195 = vpack.c.b16 %v4987, %v4983
    %v5196 = vpack.c.b16 %v4988, %v4984
    %v5197 = vpack.c.b16 %v4989, %v4985
    %v5198 = vpack.c.b16 %v4990, %v4986
    %v5199 = vpack.c.b16 %v4995, %v4991
    %v5200 = vpack.c.b16 %v4996, %v4992
    %v5201 = vpack.c.b16 %v4997, %v4993
    %v5202 = vpack.c.b16 %v4998, %v4994
    %v5203 = vpack.c.b16 %v5003, %v4999
    %v5204 = vpack.c.b16 %v5004, %v5000
    %v5205 = vpack.c.b16 %v5005, %v5001
    %v5206 = vpack.c.b16 %v5006, %v5002
    %v5207 = vpack.c.b16 %v5011, %v5007
    %v5208 = vpack.c.b16 %v5012, %v5008
    %v5209 = vpack.c.b16 %v5013, %v5009
    %v5210 = vpack.c.b16 %v5014, %v5010
    %v5211 = vpack.c.b16 %v5019, %v5015
    %v5212 = vpack.c.b16 %v5020, %v5016
    %v5213 = vpack.c.b16 %v5021, %v5017
    %v5214 = vpack.c.b16 %v5022, %v5018
    %v5215 = vpack.c.b16 %v5027, %v5023
    %v5216 = vpack.c.b16 %v5028, %v5024
    %v5217 = vpack.c.b16 %v5029, %v5025
    %v5218 = vpack.c.b16 %v5030, %v5026
    %v5219 = vpack.c.b16 %v5035, %v5031
    %v5220 = vpack.c.b16 %v5036, %v5032
    %v5221 = vpack.c.b16 %v5037, %v5033
    %v5222 = vpack.c.b16 %v5038, %v5034
    %v5223 = vpack.c.b16 %v5043, %v5039
    %v5224 = vpack.c.b16 %v5044, %v5040
    %v5225 = vpack.c.b16 %v5045, %v5041
    %v5226 = vpack.c.b16 %v5046, %v5042
    %v5227 = vpack.c.b16 %v5051, %v5047
    %v5228 = vpack.c.b16 %v5052, %v5048
    %v5229 = vpack.c.b16 %v5053, %v5049
    %v5230 = vpack.c.b16 %v5054, %v5050
    %v5231 = vpack.c.b16 %v5059, %v5055
    %v5232 = vpack.c.b16 %v5060, %v5056
    %v5233 = vpack.c.b16 %v5061, %v5057
    %v5234 = vpack.c.b16 %v5062, %v5058
    %v5235 = vpack.c.b16 %v5067, %v5063
    %v5236 = vpack.c.b16 %v5068, %v5064
    %v5237 = vpack.c.b16 %v5069, %v5065
    %v5238 = vpack.c.b16 %v5070, %v5066
    %v5239 = vpack.c.b16 %v5075, %v5071
    %v5240 = vpack.c.b16 %v5076, %v5072
    %v5241 = vpack.c.b16 %v5077, %v5073
    %v5242 = vpack.c.b16 %v5078, %v5074
    %v5243 = vpack.c.b16 %v5083, %v5079
    %v5244 = vpack.c.b16 %v5084, %v5080
    %v5245 = vpack.c.b16 %v5085, %v5081
    %v5246 = vpack.c.b16 %v5086, %v5082
    %v5247 = vpack.c.b16 %v5091, %v5087
    %v5248 = vpack.c.b16 %v5092, %v5088
    %v5249 = vpack.c.b16 %v5093, %v5089
    %v5250 = vpack.c.b16 %v5094, %v5090
    %v5251 = vpack.c.b16 %v5099, %v5095
    %v5252 = vpack.c.b16 %v5100, %v5096
    %v5253 = vpack.c.b16 %v5101, %v5097
    %v5254 = vpack.c.b16 %v5102, %v5098
    %v5255 = vpack.c.b16 %v5107, %v5103
    %v5256 = vpack.c.b16 %v5108, %v5104
    %v5257 = vpack.c.b16 %v5109, %v5105
    %v5258 = vpack.c.b16 %v5110, %v5106
    %v5259 = vpack.c.b16 %v5115, %v5111
    %v5260 = vpack.c.b16 %v5116, %v5112
    %v5261 = vpack.c.b16 %v5117, %v5113
    %v5262 = vpack.c.b16 %v5118, %v5114
    %v5263 = vpack.c.b16 %v5123, %v5119
    %v5264 = vpack.c.b16 %v5124, %v5120
    %v5265 = vpack.c.b16 %v5125, %v5121
    %v5266 = vpack.c.b16 %v5126, %v5122
    %v5267 = vpack.c.b16 %v5131, %v5127
    %v5268 = vpack.c.b16 %v5132, %v5128
    %v5269 = vpack.c.b16 %v5133, %v5129
    %v5270 = vpack.c.b16 %v5134, %v5130
    %v5271 = vpack.c.b16 %v5139, %v5135
    %v5272 = vpack.c.b16 %v5140, %v5136
    %v5273 = vpack.c.b16 %v5141, %v5137
    %v5274 = vpack.c.b16 %v5142, %v5138
    %v5275 = vpack.c.b16 %v5147, %v5143
    %v5276 = vpack.c.b16 %v5148, %v5144
    %v5277 = vpack.c.b16 %v5149, %v5145
    %v5278 = vpack.c.b16 %v5150, %v5146
    %5407 = vmatprep.subr.bf16.mxu0 %v5152
    %5408 = vmatpush1.bf16.msra.mxu0 %v5151
    %5409 = vmatprep.subr.bf16.mxu0 %v5156
    %5410 = vmatpush1.bf16.msra.mxu0 %v5155
    %5411 = vmatprep.subr.bf16.mxu0 %v5160
    %5412 = vmatpush1.bf16.msra.mxu0 %v5159
    %5413 = vmatprep.subr.bf16.mxu0 %v5164
    %5414 = vmatpush1.bf16.msra.mxu0 %v5163
    %5415 = vmatprep.subr.bf16.mxu0 %v5168
    %5416 = vmatpush1.bf16.msra.mxu0 %v5167
    %5417 = vmatprep.subr.bf16.mxu0 %v5172
    %5418 = vmatpush1.bf16.msra.mxu0 %v5171
    %5419 = vmatprep.subr.bf16.mxu0 %v5176
    %5420 = vmatpush1.bf16.msra.mxu0 %v5175
    %5421 = vmatprep.subr.bf16.mxu0 %v5180
    %5422 = vmatpush1.bf16.msra.mxu0 %v5179
    %5423 = vmatprep.subr.bf16.mxu0 %v5184
    %5424 = vmatpush1.bf16.msra.mxu0 %v5183
    %5425 = vmatprep.subr.bf16.mxu0 %v5188
    %5426 = vmatpush1.bf16.msra.mxu0 %v5187
    %5427 = vmatprep.subr.bf16.mxu0 %v5192
    %5428 = vmatpush1.bf16.msra.mxu0 %v5191
    %5429 = vmatprep.subr.bf16.mxu0 %v5196
    %5430 = vmatpush1.bf16.msra.mxu0 %v5195
    %5431 = vmatprep.subr.bf16.mxu0 %v5200
    %5432 = vmatpush1.bf16.msra.mxu0 %v5199
    %5433 = vmatprep.subr.bf16.mxu0 %v5204
    %5434 = vmatpush1.bf16.msra.mxu0 %v5203
    %5435 = vmatprep.subr.bf16.mxu0 %v5208
    %5436 = vmatpush1.bf16.msra.mxu0 %v5207
    %5437 = vmatprep.subr.bf16.mxu0 %v5212
    %5438 = vmatpush1.bf16.msra.mxu0 %v5211
    %5439 = vmatprep.mubr.bf16.mxu0 %v4614
    %5440 = vmatmul.mubr.bf16.gmra.mrb[0].mxu0 %v4613
    %v5441 = vpop.f32.mrb[0].mxu0
    %v5442 = vadd.f32 %v4750, %v5441
    %v5443 = vpop.f32.mrb[0].mxu0
    %v5444 = vadd.f32 %v4754, %v5443
    %v5445 = vpop.f32.mrb[0].mxu0
    %v5446 = vadd.f32 %v4750, %v5445
    %v5447 = vpop.f32.mrb[0].mxu0
    %v5448 = vadd.f32 %v4754, %v5447
    %5449 = vdwg.mxu0
    %5450 = vmatprep.subr.bf16.mxu0 %v5216
    %5451 = vmatpush1.bf16.msra.mxu0 %v5215
    %5452 = vmatprep.subr.bf16.mxu0 %v5220
    %5453 = vmatpush1.bf16.msra.mxu0 %v5219
    %5454 = vmatprep.subr.bf16.mxu0 %v5224
    %5455 = vmatpush1.bf16.msra.mxu0 %v5223
    %5456 = vmatprep.subr.bf16.mxu0 %v5228
    %5457 = vmatpush1.bf16.msra.mxu0 %v5227
    %5458 = vmatprep.subr.bf16.mxu0 %v5232
    %5459 = vmatpush1.bf16.msra.mxu0 %v5231
    %5460 = vmatprep.subr.bf16.mxu0 %v5236
    %5461 = vmatpush1.bf16.msra.mxu0 %v5235
    %5462 = vmatprep.subr.bf16.mxu0 %v5240
    %5463 = vmatpush1.bf16.msra.mxu0 %v5239
    %5464 = vmatprep.subr.bf16.mxu0 %v5244
    %5465 = vmatpush1.bf16.msra.mxu0 %v5243
    %5466 = vmatprep.subr.bf16.mxu0 %v5248
    %5467 = vmatpush1.bf16.msra.mxu0 %v5247
    %5468 = vmatprep.subr.bf16.mxu0 %v5252
    %5469 = vmatpush1.bf16.msra.mxu0 %v5251
    %5470 = vmatprep.subr.bf16.mxu0 %v5256
    %5471 = vmatpush1.bf16.msra.mxu0 %v5255
    %5472 = vmatprep.subr.bf16.mxu0 %v5260
    %5473 = vmatpush1.bf16.msra.mxu0 %v5259
    %5474 = vmatprep.subr.bf16.mxu0 %v5264
    %5475 = vmatpush1.bf16.msra.mxu0 %v5263
    %5476 = vmatprep.subr.bf16.mxu0 %v5268
    %5477 = vmatpush1.bf16.msra.mxu0 %v5267
    %5478 = vmatprep.subr.bf16.mxu0 %v5272
    %5479 = vmatpush1.bf16.msra.mxu0 %v5271
    %5480 = vmatprep.subr.bf16.mxu0 %v5276
    %5481 = vmatpush1.bf16.msra.mxu0 %v5275
    %5482 = vmatprep.mubr.bf16.mxu0 %v4616
    %5483 = vmatmul.mubr.bf16.gmra.mrb[0].mxu0 %v4615
    %v5484 = vpop.f32.mrb[0].mxu0
    %v5485 = vadd.f32 %v5442, %v5484
    %v5486 = vpop.f32.mrb[0].mxu0
    %v5487 = vadd.f32 %v5444, %v5486
    %v5488 = vpop.f32.mrb[0].mxu0
    %v5489 = vadd.f32 %v5446, %v5488
    %v5490 = vpop.f32.mrb[0].mxu0
    %v5491 = vadd.f32 %v5448, %v5490
    %5492 = vdwg.mxu0
    %5493 = vmatprep.subr.bf16.mxu0 %v5154
    %5494 = vmatpush1.bf16.msra.mxu0 %v5153
    %5495 = vmatprep.subr.bf16.mxu0 %v5158
    %5496 = vmatpush1.bf16.msra.mxu0 %v5157
    %5497 = vmatprep.subr.bf16.mxu0 %v5162
    %5498 = vmatpush1.bf16.msra.mxu0 %v5161
    %5499 = vmatprep.subr.bf16.mxu0 %v5166
    %5500 = vmatpush1.bf16.msra.mxu0 %v5165
    %5501 = vmatprep.subr.bf16.mxu0 %v5170
    %5502 = vmatpush1.bf16.msra.mxu0 %v5169
    %5503 = vmatprep.subr.bf16.mxu0 %v5174
    %5504 = vmatpush1.bf16.msra.mxu0 %v5173
    %5505 = vmatprep.subr.bf16.mxu0 %v5178
    %5506 = vmatpush1.bf16.msra.mxu0 %v5177
    %5507 = vmatprep.subr.bf16.mxu0 %v5182
    %5508 = vmatpush1.bf16.msra.mxu0 %v5181
    %5509 = vmatprep.subr.bf16.mxu0 %v5186
    %5510 = vmatpush1.bf16.msra.mxu0 %v5185
    %5511 = vmatprep.subr.bf16.mxu0 %v5190
    %5512 = vmatpush1.bf16.msra.mxu0 %v5189
    %5513 = vmatprep.subr.bf16.mxu0 %v5194
    %5514 = vmatpush1.bf16.msra.mxu0 %v5193
    %5515 = vmatprep.subr.bf16.mxu0 %v5198
    %5516 = vmatpush1.bf16.msra.mxu0 %v5197
    %5517 = vmatprep.subr.bf16.mxu0 %v5202
    %5518 = vmatpush1.bf16.msra.mxu0 %v5201
    %5519 = vmatprep.subr.bf16.mxu0 %v5206
    %5520 = vmatpush1.bf16.msra.mxu0 %v5205
    %5521 = vmatprep.subr.bf16.mxu0 %v5210
    %5522 = vmatpush1.bf16.msra.mxu0 %v5209
    %5523 = vmatprep.subr.bf16.mxu0 %v5214
    %5524 = vmatpush1.bf16.msra.mxu0 %v5213
    %5525 = vmatprep.mubr.bf16.mxu0 %v4614
    %5526 = vmatmul.mubr.bf16.gmra.mrb[0].mxu0 %v4613
    %v5527 = vpop.f32.mrb[0].mxu0
    %v5528 = vadd.f32 %v4758, %v5527
    %v5529 = vpop.f32.mrb[0].mxu0
    %v5530 = vadd.f32 %v4762, %v5529
    %v5531 = vpop.f32.mrb[0].mxu0
    %v5532 = vadd.f32 %v4758, %v5531
    %v5533 = vpop.f32.mrb[0].mxu0
    %v5534 = vadd.f32 %v4762, %v5533
    %5535 = vdwg.mxu0
    %5536 = vmatprep.subr.bf16.mxu0 %v5218
    %5537 = vmatpush1.bf16.msra.mxu0 %v5217
    %5538 = vmatprep.subr.bf16.mxu0 %v5222
    %5539 = vmatpush1.bf16.msra.mxu0 %v5221
    %5540 = vmatprep.subr.bf16.mxu0 %v5226
    %5541 = vmatpush1.bf16.msra.mxu0 %v5225
    %5542 = vmatprep.subr.bf16.mxu0 %v5230
    %5543 = vmatpush1.bf16.msra.mxu0 %v5229
    %5544 = vmatprep.subr.bf16.mxu0 %v5234
    %5545 = vmatpush1.bf16.msra.mxu0 %v5233
    %5546 = vmatprep.subr.bf16.mxu0 %v5238
    %5547 = vmatpush1.bf16.msra.mxu0 %v5237
    %5548 = vmatprep.subr.bf16.mxu0 %v5242
    %5549 = vmatpush1.bf16.msra.mxu0 %v5241
    %5550 = vmatprep.subr.bf16.mxu0 %v5246
    %5551 = vmatpush1.bf16.msra.mxu0 %v5245
    %5552 = vmatprep.subr.bf16.mxu0 %v5250
    %5553 = vmatpush1.bf16.msra.mxu0 %v5249
    %5554 = vmatprep.subr.bf16.mxu0 %v5254
    %5555 = vmatpush1.bf16.msra.mxu0 %v5253
    %5556 = vmatprep.subr.bf16.mxu0 %v5258
    %5557 = vmatpush1.bf16.msra.mxu0 %v5257
    %5558 = vmatprep.subr.bf16.mxu0 %v5262
    %5559 = vmatpush1.bf16.msra.mxu0 %v5261
    %5560 = vmatprep.subr.bf16.mxu0 %v5266
    %5561 = vmatpush1.bf16.msra.mxu0 %v5265
    %5562 = vmatprep.subr.bf16.mxu0 %v5270
    %5563 = vmatpush1.bf16.msra.mxu0 %v5269
    %5564 = vmatprep.subr.bf16.mxu0 %v5274
    %5565 = vmatpush1.bf16.msra.mxu0 %v5273
    %5566 = vmatprep.subr.bf16.mxu0 %v5278
    %5567 = vmatpush1.bf16.msra.mxu0 %v5277
    %5568 = vmatprep.mubr.bf16.mxu0 %v4616
    %5569 = vmatmul.mubr.bf16.gmra.mrb[0].mxu0 %v4615
    %v5570 = vpop.f32.mrb[0].mxu0
    %v5571 = vadd.f32 %v5528, %v5570
    %v5572 = vpop.f32.mrb[0].mxu0
    %v5573 = vadd.f32 %v5530, %v5572
    %v5574 = vpop.f32.mrb[0].mxu0
    %v5575 = vadd.f32 %v5532, %v5574
    %v5576 = vpop.f32.mrb[0].mxu0
    %v5577 = vadd.f32 %v5534, %v5576
    %5578 = vdwg.mxu0
    %v5579 = vmax.f32 %v5485, 0.0
    %v5580 = vmax.f32 %v5487, 0.0
    %v5581 = vmax.f32 %v5571, 0.0
    %v5582 = vmax.f32 %v5573, 0.0
    %v5583 = vmax.f32 %v5489, 0.0
    %v5584 = vmax.f32 %v5491, 0.0
    %v5585 = vmax.f32 %v5575, 0.0
    %v5586 = vmax.f32 %v5577, 0.0
    %v5587 = vpack.c.bf16 %v5583, %v5579
    %v5588 = vpack.c.bf16 %v5584, %v5580
    %v5589 = vpack.c.bf16 %v5585, %v5581
    %v5590 = vpack.c.bf16 %v5586, %v5582
    %v5591 = vld [vmem:[#allocation14] sm:$0xf]
    %v5592 = vld [vmem:[#allocation14 + $0x4] sm:$0xf]
    %v5593 = vld [vmem:[#allocation14 + $0x8] sm:$0xf]
    %v5594 = vld [vmem:[#allocation14 + $0xc] sm:$0xf]
    %v5595 = vld [vmem:[#allocation14 + $0x10] sm:$0xf]
    %v5596 = vld [vmem:[#allocation14 + $0x14] sm:$0xf]
    %v5597 = vld [vmem:[#allocation14 + $0x18] sm:$0xf]
    %v5598 = vld [vmem:[#allocation14 + $0x1c] sm:$0xf]
    %v5599 = vld [vmem:[#allocation14 + $0x20] sm:$0xf]
    %v5600 = vld [vmem:[#allocation14 + $0x24] sm:$0xf]
    %v5601 = vld [vmem:[#allocation14 + $0x28] sm:$0xf]
    %v5602 = vld [vmem:[#allocation14 + $0x2c] sm:$0xf]
    %v5603 = vld [vmem:[#allocation14 + $0x30] sm:$0xf]
    %v5604 = vld [vmem:[#allocation14 + $0x34] sm:$0xf]
    %v5605 = vld [vmem:[#allocation14 + $0x38] sm:$0xf]
    %v5606 = vld [vmem:[#allocation14 + $0x3c] sm:$0xf]
    %v5607 = vld [vmem:[#allocation14 + $0x40] sm:$0xf]
    %v5608 = vld [vmem:[#allocation14 + $0x44] sm:$0xf]
    %v5609 = vld [vmem:[#allocation14 + $0x48] sm:$0xf]
    %v5610 = vld [vmem:[#allocation14 + $0x4c] sm:$0xf]
    %v5611 = vld [vmem:[#allocation14 + $0x50] sm:$0xf]
    %v5612 = vld [vmem:[#allocation14 + $0x54] sm:$0xf]
    %v5613 = vld [vmem:[#allocation14 + $0x58] sm:$0xf]
    %v5614 = vld [vmem:[#allocation14 + $0x5c] sm:$0xf]
    %v5615 = vld [vmem:[#allocation14 + $0x60] sm:$0xf]
    %v5616 = vld [vmem:[#allocation14 + $0x64] sm:$0xf]
    %v5617 = vld [vmem:[#allocation14 + $0x68] sm:$0xf]
    %v5618 = vld [vmem:[#allocation14 + $0x6c] sm:$0xf]
    %v5619 = vld [vmem:[#allocation14 + $0x70] sm:$0xf]
    %v5620 = vld [vmem:[#allocation14 + $0x74] sm:$0xf]
    %v5621 = vld [vmem:[#allocation14 + $0x78] sm:$0xf]
    %v5622 = vld [vmem:[#allocation14 + $0x7c] sm:$0xf]
    %v5623 = vld [vmem:[#allocation14 + $0x80] sm:$0xf]
    %v5624 = vld [vmem:[#allocation14 + $0x84] sm:$0xf]
    %v5625 = vld [vmem:[#allocation14 + $0x88] sm:$0xf]
    %v5626 = vld [vmem:[#allocation14 + $0x8c] sm:$0xf]
    %v5627 = vld [vmem:[#allocation14 + $0x90] sm:$0xf]
    %v5628 = vld [vmem:[#allocation14 + $0x94] sm:$0xf]
    %v5629 = vld [vmem:[#allocation14 + $0x98] sm:$0xf]
    %v5630 = vld [vmem:[#allocation14 + $0x9c] sm:$0xf]
    %v5631 = vld [vmem:[#allocation14 + $0xa0] sm:$0xf]
    %v5632 = vld [vmem:[#allocation14 + $0xa4] sm:$0xf]
    %v5633 = vld [vmem:[#allocation14 + $0xa8] sm:$0xf]
    %v5634 = vld [vmem:[#allocation14 + $0xac] sm:$0xf]
    %v5635 = vld [vmem:[#allocation14 + $0xb0] sm:$0xf]
    %v5636 = vld [vmem:[#allocation14 + $0xb4] sm:$0xf]
    %v5637 = vld [vmem:[#allocation14 + $0xb8] sm:$0xf]
    %v5638 = vld [vmem:[#allocation14 + $0xbc] sm:$0xf]
    %v5639 = vld [vmem:[#allocation14 + $0xc0] sm:$0xf]
    %v5640 = vld [vmem:[#allocation14 + $0xc4] sm:$0xf]
    %v5641 = vld [vmem:[#allocation14 + $0xc8] sm:$0xf]
    %v5642 = vld [vmem:[#allocation14 + $0xcc] sm:$0xf]
    %v5643 = vld [vmem:[#allocation14 + $0xd0] sm:$0xf]
    %v5644 = vld [vmem:[#allocation14 + $0xd4] sm:$0xf]
    %v5645 = vld [vmem:[#allocation14 + $0xd8] sm:$0xf]
    %v5646 = vld [vmem:[#allocation14 + $0xdc] sm:$0xf]
    %v5647 = vld [vmem:[#allocation14 + $0xe0] sm:$0xf]
    %v5648 = vld [vmem:[#allocation14 + $0xe4] sm:$0xf]
    %v5649 = vld [vmem:[#allocation14 + $0xe8] sm:$0xf]
    %v5650 = vld [vmem:[#allocation14 + $0xec] sm:$0xf]
    %v5651 = vld [vmem:[#allocation14 + $0xf0] sm:$0xf]
    %v5652 = vld [vmem:[#allocation14 + $0xf4] sm:$0xf]
    %v5653 = vld [vmem:[#allocation14 + $0xf8] sm:$0xf]
    %v5654 = vld [vmem:[#allocation14 + $0xfc] sm:$0xf]
    %v5655 = vld [vmem:[#allocation16] sm:$0x1]
    %v5657 = vlaneseq
    %v5658 = vshrl.u32 %v5657, 7
    %v5659 = vsub.s32 0, %v5658
    %v5660 = vrot.slane %v5655, %v5659
    %v5726 = vunpack.c.l.b16 %v5591
    %v5727 = vunpack.c.l.b16 %v5592
    %v5728 = vunpack.c.l.b16 %v5593
    %v5729 = vunpack.c.l.b16 %v5594
    %v5730 = vunpack.c.l.b16 %v5595
    %v5731 = vunpack.c.l.b16 %v5596
    %v5732 = vunpack.c.l.b16 %v5597
    %v5733 = vunpack.c.l.b16 %v5598
    %v5734 = vunpack.c.l.b16 %v5599
    %v5735 = vunpack.c.l.b16 %v5600
    %v5736 = vunpack.c.l.b16 %v5601
    %v5737 = vunpack.c.l.b16 %v5602
    %v5738 = vunpack.c.l.b16 %v5603
    %v5739 = vunpack.c.l.b16 %v5604
    %v5740 = vunpack.c.l.b16 %v5605
    %v5741 = vunpack.c.l.b16 %v5606
    %v5742 = vunpack.c.l.b16 %v5607
    %v5743 = vunpack.c.l.b16 %v5608
    %v5744 = vunpack.c.l.b16 %v5609
    %v5745 = vunpack.c.l.b16 %v5610
    %v5746 = vunpack.c.l.b16 %v5611
    %v5747 = vunpack.c.l.b16 %v5612
    %v5748 = vunpack.c.l.b16 %v5613
    %v5749 = vunpack.c.l.b16 %v5614
    %v5750 = vunpack.c.l.b16 %v5615
    %v5751 = vunpack.c.l.b16 %v5616
    %v5752 = vunpack.c.l.b16 %v5617
    %v5753 = vunpack.c.l.b16 %v5618
    %v5754 = vunpack.c.l.b16 %v5619
    %v5755 = vunpack.c.l.b16 %v5620
    %v5756 = vunpack.c.l.b16 %v5621
    %v5757 = vunpack.c.l.b16 %v5622
    %v5758 = vunpack.c.l.b16 %v5623
    %v5759 = vunpack.c.l.b16 %v5624
    %v5760 = vunpack.c.l.b16 %v5625
    %v5761 = vunpack.c.l.b16 %v5626
    %v5762 = vunpack.c.l.b16 %v5627
    %v5763 = vunpack.c.l.b16 %v5628
    %v5764 = vunpack.c.l.b16 %v5629
    %v5765 = vunpack.c.l.b16 %v5630
    %v5766 = vunpack.c.l.b16 %v5631
    %v5767 = vunpack.c.l.b16 %v5632
    %v5768 = vunpack.c.l.b16 %v5633
    %v5769 = vunpack.c.l.b16 %v5634
    %v5770 = vunpack.c.l.b16 %v5635
    %v5771 = vunpack.c.l.b16 %v5636
    %v5772 = vunpack.c.l.b16 %v5637
    %v5773 = vunpack.c.l.b16 %v5638
    %v5774 = vunpack.c.l.b16 %v5639
    %v5775 = vunpack.c.l.b16 %v5640
    %v5776 = vunpack.c.l.b16 %v5641
    %v5777 = vunpack.c.l.b16 %v5642
    %v5778 = vunpack.c.l.b16 %v5643
    %v5779 = vunpack.c.l.b16 %v5644
    %v5780 = vunpack.c.l.b16 %v5645
    %v5781 = vunpack.c.l.b16 %v5646
    %v5782 = vunpack.c.l.b16 %v5647
    %v5783 = vunpack.c.l.b16 %v5648
    %v5784 = vunpack.c.l.b16 %v5649
    %v5785 = vunpack.c.l.b16 %v5650
    %v5786 = vunpack.c.l.b16 %v5651
    %v5787 = vunpack.c.l.b16 %v5652
    %v5788 = vunpack.c.l.b16 %v5653
    %v5789 = vunpack.c.l.b16 %v5654
    %v5790 = vpack.c.b16 %v5727, %v5726
    %v5791 = vpack.c.b16 %v5729, %v5728
    %v5792 = vpack.c.b16 %v5731, %v5730
    %v5793 = vpack.c.b16 %v5733, %v5732
    %v5794 = vpack.c.b16 %v5735, %v5734
    %v5795 = vpack.c.b16 %v5737, %v5736
    %v5796 = vpack.c.b16 %v5739, %v5738
    %v5797 = vpack.c.b16 %v5741, %v5740
    %v5798 = vpack.c.b16 %v5743, %v5742
    %v5799 = vpack.c.b16 %v5745, %v5744
    %v5800 = vpack.c.b16 %v5747, %v5746
    %v5801 = vpack.c.b16 %v5749, %v5748
    %v5802 = vpack.c.b16 %v5751, %v5750
    %v5803 = vpack.c.b16 %v5753, %v5752
    %v5804 = vpack.c.b16 %v5755, %v5754
    %v5805 = vpack.c.b16 %v5757, %v5756
    %v5806 = vpack.c.b16 %v5759, %v5758
    %v5807 = vpack.c.b16 %v5761, %v5760
    %v5808 = vpack.c.b16 %v5763, %v5762
    %v5809 = vpack.c.b16 %v5765, %v5764
    %v5810 = vpack.c.b16 %v5767, %v5766
    %v5811 = vpack.c.b16 %v5769, %v5768
    %v5812 = vpack.c.b16 %v5771, %v5770
    %v5813 = vpack.c.b16 %v5773, %v5772
    %v5814 = vpack.c.b16 %v5775, %v5774
    %v5815 = vpack.c.b16 %v5777, %v5776
    %v5816 = vpack.c.b16 %v5779, %v5778
    %v5817 = vpack.c.b16 %v5781, %v5780
    %v5818 = vpack.c.b16 %v5783, %v5782
    %v5819 = vpack.c.b16 %v5785, %v5784
    %v5820 = vpack.c.b16 %v5787, %v5786
    %v5821 = vpack.c.b16 %v5789, %v5788
    %5854 = vmatprep.subr.bf16.mxu0 0
    %5855 = vmatpush1.bf16.msra.mxu0 %v5790
    %5856 = vmatprep.subr.bf16.mxu0 0
    %5857 = vmatpush1.bf16.msra.mxu0 %v5791
    %5858 = vmatprep.subr.bf16.mxu0 0
    %5859 = vmatpush1.bf16.msra.mxu0 %v5792
    %5860 = vmatprep.subr.bf16.mxu0 0
    %5861 = vmatpush1.bf16.msra.mxu0 %v5793
    %5862 = vmatprep.subr.bf16.mxu0 0
    %5863 = vmatpush1.bf16.msra.mxu0 %v5794
    %5864 = vmatprep.subr.bf16.mxu0 0
    %5865 = vmatpush1.bf16.msra.mxu0 %v5795
    %5866 = vmatprep.subr.bf16.mxu0 0
    %5867 = vmatpush1.bf16.msra.mxu0 %v5796
    %5868 = vmatprep.subr.bf16.mxu0 0
    %5869 = vmatpush1.bf16.msra.mxu0 %v5797
    %5870 = vmatprep.subr.bf16.mxu0 0
    %5871 = vmatpush1.bf16.msra.mxu0 %v5798
    %5872 = vmatprep.subr.bf16.mxu0 0
    %5873 = vmatpush1.bf16.msra.mxu0 %v5799
    %5874 = vmatprep.subr.bf16.mxu0 0
    %5875 = vmatpush1.bf16.msra.mxu0 %v5800
    %5876 = vmatprep.subr.bf16.mxu0 0
    %5877 = vmatpush1.bf16.msra.mxu0 %v5801
    %5878 = vmatprep.subr.bf16.mxu0 0
    %5879 = vmatpush1.bf16.msra.mxu0 %v5802
    %5880 = vmatprep.subr.bf16.mxu0 0
    %5881 = vmatpush1.bf16.msra.mxu0 %v5803
    %5882 = vmatprep.subr.bf16.mxu0 0
    %5883 = vmatpush1.bf16.msra.mxu0 %v5804
    %5884 = vmatprep.subr.bf16.mxu0 0
    %5885 = vmatpush1.bf16.msra.mxu0 %v5805
    %5886 = vmatprep.mubr.bf16.mxu0 %v5588
    %5887 = vmatmul.mubr.bf16.gmra.mrb[0].mxu0 %v5587
    %v5888 = vpop.f32.mrb[0].mxu0
    %v5889 = vadd.f32 %v5660, %v5888
    %v5890 = vpop.f32.mrb[0].mxu0
    %v5891 = vpop.f32.mrb[0].mxu0
    %v5892 = vadd.f32 %v5660, %v5891
    %v5893 = vpop.f32.mrb[0].mxu0
    %5894 = vdwg.mxu0
    %5895 = vmatprep.subr.bf16.mxu0 0
    %5896 = vmatpush1.bf16.msra.mxu0 %v5806
    %5897 = vmatprep.subr.bf16.mxu0 0
    %5898 = vmatpush1.bf16.msra.mxu0 %v5807
    %5899 = vmatprep.subr.bf16.mxu0 0
    %5900 = vmatpush1.bf16.msra.mxu0 %v5808
    %5901 = vmatprep.subr.bf16.mxu0 0
    %5902 = vmatpush1.bf16.msra.mxu0 %v5809
    %5903 = vmatprep.subr.bf16.mxu0 0
    %5904 = vmatpush1.bf16.msra.mxu0 %v5810
    %5905 = vmatprep.subr.bf16.mxu0 0
    %5906 = vmatpush1.bf16.msra.mxu0 %v5811
    %5907 = vmatprep.subr.bf16.mxu0 0
    %5908 = vmatpush1.bf16.msra.mxu0 %v5812
    %5909 = vmatprep.subr.bf16.mxu0 0
    %5910 = vmatpush1.bf16.msra.mxu0 %v5813
    %5911 = vmatprep.subr.bf16.mxu0 0
    %5912 = vmatpush1.bf16.msra.mxu0 %v5814
    %5913 = vmatprep.subr.bf16.mxu0 0
    %5914 = vmatpush1.bf16.msra.mxu0 %v5815
    %5915 = vmatprep.subr.bf16.mxu0 0
    %5916 = vmatpush1.bf16.msra.mxu0 %v5816
    %5917 = vmatprep.subr.bf16.mxu0 0
    %5918 = vmatpush1.bf16.msra.mxu0 %v5817
    %5919 = vmatprep.subr.bf16.mxu0 0
    %5920 = vmatpush1.bf16.msra.mxu0 %v5818
    %5921 = vmatprep.subr.bf16.mxu0 0
    %5922 = vmatpush1.bf16.msra.mxu0 %v5819
    %5923 = vmatprep.subr.bf16.mxu0 0
    %5924 = vmatpush1.bf16.msra.mxu0 %v5820
    %5925 = vmatprep.subr.bf16.mxu0 0
    %5926 = vmatpush1.bf16.msra.mxu0 %v5821
    %5927 = vmatprep.mubr.bf16.mxu0 %v5590
    %5928 = vmatmul.mubr.bf16.gmra.mrb[0].mxu0 %v5589
    %v5929 = vpop.f32.mrb[0].mxu0
    %v5930 = vadd.f32 %v5889, %v5929
    %v5931 = vpop.f32.mrb[0].mxu0
    %v5932 = vpop.f32.mrb[0].mxu0
    %v5933 = vadd.f32 %v5892, %v5932
    %v5934 = vpop.f32.mrb[0].mxu0
    %5935 = vdwg.mxu0
    %5936 = vst [vmem:[#allocation17] sm:$0xff] %v5930
    %5937 = vst [vmem:[#allocation17 + $0x8] sm:$0xff] %v5933
    // Predicated region
    $region74: #{tpu_custom_call.1} parent=1 // pred_check
      _
    $region75: #{tpu_custom_call.1} parent=1 // pred_check_branch
      %5939 = sbr.rel (0) target = $region77
    $region76: #{tpu_custom_call.1} parent=1 // pred_region
      %s5941 = ssub.s32 256, 256
      %5942 = vsyncadd [#allocation4], %s5941
      %s5943 = sshll.u32 [#allocation17], 4
      %s5944 = int_to_ptr.vmem [resolvable:$true] %s5943
      %5949 = dma.vmem_to_hbm [thread:$0]  %s5944, 256, %s9, [#allocation4], 128, 128, 8
    $region77: #{tpu_custom_call.1} parent=1 // pred_fallthru
      _
    // Predicated region
    $region78: #{tpu_custom_call.1} parent=1 // pred_check
      _
    $region79: #{tpu_custom_call.1} parent=1 // pred_check_branch
      %5951 = sbr.rel (0) target = $region81
    $region80: #{tpu_custom_call.1} parent=1 // pred_region
      %5952 = dma.done [#allocation4], 256
    $region81: #{tpu_custom_call.1} parent=1 // pred_fallthru
      _
    %5953 = vsyncpa [#allocation3], 1
    %5954 = vsyncpa [#allocation6], 1
    %5955 = vsyncpa [#allocation9], 1
    %5956 = vsyncpa [#allocation12], 1
    %5957 = vsyncpa [#allocation15], 1
    %5958 = vsyncpa [#allocation4], 1

</llo_original>
